<compile_context>
chip_gen: v6e
topology: v6e:2x2x1
jax: 0.10.0
libtpu: 0.0.40
codegen_flags: <defaults>
</compile_context>

<pallas_src>
import functools

import jax
import jax.numpy as jnp
from jax.experimental import pallas as pl
from jax.experimental.pallas import tpu as pltpu

# ----------------------------- configuration --------------------------------
B = 2                 # batch
NUM_GLANCE = 6        # num_glance_segments (T0)
NUM_FOCUS = 4         # num_focus_segments
NUM_INPUT_FOCUS = 8   # num_input_focus_segments
NUM_CLASS = 10
C_FEAT = 16           # feature_map_channels (global_feature_dim)
C_LOCAL = 16
H_S = 16              # stn_hidden_dim
H_T = 16              # temporal_hidden_dim
INPUT_SIZE = 64       # args.input_size
PATCH_SIZE = 32       # args.patch_size  (PATCH_SIZE // 32 == 1 for feat-map patches)
GLANCE_SIZE = 56      # glance frame resolution (56/8 -> 7x7 feature maps)
SAMPLE_TIMES = 128
BN_EPS = 1e-5


# ----------------------------- small helpers --------------------------------
def _rup(n, m):
    return ((n + m - 1) // m) * m


def _cdiv(a, b):
    return -(-a // b)


def _pad_to(x, shape, fill=0.0):
    pads = [(0, s - d) for d, s in zip(x.shape, shape)]
    return jnp.pad(x, pads, constant_values=fill)


def fold_bn(bn):
    gamma, beta, mean, var = bn
    scale = gamma / jnp.sqrt(var + BN_EPS)
    shift = beta - mean * scale
    return scale, shift


_PARALLEL1 = pltpu.CompilerParams(dimension_semantics=("parallel",))


def _choose_tm(M, tile_m):
    """Pick an M tile size minimising padded rows; mildly prefer an even tile
    count (v7x has 2 TensorCores, a 'parallel' grid is sharded across them and
    an odd count leaves one core with a long tail).  On v5e/v6e (1 TC) only the
    padding-minimising choice matters, so the even-grid bias is capped."""
    n_min = max(2, _cdiv(M, tile_m))
    cands = []
    for n in (n_min - 1, n_min, n_min + 1):
        if n < 1:
            continue
        tm = _rup(_cdiv(M, n), 16)          # bf16 sublane packing: multiples of 16
        if tm > 2 * tile_m:
            continue
        g = _cdiv(M, tm)
        cands.append((g * tm - M, g % 2, tm, g))
    cands.sort()
    best = cands[0]
    for waste, odd, tm, g in cands:
        if odd == 0 and waste - best[0] <= max(16, M // 16):
            return tm, g
    return best[2], best[3]


# ----------------------------- Pallas kernels -------------------------------
def _mm_affine_kernel(a_ref, b_ref, s_ref, t_ref, o_ref, *, act):
    """Fused  (A @ B) * scale + shift  -> activation.  bf16 MXU inputs, f32 acc."""
    y = jnp.dot(a_ref[...], b_ref[...], preferred_element_type=jnp.float32)
    y = y * s_ref[...] + t_ref[...]
    if act == "relu":
        y = jnp.maximum(y, 0.0)
    elif act == "sigmoid":
        y = 1.0 / (1.0 + jnp.exp(-y))
    o_ref[...] = y.astype(o_ref.dtype)


def mm_affine(a, b, scale=None, shift=None, act="none", tile_m=256,
              out_dtype=jnp.float32):
    """Pallas matmul with fused per-output-channel affine (folded BN / bias) + act.

    * Full-extent K and N blocks: no jnp.pad of A/B, no out[:M,:N] slice.
    * M-tiled with a cdiv grid (ragged last block; masked writeback).
    * bf16 MXU operands (no-op if caller already produced bf16), f32 epilogue,
      output dtype selectable so chained matmuls stay bf16 end-to-end.
    """
    M, K = a.shape
    K2, N = b.shape
    assert K == K2
    if scale is None:
        scale = jnp.ones((N,), jnp.float32)
    if shift is None:
        shift = jnp.zeros((N,), jnp.float32)

    a = a.astype(jnp.bfloat16)
    b = b.astype(jnp.bfloat16)
    sp = jnp.asarray(scale, jnp.float32).reshape(1, N)
    tp = jnp.asarray(shift, jnp.float32).reshape(1, N)

    if M <= tile_m:
        TM, grid_m = M, 1          # single full-extent block, no row padding
    else:
        TM, grid_m = _choose_tm(M, tile_m)

    # VMEM note: B (K,N) is held resident (constant index_map) and A tiles are
    # double-buffered.  Everything here is << 1 MiB.
    # TODO(synk): at real channel counts add a K grid axis + f32 accumulator and
    # set pltpu.CompilerParams(vmem_limit_bytes=...) (v7x has 64 MiB VMEM only).
    return pl.pallas_call(
        functools.partial(_mm_affine_kernel, act=act),
        out_shape=jax.ShapeDtypeStruct((M, N), out_dtype),
        grid=(grid_m,),
        in_specs=[
            pl.BlockSpec((TM, K), lambda i: (i, 0)),
            pl.BlockSpec((K, N), lambda i: (0, 0)),   # resident across M tiles
            pl.BlockSpec((1, N), lambda i: (0, 0)),
            pl.BlockSpec((1, N), lambda i: (0, 0)),
        ],
        out_specs=pl.BlockSpec((TM, N), lambda i: (i, 0)),
        compiler_params=_PARALLEL1,
    )(a, b, sp, tp)


def _mc_kernel(w_ref, f_ref, o_ref, *, inv_count):
    """Per-batch MC logits: mean over all samples of  (w @ f) / sum_T(w)."""
    w = w_ref[0]                                           # (S_all, T)
    f = f_ref[0]                                           # (T, D)
    num = jnp.dot(w, f, preferred_element_type=jnp.float32)
    den = jnp.maximum(jnp.sum(w, axis=1, keepdims=True), 1e-12)
    rows = num / den                                       # exact reciprocal (tiny)
    o_ref[0] = jnp.sum(rows, axis=0, keepdims=True) * inv_count


def mc_reduce(w, f, inv_count):
    """w: (B, S_all, T) MC-sample weights;  f: (B, T, D) features -> (B, D).

    T is NOT padded (full-extent contraction blocks); the sample-mean reduction
    is done in-kernel so the only HBM output is the final (B, D) tensor.
    """
    Bb, S_all, T = w.shape
    D = f.shape[-1]
    Sp = _rup(S_all, 8)
    wp = w if Sp == S_all else _pad_to(w, (Bb, Sp, T))     # zero rows add 0
    out = pl.pallas_call(
        functools.partial(_mc_kernel, inv_count=inv_count),
        out_shape=jax.ShapeDtypeStruct((Bb, 1, D), jnp.float32),
        grid=(Bb,),
        in_specs=[
            pl.BlockSpec((1, Sp, T), lambda b: (b, 0, 0)),
            pl.BlockSpec((1, T, D), lambda b: (b, 0, 0)),
        ],
        out_specs=pl.BlockSpec((1, 1, D), lambda b: (b, 0, 0)),
        compiler_params=_PARALLEL1,
    )(wp.astype(jnp.float32), f.astype(jnp.float32))
    return out[:, 0, :]


def _temporal_policy_kernel(x_ref, sd_ref, su_ref, w1_ref, b1_ref, w2_ref,
                            b2_ref, w3_ref, o1_ref, o2_ref, *, inv_temp):
    """Fused TemporalPolicy: two (3,1) temporal convs (BN folded) + 1x1 conv +
    two softmaxes.  Temporal +-1 shifts are shift-matrix matmuls (MXU); all
    epilogues use exact division so the outputs sum to 1."""
    x = x_ref[0]                  # (T0, Cin)
    sd = sd_ref[...]              # (T0, T0): row t picks h[t-1] (zero at t=0)
    su = su_ref[...]              # (T0, T0): row t picks h[t+1] (zero at t=T0-1)

    def tconv_relu(h, w_full, b):
        cin = h.shape[1]
        hm1 = jnp.dot(sd, h, preferred_element_type=jnp.float32)
        hp1 = jnp.dot(su, h, preferred_element_type=jnp.float32)
        y = (jnp.dot(hm1, w_full[0:cin, :], preferred_element_type=jnp.float32)
             + jnp.dot(h, w_full[cin:2 * cin, :], preferred_element_type=jnp.float32)
             + jnp.dot(hp1, w_full[2 * cin:3 * cin, :], preferred_element_type=jnp.float32))
        return jnp.maximum(y + b, 0.0)

    h1 = tconv_relu(x, w1_ref[...], b1_ref[...])            # (T0, H_T)
    h2 = tconv_relu(h1, w2_ref[...], b2_ref[...])           # (T0, H_T)
    # tp3 bias omitted: softmax is shift-invariant so it has no effect.
    logits = jnp.sum(h2 * w3_ref[...], axis=1, keepdims=True)   # (T0, 1)

    def softmax_col(l):
        m = jnp.max(l, axis=0, keepdims=True)
        e = jnp.exp(l - m)
        return e / jnp.sum(e, axis=0, keepdims=True)

    o1_ref[0] = softmax_col(logits)
    o2_ref[0] = softmax_col(logits * inv_temp)


# --------------------------- im2col glue (plain JAX) -------------------------
def im2col_2d(x, k, s):
    """x: (N, H, W, C) -> (N, Ho, Wo, k*k*C); col index = (dh*k+dw)*C + c."""
    N, H, W, C = x.shape
    Ho = (H - k) // s + 1
    Wo = (W - k) // s + 1
    cols = []
    for dh in range(k):
        for dw in range(k):
            cols.append(x[:, dh:dh + (Ho - 1) * s + 1:s, dw:dw + (Wo - 1) * s + 1:s, :])
    return jnp.concatenate(cols, axis=-1)


def im2col_3d_k3p1(x):
    """x: (B, T, H, W, C) -> (B, T, H, W, 27*C); col index = ((dt*3+dh)*3+dw)*C + c.

    Kept in the producer's dtype (bf16 here) so the 27x-wide slab costs half the
    HBM traffic and feeds the bf16 matmul with no extra cast copy.
    TODO(synk): fold into a 27-tap K-reduction grid inside mm_affine to avoid
    materialising the intermediate entirely at real feature dims.
    """
    Bb, T, H, W, C = x.shape
    xp = jnp.pad(x, ((0, 0), (1, 1), (1, 1), (1, 1), (0, 0)))
    cols = []
    for dt in range(3):
        for dh in range(3):
            for dw in range(3):
                cols.append(xp[:, dt:dt + T, dh:dh + H, dw:dw + W, :])
    return jnp.concatenate(cols, axis=-1)


# ---------------------- affine_grid / grid_sample (plain JAX) ----------------
# TODO(synk): data-dependent bilinear gather (F.grid_sample) stays in plain JAX.
def affine_grid(theta, Hp, Wp):
    xs = (2.0 * (jnp.arange(Wp, dtype=jnp.float32) + 0.5) / Wp) - 1.0
    ys = (2.0 * (jnp.arange(Hp, dtype=jnp.float32) + 0.5) / Hp) - 1.0
    xg, yg = jnp.meshgrid(xs, ys)                            # (Hp, Wp)
    base = jnp.stack([xg, yg, jnp.ones_like(xg)], axis=-1)   # (Hp, Wp, 3)
    return jnp.einsum("hwk,bok->bhwo", base, theta)          # (B, Hp, Wp, 2)


def grid_sample(img, grid):
    """Bilinear grid sample, zeros padding, align_corners=False. img: (B,C,H,W)."""
    Bb, C, H, W = img.shape
    x = grid[..., 0]
    y = grid[..., 1]
    ix = ((x + 1.0) * W - 1.0) / 2.0
    iy = ((y + 1.0) * H - 1.0) / 2.0
    ix0 = jnp.floor(ix)
    iy0 = jnp.floor(iy)
    wx1 = ix - ix0
    wx0 = 1.0 - wx1
    wy1 = iy - iy0
    wy0 = 1.0 - wy1

    def corner(iyq, ixq, wq):
        valid = ((ixq >= 0) & (ixq <= W - 1) & (iyq >= 0) & (iyq <= H - 1)).astype(img.dtype)
        ixc = jnp.clip(ixq, 0, W - 1).astype(jnp.int32)
        iyc = jnp.clip(iyq, 0, H - 1).astype(jnp.int32)

        def g(im, iyb, ixb, vb, wb):
            return im[:, iyb, ixb] * (vb * wb)[None]

        return jax.vmap(g)(img, iyc, ixc, valid, wq)

    return (corner(iy0, ix0, wy0 * wx0) + corner(iy0, ix0 + 1, wy0 * wx1)
            + corner(iy0 + 1, ix0, wy1 * wx0) + corner(iy0 + 1, ix0 + 1, wy1 * wx1))


def get_patch_grid_scalexy(input_frames, action, image_size, patch_size, input_patch_size):
    Bb = action.shape[0]
    patch_scale = action[:, 2:4] * (224.0 - 96.0) / input_patch_size + 96.0 / input_patch_size
    patch_coordinate = action[:, :2] * (image_size - patch_size * patch_scale)
    x1 = patch_coordinate[:, 1]
    x2 = patch_coordinate[:, 1] + patch_size * patch_scale[:, 1]
    y1 = patch_coordinate[:, 0]
    y2 = patch_coordinate[:, 0] + patch_size * patch_scale[:, 0]
    theta = jnp.zeros((Bb, 2, 3), jnp.float32)
    theta = theta.at[:, 0, 0].set(patch_size * patch_scale[:, 1] / image_size)
    theta = theta.at[:, 1, 1].set(patch_size * patch_scale[:, 0] / image_size)
    theta = theta.at[:, 0, 2].set(-1.0 + (x1 + x2) / image_size)
    theta = theta.at[:, 1, 2].set(-1.0 + (y1 + y2) / image_size)
    grid = affine_grid(theta, patch_size, patch_size)
    return grid_sample(input_frames, grid)


# ------------------------- policy_sample_indices (glue) ----------------------
def policy_sample_indices(weights, num_segments, num_global_segments, num_local_segments):
    # eval path: rand_sample = False
    _b, _ = weights.shape
    integrated = jnp.cumsum(weights, axis=1)
    integrated = jnp.concatenate([jnp.zeros((_b, 1), jnp.float32), integrated], axis=1)
    integrated = integrated.at[:, -1].set(1.0)
    threshold = jnp.tile(jnp.arange(num_local_segments, dtype=jnp.float32)[None], (_b, 1))
    threshold = (threshold + 0.5) / num_local_segments
    cmp = integrated[:, :, None] >= threshold[:, None, :]
    first_cur = jnp.argmax(cmp, axis=1) - 1
    y1 = jnp.take_along_axis(integrated, first_cur, axis=1)
    y2 = jnp.take_along_axis(integrated, first_cur + 1, axis=1)
    x1 = first_cur.astype(jnp.float32) / num_global_segments
    x2 = (first_cur + 1).astype(jnp.float32) / num_global_segments
    quantile = (x2 * (threshold - y1) - x1 * (threshold - y2)) / (y2 - y1)
    real_indices = quantile * num_segments
    int_indices = jnp.floor(real_indices).astype(jnp.int32)
    for i in range(1, num_local_segments):
        prev = int_indices[:, i - 1]
        cur = int_indices[:, i]
        int_indices = int_indices.at[:, i].set(jnp.where(cur > prev, cur, prev + 1))
    lim = (num_segments - num_local_segments + jnp.arange(num_local_segments, dtype=jnp.int32))[None]
    int_indices = jnp.where(int_indices > lim, lim, int_indices)
    offset = jnp.arange(_b, dtype=jnp.int32)[:, None] * num_segments
    return (int_indices + offset).reshape(-1)


# ----------------------------- MCSampleFeature -------------------------------
def _sample_without_replacement(key, w, k):
    # TODO(synk): torch.multinomial(without replacement) emulated via Gumbel top-k.
    g = -jnp.log(-jnp.log(jax.random.uniform(key, w.shape) + 1e-20) + 1e-20)
    scores = jnp.log(w + 1e-20) + g
    _, idx = jax.lax.top_k(scores, k)
    return idx


def mc_sample_feature(global_feat, weights, global_feature_dim, T1, sample_times, key):
    """All T1 Monte-Carlo passes stacked along the sample axis -> ONE Pallas call,
    with the T1-sum and sample-mean folded into the kernel."""
    Bb = weights.shape[0]
    feat = global_feat.reshape(Bb, -1, global_feature_dim)          # (B, T, D)
    T = feat.shape[1]
    base_w = jnp.repeat(weights[:, None, :], sample_times, axis=1)  # (B, S, T)
    w_list = [base_w]
    for i in range(1, T1):
        key, sub = jax.random.split(key)
        idx = _sample_without_replacement(sub, base_w.reshape(-1, T), i)
        mask = jnp.minimum(jnp.sum(jax.nn.one_hot(idx, T, dtype=jnp.float32), axis=1), 1.0)
        w_list.append(base_w * (1.0 - mask.reshape(Bb, sample_times, T)))
    w_all = jnp.concatenate(w_list, axis=1)                         # (B, T1*S, T)
    return mc_reduce(w_all, feat, inv_count=1.0 / (T1 * sample_times))   # (B, D)


# ----------------------------- sub-modules -----------------------------------
def global_cnn_forward(params, images_glance):
    # TODO(synk): TSN(mobilenetv2) backbone replaced by deterministic conv+linear stand-in.
    Bb = images_glance.shape[0]
    x = images_glance.reshape(Bb * NUM_GLANCE, 3, GLANCE_SIZE, GLANCE_SIZE)
    x = jnp.transpose(x, (0, 2, 3, 1))                              # NHWC
    cols = im2col_2d(x, 8, 8)                                       # (B*T, 7, 7, 192)
    wm = jnp.transpose(params["g_conv_w"], (2, 3, 1, 0)).reshape(8 * 8 * 3, C_FEAT)
    feat = mm_affine(cols.reshape(-1, 8 * 8 * 3), wm, act="relu")   # Pallas, (588, 16)
    feat_cl = feat.reshape(Bb, NUM_GLANCE, 7, 7, C_FEAT)            # channels-last feat maps
    global_feat = feat_cl.mean(axis=(2, 3)).reshape(Bb * NUM_GLANCE, C_FEAT)
    # Tiny FC head (12x16x10): plain dot, not worth a pallas_call launch.
    logit = global_feat @ params["g_fc_w"].T + params["g_fc_b"]
    global_logit = logit.reshape(Bb, NUM_GLANCE, NUM_CLASS)
    global_avg_logit = global_logit.mean(axis=1)
    global_final_logit = global_avg_logit                           # avg consensus
    feat_nchw = jnp.transpose(feat_cl, (0, 1, 4, 2, 3)).reshape(Bb, NUM_GLANCE * C_FEAT, 7, 7)
    return global_final_logit, global_avg_logit, feat_nchw, global_feat, global_logit, feat_cl


def local_cnn_forward(params, patches):
    # TODO(synk): TSN(resnet50) backbone replaced by deterministic conv+linear stand-in.
    Bb = patches.shape[0]
    P = patches.shape[-1]
    x = patches.reshape(Bb * NUM_FOCUS, 3, P, P)
    x = jnp.transpose(x, (0, 2, 3, 1))
    cols = im2col_2d(x, 8, 8)
    wm = jnp.transpose(params["l_conv_w"], (2, 3, 1, 0)).reshape(8 * 8 * 3, C_LOCAL)
    feat = mm_affine(cols.reshape(-1, 8 * 8 * 3), wm, act="relu")   # Pallas, (128, 16)
    hw = (P // 8) * (P // 8)
    feat = feat.reshape(Bb * NUM_FOCUS, hw, C_LOCAL).mean(axis=1)
    logit = feat @ params["l_fc_w"].T + params["l_fc_b"]            # tiny FC: plain dot
    logit = logit.reshape(Bb, NUM_FOCUS, NUM_CLASS).mean(axis=1)
    return logit, logit


def temporal_policy_forward(params, global_feat):
    """Fully fused temporal policy head (one Pallas call; weights stay resident
    across the per-batch grid via constant index_maps)."""
    x = global_feat.reshape(-1, NUM_GLANCE, C_FEAT).astype(jnp.float32)   # (B, T0, C)
    Bb = x.shape[0]

    def tconv_wm(w):                                                # (Cout, Cin, 3, 1)
        cout, cin = w.shape[0], w.shape[1]
        return jnp.transpose(w[..., 0], (2, 1, 0)).reshape(3 * cin, cout)

    s1, t1 = fold_bn(params["tp1_bn"])
    w1 = tconv_wm(params["tp1_w"]) * s1[None, :]                    # BN scale folded into W
    s2, t2 = fold_bn(params["tp2_bn"])
    w2 = tconv_wm(params["tp2_w"]) * s2[None, :]
    w3 = params["tp3_w"][:, :, 0, 0]                                # (1, H_T) row vector

    # +-1 temporal-shift matrices (zero-padded conv): tiny MXU ops in-kernel.
    r = jnp.arange(NUM_GLANCE)
    sd = (r[:, None] == r[None, :] + 1).astype(jnp.float32)         # picks h[t-1]
    su = (r[:, None] == r[None, :] - 1).astype(jnp.float32)         # picks h[t+1]

    out1, out2 = pl.pallas_call(
        functools.partial(_temporal_policy_kernel, inv_temp=1.0),   # temperature = 1.0
        out_shape=(jax.ShapeDtypeStruct((Bb, NUM_GLANCE, 1), jnp.float32),
                   jax.ShapeDtypeStruct((Bb, NUM_GLANCE, 1), jnp.float32)),
        grid=(Bb,),
        in_specs=[
            pl.BlockSpec((1, NUM_GLANCE, C_FEAT), lambda b: (b, 0, 0)),
            pl.BlockSpec((NUM_GLANCE, NUM_GLANCE), lambda b: (0, 0)),
            pl.BlockSpec((NUM_GLANCE, NUM_GLANCE), lambda b: (0, 0)),
            pl.BlockSpec((3 * C_FEAT, H_T), lambda b: (0, 0)),
            pl.BlockSpec((1, H_T), lambda b: (0, 0)),
            pl.BlockSpec((3 * H_T, H_T), lambda b: (0, 0)),
            pl.BlockSpec((1, H_T), lambda b: (0, 0)),
            pl.BlockSpec((1, H_T), lambda b: (0, 0)),
        ],
        out_specs=(
            pl.BlockSpec((1, NUM_GLANCE, 1), lambda b: (b, 0, 0)),
            pl.BlockSpec((1, NUM_GLANCE, 1), lambda b: (b, 0, 0)),
        ),
        compiler_params=_PARALLEL1,
    )(x, sd, su, w1, t1.reshape(1, H_T), w2, t2.reshape(1, H_T), w3.reshape(1, H_T))
    return out1[..., 0], out2[..., 0]                               # (B, T0) each


def spatial_policy_forward(params, feat_cl):
    # feat_cl: (B, T0, 7, 7, C)  ==  PyTorch (B, C, T0, 7, 7) permuted input
    Bb = feat_cl.shape[0]
    w1 = params["sp1_w"][:, :, 0, 0, 0].T                           # (C, Hs)
    s, t = fold_bn(params["sp1_bn"])
    # sp1 -> sp2 -> sp3 stay bf16 end-to-end (halves HBM writeback; next
    # consumer is another bf16 matmul so no extra cast copy).
    h = mm_affine(feat_cl.reshape(-1, C_FEAT), w1, scale=s, shift=t,
                  act="relu", out_dtype=jnp.bfloat16).reshape(Bb, NUM_GLANCE, 7, 7, H_S)
    for wname, bnname in (("sp2_w", "sp2_bn"), ("sp3_w", "sp3_bn")):
        cols = im2col_3d_k3p1(h)                                    # bf16 intermediate
        wm = jnp.transpose(params[wname], (2, 3, 4, 1, 0)).reshape(27 * H_S, H_S)
        s, t = fold_bn(params[bnname])
        h = mm_affine(cols.reshape(-1, 27 * H_S), wm, scale=s, shift=t,
                      act="relu", out_dtype=jnp.bfloat16).reshape(Bb, NUM_GLANCE, 7, 7, H_S)
    wm4 = jnp.transpose(params["sp4_w"], (2, 3, 4, 1, 0)).reshape(NUM_GLANCE * 49 * H_S, 4)
    actions = mm_affine(h.reshape(Bb, -1), wm4, act="sigmoid")      # (B, 4) f32
    return actions


# ----------------------------- AdaFocus forward ------------------------------
def adafocus_forward(params, images_glance, images_input, key):
    (global_final_logit, global_avg_logit, feat_nchw,
     global_feat, global_logit, feat_cl) = global_cnn_forward(params, images_glance)
    Bb = global_logit.shape[0]

    weights, weights_T = temporal_policy_forward(params, global_feat)
    temporal_sample_logits = mc_sample_feature(
        global_logit.reshape(-1, NUM_CLASS), weights,
        global_feature_dim=NUM_CLASS, T1=NUM_GLANCE // 3,
        sample_times=SAMPLE_TIMES, key=key)

    # Spatial policy is a pure function of feat_cl: compute ONCE, reuse for both
    # action_3 (aux head) and action (focus patches) -- identical in eval mode.
    action_sp = spatial_policy_forward(params, feat_cl)
    action_3 = action_sp
    patches_3 = get_patch_grid_scalexy(feat_nchw, action_3, image_size=7,
                                       patch_size=PATCH_SIZE // 32,
                                       input_patch_size=PATCH_SIZE)
    aux_feat = patches_3.reshape(Bb, NUM_GLANCE, C_FEAT,
                                 PATCH_SIZE // 32, PATCH_SIZE // 32).mean(axis=(1, 3, 4))
    spatial_sample_logits_3 = aux_feat @ params["aux_fc_w"].T + params["aux_fc_b"]  # tiny FC

    # -------------------- eval branch (self.training == False) --------------
    focus_indices = policy_sample_indices(weights_T, NUM_INPUT_FOCUS, NUM_GLANCE, NUM_FOCUS)
    frames = images_input.reshape(-1, 3, INPUT_SIZE, INPUT_SIZE)[focus_indices]
    images_focus = frames.reshape(-1, NUM_FOCUS * 3, INPUT_SIZE, INPUT_SIZE)
    action = action_sp
    patches = get_patch_grid_scalexy(images_focus, action, image_size=INPUT_SIZE,
                                     patch_size=PATCH_SIZE, input_patch_size=PATCH_SIZE)
    local_final_logit, local_avg_logit = local_cnn_forward(params, patches)

    return (global_final_logit + local_final_logit, global_avg_logit, local_avg_logit,
            temporal_sample_logits, spatial_sample_logits_3, action, action_3,
            weights, focus_indices)


# ----------------------------- parameter init --------------------------------
def init_params(key):
    ks = jax.random.split(key, 12)

    def w(k, shape, scale=0.1):
        return jax.random.normal(k, shape, jnp.float32) * scale

    def bn(c):
        return (jnp.ones((c,), jnp.float32), jnp.zeros((c,), jnp.float32),
                jnp.zeros((c,), jnp.float32), jnp.ones((c,), jnp.float32))

    p = {}
    p["g_conv_w"] = w(ks[0], (C_FEAT, 3, 8, 8))
    p["g_fc_w"] = w(ks[1], (NUM_CLASS, C_FEAT))
    p["g_fc_b"] = jnp.zeros((NUM_CLASS,), jnp.float32)
    p["l_conv_w"] = w(ks[2], (C_LOCAL, 3, 8, 8))
    p["l_fc_w"] = w(ks[3], (NUM_CLASS, C_LOCAL))
    p["l_fc_b"] = jnp.zeros((NUM_CLASS,), jnp.float32)
    p["aux_fc_w"] = w(ks[4], (NUM_CLASS, C_FEAT))
    p["aux_fc_b"] = jnp.zeros((NUM_CLASS,), jnp.float32)
    p["sp1_w"] = w(ks[5], (H_S, C_FEAT, 1, 1, 1)); p["sp1_bn"] = bn(H_S)
    p["sp2_w"] = w(ks[6], (H_S, H_S, 3, 3, 3));    p["sp2_bn"] = bn(H_S)
    p["sp3_w"] = w(ks[7], (H_S, H_S, 3, 3, 3));    p["sp3_bn"] = bn(H_S)
    p["sp4_w"] = w(ks[8], (4, H_S, NUM_GLANCE, 7, 7))
    p["tp1_w"] = w(ks[9], (H_T, C_FEAT, 3, 1));    p["tp1_bn"] = bn(H_T)
    p["tp2_w"] = w(ks[10], (H_T, H_T, 3, 1));      p["tp2_bn"] = bn(H_T)
    p["tp3_w"] = w(ks[11], (1, H_T, 1, 1))
    return p


# ----------------------------- main -------------------------------------------
if __name__ == "__main__":
    key = jax.random.PRNGKey(0)
    kp, kg, ki, kmc = jax.random.split(key, 4)
    params = init_params(kp)
    images_glance = jax.random.normal(kg, (B, NUM_GLANCE * 3, GLANCE_SIZE, GLANCE_SIZE), jnp.float32)
    images_input = jax.random.normal(ki, (B, NUM_INPUT_FOCUS * 3, INPUT_SIZE, INPUT_SIZE), jnp.float32)

    forward = jax.jit(adafocus_forward)
    outs = forward(params, images_glance, images_input, kmc)
    jax.block_until_ready(outs)
    print("KERNEL_OK")
</pallas_src>

<mosaic_0001>
module attributes {stable_mosaic.version = 11 : i64} {
  func.func @_mm_affine_kernel(%arg0: i32, %arg1: memref<304x192xbf16, #tpu.memory_space<vmem>>, %arg2: memref<192x16xbf16, #tpu.memory_space<vmem>>, %arg3: memref<1x16xf32, #tpu.memory_space<vmem>>, %arg4: memref<1x16xf32, #tpu.memory_space<vmem>>, %arg5: memref<304x16xf32, #tpu.memory_space<vmem>>) attributes {dimension_semantics = [#tpu.dimension_semantics<parallel>], iteration_bounds = array<i64: 2>, scalar_prefetch = 0 : i64, scratch_operands = 0 : i64, tpu.core_type = #tpu.core_type<tc>, window_params = [{transform_indices = @transform_0, window_bounds = array<i64: 304, 192>}, {pipeline_mode = #tpu.pipeline_mode<synchronous>, transform_indices = @transform_1, window_bounds = array<i64: 192, 16>}, {pipeline_mode = #tpu.pipeline_mode<synchronous>, transform_indices = @transform_2, window_bounds = array<i64: 1, 16>}, {pipeline_mode = #tpu.pipeline_mode<synchronous>, transform_indices = @transform_3, window_bounds = array<i64: 1, 16>}, {transform_indices = @transform_4, window_bounds = array<i64: 304, 16>}]} {
    %c0 = arith.constant 0 : index
    %c0_0 = arith.constant 0 : index
    %0 = vector.load %arg1[%c0, %c0_0] : memref<304x192xbf16, #tpu.memory_space<vmem>>, vector<304x192xbf16>
    %c0_1 = arith.constant 0 : index
    %c0_2 = arith.constant 0 : index
    %1 = vector.load %arg2[%c0_1, %c0_2] : memref<192x16xbf16, #tpu.memory_space<vmem>>, vector<192x16xbf16>
    %cst = arith.constant dense<0.000000e+00> : vector<304x16xf32>
    %2 = tpu.matmul %0, %1, %cst {dimension_numbers = #tpu.dot_dimension_numbers<[1], [0], [0], [1], [0, 0, 1, 1], [], []>} : vector<304x192xbf16>, vector<192x16xbf16>, vector<304x16xf32> -> vector<304x16xf32>
    %c0_3 = arith.constant 0 : index
    %c0_4 = arith.constant 0 : index
    %3 = vector.load %arg3[%c0_3, %c0_4] : memref<1x16xf32, #tpu.memory_space<vmem>>, vector<1x16xf32>
    %4 = vector.broadcast %3 : vector<1x16xf32> to vector<304x16xf32>
    %5 = arith.mulf %2, %4 : vector<304x16xf32>
    %c0_5 = arith.constant 0 : index
    %c0_6 = arith.constant 0 : index
    %6 = vector.load %arg4[%c0_5, %c0_6] : memref<1x16xf32, #tpu.memory_space<vmem>>, vector<1x16xf32>
    %7 = vector.broadcast %6 : vector<1x16xf32> to vector<304x16xf32>
    %8 = arith.addf %5, %7 : vector<304x16xf32>
    %cst_7 = arith.constant 0.000000e+00 : f32
    %9 = vector.broadcast %cst_7 : f32 to vector<304x16xf32>
    %10 = arith.maximumf %8, %9 : vector<304x16xf32>
    %c0_8 = arith.constant 0 : index
    %c0_9 = arith.constant 0 : index
    %11 = vector.load %arg5[%c0_8, %c0_9] : memref<304x16xf32, #tpu.memory_space<vmem>>, vector<304x16xf32>
    tpu.vector_store %arg5[%c0_8, %c0_9], %10 {strides = array<i32>} : memref<304x16xf32, #tpu.memory_space<vmem>>, vector<304x16xf32>,
    return
  }
  func.func @transform_0(%arg0: i32) -> (i32, i32) {
    %c0_i32 = arith.constant 0 : i32
    %c0_i32_0 = arith.constant 0 : i32
    return %arg0, %c0_i32 : i32, i32
  }
  func.func @transform_1(%arg0: i32) -> (i32, i32) {
    %c0_i32 = arith.constant 0 : i32
    %c0_i32_0 = arith.constant 0 : i32
    %c0_i32_1 = arith.constant 0 : i32
    return %c0_i32, %c0_i32_0 : i32, i32
  }
  func.func @transform_2(%arg0: i32) -> (i32, i32) {
    %c0_i32 = arith.constant 0 : i32
    %c0_i32_0 = arith.constant 0 : i32
    %c0_i32_1 = arith.constant 0 : i32
    return %c0_i32, %c0_i32_0 : i32, i32
  }
  func.func @transform_3(%arg0: i32) -> (i32, i32) {
    %c0_i32 = arith.constant 0 : i32
    %c0_i32_0 = arith.constant 0 : i32
    %c0_i32_1 = arith.constant 0 : i32
    return %c0_i32, %c0_i32_0 : i32, i32
  }
  func.func @transform_4(%arg0: i32) -> (i32, i32) {
    %c0_i32 = arith.constant 0 : i32
    %c0_i32_0 = arith.constant 0 : i32
    return %arg0, %c0_i32 : i32, i32
  }
}

module attributes {stable_mosaic.version = 11 : i64} {
  func.func @_mm_affine_kernel(%arg0: i32, %arg1: memref<304x16xbf16, #tpu.memory_space<vmem>>, %arg2: memref<16x16xbf16, #tpu.memory_space<vmem>>, %arg3: memref<1x16xf32, #tpu.memory_space<vmem>>, %arg4: memref<1x16xf32, #tpu.memory_space<vmem>>, %arg5: memref<304x16xbf16, #tpu.memory_space<vmem>>) attributes {dimension_semantics = [#tpu.dimension_semantics<parallel>], iteration_bounds = array<i64: 2>, scalar_prefetch = 0 : i64, scratch_operands = 0 : i64, tpu.core_type = #tpu.core_type<tc>, window_params = [{transform_indices = @transform_0, window_bounds = array<i64: 304, 16>}, {pipeline_mode = #tpu.pipeline_mode<synchronous>, transform_indices = @transform_1, window_bounds = array<i64: 16, 16>}, {pipeline_mode = #tpu.pipeline_mode<synchronous>, transform_indices = @transform_2, window_bounds = array<i64: 1, 16>}, {pipeline_mode = #tpu.pipeline_mode<synchronous>, transform_indices = @transform_3, window_bounds = array<i64: 1, 16>}, {transform_indices = @transform_4, window_bounds = array<i64: 304, 16>}]} {
    %c0 = arith.constant 0 : index
    %c0_0 = arith.constant 0 : index
    %0 = vector.load %arg1[%c0, %c0_0] : memref<304x16xbf16, #tpu.memory_space<vmem>>, vector<304x16xbf16>
    %c0_1 = arith.constant 0 : index
    %c0_2 = arith.constant 0 : index
    %1 = vector.load %arg2[%c0_1, %c0_2] : memref<16x16xbf16, #tpu.memory_space<vmem>>, vector<16x16xbf16>
    %cst = arith.constant dense<0.000000e+00> : vector<304x16xf32>
    %2 = tpu.matmul %0, %1, %cst {dimension_numbers = #tpu.dot_dimension_numbers<[1], [0], [0], [1], [0, 0, 1, 1], [], []>} : vector<304x16xbf16>, vector<16x16xbf16>, vector<304x16xf32> -> vector<304x16xf32>
    %c0_3 = arith.constant 0 : index
    %c0_4 = arith.constant 0 : index
    %3 = vector.load %arg3[%c0_3, %c0_4] : memref<1x16xf32, #tpu.memory_space<vmem>>, vector<1x16xf32>
    %4 = vector.broadcast %3 : vector<1x16xf32> to vector<304x16xf32>
    %5 = arith.mulf %2, %4 : vector<304x16xf32>
    %c0_5 = arith.constant 0 : index
    %c0_6 = arith.constant 0 : index
    %6 = vector.load %arg4[%c0_5, %c0_6] : memref<1x16xf32, #tpu.memory_space<vmem>>, vector<1x16xf32>
    %7 = vector.broadcast %6 : vector<1x16xf32> to vector<304x16xf32>
    %8 = arith.addf %5, %7 : vector<304x16xf32>
    %cst_7 = arith.constant 0.000000e+00 : f32
    %9 = vector.broadcast %cst_7 : f32 to vector<304x16xf32>
    %10 = arith.maximumf %8, %9 : vector<304x16xf32>
    %11 = arith.truncf %10 : vector<304x16xf32> to vector<304x16xbf16>
    %c0_8 = arith.constant 0 : index
    %c0_9 = arith.constant 0 : index
    %12 = vector.load %arg5[%c0_8, %c0_9] : memref<304x16xbf16, #tpu.memory_space<vmem>>, vector<304x16xbf16>
    tpu.vector_store %arg5[%c0_8, %c0_9], %11 {strides = array<i32>} : memref<304x16xbf16, #tpu.memory_space<vmem>>, vector<304x16xbf16>,
    return
  }
  func.func @transform_0(%arg0: i32) -> (i32, i32) {
    %c0_i32 = arith.constant 0 : i32
    %c0_i32_0 = arith.constant 0 : i32
    return %arg0, %c0_i32 : i32, i32
  }
  func.func @transform_1(%arg0: i32) -> (i32, i32) {
    %c0_i32 = arith.constant 0 : i32
    %c0_i32_0 = arith.constant 0 : i32
    %c0_i32_1 = arith.constant 0 : i32
    return %c0_i32, %c0_i32_0 : i32, i32
  }
  func.func @transform_2(%arg0: i32) -> (i32, i32) {
    %c0_i32 = arith.constant 0 : i32
    %c0_i32_0 = arith.constant 0 : i32
    %c0_i32_1 = arith.constant 0 : i32
    return %c0_i32, %c0_i32_0 : i32, i32
  }
  func.func @transform_3(%arg0: i32) -> (i32, i32) {
    %c0_i32 = arith.constant 0 : i32
    %c0_i32_0 = arith.constant 0 : i32
    %c0_i32_1 = arith.constant 0 : i32
    return %c0_i32, %c0_i32_0 : i32, i32
  }
  func.func @transform_4(%arg0: i32) -> (i32, i32) {
    %c0_i32 = arith.constant 0 : i32
    %c0_i32_0 = arith.constant 0 : i32
    return %arg0, %c0_i32 : i32, i32
  }
}

module attributes {stable_mosaic.version = 11 : i64} {
  func.func @_mm_affine_kernel(%arg0: i32, %arg1: memref<304x432xbf16, #tpu.memory_space<vmem>>, %arg2: memref<432x16xbf16, #tpu.memory_space<vmem>>, %arg3: memref<1x16xf32, #tpu.memory_space<vmem>>, %arg4: memref<1x16xf32, #tpu.memory_space<vmem>>, %arg5: memref<304x16xbf16, #tpu.memory_space<vmem>>) attributes {dimension_semantics = [#tpu.dimension_semantics<parallel>], iteration_bounds = array<i64: 2>, scalar_prefetch = 0 : i64, scratch_operands = 0 : i64, tpu.core_type = #tpu.core_type<tc>, window_params = [{transform_indices = @transform_0, window_bounds = array<i64: 304, 432>}, {pipeline_mode = #tpu.pipeline_mode<synchronous>, transform_indices = @transform_1, window_bounds = array<i64: 432, 16>}, {pipeline_mode = #tpu.pipeline_mode<synchronous>, transform_indices = @transform_2, window_bounds = array<i64: 1, 16>}, {pipeline_mode = #tpu.pipeline_mode<synchronous>, transform_indices = @transform_3, window_bounds = array<i64: 1, 16>}, {transform_indices = @transform_4, window_bounds = array<i64: 304, 16>}]} {
    %c0 = arith.constant 0 : index
    %c0_0 = arith.constant 0 : index
    %0 = vector.load %arg1[%c0, %c0_0] : memref<304x432xbf16, #tpu.memory_space<vmem>>, vector<304x432xbf16>
    %c0_1 = arith.constant 0 : index
    %c0_2 = arith.constant 0 : index
    %1 = vector.load %arg2[%c0_1, %c0_2] : memref<432x16xbf16, #tpu.memory_space<vmem>>, vector<432x16xbf16>
    %cst = arith.constant dense<0.000000e+00> : vector<304x16xf32>
    %2 = tpu.matmul %0, %1, %cst {dimension_numbers = #tpu.dot_dimension_numbers<[1], [0], [0], [1], [0, 0, 1, 1], [], []>} : vector<304x432xbf16>, vector<432x16xbf16>, vector<304x16xf32> -> vector<304x16xf32>
    %c0_3 = arith.constant 0 : index
    %c0_4 = arith.constant 0 : index
    %3 = vector.load %arg3[%c0_3, %c0_4] : memref<1x16xf32, #tpu.memory_space<vmem>>, vector<1x16xf32>
    %4 = vector.broadcast %3 : vector<1x16xf32> to vector<304x16xf32>
    %5 = arith.mulf %2, %4 : vector<304x16xf32>
    %c0_5 = arith.constant 0 : index
    %c0_6 = arith.constant 0 : index
    %6 = vector.load %arg4[%c0_5, %c0_6] : memref<1x16xf32, #tpu.memory_space<vmem>>, vector<1x16xf32>
    %7 = vector.broadcast %6 : vector<1x16xf32> to vector<304x16xf32>
    %8 = arith.addf %5, %7 : vector<304x16xf32>
    %cst_7 = arith.constant 0.000000e+00 : f32
    %9 = vector.broadcast %cst_7 : f32 to vector<304x16xf32>
    %10 = arith.maximumf %8, %9 : vector<304x16xf32>
    %11 = arith.truncf %10 : vector<304x16xf32> to vector<304x16xbf16>
    %c0_8 = arith.constant 0 : index
    %c0_9 = arith.constant 0 : index
    %12 = vector.load %arg5[%c0_8, %c0_9] : memref<304x16xbf16, #tpu.memory_space<vmem>>, vector<304x16xbf16>
    tpu.vector_store %arg5[%c0_8, %c0_9], %11 {strides = array<i32>} : memref<304x16xbf16, #tpu.memory_space<vmem>>, vector<304x16xbf16>,
    return
  }
  func.func @transform_0(%arg0: i32) -> (i32, i32) {
    %c0_i32 = arith.constant 0 : i32
    %c0_i32_0 = arith.constant 0 : i32
    return %arg0, %c0_i32 : i32, i32
  }
  func.func @transform_1(%arg0: i32) -> (i32, i32) {
    %c0_i32 = arith.constant 0 : i32
    %c0_i32_0 = arith.constant 0 : i32
    %c0_i32_1 = arith.constant 0 : i32
    return %c0_i32, %c0_i32_0 : i32, i32
  }
  func.func @transform_2(%arg0: i32) -> (i32, i32) {
    %c0_i32 = arith.constant 0 : i32
    %c0_i32_0 = arith.constant 0 : i32
    %c0_i32_1 = arith.constant 0 : i32
    return %c0_i32, %c0_i32_0 : i32, i32
  }
  func.func @transform_3(%arg0: i32) -> (i32, i32) {
    %c0_i32 = arith.constant 0 : i32
    %c0_i32_0 = arith.constant 0 : i32
    %c0_i32_1 = arith.constant 0 : i32
    return %c0_i32, %c0_i32_0 : i32, i32
  }
  func.func @transform_4(%arg0: i32) -> (i32, i32) {
    %c0_i32 = arith.constant 0 : i32
    %c0_i32_0 = arith.constant 0 : i32
    return %arg0, %c0_i32 : i32, i32
  }
}

module attributes {stable_mosaic.version = 11 : i64} {
  func.func @_mm_affine_kernel(%arg0: i32, %arg1: memref<2x4704xbf16, #tpu.memory_space<vmem>>, %arg2: memref<4704x4xbf16, #tpu.memory_space<vmem>>, %arg3: memref<1x4xf32, #tpu.memory_space<vmem>>, %arg4: memref<1x4xf32, #tpu.memory_space<vmem>>, %arg5: memref<2x4xf32, #tpu.memory_space<vmem>>) attributes {dimension_semantics = [#tpu.dimension_semantics<parallel>], iteration_bounds = array<i64: 1>, scalar_prefetch = 0 : i64, scratch_operands = 0 : i64, tpu.core_type = #tpu.core_type<tc>, window_params = [{transform_indices = @transform_0, window_bounds = array<i64: 2, 4704>}, {pipeline_mode = #tpu.pipeline_mode<synchronous>, transform_indices = @transform_1, window_bounds = array<i64: 4704, 4>}, {pipeline_mode = #tpu.pipeline_mode<synchronous>, transform_indices = @transform_2, window_bounds = array<i64: 1, 4>}, {pipeline_mode = #tpu.pipeline_mode<synchronous>, transform_indices = @transform_3, window_bounds = array<i64: 1, 4>}, {transform_indices = @transform_4, window_bounds = array<i64: 2, 4>}]} {
    %c0 = arith.constant 0 : index
    %c0_0 = arith.constant 0 : index
    %0 = vector.load %arg1[%c0, %c0_0] : memref<2x4704xbf16, #tpu.memory_space<vmem>>, vector<2x4704xbf16>
    %c0_1 = arith.constant 0 : index
    %c0_2 = arith.constant 0 : index
    %1 = vector.load %arg2[%c0_1, %c0_2] : memref<4704x4xbf16, #tpu.memory_space<vmem>>, vector<4704x4xbf16>
    %cst = arith.constant dense<0.000000e+00> : vector<2x4xf32>
    %2 = tpu.matmul %0, %1, %cst {dimension_numbers = #tpu.dot_dimension_numbers<[1], [0], [0], [1], [0, 0, 1, 1], [], []>} : vector<2x4704xbf16>, vector<4704x4xbf16>, vector<2x4xf32> -> vector<2x4xf32>
    %c0_3 = arith.constant 0 : index
    %c0_4 = arith.constant 0 : index
    %3 = vector.load %arg3[%c0_3, %c0_4] : memref<1x4xf32, #tpu.memory_space<vmem>>, vector<1x4xf32>
    %4 = vector.broadcast %3 : vector<1x4xf32> to vector<2x4xf32>
    %5 = arith.mulf %2, %4 : vector<2x4xf32>
    %c0_5 = arith.constant 0 : index
    %c0_6 = arith.constant 0 : index
    %6 = vector.load %arg4[%c0_5, %c0_6] : memref<1x4xf32, #tpu.memory_space<vmem>>, vector<1x4xf32>
    %7 = vector.broadcast %6 : vector<1x4xf32> to vector<2x4xf32>
    %8 = arith.addf %5, %7 : vector<2x4xf32>
    %cst_7 = arith.constant 0.000000e+00 : f32
    %9 = vector.broadcast %cst_7 : f32 to vector<2x4xf32>
    %10 = arith.subf %9, %8 : vector<2x4xf32>
    %11 = math.exp %10 : vector<2x4xf32>
    %cst_8 = arith.constant 1.000000e+00 : f32
    %12 = vector.broadcast %cst_8 : f32 to vector<2x4xf32>
    %13 = arith.addf %12, %11 : vector<2x4xf32>
    %cst_9 = arith.constant 1.000000e+00 : f32
    %14 = vector.broadcast %cst_9 : f32 to vector<2x4xf32>
    %15 = arith.divf %14, %13 : vector<2x4xf32>
    %c0_10 = arith.constant 0 : index
    %c0_11 = arith.constant 0 : index
    %16 = vector.load %arg5[%c0_10, %c0_11] : memref<2x4xf32, #tpu.memory_space<vmem>>, vector<2x4xf32>
    tpu.vector_store %arg5[%c0_10, %c0_11], %15 {strides = array<i32>} : memref<2x4xf32, #tpu.memory_space<vmem>>, vector<2x4xf32>,
    return
  }
  func.func @transform_0(%arg0: i32) -> (i32, i32) {
    %c0_i32 = arith.constant 0 : i32
    %c0_i32_0 = arith.constant 0 : i32
    return %arg0, %c0_i32 : i32, i32
  }
  func.func @transform_1(%arg0: i32) -> (i32, i32) {
    %c0_i32 = arith.constant 0 : i32
    %c0_i32_0 = arith.constant 0 : i32
    %c0_i32_1 = arith.constant 0 : i32
    return %c0_i32, %c0_i32_0 : i32, i32
  }
  func.func @transform_2(%arg0: i32) -> (i32, i32) {
    %c0_i32 = arith.constant 0 : i32
    %c0_i32_0 = arith.constant 0 : i32
    %c0_i32_1 = arith.constant 0 : i32
    return %c0_i32, %c0_i32_0 : i32, i32
  }
  func.func @transform_3(%arg0: i32) -> (i32, i32) {
    %c0_i32 = arith.constant 0 : i32
    %c0_i32_0 = arith.constant 0 : i32
    %c0_i32_1 = arith.constant 0 : i32
    return %c0_i32, %c0_i32_0 : i32, i32
  }
  func.func @transform_4(%arg0: i32) -> (i32, i32) {
    %c0_i32 = arith.constant 0 : i32
    %c0_i32_0 = arith.constant 0 : i32
    return %arg0, %c0_i32 : i32, i32
  }
}

module attributes {stable_mosaic.version = 11 : i64} {
  func.func @_temporal_policy_kernel(%arg0: i32, %arg1: memref<1x6x16xf32, #tpu.memory_space<vmem>>, %arg2: memref<6x6xf32, #tpu.memory_space<vmem>>, %arg3: memref<6x6xf32, #tpu.memory_space<vmem>>, %arg4: memref<48x16xf32, #tpu.memory_space<vmem>>, %arg5: memref<1x16xf32, #tpu.memory_space<vmem>>, %arg6: memref<48x16xf32, #tpu.memory_space<vmem>>, %arg7: memref<1x16xf32, #tpu.memory_space<vmem>>, %arg8: memref<1x16xf32, #tpu.memory_space<vmem>>, %arg9: memref<1x6x1xf32, #tpu.memory_space<vmem>>, %arg10: memref<1x6x1xf32, #tpu.memory_space<vmem>>) attributes {dimension_semantics = [#tpu.dimension_semantics<parallel>], iteration_bounds = array<i64: 2>, scalar_prefetch = 0 : i64, scratch_operands = 0 : i64, tpu.core_type = #tpu.core_type<tc>, window_params = [{transform_indices = @transform_0, window_bounds = array<i64: 1, 6, 16>}, {pipeline_mode = #tpu.pipeline_mode<synchronous>, transform_indices = @transform_1, window_bounds = array<i64: 6, 6>}, {pipeline_mode = #tpu.pipeline_mode<synchronous>, transform_indices = @transform_2, window_bounds = array<i64: 6, 6>}, {pipeline_mode = #tpu.pipeline_mode<synchronous>, transform_indices = @transform_3, window_bounds = array<i64: 48, 16>}, {pipeline_mode = #tpu.pipeline_mode<synchronous>, transform_indices = @transform_4, window_bounds = array<i64: 1, 16>}, {pipeline_mode = #tpu.pipeline_mode<synchronous>, transform_indices = @transform_5, window_bounds = array<i64: 48, 16>}, {pipeline_mode = #tpu.pipeline_mode<synchronous>, transform_indices = @transform_6, window_bounds = array<i64: 1, 16>}, {pipeline_mode = #tpu.pipeline_mode<synchronous>, transform_indices = @transform_7, window_bounds = array<i64: 1, 16>}, {transform_indices = @transform_8, window_bounds = array<i64: 1, 6, 1>}, {transform_indices = @transform_9, window_bounds = array<i64: 1, 6, 1>}]} {
    %c0 = arith.constant 0 : index
    %c0_0 = arith.constant 0 : index
    %c0_1 = arith.constant 0 : index
    %0 = vector.load %arg1[%c0, %c0_0, %c0_1] : memref<1x6x16xf32, #tpu.memory_space<vmem>>, vector<1x6x16xf32>
    %1 = vector.shape_cast %0 : vector<1x6x16xf32> to vector<6x16xf32>
    %c0_2 = arith.constant 0 : index
    %c0_3 = arith.constant 0 : index
    %2 = vector.load %arg2[%c0_2, %c0_3] : memref<6x6xf32, #tpu.memory_space<vmem>>, vector<6x6xf32>
    %c0_4 = arith.constant 0 : index
    %c0_5 = arith.constant 0 : index
    %3 = vector.load %arg3[%c0_4, %c0_5] : memref<6x6xf32, #tpu.memory_space<vmem>>, vector<6x6xf32>
    %c0_6 = arith.constant 0 : index
    %c0_7 = arith.constant 0 : index
    %4 = vector.load %arg4[%c0_6, %c0_7] : memref<48x16xf32, #tpu.memory_space<vmem>>, vector<48x16xf32>
    %c0_8 = arith.constant 0 : index
    %c0_9 = arith.constant 0 : index
    %5 = vector.load %arg5[%c0_8, %c0_9] : memref<1x16xf32, #tpu.memory_space<vmem>>, vector<1x16xf32>
    %cst = arith.constant dense<0.000000e+00> : vector<6x16xf32>
    %6 = tpu.matmul %2, %1, %cst {dimension_numbers = #tpu.dot_dimension_numbers<[1], [0], [0], [1], [0, 0, 1, 1], [], []>} : vector<6x6xf32>, vector<6x16xf32>, vector<6x16xf32> -> vector<6x16xf32>
    %cst_10 = arith.constant dense<0.000000e+00> : vector<6x16xf32>
    %7 = tpu.matmul %3, %1, %cst_10 {dimension_numbers = #tpu.dot_dimension_numbers<[1], [0], [0], [1], [0, 0, 1, 1], [], []>} : vector<6x6xf32>, vector<6x16xf32>, vector<6x16xf32> -> vector<6x16xf32>
    %8 = vector.extract_strided_slice %4 {offsets = [0, 0], sizes = [16, 16], strides = [1, 1]} : vector<48x16xf32> to vector<16x16xf32>
    %cst_11 = arith.constant dense<0.000000e+00> : vector<6x16xf32>
    %9 = tpu.matmul %6, %8, %cst_11 {dimension_numbers = #tpu.dot_dimension_numbers<[1], [0], [0], [1], [0, 0, 1, 1], [], []>} : vector<6x16xf32>, vector<16x16xf32>, vector<6x16xf32> -> vector<6x16xf32>
    %10 = vector.extract_strided_slice %4 {offsets = [16, 0], sizes = [16, 16], strides = [1, 1]} : vector<48x16xf32> to vector<16x16xf32>
    %cst_12 = arith.constant dense<0.000000e+00> : vector<6x16xf32>
    %11 = tpu.matmul %1, %10, %cst_12 {dimension_numbers = #tpu.dot_dimension_numbers<[1], [0], [0], [1], [0, 0, 1, 1], [], []>} : vector<6x16xf32>, vector<16x16xf32>, vector<6x16xf32> -> vector<6x16xf32>
    %12 = arith.addf %9, %11 : vector<6x16xf32>
    %13 = vector.extract_strided_slice %4 {offsets = [32, 0], sizes = [16, 16], strides = [1, 1]} : vector<48x16xf32> to vector<16x16xf32>
    %cst_13 = arith.constant dense<0.000000e+00> : vector<6x16xf32>
    %14 = tpu.matmul %7, %13, %cst_13 {dimension_numbers = #tpu.dot_dimension_numbers<[1], [0], [0], [1], [0, 0, 1, 1], [], []>} : vector<6x16xf32>, vector<16x16xf32>, vector<6x16xf32> -> vector<6x16xf32>
    %15 = arith.addf %12, %14 : vector<6x16xf32>
    %16 = vector.broadcast %5 : vector<1x16xf32> to vector<6x16xf32>
    %17 = arith.addf %15, %16 : vector<6x16xf32>
    %cst_14 = arith.constant 0.000000e+00 : f32
    %18 = vector.broadcast %cst_14 : f32 to vector<6x16xf32>
    %19 = arith.maximumf %17, %18 : vector<6x16xf32>
    %c0_15 = arith.constant 0 : index
    %c0_16 = arith.constant 0 : index
    %20 = vector.load %arg6[%c0_15, %c0_16] : memref<48x16xf32, #tpu.memory_space<vmem>>, vector<48x16xf32>
    %c0_17 = arith.constant 0 : index
    %c0_18 = arith.constant 0 : index
    %21 = vector.load %arg7[%c0_17, %c0_18] : memref<1x16xf32, #tpu.memory_space<vmem>>, vector<1x16xf32>
    %cst_19 = arith.constant dense<0.000000e+00> : vector<6x16xf32>
    %22 = tpu.matmul %2, %19, %cst_19 {dimension_numbers = #tpu.dot_dimension_numbers<[1], [0], [0], [1], [0, 0, 1, 1], [], []>} : vector<6x6xf32>, vector<6x16xf32>, vector<6x16xf32> -> vector<6x16xf32>
    %cst_20 = arith.constant dense<0.000000e+00> : vector<6x16xf32>
    %23 = tpu.matmul %3, %19, %cst_20 {dimension_numbers = #tpu.dot_dimension_numbers<[1], [0], [0], [1], [0, 0, 1, 1], [], []>} : vector<6x6xf32>, vector<6x16xf32>, vector<6x16xf32> -> vector<6x16xf32>
    %24 = vector.extract_strided_slice %20 {offsets = [0, 0], sizes = [16, 16], strides = [1, 1]} : vector<48x16xf32> to vector<16x16xf32>
    %cst_21 = arith.constant dense<0.000000e+00> : vector<6x16xf32>
    %25 = tpu.matmul %22, %24, %cst_21 {dimension_numbers = #tpu.dot_dimension_numbers<[1], [0], [0], [1], [0, 0, 1, 1], [], []>} : vector<6x16xf32>, vector<16x16xf32>, vector<6x16xf32> -> vector<6x16xf32>
    %26 = vector.extract_strided_slice %20 {offsets = [16, 0], sizes = [16, 16], strides = [1, 1]} : vector<48x16xf32> to vector<16x16xf32>
    %cst_22 = arith.constant dense<0.000000e+00> : vector<6x16xf32>
    %27 = tpu.matmul %19, %26, %cst_22 {dimension_numbers = #tpu.dot_dimension_numbers<[1], [0], [0], [1], [0, 0, 1, 1], [], []>} : vector<6x16xf32>, vector<16x16xf32>, vector<6x16xf32> -> vector<6x16xf32>
    %28 = arith.addf %25, %27 : vector<6x16xf32>
    %29 = vector.extract_strided_slice %20 {offsets = [32, 0], sizes = [16, 16], strides = [1, 1]} : vector<48x16xf32> to vector<16x16xf32>
    %cst_23 = arith.constant dense<0.000000e+00> : vector<6x16xf32>
    %30 = tpu.matmul %23, %29, %cst_23 {dimension_numbers = #tpu.dot_dimension_numbers<[1], [0], [0], [1], [0, 0, 1, 1], [], []>} : vector<6x16xf32>, vector<16x16xf32>, vector<6x16xf32> -> vector<6x16xf32>
    %31 = arith.addf %28, %30 : vector<6x16xf32>
    %32 = vector.broadcast %21 : vector<1x16xf32> to vector<6x16xf32>
    %33 = arith.addf %31, %32 : vector<6x16xf32>
    %cst_24 = arith.constant 0.000000e+00 : f32
    %34 = vector.broadcast %cst_24 : f32 to vector<6x16xf32>
    %35 = arith.maximumf %33, %34 : vector<6x16xf32>
    %c0_25 = arith.constant 0 : index
    %c0_26 = arith.constant 0 : index
    %36 = vector.load %arg8[%c0_25, %c0_26] : memref<1x16xf32, #tpu.memory_space<vmem>>, vector<1x16xf32>
    %37 = vector.broadcast %36 : vector<1x16xf32> to vector<6x16xf32>
    %38 = arith.mulf %35, %37 : vector<6x16xf32>
    %cst_27 = arith.constant dense<0.000000e+00> : vector<6xf32>
    %39 = vector.multi_reduction <add>, %38, %cst_27 [1] : vector<6x16xf32> to vector<6xf32>
    %40 = vector.shape_cast %39 : vector<6xf32> to vector<6x1xf32>
    %cst_28 = arith.constant dense<0xFF800000> : vector<1xf32>
    %41 = vector.multi_reduction <maximumf>, %40, %cst_28 [0] : vector<6x1xf32> to vector<1xf32>
    %42 = vector.shape_cast %41 : vector<1xf32> to vector<1x1xf32>
    %43 = vector.broadcast %42 : vector<1x1xf32> to vector<6x1xf32>
    %44 = arith.subf %40, %43 : vector<6x1xf32>
    %45 = math.exp %44 : vector<6x1xf32>
    %cst_29 = arith.constant dense<0.000000e+00> : vector<1xf32>
    %46 = vector.multi_reduction <add>, %45, %cst_29 [0] : vector<6x1xf32> to vector<1xf32>
    %47 = vector.shape_cast %46 : vector<1xf32> to vector<1x1xf32>
    %48 = vector.broadcast %47 : vector<1x1xf32> to vector<6x1xf32>
    %49 = arith.divf %45, %48 : vector<6x1xf32>
    %c0_30 = arith.constant 0 : index
    %c0_31 = arith.constant 0 : index
    %c0_32 = arith.constant 0 : index
    %50 = vector.load %arg9[%c0_30, %c0_31, %c0_32] : memref<1x6x1xf32, #tpu.memory_space<vmem>>, vector<1x6x1xf32>
    %51 = vector.shape_cast %50 : vector<1x6x1xf32> to vector<6x1xf32>
    %52 = vector.shape_cast %49 : vector<6x1xf32> to vector<1x6x1xf32>
    tpu.vector_store %arg9[%c0_30, %c0_31, %c0_32], %52 {strides = array<i32>} : memref<1x6x1xf32, #tpu.memory_space<vmem>>, vector<1x6x1xf32>,
    %cst_33 = arith.constant 1.000000e+00 : f32
    %53 = vector.broadcast %cst_33 : f32 to vector<6x1xf32>
    %54 = arith.mulf %40, %53 : vector<6x1xf32>
    %cst_34 = arith.constant dense<0xFF800000> : vector<1xf32>
    %55 = vector.multi_reduction <maximumf>, %54, %cst_34 [0] : vector<6x1xf32> to vector<1xf32>
    %56 = vector.shape_cast %55 : vector<1xf32> to vector<1x1xf32>
    %57 = vector.broadcast %56 : vector<1x1xf32> to vector<6x1xf32>
    %58 = arith.subf %54, %57 : vector<6x1xf32>
    %59 = math.exp %58 : vector<6x1xf32>
    %cst_35 = arith.constant dense<0.000000e+00> : vector<1xf32>
    %60 = vector.multi_reduction <add>, %59, %cst_35 [0] : vector<6x1xf32> to vector<1xf32>
    %61 = vector.shape_cast %60 : vector<1xf32> to vector<1x1xf32>
    %62 = vector.broadcast %61 : vector<1x1xf32> to vector<6x1xf32>
    %63 = arith.divf %59, %62 : vector<6x1xf32>
    %c0_36 = arith.constant 0 : index
    %c0_37 = arith.constant 0 : index
    %c0_38 = arith.constant 0 : index
    %64 = vector.load %arg10[%c0_36, %c0_37, %c0_38] : memref<1x6x1xf32, #tpu.memory_space<vmem>>, vector<1x6x1xf32>
    %65 = vector.shape_cast %64 : vector<1x6x1xf32> to vector<6x1xf32>
    %66 = vector.shape_cast %63 : vector<6x1xf32> to vector<1x6x1xf32>
    tpu.vector_store %arg10[%c0_36, %c0_37, %c0_38], %66 {strides = array<i32>} : memref<1x6x1xf32, #tpu.memory_space<vmem>>, vector<1x6x1xf32>,
    return
  }
  func.func @transform_0(%arg0: i32) -> (i32, i32, i32) {
    %c0_i32 = arith.constant 0 : i32
    %c0_i32_0 = arith.constant 0 : i32
    %c0_i32_1 = arith.constant 0 : i32
    return %arg0, %c0_i32, %c0_i32_0 : i32, i32, i32
  }
  func.func @transform_1(%arg0: i32) -> (i32, i32) {
    %c0_i32 = arith.constant 0 : i32
    %c0_i32_0 = arith.constant 0 : i32
    %c0_i32_1 = arith.constant 0 : i32
    return %c0_i32, %c0_i32_0 : i32, i32
  }
  func.func @transform_2(%arg0: i32) -> (i32, i32) {
    %c0_i32 = arith.constant 0 : i32
    %c0_i32_0 = arith.constant 0 : i32
    %c0_i32_1 = arith.constant 0 : i32
    return %c0_i32, %c0_i32_0 : i32, i32
  }
  func.func @transform_3(%arg0: i32) -> (i32, i32) {
    %c0_i32 = arith.constant 0 : i32
    %c0_i32_0 = arith.constant 0 : i32
    %c0_i32_1 = arith.constant 0 : i32
    return %c0_i32, %c0_i32_0 : i32, i32
  }
  func.func @transform_4(%arg0: i32) -> (i32, i32) {
    %c0_i32 = arith.constant 0 : i32
    %c0_i32_0 = arith.constant 0 : i32
    %c0_i32_1 = arith.constant 0 : i32
    return %c0_i32, %c0_i32_0 : i32, i32
  }
  func.func @transform_5(%arg0: i32) -> (i32, i32) {
    %c0_i32 = arith.constant 0 : i32
    %c0_i32_0 = arith.constant 0 : i32
    %c0_i32_1 = arith.constant 0 : i32
    return %c0_i32, %c0_i32_0 : i32, i32
  }
  func.func @transform_6(%arg0: i32) -> (i32, i32) {
    %c0_i32 = arith.constant 0 : i32
    %c0_i32_0 = arith.constant 0 : i32
    %c0_i32_1 = arith.constant 0 : i32
    return %c0_i32, %c0_i32_0 : i32, i32
  }
  func.func @transform_7(%arg0: i32) -> (i32, i32) {
    %c0_i32 = arith.constant 0 : i32
    %c0_i32_0 = arith.constant 0 : i32
    %c0_i32_1 = arith.constant 0 : i32
    return %c0_i32, %c0_i32_0 : i32, i32
  }
  func.func @transform_8(%arg0: i32) -> (i32, i32, i32) {
    %c0_i32 = arith.constant 0 : i32
    %c0_i32_0 = arith.constant 0 : i32
    %c0_i32_1 = arith.constant 0 : i32
    return %arg0, %c0_i32, %c0_i32_0 : i32, i32, i32
  }
  func.func @transform_9(%arg0: i32) -> (i32, i32, i32) {
    %c0_i32 = arith.constant 0 : i32
    %c0_i32_0 = arith.constant 0 : i32
    %c0_i32_1 = arith.constant 0 : i32
    return %arg0, %c0_i32, %c0_i32_0 : i32, i32, i32
  }
}

module attributes {stable_mosaic.version = 11 : i64} {
  func.func @_mm_affine_kernel(%arg0: i32, %arg1: memref<128x192xbf16, #tpu.memory_space<vmem>>, %arg2: memref<192x16xbf16, #tpu.memory_space<vmem>>, %arg3: memref<1x16xf32, #tpu.memory_space<vmem>>, %arg4: memref<1x16xf32, #tpu.memory_space<vmem>>, %arg5: memref<128x16xf32, #tpu.memory_space<vmem>>) attributes {dimension_semantics = [#tpu.dimension_semantics<parallel>], iteration_bounds = array<i64: 1>, scalar_prefetch = 0 : i64, scratch_operands = 0 : i64, tpu.core_type = #tpu.core_type<tc>, window_params = [{transform_indices = @transform_0, window_bounds = array<i64: 128, 192>}, {pipeline_mode = #tpu.pipeline_mode<synchronous>, transform_indices = @transform_1, window_bounds = array<i64: 192, 16>}, {pipeline_mode = #tpu.pipeline_mode<synchronous>, transform_indices = @transform_2, window_bounds = array<i64: 1, 16>}, {pipeline_mode = #tpu.pipeline_mode<synchronous>, transform_indices = @transform_3, window_bounds = array<i64: 1, 16>}, {transform_indices = @transform_4, window_bounds = array<i64: 128, 16>}]} {
    %c0 = arith.constant 0 : index
    %c0_0 = arith.constant 0 : index
    %0 = vector.load %arg1[%c0, %c0_0] : memref<128x192xbf16, #tpu.memory_space<vmem>>, vector<128x192xbf16>
    %c0_1 = arith.constant 0 : index
    %c0_2 = arith.constant 0 : index
    %1 = vector.load %arg2[%c0_1, %c0_2] : memref<192x16xbf16, #tpu.memory_space<vmem>>, vector<192x16xbf16>
    %cst = arith.constant dense<0.000000e+00> : vector<128x16xf32>
    %2 = tpu.matmul %0, %1, %cst {dimension_numbers = #tpu.dot_dimension_numbers<[1], [0], [0], [1], [0, 0, 1, 1], [], []>} : vector<128x192xbf16>, vector<192x16xbf16>, vector<128x16xf32> -> vector<128x16xf32>
    %c0_3 = arith.constant 0 : index
    %c0_4 = arith.constant 0 : index
    %3 = vector.load %arg3[%c0_3, %c0_4] : memref<1x16xf32, #tpu.memory_space<vmem>>, vector<1x16xf32>
    %4 = vector.broadcast %3 : vector<1x16xf32> to vector<128x16xf32>
    %5 = arith.mulf %2, %4 : vector<128x16xf32>
    %c0_5 = arith.constant 0 : index
    %c0_6 = arith.constant 0 : index
    %6 = vector.load %arg4[%c0_5, %c0_6] : memref<1x16xf32, #tpu.memory_space<vmem>>, vector<1x16xf32>
    %7 = vector.broadcast %6 : vector<1x16xf32> to vector<128x16xf32>
    %8 = arith.addf %5, %7 : vector<128x16xf32>
    %cst_7 = arith.constant 0.000000e+00 : f32
    %9 = vector.broadcast %cst_7 : f32 to vector<128x16xf32>
    %10 = arith.maximumf %8, %9 : vector<128x16xf32>
    %c0_8 = arith.constant 0 : index
    %c0_9 = arith.constant 0 : index
    %11 = vector.load %arg5[%c0_8, %c0_9] : memref<128x16xf32, #tpu.memory_space<vmem>>, vector<128x16xf32>
    tpu.vector_store %arg5[%c0_8, %c0_9], %10 {strides = array<i32>} : memref<128x16xf32, #tpu.memory_space<vmem>>, vector<128x16xf32>,
    return
  }
  func.func @transform_0(%arg0: i32) -> (i32, i32) {
    %c0_i32 = arith.constant 0 : i32
    %c0_i32_0 = arith.constant 0 : i32
    return %arg0, %c0_i32 : i32, i32
  }
  func.func @transform_1(%arg0: i32) -> (i32, i32) {
    %c0_i32 = arith.constant 0 : i32
    %c0_i32_0 = arith.constant 0 : i32
    %c0_i32_1 = arith.constant 0 : i32
    return %c0_i32, %c0_i32_0 : i32, i32
  }
  func.func @transform_2(%arg0: i32) -> (i32, i32) {
    %c0_i32 = arith.constant 0 : i32
    %c0_i32_0 = arith.constant 0 : i32
    %c0_i32_1 = arith.constant 0 : i32
    return %c0_i32, %c0_i32_0 : i32, i32
  }
  func.func @transform_3(%arg0: i32) -> (i32, i32) {
    %c0_i32 = arith.constant 0 : i32
    %c0_i32_0 = arith.constant 0 : i32
    %c0_i32_1 = arith.constant 0 : i32
    return %c0_i32, %c0_i32_0 : i32, i32
  }
  func.func @transform_4(%arg0: i32) -> (i32, i32) {
    %c0_i32 = arith.constant 0 : i32
    %c0_i32_0 = arith.constant 0 : i32
    return %arg0, %c0_i32 : i32, i32
  }
}

module attributes {stable_mosaic.version = 11 : i64} {
  func.func @_mc_kernel(%arg0: i32, %arg1: memref<1x256x6xf32, #tpu.memory_space<vmem>>, %arg2: memref<1x6x10xf32, #tpu.memory_space<vmem>>, %arg3: memref<1x1x10xf32, #tpu.memory_space<vmem>>) attributes {dimension_semantics = [#tpu.dimension_semantics<parallel>], iteration_bounds = array<i64: 2>, scalar_prefetch = 0 : i64, scratch_operands = 0 : i64, tpu.core_type = #tpu.core_type<tc>, window_params = [{transform_indices = @transform_0, window_bounds = array<i64: 1, 256, 6>}, {transform_indices = @transform_1, window_bounds = array<i64: 1, 6, 10>}, {transform_indices = @transform_2, window_bounds = array<i64: 1, 1, 10>}]} {
    %c0 = arith.constant 0 : index
    %c0_0 = arith.constant 0 : index
    %c0_1 = arith.constant 0 : index
    %0 = vector.load %arg1[%c0, %c0_0, %c0_1] : memref<1x256x6xf32, #tpu.memory_space<vmem>>, vector<1x256x6xf32>
    %1 = vector.shape_cast %0 : vector<1x256x6xf32> to vector<256x6xf32>
    %c0_2 = arith.constant 0 : index
    %c0_3 = arith.constant 0 : index
    %c0_4 = arith.constant 0 : index
    %2 = vector.load %arg2[%c0_2, %c0_3, %c0_4] : memref<1x6x10xf32, #tpu.memory_space<vmem>>, vector<1x6x10xf32>
    %3 = vector.shape_cast %2 : vector<1x6x10xf32> to vector<6x10xf32>
    %cst = arith.constant dense<0.000000e+00> : vector<256x10xf32>
    %4 = tpu.matmul %1, %3, %cst {dimension_numbers = #tpu.dot_dimension_numbers<[1], [0], [0], [1], [0, 0, 1, 1], [], []>} : vector<256x6xf32>, vector<6x10xf32>, vector<256x10xf32> -> vector<256x10xf32>
    %cst_5 = arith.constant dense<0.000000e+00> : vector<256xf32>
    %5 = vector.multi_reduction <add>, %1, %cst_5 [1] : vector<256x6xf32> to vector<256xf32>
    %6 = vector.shape_cast %5 : vector<256xf32> to vector<256x1xf32>
    %cst_6 = arith.constant 9.99999996E-13 : f32
    %7 = vector.broadcast %cst_6 : f32 to vector<256x1xf32>
    %8 = arith.maximumf %6, %7 : vector<256x1xf32>
    %9 = vector.broadcast %8 : vector<256x1xf32> to vector<256x10xf32>
    %10 = arith.divf %4, %9 : vector<256x10xf32>
    %cst_7 = arith.constant dense<0.000000e+00> : vector<10xf32>
    %11 = vector.multi_reduction <add>, %10, %cst_7 [0] : vector<256x10xf32> to vector<10xf32>
    %12 = vector.shape_cast %11 : vector<10xf32> to vector<1x10xf32>
    %cst_8 = arith.constant 3.906250e-03 : f32
    %13 = vector.broadcast %cst_8 : f32 to vector<1x10xf32>
    %14 = arith.mulf %12, %13 : vector<1x10xf32>
    %c0_9 = arith.constant 0 : index
    %c0_10 = arith.constant 0 : index
    %c0_11 = arith.constant 0 : index
    %15 = vector.load %arg3[%c0_9, %c0_10, %c0_11] : memref<1x1x10xf32, #tpu.memory_space<vmem>>, vector<1x1x10xf32>
    %16 = vector.shape_cast %15 : vector<1x1x10xf32> to vector<1x10xf32>
    %17 = vector.shape_cast %14 : vector<1x10xf32> to vector<1x1x10xf32>
    tpu.vector_store %arg3[%c0_9, %c0_10, %c0_11], %17 {strides = array<i32>} : memref<1x1x10xf32, #tpu.memory_space<vmem>>, vector<1x1x10xf32>,
    return
  }
  func.func @transform_0(%arg0: i32) -> (i32, i32, i32) {
    %c0_i32 = arith.constant 0 : i32
    %c0_i32_0 = arith.constant 0 : i32
    %c0_i32_1 = arith.constant 0 : i32
    return %arg0, %c0_i32, %c0_i32_0 : i32, i32, i32
  }
  func.func @transform_1(%arg0: i32) -> (i32, i32, i32) {
    %c0_i32 = arith.constant 0 : i32
    %c0_i32_0 = arith.constant 0 : i32
    %c0_i32_1 = arith.constant 0 : i32
    return %arg0, %c0_i32, %c0_i32_0 : i32, i32, i32
  }
  func.func @transform_2(%arg0: i32) -> (i32, i32, i32) {
    %c0_i32 = arith.constant 0 : i32
    %c0_i32_0 = arith.constant 0 : i32
    %c0_i32_1 = arith.constant 0 : i32
    return %arg0, %c0_i32, %c0_i32_0 : i32, i32, i32
  }
}

</mosaic_0001>

<llo_original>
// kernel: adafocus_forward.8
$region0: #{adafocus_forward.8}
  #allocation0 [shape = 'u32[]', space=smem, size = 0x4, offset = 0x4, fixed_abs, tag = 'smem constant byte address 0x4 - core index']
  #allocation1 [shape = 'u32[144,128]{1,0:T(1,128)}', space=vmem, size = 0x12000, scoped, tag = 'internal scratch']
  %s0 = inlined_call_operand.vmem [shape: bf16[588,192], index: 0, kind: input, shape index: {}]
  %s1 = inlined_call_operand.vmem [shape: bf16[192,16], index: 1, kind: input, shape index: {}]
  %s2 = inlined_call_operand.vmem [shape: f32[1,16], index: 2, kind: input, shape index: {}]
  %s3 = inlined_call_operand.vmem [shape: f32[1,16], index: 3, kind: input, shape index: {}]
  %s4 = inlined_call_operand.vmem [shape: f32[588,16], index: 4, kind: output, shape index: {}]
  %s5 = sld [smem:[#allocation0]]
  $region97: #{adafocus_forward.8} parent=0
    _
  %s7 = ssub.s32 1, %s5
  %s8 = scalar_select 0, %s7, %s5
  $region1: #{adafocus_forward.8} parent=0
    #allocation2 [shape = 'u8[311296]{0}', space=vmem, size = 0x4c000, scoped, tag = 'output window, operand 0']
    loop: start=0, step=1, limit=4
    $region2: #{adafocus_forward.8} parent=1 // loop_pre_header
      _
    $region3: #{adafocus_forward.8} parent=1 // loop_header
      %s10 = sphi 0, %s14
      %p11 = scmp.ge.s32.totalorder %s10, 4
      %s20 = sphi 0, %s22
      %s23 = sphi 0, %s20
      %s24 = sphi 0, %s23
      %s40 = sphi 0, %s24
      %s44 = sphi 0, %s44
      %s46 = sphi 0, %s44
      %s47 = sphi 0, %s46
      %s61 = sphi 0, %s47
      %s65 = sphi 0, %s65
      %s67 = sphi 0, %s65
      %s68 = sphi 0, %s67
      %s82 = sphi 0, %s68
      %s86 = sphi 0, %s86
      %s88 = sphi 0, %s86
      %s89 = sphi 0, %s88
      %s103 = sphi 0, %s89
      %s109 = sphi 0, %s111
      %s112 = sphi 0, %s109
      %s113 = sphi 0, %s112
      %s129 = sphi 0, %s113
    $region4: #{adafocus_forward.8} parent=1 // loop_header_branch
      %13 = sbr.rel (%p11) target = $region8
    $region5: #{adafocus_forward.8} parent=1 // loop_body
      %s15 = ssub.s32 %s10, 1
      %s16 = ssub.s32 %s10, 2
      %s17 = sadd.s32 %s10, 1
      %s18 = ssub.s32 %s10, %s17
      %p19 = scmp.eq.s32.totalorder %s18, 0
      %s21 = sadd.s32 %s20, 1
      %s22 = scalar_select %p19, %s20, %s21
      %p25 = pneg %p19
      %p26 = scmp.eq.s32.totalorder %s10, 1
      %p27 = por %p25, %p26
      %p28 = scmp.ne.s32.totalorder %s20, %s23
      %p29 = scmp.eq.s32.totalorder %s10, 0
      %p30 = por %p28, %p29
      %p31 = scmp.ne.s32.totalorder %s20, %s23
      %p32 = scmp.eq.s32.totalorder %s15, 1
      %p33 = por %p31, %p32
      %p34 = scmp.ne.s32.totalorder %s23, %s24
      %p35 = scmp.eq.s32.totalorder %s15, 0
      %p36 = por %p34, %p35
      %p37 = scmp.ne.s32.totalorder %s23, %s24
      %p38 = scmp.eq.s32.totalorder %s16, 1
      %p39 = por %p37, %p38
      %p41 = scmp.ne.s32.totalorder %s24, %s40
      %p42 = scmp.eq.s32.totalorder %s16, 0
      %p43 = por %p41, %p42
      %s45 = sadd.s32 %s44, 1
      %p48 = scmp.eq.s32.totalorder %s10, 1
      %p49 = scmp.ne.s32.totalorder %s44, %s46
      %p50 = scmp.eq.s32.totalorder %s10, 0
      %p51 = por %p49, %p50
      %p52 = scmp.ne.s32.totalorder %s44, %s46
      %p53 = scmp.eq.s32.totalorder %s15, 1
      %p54 = por %p52, %p53
      %p55 = scmp.ne.s32.totalorder %s46, %s47
      %p56 = scmp.eq.s32.totalorder %s15, 0
      %p57 = por %p55, %p56
      %p58 = scmp.ne.s32.totalorder %s46, %s47
      %p59 = scmp.eq.s32.totalorder %s16, 1
      %p60 = por %p58, %p59
      %p62 = scmp.ne.s32.totalorder %s47, %s61
      %p63 = scmp.eq.s32.totalorder %s16, 0
      %p64 = por %p62, %p63
      %s66 = sadd.s32 %s65, 1
      %p69 = scmp.eq.s32.totalorder %s10, 1
      %p70 = scmp.ne.s32.totalorder %s65, %s67
      %p71 = scmp.eq.s32.totalorder %s10, 0
      %p72 = por %p70, %p71
      %p73 = scmp.ne.s32.totalorder %s65, %s67
      %p74 = scmp.eq.s32.totalorder %s15, 1
      %p75 = por %p73, %p74
      %p76 = scmp.ne.s32.totalorder %s67, %s68
      %p77 = scmp.eq.s32.totalorder %s15, 0
      %p78 = por %p76, %p77
      %p79 = scmp.ne.s32.totalorder %s67, %s68
      %p80 = scmp.eq.s32.totalorder %s16, 1
      %p81 = por %p79, %p80
      %p83 = scmp.ne.s32.totalorder %s68, %s82
      %p84 = scmp.eq.s32.totalorder %s16, 0
      %p85 = por %p83, %p84
      %s87 = sadd.s32 %s86, 1
      %p90 = scmp.eq.s32.totalorder %s10, 1
      %p91 = scmp.ne.s32.totalorder %s86, %s88
      %p92 = scmp.eq.s32.totalorder %s10, 0
      %p93 = por %p91, %p92
      %p94 = scmp.ne.s32.totalorder %s86, %s88
      %p95 = scmp.eq.s32.totalorder %s15, 1
      %p96 = por %p94, %p95
      %p97 = scmp.ne.s32.totalorder %s88, %s89
      %p98 = scmp.eq.s32.totalorder %s15, 0
      %p99 = por %p97, %p98
      %p100 = scmp.ne.s32.totalorder %s88, %s89
      %p101 = scmp.eq.s32.totalorder %s16, 1
      %p102 = por %p100, %p101
      %p104 = scmp.ne.s32.totalorder %s89, %s103
      %p105 = scmp.eq.s32.totalorder %s16, 0
      %p106 = por %p104, %p105
      %s107 = ssub.s32 %s10, %s17
      %p108 = scmp.eq.s32.totalorder %s107, 0
      %s110 = sadd.s32 %s109, 1
      %s111 = scalar_select %p108, %s109, %s110
      %p114 = pneg %p108
      %p115 = scmp.eq.s32.totalorder %s10, 1
      %p116 = por %p114, %p115
      %p117 = scmp.ne.s32.totalorder %s109, %s112
      %p118 = scmp.eq.s32.totalorder %s10, 0
      %p119 = por %p117, %p118
      %p120 = scmp.ne.s32.totalorder %s109, %s112
      %p121 = scmp.eq.s32.totalorder %s15, 1
      %p122 = por %p120, %p121
      %p123 = scmp.ne.s32.totalorder %s112, %s113
      %p124 = scmp.eq.s32.totalorder %s15, 0
      %p125 = por %p123, %p124
      %p126 = scmp.ne.s32.totalorder %s112, %s113
      %p127 = scmp.eq.s32.totalorder %s16, 1
      %p128 = por %p126, %p127
      %p130 = scmp.ne.s32.totalorder %s113, %s129
      %p131 = scmp.eq.s32.totalorder %s16, 0
      %p132 = por %p130, %p131
      %p133 = scmp.le.s32.totalorder 1, %s10
      %p134 = scmp.lt.s32.totalorder %s10, 3
      %p135 = pnand %p133, %p134
      %p136 = pneg %p135
      // Predicated region
      $region9: #{adafocus_forward.8} parent=5 // pred_check
        _
      $region10: #{adafocus_forward.8} parent=5 // pred_check_branch
        %138 = sbr.rel (%p135) target = $region12
      $region11: #{adafocus_forward.8} parent=5 // pred_region
        %s139 = ssub.s32 %s10, 1
        // Predicated region
        $region13: #{adafocus_forward.8} parent=11 // pred_check
          %p140 = pneg %p57
        $region14: #{adafocus_forward.8} parent=11 // pred_check_branch
          %142 = sbr.rel (%p140) target = $region16
        $region15: #{adafocus_forward.8} parent=11 // pred_region
          _
        $region16: #{adafocus_forward.8} parent=11 // pred_fallthru
          _
        // Predicated region
        $region17: #{adafocus_forward.8} parent=11 // pred_check
          %p143 = pneg %p78
        $region18: #{adafocus_forward.8} parent=11 // pred_check_branch
          %145 = sbr.rel (%p143) target = $region20
        $region19: #{adafocus_forward.8} parent=11 // pred_region
          _
        $region20: #{adafocus_forward.8} parent=11 // pred_fallthru
          _
        // Predicated region
        $region21: #{adafocus_forward.8} parent=11 // pred_check
          %p146 = pneg %p99
        $region22: #{adafocus_forward.8} parent=11 // pred_check_branch
          %148 = sbr.rel (%p146) target = $region24
        $region23: #{adafocus_forward.8} parent=11 // pred_region
          _
        $region24: #{adafocus_forward.8} parent=11 // pred_fallthru
          _
      $region12: #{adafocus_forward.8} parent=5 // pred_fallthru
        _
      %p149 = scmp.lt.s32.totalorder %s10, 2
      // Predicated region
      $region25: #{adafocus_forward.8} parent=5 // pred_check
        %p150 = pneg %p149
      $region26: #{adafocus_forward.8} parent=5 // pred_check_branch
        %152 = sbr.rel (%p150) target = $region28
      $region27: #{adafocus_forward.8} parent=5 // pred_region
        // Predicated region
        $region29: #{adafocus_forward.8} parent=27 // pred_check
          %p153 = pneg %p30
        $region30: #{adafocus_forward.8} parent=27 // pred_check_branch
          %155 = sbr.rel (%p153) target = $region32
        $region31: #{adafocus_forward.8} parent=27 // pred_region
          %s156 = smul.u32 38, %s10
          %s157 = ssub.s32 74, %s156
          %p158 = scmp.lt.s32.totalorder %s157, 38
          %s159 = scalar_select %p158, %s157, 38
          %s160 = smul.u32 64, %s159
          %s161 = smul.u32 %s160, 2
          %p162 = scmp.lt.s32.totalorder %s156, 73
          %s163 = scalar_select %p162, %s156, 73
          %s164 = smul.addr %s163, 2
          %s165 = smul.addr %s164, 4
          %s166 = scalar_lea.vmem %s0, %s165
          %s167 = smul.u32 38, %s10
          %s168 = ssub.s32 74, %s167
          %p169 = scmp.lt.s32.totalorder %s168, 38
          %s170 = scalar_select %p169, %s168, 38
          %s171 = smul.u32 64, %s170
          %s172 = smul.u32 %s171, 2
        $region32: #{adafocus_forward.8} parent=27 // pred_fallthru
          _
      $region28: #{adafocus_forward.8} parent=5 // pred_fallthru
        _
      %p173 = scmp.le.s32.totalorder 1, %s10
      %p174 = scmp.lt.s32.totalorder %s10, 3
      %p175 = pnand %p173, %p174
      %p176 = pneg %p175
      // Predicated region
      $region33: #{adafocus_forward.8} parent=5 // pred_check
        _
      $region34: #{adafocus_forward.8} parent=5 // pred_check_branch
        %178 = sbr.rel (%p175) target = $region36
      $region35: #{adafocus_forward.8} parent=5 // pred_region
        %s179 = ssub.s32 %s10, 1
        %s180 = smul.u32 38, %s15
        %s181 = ssub.s32 74, %s180
        %p182 = scmp.lt.s32.totalorder %s181, 38
        %s183 = scalar_select %p182, %s181, 38
        %s184 = smul.u32 64, %s183
        %s185 = smul.u32 %s184, 2
        %p186 = scmp.lt.s32.totalorder %s180, 73
        %s187 = scalar_select %p186, %s180, 73
        %s188 = smul.addr %s187, 2
        %s189 = smul.addr %s188, 4
        %s190 = scalar_lea.vmem %s0, %s189
        %p191 = pneg %p36
        %p192 = pneg %p33
        %p193 = pneg %p57
        %p194 = pneg %p54
        %p195 = pneg %p78
        %p196 = pneg %p75
        %p197 = pneg %p99
        %p198 = pneg %p96
        %p199 = pneg %p125
        %p200 = pneg %p122
        %s201 = sand.u32 %s112, 1
        %s202 = sand.u32 %s112, 1
        %s203 = smul.addr %s202, 304
        %s204 = scalar_lea.vmem [#allocation2], %s203
        %s205 = smul.u32 38, %s15
        %s206 = ssub.s32 74, %s205
        %p207 = scmp.lt.s32.totalorder %s206, 38
        %s208 = scalar_select %p207, %s206, 38
        %s209 = smul.u32 64, %s208
        %s210 = smul.u32 %s209, 2
        %p211 = scmp.lt.s32.totalorder %s205, 73
        %s212 = scalar_select %p211, %s205, 73
        %s213 = smul.addr %s212, 2
        %s214 = smul.addr %s213, 4
        %s215 = scalar_lea.vmem %s0, %s214
        %s216 = smul.u32 38, %s15
        %s217 = ssub.s32 74, %s216
        %p218 = scmp.lt.s32.totalorder %s217, 38
        %s219 = scalar_select %p218, %s217, 38
        %s220 = smul.u32 64, %s219
        %s221 = smul.u32 %s220, 2
        %s222 = smul.u32 38, %s15
        %s223 = ssub.s32 74, %s222
        %p224 = scmp.lt.s32.totalorder %s223, 38
        %s225 = scalar_select %p224, %s223, 38
        %s226 = smul.u32 128, %s225
        %v228 = vld [vmem:[%s215] sm:$0xff]
        %v229 = vld [vmem:[%s215 + $0x8] sm:$0xff]
        %v230 = vld [vmem:[%s215 + $0x10] sm:$0xff]
        %v231 = vld [vmem:[%s215 + $0x18] sm:$0xff]
        %v232 = vld [vmem:[%s215 + $0x20] sm:$0xff]
        %v233 = vld [vmem:[%s215 + $0x28] sm:$0xff]
        %v234 = vld [vmem:[%s215 + $0x30] sm:$0xff]
        %v235 = vld [vmem:[%s215 + $0x38] sm:$0xff]
        %v236 = vld [vmem:[%s215 + $0x40] sm:$0xff]
        %v237 = vld [vmem:[%s215 + $0x48] sm:$0xff]
        %v238 = vld [vmem:[%s215 + $0x50] sm:$0xff]
        %v239 = vld [vmem:[%s215 + $0x58] sm:$0xff]
        %v240 = vld [vmem:[%s215 + $0x60] sm:$0xff]
        %v241 = vld [vmem:[%s215 + $0x68] sm:$0xff]
        %v242 = vld [vmem:[%s215 + $0x70] sm:$0xff]
        %v243 = vld [vmem:[%s215 + $0x78] sm:$0xff]
        %v244 = vld [vmem:[%s215 + $0x80] sm:$0xff]
        %v245 = vld [vmem:[%s215 + $0x88] sm:$0xff]
        %v246 = vld [vmem:[%s215 + $0x90] sm:$0xff]
        %v247 = vld [vmem:[%s215 + $0x98] sm:$0xff]
        %v248 = vld [vmem:[%s215 + $0xa0] sm:$0xff]
        %v249 = vld [vmem:[%s215 + $0xa8] sm:$0xff]
        %v250 = vld [vmem:[%s215 + $0xb0] sm:$0xff]
        %v251 = vld [vmem:[%s215 + $0xb8] sm:$0xff]
        %v252 = vld [vmem:[%s215 + $0xc0] sm:$0xff]
        %v253 = vld [vmem:[%s215 + $0xc8] sm:$0xff]
        %v254 = vld [vmem:[%s215 + $0xd0] sm:$0xff]
        %v255 = vld [vmem:[%s215 + $0xd8] sm:$0xff]
        %v256 = vld [vmem:[%s215 + $0xe0] sm:$0xff]
        %v257 = vld [vmem:[%s215 + $0xe8] sm:$0xff]
        %v258 = vld [vmem:[%s215 + $0xf0] sm:$0xff]
        %v259 = vld [vmem:[%s215 + $0xf8] sm:$0xff]
        %v260 = vld [vmem:[%s215 + $0x100] sm:$0xff]
        %v261 = vld [vmem:[%s215 + $0x108] sm:$0xff]
        %v262 = vld [vmem:[%s215 + $0x110] sm:$0xff]
        %v263 = vld [vmem:[%s215 + $0x118] sm:$0xff]
        %v264 = vld [vmem:[%s215 + $0x120] sm:$0xff]
        %v265 = vld [vmem:[%s215 + $0x128] sm:$0xff]
        %v266 = vld [vmem:[%s1] sm:$0xf]
        %v267 = vld [vmem:[%s1 + $0x4] sm:$0xf]
        %v268 = vld [vmem:[%s1 + $0x8] sm:$0xf]
        %v269 = vld [vmem:[%s1 + $0xc] sm:$0xf]
        %v270 = vld [vmem:[%s1 + $0x10] sm:$0xf]
        %v271 = vld [vmem:[%s1 + $0x14] sm:$0xf]
        %v272 = vld [vmem:[%s1 + $0x18] sm:$0xf]
        %v273 = vld [vmem:[%s1 + $0x1c] sm:$0xf]
        %v274 = vld [vmem:[%s1 + $0x20] sm:$0xf]
        %v275 = vld [vmem:[%s1 + $0x24] sm:$0xf]
        %v276 = vld [vmem:[%s1 + $0x28] sm:$0xf]
        %v277 = vld [vmem:[%s1 + $0x2c] sm:$0xf]
        %v278 = vld [vmem:[%s1 + $0x30] sm:$0xf]
        %v279 = vld [vmem:[%s1 + $0x34] sm:$0xf]
        %v280 = vld [vmem:[%s1 + $0x38] sm:$0xf]
        %v281 = vld [vmem:[%s1 + $0x3c] sm:$0xf]
        %v282 = vld [vmem:[%s1 + $0x40] sm:$0xf]
        %v283 = vld [vmem:[%s1 + $0x44] sm:$0xf]
        %v284 = vld [vmem:[%s1 + $0x48] sm:$0xf]
        %v285 = vld [vmem:[%s1 + $0x4c] sm:$0xf]
        %v286 = vld [vmem:[%s1 + $0x50] sm:$0xf]
        %v287 = vld [vmem:[%s1 + $0x54] sm:$0xf]
        %v288 = vld [vmem:[%s1 + $0x58] sm:$0xf]
        %v289 = vld [vmem:[%s1 + $0x5c] sm:$0xf]
        %v328 = vunpack.c.l.b16 %v228
        %v329 = vunpack.c.h.b16 %v228
        %v330 = vunpack.c.l.b16 %v229
        %v331 = vunpack.c.h.b16 %v229
        %v332 = vunpack.c.l.b16 %v230
        %v333 = vunpack.c.h.b16 %v230
        %v334 = vunpack.c.l.b16 %v231
        %v335 = vunpack.c.h.b16 %v231
        %v336 = vunpack.c.l.b16 %v232
        %v337 = vunpack.c.h.b16 %v232
        %v338 = vunpack.c.l.b16 %v233
        %v339 = vunpack.c.h.b16 %v233
        %v340 = vunpack.c.l.b16 %v234
        %v341 = vunpack.c.h.b16 %v234
        %v342 = vunpack.c.l.b16 %v235
        %v343 = vunpack.c.h.b16 %v235
        %v344 = vunpack.c.l.b16 %v236
        %v345 = vunpack.c.h.b16 %v236
        %v346 = vunpack.c.l.b16 %v237
        %v347 = vunpack.c.h.b16 %v237
        %v348 = vunpack.c.l.b16 %v238
        %v349 = vunpack.c.h.b16 %v238
        %v350 = vunpack.c.l.b16 %v239
        %v351 = vunpack.c.h.b16 %v239
        %v352 = vunpack.c.l.b16 %v240
        %v353 = vunpack.c.h.b16 %v240
        %v354 = vunpack.c.l.b16 %v241
        %v355 = vunpack.c.h.b16 %v241
        %v356 = vunpack.c.l.b16 %v242
        %v357 = vunpack.c.h.b16 %v242
        %v358 = vunpack.c.l.b16 %v243
        %v359 = vunpack.c.h.b16 %v243
        %v360 = vunpack.c.l.b16 %v244
        %v361 = vunpack.c.h.b16 %v244
        %v362 = vunpack.c.l.b16 %v245
        %v363 = vunpack.c.h.b16 %v245
        %v364 = vunpack.c.l.b16 %v246
        %v365 = vunpack.c.h.b16 %v246
        %v366 = vunpack.c.l.b16 %v247
        %v367 = vunpack.c.h.b16 %v247
        %v368 = vunpack.c.l.b16 %v248
        %v369 = vunpack.c.h.b16 %v248
        %v370 = vunpack.c.l.b16 %v249
        %v371 = vunpack.c.h.b16 %v249
        %v372 = vunpack.c.l.b16 %v250
        %v373 = vunpack.c.h.b16 %v250
        %v374 = vunpack.c.l.b16 %v251
        %v375 = vunpack.c.h.b16 %v251
        %v376 = vunpack.c.l.b16 %v252
        %v377 = vunpack.c.h.b16 %v252
        %v378 = vunpack.c.l.b16 %v253
        %v379 = vunpack.c.h.b16 %v253
        %v380 = vunpack.c.l.b16 %v254
        %v381 = vunpack.c.h.b16 %v254
        %v382 = vunpack.c.l.b16 %v255
        %v383 = vunpack.c.h.b16 %v255
        %v384 = vunpack.c.l.b16 %v256
        %v385 = vunpack.c.h.b16 %v256
        %v386 = vunpack.c.l.b16 %v257
        %v387 = vunpack.c.h.b16 %v257
        %v388 = vunpack.c.l.b16 %v258
        %v389 = vunpack.c.h.b16 %v258
        %v390 = vunpack.c.l.b16 %v259
        %v391 = vunpack.c.h.b16 %v259
        %v392 = vunpack.c.l.b16 %v260
        %v393 = vunpack.c.h.b16 %v260
        %v394 = vunpack.c.l.b16 %v261
        %v395 = vunpack.c.h.b16 %v261
        %v396 = vunpack.c.l.b16 %v262
        %v397 = vunpack.c.h.b16 %v262
        %v398 = vunpack.c.l.b16 %v263
        %v399 = vunpack.c.h.b16 %v263
        %v400 = vunpack.c.l.b16 %v264
        %v401 = vunpack.c.h.b16 %v264
        %v402 = vunpack.c.l.b16 %v265
        %v403 = vunpack.c.h.b16 %v265
        %v404 = vpack.c.b16 %v330, %v328
        %v405 = vpack.c.b16 %v331, %v329
        %v406 = vpack.c.b16 %v334, %v332
        %v407 = vpack.c.b16 %v335, %v333
        %v408 = vpack.c.b16 %v338, %v336
        %v409 = vpack.c.b16 %v339, %v337
        %v410 = vpack.c.b16 %v342, %v340
        %v411 = vpack.c.b16 %v343, %v341
        %v412 = vpack.c.b16 %v346, %v344
        %v413 = vpack.c.b16 %v347, %v345
        %v414 = vpack.c.b16 %v350, %v348
        %v415 = vpack.c.b16 %v351, %v349
        %v416 = vpack.c.b16 %v354, %v352
        %v417 = vpack.c.b16 %v355, %v353
        %v418 = vpack.c.b16 %v358, %v356
        %v419 = vpack.c.b16 %v359, %v357
        %v420 = vpack.c.b16 %v362, %v360
        %v421 = vpack.c.b16 %v363, %v361
        %v422 = vpack.c.b16 %v366, %v364
        %v423 = vpack.c.b16 %v367, %v365
        %v424 = vpack.c.b16 %v370, %v368
        %v425 = vpack.c.b16 %v371, %v369
        %v426 = vpack.c.b16 %v374, %v372
        %v427 = vpack.c.b16 %v375, %v373
        %v428 = vpack.c.b16 %v378, %v376
        %v429 = vpack.c.b16 %v379, %v377
        %v430 = vpack.c.b16 %v382, %v380
        %v431 = vpack.c.b16 %v383, %v381
        %v432 = vpack.c.b16 %v386, %v384
        %v433 = vpack.c.b16 %v387, %v385
        %v434 = vpack.c.b16 %v390, %v388
        %v435 = vpack.c.b16 %v391, %v389
        %v436 = vpack.c.b16 %v394, %v392
        %v437 = vpack.c.b16 %v395, %v393
        %v438 = vpack.c.b16 %v398, %v396
        %v439 = vpack.c.b16 %v399, %v397
        %v440 = vpack.c.b16 %v402, %v400
        %v441 = vpack.c.b16 %v403, %v401
        %v485 = vunpack.c.l.b16 %v266
        %v486 = vunpack.c.l.b16 %v267
        %v487 = vunpack.c.l.b16 %v268
        %v488 = vunpack.c.l.b16 %v269
        %v489 = vunpack.c.l.b16 %v270
        %v490 = vunpack.c.l.b16 %v271
        %v491 = vunpack.c.l.b16 %v272
        %v492 = vunpack.c.l.b16 %v273
        %v493 = vunpack.c.l.b16 %v274
        %v494 = vunpack.c.l.b16 %v275
        %v495 = vunpack.c.l.b16 %v276
        %v496 = vunpack.c.l.b16 %v277
        %v497 = vunpack.c.l.b16 %v278
        %v498 = vunpack.c.l.b16 %v279
        %v499 = vunpack.c.l.b16 %v280
        %v500 = vunpack.c.l.b16 %v281
        %v501 = vunpack.c.l.b16 %v282
        %v502 = vunpack.c.l.b16 %v283
        %v503 = vunpack.c.l.b16 %v284
        %v504 = vunpack.c.l.b16 %v285
        %v505 = vunpack.c.l.b16 %v286
        %v506 = vunpack.c.l.b16 %v287
        %v507 = vunpack.c.l.b16 %v288
        %v508 = vunpack.c.l.b16 %v289
        %v509 = vpack.c.b16 %v486, %v485
        %v510 = vpack.c.b16 %v488, %v487
        %v511 = vpack.c.b16 %v490, %v489
        %v512 = vpack.c.b16 %v492, %v491
        %v513 = vpack.c.b16 %v494, %v493
        %v514 = vpack.c.b16 %v496, %v495
        %v515 = vpack.c.b16 %v498, %v497
        %v516 = vpack.c.b16 %v500, %v499
        %v517 = vpack.c.b16 %v502, %v501
        %v518 = vpack.c.b16 %v504, %v503
        %v519 = vpack.c.b16 %v506, %v505
        %v520 = vpack.c.b16 %v508, %v507
        %vm533 = vcmask 523264
        %v535 = vsel %vm533, %v405, 0
        %v538 = vsel %vm533, %v407, 0
        %v541 = vsel %vm533, %v409, 0
        %v544 = vsel %vm533, %v411, 0
        %v547 = vsel %vm533, %v413, 0
        %v550 = vsel %vm533, %v415, 0
        %v553 = vsel %vm533, %v417, 0
        %v556 = vsel %vm533, %v419, 0
        %v559 = vsel %vm533, %v421, 0
        %v562 = vsel %vm533, %v423, 0
        %v565 = vsel %vm533, %v425, 0
        %v568 = vsel %vm533, %v427, 0
        %v571 = vsel %vm533, %v429, 0
        %v574 = vsel %vm533, %v431, 0
        %v577 = vsel %vm533, %v433, 0
        %v580 = vsel %vm533, %v435, 0
        %v583 = vsel %vm533, %v437, 0
        %v586 = vsel %vm533, %v439, 0
        %v589 = vsel %vm533, %v441, 0
        %591 = vmatprep.subr.bf16.mxu0 0
        %592 = vmatpush1.bf16.msra.mxu0 %v516
        %593 = vmatprep.subr.bf16.mxu0 0
        %594 = vmatpush1.bf16.msra.mxu0 %v515
        %595 = vmatprep.subr.bf16.mxu0 0
        %596 = vmatpush1.bf16.msra.mxu0 %v514
        %597 = vmatprep.subr.bf16.mxu0 0
        %598 = vmatpush1.bf16.msra.mxu0 %v513
        %599 = vmatprep.subr.bf16.mxu0 0
        %600 = vmatpush1.bf16.msra.mxu0 %v512
        %601 = vmatprep.subr.bf16.mxu0 0
        %602 = vmatpush1.bf16.msra.mxu0 %v511
        %603 = vmatprep.subr.bf16.mxu0 0
        %604 = vmatpush1.bf16.msra.mxu0 %v510
        %605 = vmatprep.subr.bf16.mxu0 0
        %606 = vmatpush1.bf16.msra.mxu0 %v509
        %607 = vmatprep.subr.bf16.mxu0 0
        %608 = vmatpush2.bf16.msra.mxu0 0
        %609 = vmatprep.subr.bf16.mxu0 0
        %610 = vmatpush2.bf16.msra.mxu0 0
        %611 = vmatprep.subr.bf16.mxu0 0
        %612 = vmatpush2.bf16.msra.mxu0 0
        %613 = vmatprep.subr.bf16.mxu0 0
        %614 = vmatpush2.bf16.msra.mxu0 0
        %615 = vmatprep.subr.bf16.mxu0 0
        %616 = vmatpush2.bf16.msra.mxu0 %v520
        %617 = vmatprep.subr.bf16.mxu0 0
        %618 = vmatpush2.bf16.msra.mxu0 %v519
        %619 = vmatprep.subr.bf16.mxu0 0
        %620 = vmatpush2.bf16.msra.mxu0 %v518
        %621 = vmatprep.subr.bf16.mxu0 0
        %622 = vmatpush2.bf16.msra.mxu0 %v517
        %623 = vmatprep.mubr.bf16.mxu0 %v535
        %624 = vmatmul.mubr.bf16.gmra.mxu0 %v404
        %v625 = vpop.f32.mrf.mxu0
        %v626 = vadd.f32 0.0, %v625
        %v627 = vpop.f32.mrf.mxu0
        %v628 = vpop.f32.mrf.mxu0
        %v629 = vadd.f32 0.0, %v628
        %v630 = vpop.f32.mrf.mxu0
        %631 = vmatprep.mubr.bf16.mxu0 %v538
        %632 = vmatmul.mubr.bf16.gmra.mxu0 %v406
        %v633 = vpop.f32.mrf.mxu0
        %v634 = vadd.f32 0.0, %v633
        %v635 = vpop.f32.mrf.mxu0
        %v636 = vpop.f32.mrf.mxu0
        %v637 = vadd.f32 0.0, %v636
        %v638 = vpop.f32.mrf.mxu0
        %639 = vmatprep.mubr.bf16.mxu0 %v541
        %640 = vmatmul.mubr.bf16.gmra.mxu0 %v408
        %v641 = vpop.f32.mrf.mxu0
        %v642 = vadd.f32 0.0, %v641
        %v643 = vpop.f32.mrf.mxu0
        %v644 = vpop.f32.mrf.mxu0
        %v645 = vadd.f32 0.0, %v644
        %v646 = vpop.f32.mrf.mxu0
        %647 = vmatprep.mubr.bf16.mxu0 %v544
        %648 = vmatmul.mubr.bf16.gmra.mxu0 %v410
        %v649 = vpop.f32.mrf.mxu0
        %v650 = vadd.f32 0.0, %v649
        %v651 = vpop.f32.mrf.mxu0
        %v652 = vpop.f32.mrf.mxu0
        %v653 = vadd.f32 0.0, %v652
        %v654 = vpop.f32.mrf.mxu0
        %655 = vmatprep.mubr.bf16.mxu0 %v547
        %656 = vmatmul.mubr.bf16.gmra.mxu0 %v412
        %v657 = vpop.f32.mrf.mxu0
        %v658 = vadd.f32 0.0, %v657
        %v659 = vpop.f32.mrf.mxu0
        %v660 = vpop.f32.mrf.mxu0
        %v661 = vadd.f32 0.0, %v660
        %v662 = vpop.f32.mrf.mxu0
        %663 = vmatprep.mubr.bf16.mxu0 %v550
        %664 = vmatmul.mubr.bf16.gmra.mxu0 %v414
        %v665 = vpop.f32.mrf.mxu0
        %v666 = vadd.f32 0.0, %v665
        %v667 = vpop.f32.mrf.mxu0
        %v668 = vpop.f32.mrf.mxu0
        %v669 = vadd.f32 0.0, %v668
        %v670 = vpop.f32.mrf.mxu0
        %671 = vmatprep.mubr.bf16.mxu0 %v553
        %672 = vmatmul.mubr.bf16.gmra.mxu0 %v416
        %v673 = vpop.f32.mrf.mxu0
        %v674 = vadd.f32 0.0, %v673
        %v675 = vpop.f32.mrf.mxu0
        %v676 = vpop.f32.mrf.mxu0
        %v677 = vadd.f32 0.0, %v676
        %v678 = vpop.f32.mrf.mxu0
        %679 = vmatprep.mubr.bf16.mxu0 %v556
        %680 = vmatmul.mubr.bf16.gmra.mxu0 %v418
        %v681 = vpop.f32.mrf.mxu0
        %v682 = vadd.f32 0.0, %v681
        %v683 = vpop.f32.mrf.mxu0
        %v684 = vpop.f32.mrf.mxu0
        %v685 = vadd.f32 0.0, %v684
        %v686 = vpop.f32.mrf.mxu0
        %687 = vmatprep.mubr.bf16.mxu0 %v559
        %688 = vmatmul.mubr.bf16.gmra.mxu0 %v420
        %v689 = vpop.f32.mrf.mxu0
        %v690 = vadd.f32 0.0, %v689
        %v691 = vpop.f32.mrf.mxu0
        %v692 = vpop.f32.mrf.mxu0
        %v693 = vadd.f32 0.0, %v692
        %v694 = vpop.f32.mrf.mxu0
        %695 = vmatprep.mubr.bf16.mxu0 %v562
        %696 = vmatmul.mubr.bf16.gmra.mxu0 %v422
        %v697 = vpop.f32.mrf.mxu0
        %v698 = vadd.f32 0.0, %v697
        %v699 = vpop.f32.mrf.mxu0
        %v700 = vpop.f32.mrf.mxu0
        %v701 = vadd.f32 0.0, %v700
        %v702 = vpop.f32.mrf.mxu0
        %703 = vmatprep.mubr.bf16.mxu0 %v565
        %704 = vmatmul.mubr.bf16.gmra.mxu0 %v424
        %v705 = vpop.f32.mrf.mxu0
        %v706 = vadd.f32 0.0, %v705
        %v707 = vpop.f32.mrf.mxu0
        %v708 = vpop.f32.mrf.mxu0
        %v709 = vadd.f32 0.0, %v708
        %v710 = vpop.f32.mrf.mxu0
        %711 = vmatprep.mubr.bf16.mxu0 %v568
        %712 = vmatmul.mubr.bf16.gmra.mxu0 %v426
        %v713 = vpop.f32.mrf.mxu0
        %v714 = vadd.f32 0.0, %v713
        %v715 = vpop.f32.mrf.mxu0
        %v716 = vpop.f32.mrf.mxu0
        %v717 = vadd.f32 0.0, %v716
        %v718 = vpop.f32.mrf.mxu0
        %719 = vmatprep.mubr.bf16.mxu0 %v571
        %720 = vmatmul.mubr.bf16.gmra.mxu0 %v428
        %v721 = vpop.f32.mrf.mxu0
        %v722 = vadd.f32 0.0, %v721
        %v723 = vpop.f32.mrf.mxu0
        %v724 = vpop.f32.mrf.mxu0
        %v725 = vadd.f32 0.0, %v724
        %v726 = vpop.f32.mrf.mxu0
        %727 = vmatprep.mubr.bf16.mxu0 %v574
        %728 = vmatmul.mubr.bf16.gmra.mxu0 %v430
        %v729 = vpop.f32.mrf.mxu0
        %v730 = vadd.f32 0.0, %v729
        %v731 = vpop.f32.mrf.mxu0
        %v732 = vpop.f32.mrf.mxu0
        %v733 = vadd.f32 0.0, %v732
        %v734 = vpop.f32.mrf.mxu0
        %735 = vmatprep.mubr.bf16.mxu0 %v577
        %736 = vmatmul.mubr.bf16.gmra.mxu0 %v432
        %v737 = vpop.f32.mrf.mxu0
        %v738 = vadd.f32 0.0, %v737
        %v739 = vpop.f32.mrf.mxu0
        %v740 = vpop.f32.mrf.mxu0
        %v741 = vadd.f32 0.0, %v740
        %v742 = vpop.f32.mrf.mxu0
        %743 = vmatprep.mubr.bf16.mxu0 %v580
        %744 = vmatmul.mubr.bf16.gmra.mxu0 %v434
        %v745 = vpop.f32.mrf.mxu0
        %v746 = vadd.f32 0.0, %v745
        %v747 = vpop.f32.mrf.mxu0
        %v748 = vpop.f32.mrf.mxu0
        %v749 = vadd.f32 0.0, %v748
        %v750 = vpop.f32.mrf.mxu0
        %751 = vmatprep.mubr.bf16.mxu0 %v583
        %752 = vmatmul.mubr.bf16.gmra.mxu0 %v436
        %v753 = vpop.f32.mrf.mxu0
        %v754 = vadd.f32 0.0, %v753
        %v755 = vpop.f32.mrf.mxu0
        %v756 = vpop.f32.mrf.mxu0
        %v757 = vadd.f32 0.0, %v756
        %v758 = vpop.f32.mrf.mxu0
        %759 = vmatprep.mubr.bf16.mxu0 %v586
        %760 = vmatmul.mubr.bf16.gmra.mxu0 %v438
        %v761 = vpop.f32.mrf.mxu0
        %v762 = vadd.f32 0.0, %v761
        %v763 = vpop.f32.mrf.mxu0
        %v764 = vpop.f32.mrf.mxu0
        %v765 = vadd.f32 0.0, %v764
        %v766 = vpop.f32.mrf.mxu0
        %767 = vmatprep.mubr.bf16.mxu0 %v589
        %768 = vmatmul.mubr.bf16.gmra.mxu0 %v440
        %v769 = vpop.f32.mrf.mxu0
        %v770 = vadd.f32 0.0, %v769
        %v771 = vpop.f32.mrf.mxu0
        %v772 = vpop.f32.mrf.mxu0
        %v773 = vadd.f32 0.0, %v772
        %v774 = vpop.f32.mrf.mxu0
        %775 = vdwg.mxu0
        %v776 = vld [vmem:[%s2] sm:$0x1]
        %v778 = vlaneseq
        %v779 = vshrl.u32 %v778, 7
        %v780 = vsub.s32 0, %v779
        %v781 = vrot.slane %v776, %v780
        %v783 = vmul.f32 %v626, %v781
        %v784 = vmul.f32 %v629, %v781
        %v785 = vmul.f32 %v634, %v781
        %v786 = vmul.f32 %v637, %v781
        %v787 = vmul.f32 %v642, %v781
        %v788 = vmul.f32 %v645, %v781
        %v789 = vmul.f32 %v650, %v781
        %v790 = vmul.f32 %v653, %v781
        %v791 = vmul.f32 %v658, %v781
        %v792 = vmul.f32 %v661, %v781
        %v793 = vmul.f32 %v666, %v781
        %v794 = vmul.f32 %v669, %v781
        %v795 = vmul.f32 %v674, %v781
        %v796 = vmul.f32 %v677, %v781
        %v797 = vmul.f32 %v682, %v781
        %v798 = vmul.f32 %v685, %v781
        %v799 = vmul.f32 %v690, %v781
        %v800 = vmul.f32 %v693, %v781
        %v801 = vmul.f32 %v698, %v781
        %v802 = vmul.f32 %v701, %v781
        %v803 = vmul.f32 %v706, %v781
        %v804 = vmul.f32 %v709, %v781
        %v805 = vmul.f32 %v714, %v781
        %v806 = vmul.f32 %v717, %v781
        %v807 = vmul.f32 %v722, %v781
        %v808 = vmul.f32 %v725, %v781
        %v809 = vmul.f32 %v730, %v781
        %v810 = vmul.f32 %v733, %v781
        %v811 = vmul.f32 %v738, %v781
        %v812 = vmul.f32 %v741, %v781
        %v813 = vmul.f32 %v746, %v781
        %v814 = vmul.f32 %v749, %v781
        %v815 = vmul.f32 %v754, %v781
        %v816 = vmul.f32 %v757, %v781
        %v817 = vmul.f32 %v762, %v781
        %v818 = vmul.f32 %v765, %v781
        %v819 = vmul.f32 %v770, %v781
        %v820 = vmul.f32 %v773, %v781
        %v821 = vld [vmem:[%s3] sm:$0x1]
        %v823 = vlaneseq
        %v824 = vshrl.u32 %v823, 7
        %v825 = vsub.s32 0, %v824
        %v826 = vrot.slane %v821, %v825
        %v828 = vadd.f32 %v783, %v826
        %v829 = vadd.f32 %v784, %v826
        %v830 = vadd.f32 %v785, %v826
        %v831 = vadd.f32 %v786, %v826
        %v832 = vadd.f32 %v787, %v826
        %v833 = vadd.f32 %v788, %v826
        %v834 = vadd.f32 %v789, %v826
        %v835 = vadd.f32 %v790, %v826
        %v836 = vadd.f32 %v791, %v826
        %v837 = vadd.f32 %v792, %v826
        %v838 = vadd.f32 %v793, %v826
        %v839 = vadd.f32 %v794, %v826
        %v840 = vadd.f32 %v795, %v826
        %v841 = vadd.f32 %v796, %v826
        %v842 = vadd.f32 %v797, %v826
        %v843 = vadd.f32 %v798, %v826
        %v844 = vadd.f32 %v799, %v826
        %v845 = vadd.f32 %v800, %v826
        %v846 = vadd.f32 %v801, %v826
        %v847 = vadd.f32 %v802, %v826
        %v848 = vadd.f32 %v803, %v826
        %v849 = vadd.f32 %v804, %v826
        %v850 = vadd.f32 %v805, %v826
        %v851 = vadd.f32 %v806, %v826
        %v852 = vadd.f32 %v807, %v826
        %v853 = vadd.f32 %v808, %v826
        %v854 = vadd.f32 %v809, %v826
        %v855 = vadd.f32 %v810, %v826
        %v856 = vadd.f32 %v811, %v826
        %v857 = vadd.f32 %v812, %v826
        %v858 = vadd.f32 %v813, %v826
        %v859 = vadd.f32 %v814, %v826
        %v860 = vadd.f32 %v815, %v826
        %v861 = vadd.f32 %v816, %v826
        %v862 = vadd.f32 %v817, %v826
        %v863 = vadd.f32 %v818, %v826
        %v864 = vadd.f32 %v819, %v826
        %v865 = vadd.f32 %v820, %v826
        %v866 = vmax.f32 %v828, 0.0
        %v867 = vmax.f32 %v829, 0.0
        %v868 = vmax.f32 %v830, 0.0
        %v869 = vmax.f32 %v831, 0.0
        %v870 = vmax.f32 %v832, 0.0
        %v871 = vmax.f32 %v833, 0.0
        %v872 = vmax.f32 %v834, 0.0
        %v873 = vmax.f32 %v835, 0.0
        %v874 = vmax.f32 %v836, 0.0
        %v875 = vmax.f32 %v837, 0.0
        %v876 = vmax.f32 %v838, 0.0
        %v877 = vmax.f32 %v839, 0.0
        %v878 = vmax.f32 %v840, 0.0
        %v879 = vmax.f32 %v841, 0.0
        %v880 = vmax.f32 %v842, 0.0
        %v881 = vmax.f32 %v843, 0.0
        %v882 = vmax.f32 %v844, 0.0
        %v883 = vmax.f32 %v845, 0.0
        %v884 = vmax.f32 %v846, 0.0
        %v885 = vmax.f32 %v847, 0.0
        %v886 = vmax.f32 %v848, 0.0
        %v887 = vmax.f32 %v849, 0.0
        %v888 = vmax.f32 %v850, 0.0
        %v889 = vmax.f32 %v851, 0.0
        %v890 = vmax.f32 %v852, 0.0
        %v891 = vmax.f32 %v853, 0.0
        %v892 = vmax.f32 %v854, 0.0
        %v893 = vmax.f32 %v855, 0.0
        %v894 = vmax.f32 %v856, 0.0
        %v895 = vmax.f32 %v857, 0.0
        %v896 = vmax.f32 %v858, 0.0
        %v897 = vmax.f32 %v859, 0.0
        %v898 = vmax.f32 %v860, 0.0
        %v899 = vmax.f32 %v861, 0.0
        %v900 = vmax.f32 %v862, 0.0
        %v901 = vmax.f32 %v863, 0.0
        %v902 = vmax.f32 %v864, 0.0
        %v903 = vmax.f32 %v865, 0.0
        %vm904 = vcmask 130048
        %905 = vst.msk [vmem:[%s204] sm:$0xff] %vm904, %v866
        %906 = vst.msk [vmem:[%s204 + $0x8] sm:$0xff] %vm904, %v867
        %907 = vst.msk [vmem:[%s204 + $0x10] sm:$0xff] %vm904, %v868
        %908 = vst.msk [vmem:[%s204 + $0x18] sm:$0xff] %vm904, %v869
        %909 = vst.msk [vmem:[%s204 + $0x20] sm:$0xff] %vm904, %v870
        %910 = vst.msk [vmem:[%s204 + $0x28] sm:$0xff] %vm904, %v871
        %911 = vst.msk [vmem:[%s204 + $0x30] sm:$0xff] %vm904, %v872
        %912 = vst.msk [vmem:[%s204 + $0x38] sm:$0xff] %vm904, %v873
        %913 = vst.msk [vmem:[%s204 + $0x40] sm:$0xff] %vm904, %v874
        %914 = vst.msk [vmem:[%s204 + $0x48] sm:$0xff] %vm904, %v875
        %915 = vst.msk [vmem:[%s204 + $0x50] sm:$0xff] %vm904, %v876
        %916 = vst.msk [vmem:[%s204 + $0x58] sm:$0xff] %vm904, %v877
        %917 = vst.msk [vmem:[%s204 + $0x60] sm:$0xff] %vm904, %v878
        %918 = vst.msk [vmem:[%s204 + $0x68] sm:$0xff] %vm904, %v879
        %919 = vst.msk [vmem:[%s204 + $0x70] sm:$0xff] %vm904, %v880
        %920 = vst.msk [vmem:[%s204 + $0x78] sm:$0xff] %vm904, %v881
        %921 = vst.msk [vmem:[%s204 + $0x80] sm:$0xff] %vm904, %v882
        %922 = vst.msk [vmem:[%s204 + $0x88] sm:$0xff] %vm904, %v883
        %923 = vst.msk [vmem:[%s204 + $0x90] sm:$0xff] %vm904, %v884
        %924 = vst.msk [vmem:[%s204 + $0x98] sm:$0xff] %vm904, %v885
        %925 = vst.msk [vmem:[%s204 + $0xa0] sm:$0xff] %vm904, %v886
        %926 = vst.msk [vmem:[%s204 + $0xa8] sm:$0xff] %vm904, %v887
        %927 = vst.msk [vmem:[%s204 + $0xb0] sm:$0xff] %vm904, %v888
        %928 = vst.msk [vmem:[%s204 + $0xb8] sm:$0xff] %vm904, %v889
        %929 = vst.msk [vmem:[%s204 + $0xc0] sm:$0xff] %vm904, %v890
        %930 = vst.msk [vmem:[%s204 + $0xc8] sm:$0xff] %vm904, %v891
        %931 = vst.msk [vmem:[%s204 + $0xd0] sm:$0xff] %vm904, %v892
        %932 = vst.msk [vmem:[%s204 + $0xd8] sm:$0xff] %vm904, %v893
        %933 = vst.msk [vmem:[%s204 + $0xe0] sm:$0xff] %vm904, %v894
        %934 = vst.msk [vmem:[%s204 + $0xe8] sm:$0xff] %vm904, %v895
        %935 = vst.msk [vmem:[%s204 + $0xf0] sm:$0xff] %vm904, %v896
        %936 = vst.msk [vmem:[%s204 + $0xf8] sm:$0xff] %vm904, %v897
        %937 = vst.msk [vmem:[%s204 + $0x100] sm:$0xff] %vm904, %v898
        %938 = vst.msk [vmem:[%s204 + $0x108] sm:$0xff] %vm904, %v899
        %939 = vst.msk [vmem:[%s204 + $0x110] sm:$0xff] %vm904, %v900
        %940 = vst.msk [vmem:[%s204 + $0x118] sm:$0xff] %vm904, %v901
        %941 = vst.msk [vmem:[%s204 + $0x120] sm:$0xff] %vm904, %v902
        %942 = vst.msk [vmem:[%s204 + $0x128] sm:$0xff] %vm904, %v903
        %s943 = sand.u32 %s112, 1
        %s944 = sand.u32 %s112, 1
        %s945 = smul.addr %s944, 304
        %s946 = scalar_lea.vmem [#allocation2], %s945
        // Predicated region
        $region37: #{adafocus_forward.8} parent=35 // pred_check
          %p947 = pneg %p122
        $region38: #{adafocus_forward.8} parent=35 // pred_check_branch
          %949 = sbr.rel (%p947) target = $region40
        $region39: #{adafocus_forward.8} parent=35 // pred_region
          %s950 = smul.u32 38, %s15
          %s951 = ssub.s32 74, %s950
          %p952 = scmp.lt.s32.totalorder %s951, 38
          %s953 = scalar_select %p952, %s951, 38
          %s954 = smul.u32 128, %s953
          %p955 = scmp.ne.s32.totalorder 0, %s954
          %s956 = smul.addr %s950, 8
          %s957 = scalar_lea.vmem %s4, %s956
          // Predicated region
          $region41: #{adafocus_forward.8} parent=39 // pred_check
            %p958 = pneg %p955
          $region42: #{adafocus_forward.8} parent=39 // pred_check_branch
            %960 = sbr.rel (%p958) target = $region44
          $region43: #{adafocus_forward.8} parent=39 // pred_region
            // Predicated region
            $region45: #{adafocus_forward.8} parent=43 // pred_check
              _
            $region46: #{adafocus_forward.8} parent=43 // pred_check_branch
              %962 = sbr.rel (0) target = $region48
            $region47: #{adafocus_forward.8} parent=43 // pred_region
              // Predicated region
              $region67: #{adafocus_forward.8} parent=47 // pred_check
                _
              $region68: #{adafocus_forward.8} parent=47 // pred_check_branch
                %1087 = sbr.rel (0) target = $region70
              $region69: #{adafocus_forward.8} parent=47 // pred_region
                %s1088 = sdiv.u32.pop %s953, 38
                %s1089 = srem.u32.pop %s953, 38
                // While loop
                $region71: #{adafocus_forward.8} parent=69 // loop_pre_header
                  _
                $region72: #{adafocus_forward.8} parent=69 // loop_header
                  %s1091 = sphi 0, %s1093
                  %p1092 = scmp.ge.s32.totalorder %s1091, %s1088
                  %s1096 = sphi 0, %s1177
                  %s1097 = sphi %s946, %s1180
                  %s1098 = sphi %s957, %s1181
                $region73: #{adafocus_forward.8} parent=69 // loop_header_branch
                  %1095 = sbr.rel (%p1092) target = $region77
                $region74: #{adafocus_forward.8} parent=69 // loop_body
                  %v1099 = vld [vmem:[%s1097] sm:$0xff]
                  %1100 = vst [vmem:[%s1098] sm:$0xff] %v1099
                  %v1101 = vld [vmem:[%s1097 + $0x8] sm:$0xff]
                  %1102 = vst [vmem:[%s1098 + $0x8] sm:$0xff] %v1101
                  %v1103 = vld [vmem:[%s1097 + $0x10] sm:$0xff]
                  %1104 = vst [vmem:[%s1098 + $0x10] sm:$0xff] %v1103
                  %v1105 = vld [vmem:[%s1097 + $0x18] sm:$0xff]
                  %1106 = vst [vmem:[%s1098 + $0x18] sm:$0xff] %v1105
                  %v1107 = vld [vmem:[%s1097 + $0x20] sm:$0xff]
                  %1108 = vst [vmem:[%s1098 + $0x20] sm:$0xff] %v1107
                  %v1109 = vld [vmem:[%s1097 + $0x28] sm:$0xff]
                  %1110 = vst [vmem:[%s1098 + $0x28] sm:$0xff] %v1109
                  %v1111 = vld [vmem:[%s1097 + $0x30] sm:$0xff]
                  %1112 = vst [vmem:[%s1098 + $0x30] sm:$0xff] %v1111
                  %v1113 = vld [vmem:[%s1097 + $0x38] sm:$0xff]
                  %1114 = vst [vmem:[%s1098 + $0x38] sm:$0xff] %v1113
                  %v1115 = vld [vmem:[%s1097 + $0x40] sm:$0xff]
                  %1116 = vst [vmem:[%s1098 + $0x40] sm:$0xff] %v1115
                  %v1117 = vld [vmem:[%s1097 + $0x48] sm:$0xff]
                  %1118 = vst [vmem:[%s1098 + $0x48] sm:$0xff] %v1117
                  %v1119 = vld [vmem:[%s1097 + $0x50] sm:$0xff]
                  %1120 = vst [vmem:[%s1098 + $0x50] sm:$0xff] %v1119
                  %v1121 = vld [vmem:[%s1097 + $0x58] sm:$0xff]
                  %1122 = vst [vmem:[%s1098 + $0x58] sm:$0xff] %v1121
                  %v1123 = vld [vmem:[%s1097 + $0x60] sm:$0xff]
                  %1124 = vst [vmem:[%s1098 + $0x60] sm:$0xff] %v1123
                  %v1125 = vld [vmem:[%s1097 + $0x68] sm:$0xff]
                  %1126 = vst [vmem:[%s1098 + $0x68] sm:$0xff] %v1125
                  %v1127 = vld [vmem:[%s1097 + $0x70] sm:$0xff]
                  %1128 = vst [vmem:[%s1098 + $0x70] sm:$0xff] %v1127
                  %v1129 = vld [vmem:[%s1097 + $0x78] sm:$0xff]
                  %1130 = vst [vmem:[%s1098 + $0x78] sm:$0xff] %v1129
                  %v1131 = vld [vmem:[%s1097 + $0x80] sm:$0xff]
                  %1132 = vst [vmem:[%s1098 + $0x80] sm:$0xff] %v1131
                  %v1133 = vld [vmem:[%s1097 + $0x88] sm:$0xff]
                  %1134 = vst [vmem:[%s1098 + $0x88] sm:$0xff] %v1133
                  %v1135 = vld [vmem:[%s1097 + $0x90] sm:$0xff]
                  %1136 = vst [vmem:[%s1098 + $0x90] sm:$0xff] %v1135
                  %v1137 = vld [vmem:[%s1097 + $0x98] sm:$0xff]
                  %1138 = vst [vmem:[%s1098 + $0x98] sm:$0xff] %v1137
                  %v1139 = vld [vmem:[%s1097 + $0xa0] sm:$0xff]
                  %1140 = vst [vmem:[%s1098 + $0xa0] sm:$0xff] %v1139
                  %v1141 = vld [vmem:[%s1097 + $0xa8] sm:$0xff]
                  %1142 = vst [vmem:[%s1098 + $0xa8] sm:$0xff] %v1141
                  %v1143 = vld [vmem:[%s1097 + $0xb0] sm:$0xff]
                  %1144 = vst [vmem:[%s1098 + $0xb0] sm:$0xff] %v1143
                  %v1145 = vld [vmem:[%s1097 + $0xb8] sm:$0xff]
                  %1146 = vst [vmem:[%s1098 + $0xb8] sm:$0xff] %v1145
                  %v1147 = vld [vmem:[%s1097 + $0xc0] sm:$0xff]
                  %1148 = vst [vmem:[%s1098 + $0xc0] sm:$0xff] %v1147
                  %v1149 = vld [vmem:[%s1097 + $0xc8] sm:$0xff]
                  %1150 = vst [vmem:[%s1098 + $0xc8] sm:$0xff] %v1149
                  %v1151 = vld [vmem:[%s1097 + $0xd0] sm:$0xff]
                  %1152 = vst [vmem:[%s1098 + $0xd0] sm:$0xff] %v1151
                  %v1153 = vld [vmem:[%s1097 + $0xd8] sm:$0xff]
                  %1154 = vst [vmem:[%s1098 + $0xd8] sm:$0xff] %v1153
                  %v1155 = vld [vmem:[%s1097 + $0xe0] sm:$0xff]
                  %1156 = vst [vmem:[%s1098 + $0xe0] sm:$0xff] %v1155
                  %v1157 = vld [vmem:[%s1097 + $0xe8] sm:$0xff]
                  %1158 = vst [vmem:[%s1098 + $0xe8] sm:$0xff] %v1157
                  %v1159 = vld [vmem:[%s1097 + $0xf0] sm:$0xff]
                  %1160 = vst [vmem:[%s1098 + $0xf0] sm:$0xff] %v1159
                  %v1161 = vld [vmem:[%s1097 + $0xf8] sm:$0xff]
                  %1162 = vst [vmem:[%s1098 + $0xf8] sm:$0xff] %v1161
                  %v1163 = vld [vmem:[%s1097 + $0x100] sm:$0xff]
                  %1164 = vst [vmem:[%s1098 + $0x100] sm:$0xff] %v1163
                  %v1165 = vld [vmem:[%s1097 + $0x108] sm:$0xff]
                  %1166 = vst [vmem:[%s1098 + $0x108] sm:$0xff] %v1165
                  %v1167 = vld [vmem:[%s1097 + $0x110] sm:$0xff]
                  %1168 = vst [vmem:[%s1098 + $0x110] sm:$0xff] %v1167
                  %v1169 = vld [vmem:[%s1097 + $0x118] sm:$0xff]
                  %1170 = vst [vmem:[%s1098 + $0x118] sm:$0xff] %v1169
                  %v1171 = vld [vmem:[%s1097 + $0x120] sm:$0xff]
                  %1172 = vst [vmem:[%s1098 + $0x120] sm:$0xff] %v1171
                  %v1173 = vld [vmem:[%s1097 + $0x128] sm:$0xff]
                  %1174 = vst [vmem:[%s1098 + $0x128] sm:$0xff] %v1173
                  %s1175 = sadd.s32 1, %s1096
                  %p1176 = scmp.ge.s32.totalorder %s1175, %s1088
                  %s1177 = scalar_select %p1176, 0, %s1175
                  %s1178 = smul.u32 %s1177, 304
                  %s1179 = smul.u32 %s1177, 304
                  %s1180 = scalar_lea.vmem %s946, %s1178 [#allocation2]
                  %s1181 = scalar_lea.vmem %s957, %s1179
                $region75: #{adafocus_forward.8} parent=69 // loop_footer
                  %s1093 = sadd.s32 %s1091, 1
                $region76: #{adafocus_forward.8} parent=69 // loop_footer_branch
                  %1090 = sbr.rel target = $region72
                $region77: #{adafocus_forward.8} parent=69 // loop_exit
                  _
                %s1182 = sdiv.u32.pop %s953, 38
                %s1183 = srem.u32.pop %s953, 38
                %s1184 = smul.u32 %s1182, 38
                %s1185 = smul.u32 8, %s1184
                %s1186 = scalar_lea.vmem %s946, %s1185 [#allocation2]
                %s1187 = smul.u32 8, %s1184
                %s1188 = scalar_lea.vmem %s957, %s1187
                // While loop
                $region78: #{adafocus_forward.8} parent=69 // loop_pre_header
                  _
                $region79: #{adafocus_forward.8} parent=69 // loop_header
                  %s1190 = sphi 0, %s1192
                  %p1191 = scmp.ge.s32.totalorder %s1190, %s1183
                  %s1195 = sphi 0, %s1202
                  %s1196 = sphi %s1186, %s1205
                  %s1197 = sphi %s1188, %s1206
                $region80: #{adafocus_forward.8} parent=69 // loop_header_branch
                  %1194 = sbr.rel (%p1191) target = $region84
                $region81: #{adafocus_forward.8} parent=69 // loop_body
                  %v1198 = vld [vmem:[%s1196] sm:$0xff]
                  %1199 = vst [vmem:[%s1197] sm:$0xff] %v1198
                  %s1200 = sadd.s32 1, %s1195
                  %p1201 = scmp.ge.s32.totalorder %s1200, %s1183
                  %s1202 = scalar_select %p1201, 0, %s1200
                  %s1203 = smul.u32 %s1202, 8
                  %s1204 = smul.u32 %s1202, 8
                  %s1205 = scalar_lea.vmem %s1186, %s1203 [#allocation2]
                  %s1206 = scalar_lea.vmem %s1188, %s1204
                $region82: #{adafocus_forward.8} parent=69 // loop_footer
                  %s1192 = sadd.s32 %s1190, 1
                $region83: #{adafocus_forward.8} parent=69 // loop_footer_branch
                  %1189 = sbr.rel target = $region79
                $region84: #{adafocus_forward.8} parent=69 // loop_exit
                  _
              $region70: #{adafocus_forward.8} parent=47 // pred_fallthru
                _
              // Predicated region
              $region85: #{adafocus_forward.8} parent=47 // pred_check
                _
              $region86: #{adafocus_forward.8} parent=47 // pred_check_branch
                %1208 = sbr.rel target = $region88
              $region87: #{adafocus_forward.8} parent=47 // pred_region
                _
              $region88: #{adafocus_forward.8} parent=47 // pred_fallthru
                _
            $region48: #{adafocus_forward.8} parent=43 // pred_fallthru
              _
            // Predicated region
            $region49: #{adafocus_forward.8} parent=43 // pred_check
              _
            $region50: #{adafocus_forward.8} parent=43 // pred_check_branch
              %964 = sbr.rel target = $region52
            $region51: #{adafocus_forward.8} parent=43 // pred_region
              %s966 = ssub.s32 256, 1
              %s967 = sdiv.u32.pop %s953, 38
              %s968 = srem.u32.pop %s953, 38
              // While loop
              $region53: #{adafocus_forward.8} parent=51 // loop_pre_header
                _
              $region54: #{adafocus_forward.8} parent=51 // loop_header
                %s970 = sphi 0, %s972
                %p971 = scmp.ge.s32.totalorder %s970, %s967
                %s975 = sphi 0, %s1056
                %s976 = sphi %s946, %s1059
                %s977 = sphi %s957, %s1060
              $region55: #{adafocus_forward.8} parent=51 // loop_header_branch
                %974 = sbr.rel (%p971) target = $region59
              $region56: #{adafocus_forward.8} parent=51 // loop_body
                %v978 = vld [vmem:[%s976] sm:%s966]
                %979 = vst [vmem:[%s977] sm:%s966] %v978
                %v980 = vld [vmem:[%s976 + $0x8] sm:%s966]
                %981 = vst [vmem:[%s977 + $0x8] sm:%s966] %v980
                %v982 = vld [vmem:[%s976 + $0x10] sm:%s966]
                %983 = vst [vmem:[%s977 + $0x10] sm:%s966] %v982
                %v984 = vld [vmem:[%s976 + $0x18] sm:%s966]
                %985 = vst [vmem:[%s977 + $0x18] sm:%s966] %v984
                %v986 = vld [vmem:[%s976 + $0x20] sm:%s966]
                %987 = vst [vmem:[%s977 + $0x20] sm:%s966] %v986
                %v988 = vld [vmem:[%s976 + $0x28] sm:%s966]
                %989 = vst [vmem:[%s977 + $0x28] sm:%s966] %v988
                %v990 = vld [vmem:[%s976 + $0x30] sm:%s966]
                %991 = vst [vmem:[%s977 + $0x30] sm:%s966] %v990
                %v992 = vld [vmem:[%s976 + $0x38] sm:%s966]
                %993 = vst [vmem:[%s977 + $0x38] sm:%s966] %v992
                %v994 = vld [vmem:[%s976 + $0x40] sm:%s966]
                %995 = vst [vmem:[%s977 + $0x40] sm:%s966] %v994
                %v996 = vld [vmem:[%s976 + $0x48] sm:%s966]
                %997 = vst [vmem:[%s977 + $0x48] sm:%s966] %v996
                %v998 = vld [vmem:[%s976 + $0x50] sm:%s966]
                %999 = vst [vmem:[%s977 + $0x50] sm:%s966] %v998
                %v1000 = vld [vmem:[%s976 + $0x58] sm:%s966]
                %1001 = vst [vmem:[%s977 + $0x58] sm:%s966] %v1000
                %v1002 = vld [vmem:[%s976 + $0x60] sm:%s966]
                %1003 = vst [vmem:[%s977 + $0x60] sm:%s966] %v1002
                %v1004 = vld [vmem:[%s976 + $0x68] sm:%s966]
                %1005 = vst [vmem:[%s977 + $0x68] sm:%s966] %v1004
                %v1006 = vld [vmem:[%s976 + $0x70] sm:%s966]
                %1007 = vst [vmem:[%s977 + $0x70] sm:%s966] %v1006
                %v1008 = vld [vmem:[%s976 + $0x78] sm:%s966]
                %1009 = vst [vmem:[%s977 + $0x78] sm:%s966] %v1008
                %v1010 = vld [vmem:[%s976 + $0x80] sm:%s966]
                %1011 = vst [vmem:[%s977 + $0x80] sm:%s966] %v1010
                %v1012 = vld [vmem:[%s976 + $0x88] sm:%s966]
                %1013 = vst [vmem:[%s977 + $0x88] sm:%s966] %v1012
                %v1014 = vld [vmem:[%s976 + $0x90] sm:%s966]
                %1015 = vst [vmem:[%s977 + $0x90] sm:%s966] %v1014
                %v1016 = vld [vmem:[%s976 + $0x98] sm:%s966]
                %1017 = vst [vmem:[%s977 + $0x98] sm:%s966] %v1016
                %v1018 = vld [vmem:[%s976 + $0xa0] sm:%s966]
                %1019 = vst [vmem:[%s977 + $0xa0] sm:%s966] %v1018
                %v1020 = vld [vmem:[%s976 + $0xa8] sm:%s966]
                %1021 = vst [vmem:[%s977 + $0xa8] sm:%s966] %v1020
                %v1022 = vld [vmem:[%s976 + $0xb0] sm:%s966]
                %1023 = vst [vmem:[%s977 + $0xb0] sm:%s966] %v1022
                %v1024 = vld [vmem:[%s976 + $0xb8] sm:%s966]
                %1025 = vst [vmem:[%s977 + $0xb8] sm:%s966] %v1024
                %v1026 = vld [vmem:[%s976 + $0xc0] sm:%s966]
                %1027 = vst [vmem:[%s977 + $0xc0] sm:%s966] %v1026
                %v1028 = vld [vmem:[%s976 + $0xc8] sm:%s966]
                %1029 = vst [vmem:[%s977 + $0xc8] sm:%s966] %v1028
                %v1030 = vld [vmem:[%s976 + $0xd0] sm:%s966]
                %1031 = vst [vmem:[%s977 + $0xd0] sm:%s966] %v1030
                %v1032 = vld [vmem:[%s976 + $0xd8] sm:%s966]
                %1033 = vst [vmem:[%s977 + $0xd8] sm:%s966] %v1032
                %v1034 = vld [vmem:[%s976 + $0xe0] sm:%s966]
                %1035 = vst [vmem:[%s977 + $0xe0] sm:%s966] %v1034
                %v1036 = vld [vmem:[%s976 + $0xe8] sm:%s966]
                %1037 = vst [vmem:[%s977 + $0xe8] sm:%s966] %v1036
                %v1038 = vld [vmem:[%s976 + $0xf0] sm:%s966]
                %1039 = vst [vmem:[%s977 + $0xf0] sm:%s966] %v1038
                %v1040 = vld [vmem:[%s976 + $0xf8] sm:%s966]
                %1041 = vst [vmem:[%s977 + $0xf8] sm:%s966] %v1040
                %v1042 = vld [vmem:[%s976 + $0x100] sm:%s966]
                %1043 = vst [vmem:[%s977 + $0x100] sm:%s966] %v1042
                %v1044 = vld [vmem:[%s976 + $0x108] sm:%s966]
                %1045 = vst [vmem:[%s977 + $0x108] sm:%s966] %v1044
                %v1046 = vld [vmem:[%s976 + $0x110] sm:%s966]
                %1047 = vst [vmem:[%s977 + $0x110] sm:%s966] %v1046
                %v1048 = vld [vmem:[%s976 + $0x118] sm:%s966]
                %1049 = vst [vmem:[%s977 + $0x118] sm:%s966] %v1048
                %v1050 = vld [vmem:[%s976 + $0x120] sm:%s966]
                %1051 = vst [vmem:[%s977 + $0x120] sm:%s966] %v1050
                %v1052 = vld [vmem:[%s976 + $0x128] sm:%s966]
                %1053 = vst [vmem:[%s977 + $0x128] sm:%s966] %v1052
                %s1054 = sadd.s32 1, %s975
                %p1055 = scmp.ge.s32.totalorder %s1054, %s967
                %s1056 = scalar_select %p1055, 0, %s1054
                %s1057 = smul.u32 %s1056, 304
                %s1058 = smul.u32 %s1056, 304
                %s1059 = scalar_lea.vmem %s946, %s1057 [#allocation2]
                %s1060 = scalar_lea.vmem %s957, %s1058
              $region57: #{adafocus_forward.8} parent=51 // loop_footer
                %s972 = sadd.s32 %s970, 1
              $region58: #{adafocus_forward.8} parent=51 // loop_footer_branch
                %969 = sbr.rel target = $region54
              $region59: #{adafocus_forward.8} parent=51 // loop_exit
                _
              %s1061 = sdiv.u32.pop %s953, 38
              %s1062 = srem.u32.pop %s953, 38
              %s1063 = smul.u32 %s1061, 38
              %s1064 = smul.u32 8, %s1063
              %s1065 = scalar_lea.vmem %s946, %s1064 [#allocation2]
              %s1066 = smul.u32 8, %s1063
              %s1067 = scalar_lea.vmem %s957, %s1066
              // While loop
              $region60: #{adafocus_forward.8} parent=51 // loop_pre_header
                _
              $region61: #{adafocus_forward.8} parent=51 // loop_header
                %s1069 = sphi 0, %s1071
                %p1070 = scmp.ge.s32.totalorder %s1069, %s1062
                %s1074 = sphi 0, %s1081
                %s1075 = sphi %s1065, %s1084
                %s1076 = sphi %s1067, %s1085
              $region62: #{adafocus_forward.8} parent=51 // loop_header_branch
                %1073 = sbr.rel (%p1070) target = $region66
              $region63: #{adafocus_forward.8} parent=51 // loop_body
                %v1077 = vld [vmem:[%s1075] sm:%s966]
                %1078 = vst [vmem:[%s1076] sm:%s966] %v1077
                %s1079 = sadd.s32 1, %s1074
                %p1080 = scmp.ge.s32.totalorder %s1079, %s1062
                %s1081 = scalar_select %p1080, 0, %s1079
                %s1082 = smul.u32 %s1081, 8
                %s1083 = smul.u32 %s1081, 8
                %s1084 = scalar_lea.vmem %s1065, %s1082 [#allocation2]
                %s1085 = scalar_lea.vmem %s1067, %s1083
              $region64: #{adafocus_forward.8} parent=51 // loop_footer
                %s1071 = sadd.s32 %s1069, 1
              $region65: #{adafocus_forward.8} parent=51 // loop_footer_branch
                %1068 = sbr.rel target = $region61
              $region66: #{adafocus_forward.8} parent=51 // loop_exit
                _
            $region52: #{adafocus_forward.8} parent=43 // pred_fallthru
              _
          $region44: #{adafocus_forward.8} parent=39 // pred_fallthru
            _
          %1209 = vnop
        $region40: #{adafocus_forward.8} parent=35 // pred_fallthru
          _
      $region36: #{adafocus_forward.8} parent=5 // pred_fallthru
        _
      %p1210 = scmp.le.s32.totalorder 2, %s10
      // Predicated region
      $region89: #{adafocus_forward.8} parent=5 // pred_check
        %p1211 = pneg %p1210
      $region90: #{adafocus_forward.8} parent=5 // pred_check_branch
        %1213 = sbr.rel (%p1211) target = $region92
      $region91: #{adafocus_forward.8} parent=5 // pred_region
        %s1214 = ssub.s32 %s10, 2
        // Predicated region
        $region93: #{adafocus_forward.8} parent=91 // pred_check
          %p1215 = pneg %p128
        $region94: #{adafocus_forward.8} parent=91 // pred_check_branch
          %1217 = sbr.rel (%p1215) target = $region96
        $region95: #{adafocus_forward.8} parent=91 // pred_region
          %s1218 = sand.u32 %s113, 1
          %s1219 = sand.u32 %s113, 1
          %s1220 = smul.addr %s1219, 304
          %s1221 = scalar_lea.vmem [#allocation2], %s1220
        $region96: #{adafocus_forward.8} parent=91 // pred_fallthru
          _
      $region92: #{adafocus_forward.8} parent=5 // pred_fallthru
        _
    $region6: #{adafocus_forward.8} parent=1 // loop_footer
      %s14 = sadd.s32 1, %s10
    $region7: #{adafocus_forward.8} parent=1 // loop_footer_branch
      %9 = sbr.rel target = $region3
    $region8: #{adafocus_forward.8} parent=1 // loop_exit
      _

// kernel: adafocus_forward.10
$region0: #{adafocus_forward.10}
  #allocation0 [shape = 'u32[]', space=smem, size = 0x4, offset = 0x4, fixed_abs, tag = 'smem constant byte address 0x4 - core index']
  #allocation1 [shape = 'u32[144,128]{1,0:T(1,128)}', space=vmem, size = 0x12000, scoped, tag = 'internal scratch']
  %s0 = inlined_call_operand.vmem [shape: bf16[588,16], index: 0, kind: input, shape index: {}]
  %s1 = inlined_call_operand.vmem [shape: bf16[16,16], index: 1, kind: input, shape index: {}]
  %s2 = inlined_call_operand.vmem [shape: f32[1,16], index: 2, kind: input, shape index: {}]
  %s3 = inlined_call_operand.vmem [shape: f32[1,16], index: 3, kind: input, shape index: {}]
  %s4 = inlined_call_operand.vmem [shape: bf16[588,16], index: 4, kind: output, shape index: {}]
  %s5 = sld [smem:[#allocation0]]
  $region93: #{adafocus_forward.10} parent=0
    _
  %s7 = ssub.s32 1, %s5
  %s8 = scalar_select 0, %s7, %s5
  $region1: #{adafocus_forward.10} parent=0
    #allocation2 [shape = 'u8[155648]{0}', space=vmem, size = 0x26000, scoped, tag = 'output window, operand 0']
    loop: start=0, step=1, limit=4
    $region2: #{adafocus_forward.10} parent=1 // loop_pre_header
      _
    $region3: #{adafocus_forward.10} parent=1 // loop_header
      %s10 = sphi 0, %s14
      %p11 = scmp.ge.s32.totalorder %s10, 4
      %s20 = sphi 0, %s22
      %s23 = sphi 0, %s20
      %s24 = sphi 0, %s23
      %s40 = sphi 0, %s24
      %s44 = sphi 0, %s44
      %s46 = sphi 0, %s44
      %s47 = sphi 0, %s46
      %s61 = sphi 0, %s47
      %s65 = sphi 0, %s65
      %s67 = sphi 0, %s65
      %s68 = sphi 0, %s67
      %s82 = sphi 0, %s68
      %s86 = sphi 0, %s86
      %s88 = sphi 0, %s86
      %s89 = sphi 0, %s88
      %s103 = sphi 0, %s89
      %s109 = sphi 0, %s111
      %s112 = sphi 0, %s109
      %s113 = sphi 0, %s112
      %s129 = sphi 0, %s113
    $region4: #{adafocus_forward.10} parent=1 // loop_header_branch
      %13 = sbr.rel (%p11) target = $region8
    $region5: #{adafocus_forward.10} parent=1 // loop_body
      %s15 = ssub.s32 %s10, 1
      %s16 = ssub.s32 %s10, 2
      %s17 = sadd.s32 %s10, 1
      %s18 = ssub.s32 %s10, %s17
      %p19 = scmp.eq.s32.totalorder %s18, 0
      %s21 = sadd.s32 %s20, 1
      %s22 = scalar_select %p19, %s20, %s21
      %p25 = pneg %p19
      %p26 = scmp.eq.s32.totalorder %s10, 1
      %p27 = por %p25, %p26
      %p28 = scmp.ne.s32.totalorder %s20, %s23
      %p29 = scmp.eq.s32.totalorder %s10, 0
      %p30 = por %p28, %p29
      %p31 = scmp.ne.s32.totalorder %s20, %s23
      %p32 = scmp.eq.s32.totalorder %s15, 1
      %p33 = por %p31, %p32
      %p34 = scmp.ne.s32.totalorder %s23, %s24
      %p35 = scmp.eq.s32.totalorder %s15, 0
      %p36 = por %p34, %p35
      %p37 = scmp.ne.s32.totalorder %s23, %s24
      %p38 = scmp.eq.s32.totalorder %s16, 1
      %p39 = por %p37, %p38
      %p41 = scmp.ne.s32.totalorder %s24, %s40
      %p42 = scmp.eq.s32.totalorder %s16, 0
      %p43 = por %p41, %p42
      %s45 = sadd.s32 %s44, 1
      %p48 = scmp.eq.s32.totalorder %s10, 1
      %p49 = scmp.ne.s32.totalorder %s44, %s46
      %p50 = scmp.eq.s32.totalorder %s10, 0
      %p51 = por %p49, %p50
      %p52 = scmp.ne.s32.totalorder %s44, %s46
      %p53 = scmp.eq.s32.totalorder %s15, 1
      %p54 = por %p52, %p53
      %p55 = scmp.ne.s32.totalorder %s46, %s47
      %p56 = scmp.eq.s32.totalorder %s15, 0
      %p57 = por %p55, %p56
      %p58 = scmp.ne.s32.totalorder %s46, %s47
      %p59 = scmp.eq.s32.totalorder %s16, 1
      %p60 = por %p58, %p59
      %p62 = scmp.ne.s32.totalorder %s47, %s61
      %p63 = scmp.eq.s32.totalorder %s16, 0
      %p64 = por %p62, %p63
      %s66 = sadd.s32 %s65, 1
      %p69 = scmp.eq.s32.totalorder %s10, 1
      %p70 = scmp.ne.s32.totalorder %s65, %s67
      %p71 = scmp.eq.s32.totalorder %s10, 0
      %p72 = por %p70, %p71
      %p73 = scmp.ne.s32.totalorder %s65, %s67
      %p74 = scmp.eq.s32.totalorder %s15, 1
      %p75 = por %p73, %p74
      %p76 = scmp.ne.s32.totalorder %s67, %s68
      %p77 = scmp.eq.s32.totalorder %s15, 0
      %p78 = por %p76, %p77
      %p79 = scmp.ne.s32.totalorder %s67, %s68
      %p80 = scmp.eq.s32.totalorder %s16, 1
      %p81 = por %p79, %p80
      %p83 = scmp.ne.s32.totalorder %s68, %s82
      %p84 = scmp.eq.s32.totalorder %s16, 0
      %p85 = por %p83, %p84
      %s87 = sadd.s32 %s86, 1
      %p90 = scmp.eq.s32.totalorder %s10, 1
      %p91 = scmp.ne.s32.totalorder %s86, %s88
      %p92 = scmp.eq.s32.totalorder %s10, 0
      %p93 = por %p91, %p92
      %p94 = scmp.ne.s32.totalorder %s86, %s88
      %p95 = scmp.eq.s32.totalorder %s15, 1
      %p96 = por %p94, %p95
      %p97 = scmp.ne.s32.totalorder %s88, %s89
      %p98 = scmp.eq.s32.totalorder %s15, 0
      %p99 = por %p97, %p98
      %p100 = scmp.ne.s32.totalorder %s88, %s89
      %p101 = scmp.eq.s32.totalorder %s16, 1
      %p102 = por %p100, %p101
      %p104 = scmp.ne.s32.totalorder %s89, %s103
      %p105 = scmp.eq.s32.totalorder %s16, 0
      %p106 = por %p104, %p105
      %s107 = ssub.s32 %s10, %s17
      %p108 = scmp.eq.s32.totalorder %s107, 0
      %s110 = sadd.s32 %s109, 1
      %s111 = scalar_select %p108, %s109, %s110
      %p114 = pneg %p108
      %p115 = scmp.eq.s32.totalorder %s10, 1
      %p116 = por %p114, %p115
      %p117 = scmp.ne.s32.totalorder %s109, %s112
      %p118 = scmp.eq.s32.totalorder %s10, 0
      %p119 = por %p117, %p118
      %p120 = scmp.ne.s32.totalorder %s109, %s112
      %p121 = scmp.eq.s32.totalorder %s15, 1
      %p122 = por %p120, %p121
      %p123 = scmp.ne.s32.totalorder %s112, %s113
      %p124 = scmp.eq.s32.totalorder %s15, 0
      %p125 = por %p123, %p124
      %p126 = scmp.ne.s32.totalorder %s112, %s113
      %p127 = scmp.eq.s32.totalorder %s16, 1
      %p128 = por %p126, %p127
      %p130 = scmp.ne.s32.totalorder %s113, %s129
      %p131 = scmp.eq.s32.totalorder %s16, 0
      %p132 = por %p130, %p131
      %p133 = scmp.le.s32.totalorder 1, %s10
      %p134 = scmp.lt.s32.totalorder %s10, 3
      %p135 = pnand %p133, %p134
      %p136 = pneg %p135
      // Predicated region
      $region9: #{adafocus_forward.10} parent=5 // pred_check
        _
      $region10: #{adafocus_forward.10} parent=5 // pred_check_branch
        %138 = sbr.rel (%p135) target = $region12
      $region11: #{adafocus_forward.10} parent=5 // pred_region
        %s139 = ssub.s32 %s10, 1
        // Predicated region
        $region13: #{adafocus_forward.10} parent=11 // pred_check
          %p140 = pneg %p57
        $region14: #{adafocus_forward.10} parent=11 // pred_check_branch
          %142 = sbr.rel (%p140) target = $region16
        $region15: #{adafocus_forward.10} parent=11 // pred_region
          _
        $region16: #{adafocus_forward.10} parent=11 // pred_fallthru
          _
        // Predicated region
        $region17: #{adafocus_forward.10} parent=11 // pred_check
          %p143 = pneg %p78
        $region18: #{adafocus_forward.10} parent=11 // pred_check_branch
          %145 = sbr.rel (%p143) target = $region20
        $region19: #{adafocus_forward.10} parent=11 // pred_region
          _
        $region20: #{adafocus_forward.10} parent=11 // pred_fallthru
          _
        // Predicated region
        $region21: #{adafocus_forward.10} parent=11 // pred_check
          %p146 = pneg %p99
        $region22: #{adafocus_forward.10} parent=11 // pred_check_branch
          %148 = sbr.rel (%p146) target = $region24
        $region23: #{adafocus_forward.10} parent=11 // pred_region
          _
        $region24: #{adafocus_forward.10} parent=11 // pred_fallthru
          _
      $region12: #{adafocus_forward.10} parent=5 // pred_fallthru
        _
      %p149 = scmp.lt.s32.totalorder %s10, 2
      // Predicated region
      $region25: #{adafocus_forward.10} parent=5 // pred_check
        %p150 = pneg %p149
      $region26: #{adafocus_forward.10} parent=5 // pred_check_branch
        %152 = sbr.rel (%p150) target = $region28
      $region27: #{adafocus_forward.10} parent=5 // pred_region
        // Predicated region
        $region29: #{adafocus_forward.10} parent=27 // pred_check
          %p153 = pneg %p30
        $region30: #{adafocus_forward.10} parent=27 // pred_check_branch
          %155 = sbr.rel (%p153) target = $region32
        $region31: #{adafocus_forward.10} parent=27 // pred_region
          %s156 = smul.u32 38, %s10
          %s157 = ssub.s32 74, %s156
          %p158 = scmp.lt.s32.totalorder %s157, 38
          %s159 = scalar_select %p158, %s157, 38
          %s160 = smul.u32 64, %s159
          %p161 = scmp.lt.s32.totalorder %s156, 73
          %s162 = scalar_select %p161, %s156, 73
          %s163 = smul.addr %s162, 4
          %s164 = scalar_lea.vmem %s0, %s163
          %s165 = smul.u32 38, %s10
          %s166 = ssub.s32 74, %s165
          %p167 = scmp.lt.s32.totalorder %s166, 38
          %s168 = scalar_select %p167, %s166, 38
          %s169 = smul.u32 64, %s168
        $region32: #{adafocus_forward.10} parent=27 // pred_fallthru
          _
      $region28: #{adafocus_forward.10} parent=5 // pred_fallthru
        _
      %p170 = scmp.le.s32.totalorder 1, %s10
      %p171 = scmp.lt.s32.totalorder %s10, 3
      %p172 = pnand %p170, %p171
      %p173 = pneg %p172
      // Predicated region
      $region33: #{adafocus_forward.10} parent=5 // pred_check
        _
      $region34: #{adafocus_forward.10} parent=5 // pred_check_branch
        %175 = sbr.rel (%p172) target = $region36
      $region35: #{adafocus_forward.10} parent=5 // pred_region
        %s176 = ssub.s32 %s10, 1
        %s177 = smul.u32 38, %s15
        %s178 = ssub.s32 74, %s177
        %p179 = scmp.lt.s32.totalorder %s178, 38
        %s180 = scalar_select %p179, %s178, 38
        %s181 = smul.u32 64, %s180
        %p182 = scmp.lt.s32.totalorder %s177, 73
        %s183 = scalar_select %p182, %s177, 73
        %s184 = smul.addr %s183, 4
        %s185 = scalar_lea.vmem %s0, %s184
        %p186 = pneg %p36
        %p187 = pneg %p33
        %p188 = pneg %p57
        %p189 = pneg %p54
        %p190 = pneg %p78
        %p191 = pneg %p75
        %p192 = pneg %p99
        %p193 = pneg %p96
        %p194 = pneg %p125
        %p195 = pneg %p122
        %s196 = sand.u32 %s112, 1
        %s197 = sand.u32 %s112, 1
        %s198 = smul.addr %s197, 152
        %s199 = scalar_lea.vmem [#allocation2], %s198
        %s200 = smul.u32 38, %s15
        %s201 = ssub.s32 74, %s200
        %p202 = scmp.lt.s32.totalorder %s201, 38
        %s203 = scalar_select %p202, %s201, 38
        %s204 = smul.u32 64, %s203
        %p205 = scmp.lt.s32.totalorder %s200, 73
        %s206 = scalar_select %p205, %s200, 73
        %s207 = smul.addr %s206, 4
        %s208 = scalar_lea.vmem %s0, %s207
        %s209 = smul.u32 38, %s15
        %s210 = ssub.s32 74, %s209
        %p211 = scmp.lt.s32.totalorder %s210, 38
        %s212 = scalar_select %p211, %s210, 38
        %s213 = smul.u32 64, %s212
        %s214 = smul.u32 38, %s15
        %s215 = ssub.s32 74, %s214
        %p216 = scmp.lt.s32.totalorder %s215, 38
        %s217 = scalar_select %p216, %s215, 38
        %s218 = smul.u32 64, %s217
        %v220 = vld [vmem:[%s208] sm:$0xf]
        %v221 = vld [vmem:[%s208 + $0x4] sm:$0xf]
        %v222 = vld [vmem:[%s208 + $0x8] sm:$0xf]
        %v223 = vld [vmem:[%s208 + $0xc] sm:$0xf]
        %v224 = vld [vmem:[%s208 + $0x10] sm:$0xf]
        %v225 = vld [vmem:[%s208 + $0x14] sm:$0xf]
        %v226 = vld [vmem:[%s208 + $0x18] sm:$0xf]
        %v227 = vld [vmem:[%s208 + $0x1c] sm:$0xf]
        %v228 = vld [vmem:[%s208 + $0x20] sm:$0xf]
        %v229 = vld [vmem:[%s208 + $0x24] sm:$0xf]
        %v230 = vld [vmem:[%s208 + $0x28] sm:$0xf]
        %v231 = vld [vmem:[%s208 + $0x2c] sm:$0xf]
        %v232 = vld [vmem:[%s208 + $0x30] sm:$0xf]
        %v233 = vld [vmem:[%s208 + $0x34] sm:$0xf]
        %v234 = vld [vmem:[%s208 + $0x38] sm:$0xf]
        %v235 = vld [vmem:[%s208 + $0x3c] sm:$0xf]
        %v236 = vld [vmem:[%s208 + $0x40] sm:$0xf]
        %v237 = vld [vmem:[%s208 + $0x44] sm:$0xf]
        %v238 = vld [vmem:[%s208 + $0x48] sm:$0xf]
        %v239 = vld [vmem:[%s208 + $0x4c] sm:$0xf]
        %v240 = vld [vmem:[%s208 + $0x50] sm:$0xf]
        %v241 = vld [vmem:[%s208 + $0x54] sm:$0xf]
        %v242 = vld [vmem:[%s208 + $0x58] sm:$0xf]
        %v243 = vld [vmem:[%s208 + $0x5c] sm:$0xf]
        %v244 = vld [vmem:[%s208 + $0x60] sm:$0xf]
        %v245 = vld [vmem:[%s208 + $0x64] sm:$0xf]
        %v246 = vld [vmem:[%s208 + $0x68] sm:$0xf]
        %v247 = vld [vmem:[%s208 + $0x6c] sm:$0xf]
        %v248 = vld [vmem:[%s208 + $0x70] sm:$0xf]
        %v249 = vld [vmem:[%s208 + $0x74] sm:$0xf]
        %v250 = vld [vmem:[%s208 + $0x78] sm:$0xf]
        %v251 = vld [vmem:[%s208 + $0x7c] sm:$0xf]
        %v252 = vld [vmem:[%s208 + $0x80] sm:$0xf]
        %v253 = vld [vmem:[%s208 + $0x84] sm:$0xf]
        %v254 = vld [vmem:[%s208 + $0x88] sm:$0xf]
        %v255 = vld [vmem:[%s208 + $0x8c] sm:$0xf]
        %v256 = vld [vmem:[%s208 + $0x90] sm:$0xf]
        %v257 = vld [vmem:[%s208 + $0x94] sm:$0xf]
        %v258 = vld [vmem:[%s1] sm:$0xf]
        %v259 = vld [vmem:[%s1 + $0x4] sm:$0xf]
        %v298 = vunpack.c.l.b16 %v220
        %v299 = vunpack.c.l.b16 %v221
        %v300 = vunpack.c.l.b16 %v222
        %v301 = vunpack.c.l.b16 %v223
        %v302 = vunpack.c.l.b16 %v224
        %v303 = vunpack.c.l.b16 %v225
        %v304 = vunpack.c.l.b16 %v226
        %v305 = vunpack.c.l.b16 %v227
        %v306 = vunpack.c.l.b16 %v228
        %v307 = vunpack.c.l.b16 %v229
        %v308 = vunpack.c.l.b16 %v230
        %v309 = vunpack.c.l.b16 %v231
        %v310 = vunpack.c.l.b16 %v232
        %v311 = vunpack.c.l.b16 %v233
        %v312 = vunpack.c.l.b16 %v234
        %v313 = vunpack.c.l.b16 %v235
        %v314 = vunpack.c.l.b16 %v236
        %v315 = vunpack.c.l.b16 %v237
        %v316 = vunpack.c.l.b16 %v238
        %v317 = vunpack.c.l.b16 %v239
        %v318 = vunpack.c.l.b16 %v240
        %v319 = vunpack.c.l.b16 %v241
        %v320 = vunpack.c.l.b16 %v242
        %v321 = vunpack.c.l.b16 %v243
        %v322 = vunpack.c.l.b16 %v244
        %v323 = vunpack.c.l.b16 %v245
        %v324 = vunpack.c.l.b16 %v246
        %v325 = vunpack.c.l.b16 %v247
        %v326 = vunpack.c.l.b16 %v248
        %v327 = vunpack.c.l.b16 %v249
        %v328 = vunpack.c.l.b16 %v250
        %v329 = vunpack.c.l.b16 %v251
        %v330 = vunpack.c.l.b16 %v252
        %v331 = vunpack.c.l.b16 %v253
        %v332 = vunpack.c.l.b16 %v254
        %v333 = vunpack.c.l.b16 %v255
        %v334 = vunpack.c.l.b16 %v256
        %v335 = vunpack.c.l.b16 %v257
        %v336 = vpack.c.b16 %v299, %v298
        %v337 = vpack.c.b16 %v301, %v300
        %v338 = vpack.c.b16 %v303, %v302
        %v339 = vpack.c.b16 %v305, %v304
        %v340 = vpack.c.b16 %v307, %v306
        %v341 = vpack.c.b16 %v309, %v308
        %v342 = vpack.c.b16 %v311, %v310
        %v343 = vpack.c.b16 %v313, %v312
        %v344 = vpack.c.b16 %v315, %v314
        %v345 = vpack.c.b16 %v317, %v316
        %v346 = vpack.c.b16 %v319, %v318
        %v347 = vpack.c.b16 %v321, %v320
        %v348 = vpack.c.b16 %v323, %v322
        %v349 = vpack.c.b16 %v325, %v324
        %v350 = vpack.c.b16 %v327, %v326
        %v351 = vpack.c.b16 %v329, %v328
        %v352 = vpack.c.b16 %v331, %v330
        %v353 = vpack.c.b16 %v333, %v332
        %v354 = vpack.c.b16 %v335, %v334
        %v357 = vunpack.c.l.b16 %v258
        %v358 = vunpack.c.l.b16 %v259
        %v359 = vpack.c.b16 %v358, %v357
        %vm361 = vcmask 130048
        %v363 = vsel %vm361, %v336, 0
        %v366 = vsel %vm361, %v337, 0
        %v369 = vsel %vm361, %v338, 0
        %v372 = vsel %vm361, %v339, 0
        %v375 = vsel %vm361, %v340, 0
        %v378 = vsel %vm361, %v341, 0
        %v381 = vsel %vm361, %v342, 0
        %v384 = vsel %vm361, %v343, 0
        %v387 = vsel %vm361, %v344, 0
        %v390 = vsel %vm361, %v345, 0
        %v393 = vsel %vm361, %v346, 0
        %v396 = vsel %vm361, %v347, 0
        %v399 = vsel %vm361, %v348, 0
        %v402 = vsel %vm361, %v349, 0
        %v405 = vsel %vm361, %v350, 0
        %v408 = vsel %vm361, %v351, 0
        %v411 = vsel %vm361, %v352, 0
        %v414 = vsel %vm361, %v353, 0
        %v417 = vsel %vm361, %v354, 0
        %419 = vmatprep.subr.bf16.mxu0 0
        %420 = vmatpush1.bf16.msra.mxu0 0
        %421 = vmatprep.subr.bf16.mxu0 0
        %422 = vmatpush1.bf16.msra.mxu0 0
        %423 = vmatprep.subr.bf16.mxu0 0
        %424 = vmatpush1.bf16.msra.mxu0 0
        %425 = vmatprep.subr.bf16.mxu0 0
        %426 = vmatpush1.bf16.msra.mxu0 0
        %427 = vmatprep.subr.bf16.mxu0 0
        %428 = vmatpush1.bf16.msra.mxu0 0
        %429 = vmatprep.subr.bf16.mxu0 0
        %430 = vmatpush1.bf16.msra.mxu0 0
        %431 = vmatprep.subr.bf16.mxu0 0
        %432 = vmatpush1.bf16.msra.mxu0 0
        %433 = vmatprep.subr.bf16.mxu0 0
        %434 = vmatpush1.bf16.msra.mxu0 %v359
        %435 = vmatprep.subr.bf16.mxu0 0
        %436 = vmatpush2.bf16.msra.mxu0 0
        %437 = vmatprep.subr.bf16.mxu0 0
        %438 = vmatpush2.bf16.msra.mxu0 0
        %439 = vmatprep.subr.bf16.mxu0 0
        %440 = vmatpush2.bf16.msra.mxu0 0
        %441 = vmatprep.subr.bf16.mxu0 0
        %442 = vmatpush2.bf16.msra.mxu0 0
        %443 = vmatprep.subr.bf16.mxu0 0
        %444 = vmatpush2.bf16.msra.mxu0 0
        %445 = vmatprep.subr.bf16.mxu0 0
        %446 = vmatpush2.bf16.msra.mxu0 0
        %447 = vmatprep.subr.bf16.mxu0 0
        %448 = vmatpush2.bf16.msra.mxu0 0
        %449 = vmatprep.subr.bf16.mxu0 0
        %450 = vmatpush2.bf16.msra.mxu0 0
        %451 = vmatprep.mubr.bf16.mxu0 0
        %452 = vmatmul.mubr.bf16.gmra.mxu0 %v363
        %v453 = vpop.f32.mrf.mxu0
        %v454 = vadd.f32 0.0, %v453
        %v455 = vpop.f32.mrf.mxu0
        %v456 = vpop.f32.mrf.mxu0
        %v457 = vadd.f32 0.0, %v456
        %v458 = vpop.f32.mrf.mxu0
        %459 = vmatprep.mubr.bf16.mxu0 0
        %460 = vmatmul.mubr.bf16.gmra.mxu0 %v366
        %v461 = vpop.f32.mrf.mxu0
        %v462 = vadd.f32 0.0, %v461
        %v463 = vpop.f32.mrf.mxu0
        %v464 = vpop.f32.mrf.mxu0
        %v465 = vadd.f32 0.0, %v464
        %v466 = vpop.f32.mrf.mxu0
        %467 = vmatprep.mubr.bf16.mxu0 0
        %468 = vmatmul.mubr.bf16.gmra.mxu0 %v369
        %v469 = vpop.f32.mrf.mxu0
        %v470 = vadd.f32 0.0, %v469
        %v471 = vpop.f32.mrf.mxu0
        %v472 = vpop.f32.mrf.mxu0
        %v473 = vadd.f32 0.0, %v472
        %v474 = vpop.f32.mrf.mxu0
        %475 = vmatprep.mubr.bf16.mxu0 0
        %476 = vmatmul.mubr.bf16.gmra.mxu0 %v372
        %v477 = vpop.f32.mrf.mxu0
        %v478 = vadd.f32 0.0, %v477
        %v479 = vpop.f32.mrf.mxu0
        %v480 = vpop.f32.mrf.mxu0
        %v481 = vadd.f32 0.0, %v480
        %v482 = vpop.f32.mrf.mxu0
        %483 = vmatprep.mubr.bf16.mxu0 0
        %484 = vmatmul.mubr.bf16.gmra.mxu0 %v375
        %v485 = vpop.f32.mrf.mxu0
        %v486 = vadd.f32 0.0, %v485
        %v487 = vpop.f32.mrf.mxu0
        %v488 = vpop.f32.mrf.mxu0
        %v489 = vadd.f32 0.0, %v488
        %v490 = vpop.f32.mrf.mxu0
        %491 = vmatprep.mubr.bf16.mxu0 0
        %492 = vmatmul.mubr.bf16.gmra.mxu0 %v378
        %v493 = vpop.f32.mrf.mxu0
        %v494 = vadd.f32 0.0, %v493
        %v495 = vpop.f32.mrf.mxu0
        %v496 = vpop.f32.mrf.mxu0
        %v497 = vadd.f32 0.0, %v496
        %v498 = vpop.f32.mrf.mxu0
        %499 = vmatprep.mubr.bf16.mxu0 0
        %500 = vmatmul.mubr.bf16.gmra.mxu0 %v381
        %v501 = vpop.f32.mrf.mxu0
        %v502 = vadd.f32 0.0, %v501
        %v503 = vpop.f32.mrf.mxu0
        %v504 = vpop.f32.mrf.mxu0
        %v505 = vadd.f32 0.0, %v504
        %v506 = vpop.f32.mrf.mxu0
        %507 = vmatprep.mubr.bf16.mxu0 0
        %508 = vmatmul.mubr.bf16.gmra.mxu0 %v384
        %v509 = vpop.f32.mrf.mxu0
        %v510 = vadd.f32 0.0, %v509
        %v511 = vpop.f32.mrf.mxu0
        %v512 = vpop.f32.mrf.mxu0
        %v513 = vadd.f32 0.0, %v512
        %v514 = vpop.f32.mrf.mxu0
        %515 = vmatprep.mubr.bf16.mxu0 0
        %516 = vmatmul.mubr.bf16.gmra.mxu0 %v387
        %v517 = vpop.f32.mrf.mxu0
        %v518 = vadd.f32 0.0, %v517
        %v519 = vpop.f32.mrf.mxu0
        %v520 = vpop.f32.mrf.mxu0
        %v521 = vadd.f32 0.0, %v520
        %v522 = vpop.f32.mrf.mxu0
        %523 = vmatprep.mubr.bf16.mxu0 0
        %524 = vmatmul.mubr.bf16.gmra.mxu0 %v390
        %v525 = vpop.f32.mrf.mxu0
        %v526 = vadd.f32 0.0, %v525
        %v527 = vpop.f32.mrf.mxu0
        %v528 = vpop.f32.mrf.mxu0
        %v529 = vadd.f32 0.0, %v528
        %v530 = vpop.f32.mrf.mxu0
        %531 = vmatprep.mubr.bf16.mxu0 0
        %532 = vmatmul.mubr.bf16.gmra.mxu0 %v393
        %v533 = vpop.f32.mrf.mxu0
        %v534 = vadd.f32 0.0, %v533
        %v535 = vpop.f32.mrf.mxu0
        %v536 = vpop.f32.mrf.mxu0
        %v537 = vadd.f32 0.0, %v536
        %v538 = vpop.f32.mrf.mxu0
        %539 = vmatprep.mubr.bf16.mxu0 0
        %540 = vmatmul.mubr.bf16.gmra.mxu0 %v396
        %v541 = vpop.f32.mrf.mxu0
        %v542 = vadd.f32 0.0, %v541
        %v543 = vpop.f32.mrf.mxu0
        %v544 = vpop.f32.mrf.mxu0
        %v545 = vadd.f32 0.0, %v544
        %v546 = vpop.f32.mrf.mxu0
        %547 = vmatprep.mubr.bf16.mxu0 0
        %548 = vmatmul.mubr.bf16.gmra.mxu0 %v399
        %v549 = vpop.f32.mrf.mxu0
        %v550 = vadd.f32 0.0, %v549
        %v551 = vpop.f32.mrf.mxu0
        %v552 = vpop.f32.mrf.mxu0
        %v553 = vadd.f32 0.0, %v552
        %v554 = vpop.f32.mrf.mxu0
        %555 = vmatprep.mubr.bf16.mxu0 0
        %556 = vmatmul.mubr.bf16.gmra.mxu0 %v402
        %v557 = vpop.f32.mrf.mxu0
        %v558 = vadd.f32 0.0, %v557
        %v559 = vpop.f32.mrf.mxu0
        %v560 = vpop.f32.mrf.mxu0
        %v561 = vadd.f32 0.0, %v560
        %v562 = vpop.f32.mrf.mxu0
        %563 = vmatprep.mubr.bf16.mxu0 0
        %564 = vmatmul.mubr.bf16.gmra.mxu0 %v405
        %v565 = vpop.f32.mrf.mxu0
        %v566 = vadd.f32 0.0, %v565
        %v567 = vpop.f32.mrf.mxu0
        %v568 = vpop.f32.mrf.mxu0
        %v569 = vadd.f32 0.0, %v568
        %v570 = vpop.f32.mrf.mxu0
        %571 = vmatprep.mubr.bf16.mxu0 0
        %572 = vmatmul.mubr.bf16.gmra.mxu0 %v408
        %v573 = vpop.f32.mrf.mxu0
        %v574 = vadd.f32 0.0, %v573
        %v575 = vpop.f32.mrf.mxu0
        %v576 = vpop.f32.mrf.mxu0
        %v577 = vadd.f32 0.0, %v576
        %v578 = vpop.f32.mrf.mxu0
        %579 = vmatprep.mubr.bf16.mxu0 0
        %580 = vmatmul.mubr.bf16.gmra.mxu0 %v411
        %v581 = vpop.f32.mrf.mxu0
        %v582 = vadd.f32 0.0, %v581
        %v583 = vpop.f32.mrf.mxu0
        %v584 = vpop.f32.mrf.mxu0
        %v585 = vadd.f32 0.0, %v584
        %v586 = vpop.f32.mrf.mxu0
        %587 = vmatprep.mubr.bf16.mxu0 0
        %588 = vmatmul.mubr.bf16.gmra.mxu0 %v414
        %v589 = vpop.f32.mrf.mxu0
        %v590 = vadd.f32 0.0, %v589
        %v591 = vpop.f32.mrf.mxu0
        %v592 = vpop.f32.mrf.mxu0
        %v593 = vadd.f32 0.0, %v592
        %v594 = vpop.f32.mrf.mxu0
        %595 = vmatprep.mubr.bf16.mxu0 0
        %596 = vmatmul.mubr.bf16.gmra.mxu0 %v417
        %v597 = vpop.f32.mrf.mxu0
        %v598 = vadd.f32 0.0, %v597
        %v599 = vpop.f32.mrf.mxu0
        %v600 = vpop.f32.mrf.mxu0
        %v601 = vadd.f32 0.0, %v600
        %v602 = vpop.f32.mrf.mxu0
        %603 = vdwg.mxu0
        %v604 = vld [vmem:[%s2] sm:$0x1]
        %v606 = vlaneseq
        %v607 = vshrl.u32 %v606, 7
        %v608 = vsub.s32 0, %v607
        %v609 = vrot.slane %v604, %v608
        %v611 = vmul.f32 %v454, %v609
        %v612 = vmul.f32 %v457, %v609
        %v613 = vmul.f32 %v462, %v609
        %v614 = vmul.f32 %v465, %v609
        %v615 = vmul.f32 %v470, %v609
        %v616 = vmul.f32 %v473, %v609
        %v617 = vmul.f32 %v478, %v609
        %v618 = vmul.f32 %v481, %v609
        %v619 = vmul.f32 %v486, %v609
        %v620 = vmul.f32 %v489, %v609
        %v621 = vmul.f32 %v494, %v609
        %v622 = vmul.f32 %v497, %v609
        %v623 = vmul.f32 %v502, %v609
        %v624 = vmul.f32 %v505, %v609
        %v625 = vmul.f32 %v510, %v609
        %v626 = vmul.f32 %v513, %v609
        %v627 = vmul.f32 %v518, %v609
        %v628 = vmul.f32 %v521, %v609
        %v629 = vmul.f32 %v526, %v609
        %v630 = vmul.f32 %v529, %v609
        %v631 = vmul.f32 %v534, %v609
        %v632 = vmul.f32 %v537, %v609
        %v633 = vmul.f32 %v542, %v609
        %v634 = vmul.f32 %v545, %v609
        %v635 = vmul.f32 %v550, %v609
        %v636 = vmul.f32 %v553, %v609
        %v637 = vmul.f32 %v558, %v609
        %v638 = vmul.f32 %v561, %v609
        %v639 = vmul.f32 %v566, %v609
        %v640 = vmul.f32 %v569, %v609
        %v641 = vmul.f32 %v574, %v609
        %v642 = vmul.f32 %v577, %v609
        %v643 = vmul.f32 %v582, %v609
        %v644 = vmul.f32 %v585, %v609
        %v645 = vmul.f32 %v590, %v609
        %v646 = vmul.f32 %v593, %v609
        %v647 = vmul.f32 %v598, %v609
        %v648 = vmul.f32 %v601, %v609
        %v649 = vld [vmem:[%s3] sm:$0x1]
        %v651 = vlaneseq
        %v652 = vshrl.u32 %v651, 7
        %v653 = vsub.s32 0, %v652
        %v654 = vrot.slane %v649, %v653
        %v656 = vadd.f32 %v611, %v654
        %v657 = vadd.f32 %v612, %v654
        %v658 = vadd.f32 %v613, %v654
        %v659 = vadd.f32 %v614, %v654
        %v660 = vadd.f32 %v615, %v654
        %v661 = vadd.f32 %v616, %v654
        %v662 = vadd.f32 %v617, %v654
        %v663 = vadd.f32 %v618, %v654
        %v664 = vadd.f32 %v619, %v654
        %v665 = vadd.f32 %v620, %v654
        %v666 = vadd.f32 %v621, %v654
        %v667 = vadd.f32 %v622, %v654
        %v668 = vadd.f32 %v623, %v654
        %v669 = vadd.f32 %v624, %v654
        %v670 = vadd.f32 %v625, %v654
        %v671 = vadd.f32 %v626, %v654
        %v672 = vadd.f32 %v627, %v654
        %v673 = vadd.f32 %v628, %v654
        %v674 = vadd.f32 %v629, %v654
        %v675 = vadd.f32 %v630, %v654
        %v676 = vadd.f32 %v631, %v654
        %v677 = vadd.f32 %v632, %v654
        %v678 = vadd.f32 %v633, %v654
        %v679 = vadd.f32 %v634, %v654
        %v680 = vadd.f32 %v635, %v654
        %v681 = vadd.f32 %v636, %v654
        %v682 = vadd.f32 %v637, %v654
        %v683 = vadd.f32 %v638, %v654
        %v684 = vadd.f32 %v639, %v654
        %v685 = vadd.f32 %v640, %v654
        %v686 = vadd.f32 %v641, %v654
        %v687 = vadd.f32 %v642, %v654
        %v688 = vadd.f32 %v643, %v654
        %v689 = vadd.f32 %v644, %v654
        %v690 = vadd.f32 %v645, %v654
        %v691 = vadd.f32 %v646, %v654
        %v692 = vadd.f32 %v647, %v654
        %v693 = vadd.f32 %v648, %v654
        %v694 = vmax.f32 %v656, 0.0
        %v695 = vmax.f32 %v657, 0.0
        %v696 = vmax.f32 %v658, 0.0
        %v697 = vmax.f32 %v659, 0.0
        %v698 = vmax.f32 %v660, 0.0
        %v699 = vmax.f32 %v661, 0.0
        %v700 = vmax.f32 %v662, 0.0
        %v701 = vmax.f32 %v663, 0.0
        %v702 = vmax.f32 %v664, 0.0
        %v703 = vmax.f32 %v665, 0.0
        %v704 = vmax.f32 %v666, 0.0
        %v705 = vmax.f32 %v667, 0.0
        %v706 = vmax.f32 %v668, 0.0
        %v707 = vmax.f32 %v669, 0.0
        %v708 = vmax.f32 %v670, 0.0
        %v709 = vmax.f32 %v671, 0.0
        %v710 = vmax.f32 %v672, 0.0
        %v711 = vmax.f32 %v673, 0.0
        %v712 = vmax.f32 %v674, 0.0
        %v713 = vmax.f32 %v675, 0.0
        %v714 = vmax.f32 %v676, 0.0
        %v715 = vmax.f32 %v677, 0.0
        %v716 = vmax.f32 %v678, 0.0
        %v717 = vmax.f32 %v679, 0.0
        %v718 = vmax.f32 %v680, 0.0
        %v719 = vmax.f32 %v681, 0.0
        %v720 = vmax.f32 %v682, 0.0
        %v721 = vmax.f32 %v683, 0.0
        %v722 = vmax.f32 %v684, 0.0
        %v723 = vmax.f32 %v685, 0.0
        %v724 = vmax.f32 %v686, 0.0
        %v725 = vmax.f32 %v687, 0.0
        %v726 = vmax.f32 %v688, 0.0
        %v727 = vmax.f32 %v689, 0.0
        %v728 = vmax.f32 %v690, 0.0
        %v729 = vmax.f32 %v691, 0.0
        %v730 = vmax.f32 %v692, 0.0
        %v731 = vmax.f32 %v693, 0.0
        %v732 = vpack.c.bf16 %v695, %v694
        %v733 = vpack.c.bf16 %v697, %v696
        %v734 = vpack.c.bf16 %v699, %v698
        %v735 = vpack.c.bf16 %v701, %v700
        %v736 = vpack.c.bf16 %v703, %v702
        %v737 = vpack.c.bf16 %v705, %v704
        %v738 = vpack.c.bf16 %v707, %v706
        %v739 = vpack.c.bf16 %v709, %v708
        %v740 = vpack.c.bf16 %v711, %v710
        %v741 = vpack.c.bf16 %v713, %v712
        %v742 = vpack.c.bf16 %v715, %v714
        %v743 = vpack.c.bf16 %v717, %v716
        %v744 = vpack.c.bf16 %v719, %v718
        %v745 = vpack.c.bf16 %v721, %v720
        %v746 = vpack.c.bf16 %v723, %v722
        %v747 = vpack.c.bf16 %v725, %v724
        %v748 = vpack.c.bf16 %v727, %v726
        %v749 = vpack.c.bf16 %v729, %v728
        %v750 = vpack.c.bf16 %v731, %v730
        %v770 = vunpack.c.l.b16 %v732
        %v771 = vunpack.c.h.b16 %v732
        %v772 = vunpack.c.l.b16 %v733
        %v773 = vunpack.c.h.b16 %v733
        %v774 = vunpack.c.l.b16 %v734
        %v775 = vunpack.c.h.b16 %v734
        %v776 = vunpack.c.l.b16 %v735
        %v777 = vunpack.c.h.b16 %v735
        %v778 = vunpack.c.l.b16 %v736
        %v779 = vunpack.c.h.b16 %v736
        %v780 = vunpack.c.l.b16 %v737
        %v781 = vunpack.c.h.b16 %v737
        %v782 = vunpack.c.l.b16 %v738
        %v783 = vunpack.c.h.b16 %v738
        %v784 = vunpack.c.l.b16 %v739
        %v785 = vunpack.c.h.b16 %v739
        %v786 = vunpack.c.l.b16 %v740
        %v787 = vunpack.c.h.b16 %v740
        %v788 = vunpack.c.l.b16 %v741
        %v789 = vunpack.c.h.b16 %v741
        %v790 = vunpack.c.l.b16 %v742
        %v791 = vunpack.c.h.b16 %v742
        %v792 = vunpack.c.l.b16 %v743
        %v793 = vunpack.c.h.b16 %v743
        %v794 = vunpack.c.l.b16 %v744
        %v795 = vunpack.c.h.b16 %v744
        %v796 = vunpack.c.l.b16 %v745
        %v797 = vunpack.c.h.b16 %v745
        %v798 = vunpack.c.l.b16 %v746
        %v799 = vunpack.c.h.b16 %v746
        %v800 = vunpack.c.l.b16 %v747
        %v801 = vunpack.c.h.b16 %v747
        %v802 = vunpack.c.l.b16 %v748
        %v803 = vunpack.c.h.b16 %v748
        %v804 = vunpack.c.l.b16 %v749
        %v805 = vunpack.c.h.b16 %v749
        %v806 = vunpack.c.l.b16 %v750
        %v807 = vunpack.c.h.b16 %v750
        %v808 = vpack.c.b16 %v770, %v770
        %v809 = vpack.c.b16 %v771, %v771
        %v810 = vpack.c.b16 %v772, %v772
        %v811 = vpack.c.b16 %v773, %v773
        %v812 = vpack.c.b16 %v774, %v774
        %v813 = vpack.c.b16 %v775, %v775
        %v814 = vpack.c.b16 %v776, %v776
        %v815 = vpack.c.b16 %v777, %v777
        %v816 = vpack.c.b16 %v778, %v778
        %v817 = vpack.c.b16 %v779, %v779
        %v818 = vpack.c.b16 %v780, %v780
        %v819 = vpack.c.b16 %v781, %v781
        %v820 = vpack.c.b16 %v782, %v782
        %v821 = vpack.c.b16 %v783, %v783
        %v822 = vpack.c.b16 %v784, %v784
        %v823 = vpack.c.b16 %v785, %v785
        %v824 = vpack.c.b16 %v786, %v786
        %v825 = vpack.c.b16 %v787, %v787
        %v826 = vpack.c.b16 %v788, %v788
        %v827 = vpack.c.b16 %v789, %v789
        %v828 = vpack.c.b16 %v790, %v790
        %v829 = vpack.c.b16 %v791, %v791
        %v830 = vpack.c.b16 %v792, %v792
        %v831 = vpack.c.b16 %v793, %v793
        %v832 = vpack.c.b16 %v794, %v794
        %v833 = vpack.c.b16 %v795, %v795
        %v834 = vpack.c.b16 %v796, %v796
        %v835 = vpack.c.b16 %v797, %v797
        %v836 = vpack.c.b16 %v798, %v798
        %v837 = vpack.c.b16 %v799, %v799
        %v838 = vpack.c.b16 %v800, %v800
        %v839 = vpack.c.b16 %v801, %v801
        %v840 = vpack.c.b16 %v802, %v802
        %v841 = vpack.c.b16 %v803, %v803
        %v842 = vpack.c.b16 %v804, %v804
        %v843 = vpack.c.b16 %v805, %v805
        %v844 = vpack.c.b16 %v806, %v806
        %v845 = vpack.c.b16 %v807, %v807
        %vm884 = vcmask 125952
        %885 = vst.msk [vmem:[%s199] sm:$0xf] %vm884, %v808
        %886 = vst.msk [vmem:[%s199 + $0x4] sm:$0xf] %vm884, %v809
        %887 = vst.msk [vmem:[%s199 + $0x8] sm:$0xf] %vm884, %v810
        %888 = vst.msk [vmem:[%s199 + $0xc] sm:$0xf] %vm884, %v811
        %889 = vst.msk [vmem:[%s199 + $0x10] sm:$0xf] %vm884, %v812
        %890 = vst.msk [vmem:[%s199 + $0x14] sm:$0xf] %vm884, %v813
        %891 = vst.msk [vmem:[%s199 + $0x18] sm:$0xf] %vm884, %v814
        %892 = vst.msk [vmem:[%s199 + $0x1c] sm:$0xf] %vm884, %v815
        %893 = vst.msk [vmem:[%s199 + $0x20] sm:$0xf] %vm884, %v816
        %894 = vst.msk [vmem:[%s199 + $0x24] sm:$0xf] %vm884, %v817
        %895 = vst.msk [vmem:[%s199 + $0x28] sm:$0xf] %vm884, %v818
        %896 = vst.msk [vmem:[%s199 + $0x2c] sm:$0xf] %vm884, %v819
        %897 = vst.msk [vmem:[%s199 + $0x30] sm:$0xf] %vm884, %v820
        %898 = vst.msk [vmem:[%s199 + $0x34] sm:$0xf] %vm884, %v821
        %899 = vst.msk [vmem:[%s199 + $0x38] sm:$0xf] %vm884, %v822
        %900 = vst.msk [vmem:[%s199 + $0x3c] sm:$0xf] %vm884, %v823
        %901 = vst.msk [vmem:[%s199 + $0x40] sm:$0xf] %vm884, %v824
        %902 = vst.msk [vmem:[%s199 + $0x44] sm:$0xf] %vm884, %v825
        %903 = vst.msk [vmem:[%s199 + $0x48] sm:$0xf] %vm884, %v826
        %904 = vst.msk [vmem:[%s199 + $0x4c] sm:$0xf] %vm884, %v827
        %905 = vst.msk [vmem:[%s199 + $0x50] sm:$0xf] %vm884, %v828
        %906 = vst.msk [vmem:[%s199 + $0x54] sm:$0xf] %vm884, %v829
        %907 = vst.msk [vmem:[%s199 + $0x58] sm:$0xf] %vm884, %v830
        %908 = vst.msk [vmem:[%s199 + $0x5c] sm:$0xf] %vm884, %v831
        %909 = vst.msk [vmem:[%s199 + $0x60] sm:$0xf] %vm884, %v832
        %910 = vst.msk [vmem:[%s199 + $0x64] sm:$0xf] %vm884, %v833
        %911 = vst.msk [vmem:[%s199 + $0x68] sm:$0xf] %vm884, %v834
        %912 = vst.msk [vmem:[%s199 + $0x6c] sm:$0xf] %vm884, %v835
        %913 = vst.msk [vmem:[%s199 + $0x70] sm:$0xf] %vm884, %v836
        %914 = vst.msk [vmem:[%s199 + $0x74] sm:$0xf] %vm884, %v837
        %915 = vst.msk [vmem:[%s199 + $0x78] sm:$0xf] %vm884, %v838
        %916 = vst.msk [vmem:[%s199 + $0x7c] sm:$0xf] %vm884, %v839
        %917 = vst.msk [vmem:[%s199 + $0x80] sm:$0xf] %vm884, %v840
        %918 = vst.msk [vmem:[%s199 + $0x84] sm:$0xf] %vm884, %v841
        %919 = vst.msk [vmem:[%s199 + $0x88] sm:$0xf] %vm884, %v842
        %920 = vst.msk [vmem:[%s199 + $0x8c] sm:$0xf] %vm884, %v843
        %921 = vst.msk [vmem:[%s199 + $0x90] sm:$0xf] %vm884, %v844
        %922 = vst.msk [vmem:[%s199 + $0x94] sm:$0xf] %vm884, %v845
        %s923 = sand.u32 %s112, 1
        %s924 = sand.u32 %s112, 1
        %s925 = smul.addr %s924, 152
        %s926 = scalar_lea.vmem [#allocation2], %s925
        // Predicated region
        $region37: #{adafocus_forward.10} parent=35 // pred_check
          %p927 = pneg %p122
        $region38: #{adafocus_forward.10} parent=35 // pred_check_branch
          %929 = sbr.rel (%p927) target = $region40
        $region39: #{adafocus_forward.10} parent=35 // pred_region
          %s930 = smul.u32 38, %s15
          %s931 = ssub.s32 74, %s930
          %p932 = scmp.lt.s32.totalorder %s931, 38
          %s933 = scalar_select %p932, %s931, 38
          %s934 = smul.u32 64, %s933
          %p935 = scmp.ne.s32.totalorder 0, %s934
          %s936 = smul.addr %s930, 4
          %s937 = scalar_lea.vmem %s4, %s936
          // Predicated region
          $region41: #{adafocus_forward.10} parent=39 // pred_check
            %p938 = pneg %p935
          $region42: #{adafocus_forward.10} parent=39 // pred_check_branch
            %940 = sbr.rel (%p938) target = $region44
          $region43: #{adafocus_forward.10} parent=39 // pred_region
            // Predicated region
            $region45: #{adafocus_forward.10} parent=43 // pred_check
              _
            $region46: #{adafocus_forward.10} parent=43 // pred_check_branch
              %942 = sbr.rel target = $region48
            $region47: #{adafocus_forward.10} parent=43 // pred_region
              // Predicated region
              $region67: #{adafocus_forward.10} parent=47 // pred_check
                _
              $region68: #{adafocus_forward.10} parent=47 // pred_check_branch
                %1067 = sbr.rel (0) target = $region70
              $region69: #{adafocus_forward.10} parent=47 // pred_region
                %s1069 = ssub.s32 16, 1
                %s1070 = sdiv.u32.pop %s933, 38
                %s1071 = srem.u32.pop %s933, 38
                // While loop
                $region71: #{adafocus_forward.10} parent=69 // loop_pre_header
                  _
                $region72: #{adafocus_forward.10} parent=69 // loop_header
                  %s1073 = sphi 0, %s1075
                  %p1074 = scmp.ge.s32.totalorder %s1073, %s1070
                  %s1078 = sphi 0, %s1159
                  %s1079 = sphi %s926, %s1162
                  %s1080 = sphi %s937, %s1163
                $region73: #{adafocus_forward.10} parent=69 // loop_header_branch
                  %1077 = sbr.rel (%p1074) target = $region77
                $region74: #{adafocus_forward.10} parent=69 // loop_body
                  %v1081 = vld [vmem:[%s1079] sm:%s1069]
                  %1082 = vst [vmem:[%s1080] sm:%s1069] %v1081
                  %v1083 = vld [vmem:[%s1079 + $0x4] sm:%s1069]
                  %1084 = vst [vmem:[%s1080 + $0x4] sm:%s1069] %v1083
                  %v1085 = vld [vmem:[%s1079 + $0x8] sm:%s1069]
                  %1086 = vst [vmem:[%s1080 + $0x8] sm:%s1069] %v1085
                  %v1087 = vld [vmem:[%s1079 + $0xc] sm:%s1069]
                  %1088 = vst [vmem:[%s1080 + $0xc] sm:%s1069] %v1087
                  %v1089 = vld [vmem:[%s1079 + $0x10] sm:%s1069]
                  %1090 = vst [vmem:[%s1080 + $0x10] sm:%s1069] %v1089
                  %v1091 = vld [vmem:[%s1079 + $0x14] sm:%s1069]
                  %1092 = vst [vmem:[%s1080 + $0x14] sm:%s1069] %v1091
                  %v1093 = vld [vmem:[%s1079 + $0x18] sm:%s1069]
                  %1094 = vst [vmem:[%s1080 + $0x18] sm:%s1069] %v1093
                  %v1095 = vld [vmem:[%s1079 + $0x1c] sm:%s1069]
                  %1096 = vst [vmem:[%s1080 + $0x1c] sm:%s1069] %v1095
                  %v1097 = vld [vmem:[%s1079 + $0x20] sm:%s1069]
                  %1098 = vst [vmem:[%s1080 + $0x20] sm:%s1069] %v1097
                  %v1099 = vld [vmem:[%s1079 + $0x24] sm:%s1069]
                  %1100 = vst [vmem:[%s1080 + $0x24] sm:%s1069] %v1099
                  %v1101 = vld [vmem:[%s1079 + $0x28] sm:%s1069]
                  %1102 = vst [vmem:[%s1080 + $0x28] sm:%s1069] %v1101
                  %v1103 = vld [vmem:[%s1079 + $0x2c] sm:%s1069]
                  %1104 = vst [vmem:[%s1080 + $0x2c] sm:%s1069] %v1103
                  %v1105 = vld [vmem:[%s1079 + $0x30] sm:%s1069]
                  %1106 = vst [vmem:[%s1080 + $0x30] sm:%s1069] %v1105
                  %v1107 = vld [vmem:[%s1079 + $0x34] sm:%s1069]
                  %1108 = vst [vmem:[%s1080 + $0x34] sm:%s1069] %v1107
                  %v1109 = vld [vmem:[%s1079 + $0x38] sm:%s1069]
                  %1110 = vst [vmem:[%s1080 + $0x38] sm:%s1069] %v1109
                  %v1111 = vld [vmem:[%s1079 + $0x3c] sm:%s1069]
                  %1112 = vst [vmem:[%s1080 + $0x3c] sm:%s1069] %v1111
                  %v1113 = vld [vmem:[%s1079 + $0x40] sm:%s1069]
                  %1114 = vst [vmem:[%s1080 + $0x40] sm:%s1069] %v1113
                  %v1115 = vld [vmem:[%s1079 + $0x44] sm:%s1069]
                  %1116 = vst [vmem:[%s1080 + $0x44] sm:%s1069] %v1115
                  %v1117 = vld [vmem:[%s1079 + $0x48] sm:%s1069]
                  %1118 = vst [vmem:[%s1080 + $0x48] sm:%s1069] %v1117
                  %v1119 = vld [vmem:[%s1079 + $0x4c] sm:%s1069]
                  %1120 = vst [vmem:[%s1080 + $0x4c] sm:%s1069] %v1119
                  %v1121 = vld [vmem:[%s1079 + $0x50] sm:%s1069]
                  %1122 = vst [vmem:[%s1080 + $0x50] sm:%s1069] %v1121
                  %v1123 = vld [vmem:[%s1079 + $0x54] sm:%s1069]
                  %1124 = vst [vmem:[%s1080 + $0x54] sm:%s1069] %v1123
                  %v1125 = vld [vmem:[%s1079 + $0x58] sm:%s1069]
                  %1126 = vst [vmem:[%s1080 + $0x58] sm:%s1069] %v1125
                  %v1127 = vld [vmem:[%s1079 + $0x5c] sm:%s1069]
                  %1128 = vst [vmem:[%s1080 + $0x5c] sm:%s1069] %v1127
                  %v1129 = vld [vmem:[%s1079 + $0x60] sm:%s1069]
                  %1130 = vst [vmem:[%s1080 + $0x60] sm:%s1069] %v1129
                  %v1131 = vld [vmem:[%s1079 + $0x64] sm:%s1069]
                  %1132 = vst [vmem:[%s1080 + $0x64] sm:%s1069] %v1131
                  %v1133 = vld [vmem:[%s1079 + $0x68] sm:%s1069]
                  %1134 = vst [vmem:[%s1080 + $0x68] sm:%s1069] %v1133
                  %v1135 = vld [vmem:[%s1079 + $0x6c] sm:%s1069]
                  %1136 = vst [vmem:[%s1080 + $0x6c] sm:%s1069] %v1135
                  %v1137 = vld [vmem:[%s1079 + $0x70] sm:%s1069]
                  %1138 = vst [vmem:[%s1080 + $0x70] sm:%s1069] %v1137
                  %v1139 = vld [vmem:[%s1079 + $0x74] sm:%s1069]
                  %1140 = vst [vmem:[%s1080 + $0x74] sm:%s1069] %v1139
                  %v1141 = vld [vmem:[%s1079 + $0x78] sm:%s1069]
                  %1142 = vst [vmem:[%s1080 + $0x78] sm:%s1069] %v1141
                  %v1143 = vld [vmem:[%s1079 + $0x7c] sm:%s1069]
                  %1144 = vst [vmem:[%s1080 + $0x7c] sm:%s1069] %v1143
                  %v1145 = vld [vmem:[%s1079 + $0x80] sm:%s1069]
                  %1146 = vst [vmem:[%s1080 + $0x80] sm:%s1069] %v1145
                  %v1147 = vld [vmem:[%s1079 + $0x84] sm:%s1069]
                  %1148 = vst [vmem:[%s1080 + $0x84] sm:%s1069] %v1147
                  %v1149 = vld [vmem:[%s1079 + $0x88] sm:%s1069]
                  %1150 = vst [vmem:[%s1080 + $0x88] sm:%s1069] %v1149
                  %v1151 = vld [vmem:[%s1079 + $0x8c] sm:%s1069]
                  %1152 = vst [vmem:[%s1080 + $0x8c] sm:%s1069] %v1151
                  %v1153 = vld [vmem:[%s1079 + $0x90] sm:%s1069]
                  %1154 = vst [vmem:[%s1080 + $0x90] sm:%s1069] %v1153
                  %v1155 = vld [vmem:[%s1079 + $0x94] sm:%s1069]
                  %1156 = vst [vmem:[%s1080 + $0x94] sm:%s1069] %v1155
                  %s1157 = sadd.s32 1, %s1078
                  %p1158 = scmp.ge.s32.totalorder %s1157, %s1070
                  %s1159 = scalar_select %p1158, 0, %s1157
                  %s1160 = smul.u32 %s1159, 152
                  %s1161 = smul.u32 %s1159, 152
                  %s1162 = scalar_lea.vmem %s926, %s1160 [#allocation2]
                  %s1163 = scalar_lea.vmem %s937, %s1161
                $region75: #{adafocus_forward.10} parent=69 // loop_footer
                  %s1075 = sadd.s32 %s1073, 1
                $region76: #{adafocus_forward.10} parent=69 // loop_footer_branch
                  %1072 = sbr.rel target = $region72
                $region77: #{adafocus_forward.10} parent=69 // loop_exit
                  _
                %s1164 = sdiv.u32.pop %s933, 38
                %s1165 = srem.u32.pop %s933, 38
                %s1166 = smul.u32 %s1164, 38
                %s1167 = smul.u32 4, %s1166
                %s1168 = scalar_lea.vmem %s926, %s1167 [#allocation2]
                %s1169 = smul.u32 4, %s1166
                %s1170 = scalar_lea.vmem %s937, %s1169
                // While loop
                $region78: #{adafocus_forward.10} parent=69 // loop_pre_header
                  _
                $region79: #{adafocus_forward.10} parent=69 // loop_header
                  %s1172 = sphi 0, %s1174
                  %p1173 = scmp.ge.s32.totalorder %s1172, %s1165
                  %s1177 = sphi 0, %s1184
                  %s1178 = sphi %s1168, %s1187
                  %s1179 = sphi %s1170, %s1188
                $region80: #{adafocus_forward.10} parent=69 // loop_header_branch
                  %1176 = sbr.rel (%p1173) target = $region84
                $region81: #{adafocus_forward.10} parent=69 // loop_body
                  %v1180 = vld [vmem:[%s1178] sm:%s1069]
                  %1181 = vst [vmem:[%s1179] sm:%s1069] %v1180
                  %s1182 = sadd.s32 1, %s1177
                  %p1183 = scmp.ge.s32.totalorder %s1182, %s1165
                  %s1184 = scalar_select %p1183, 0, %s1182
                  %s1185 = smul.u32 %s1184, 4
                  %s1186 = smul.u32 %s1184, 4
                  %s1187 = scalar_lea.vmem %s1168, %s1185 [#allocation2]
                  %s1188 = scalar_lea.vmem %s1170, %s1186
                $region82: #{adafocus_forward.10} parent=69 // loop_footer
                  %s1174 = sadd.s32 %s1172, 1
                $region83: #{adafocus_forward.10} parent=69 // loop_footer_branch
                  %1171 = sbr.rel target = $region79
                $region84: #{adafocus_forward.10} parent=69 // loop_exit
                  _
              $region70: #{adafocus_forward.10} parent=47 // pred_fallthru
                _
            $region48: #{adafocus_forward.10} parent=43 // pred_fallthru
              _
            // Predicated region
            $region49: #{adafocus_forward.10} parent=43 // pred_check
              _
            $region50: #{adafocus_forward.10} parent=43 // pred_check_branch
              %944 = sbr.rel (0) target = $region52
            $region51: #{adafocus_forward.10} parent=43 // pred_region
              %s946 = ssub.s32 16, 1
              %s947 = sdiv.u32.pop %s933, 38
              %s948 = srem.u32.pop %s933, 38
              // While loop
              $region53: #{adafocus_forward.10} parent=51 // loop_pre_header
                _
              $region54: #{adafocus_forward.10} parent=51 // loop_header
                %s950 = sphi 0, %s952
                %p951 = scmp.ge.s32.totalorder %s950, %s947
                %s955 = sphi 0, %s1036
                %s956 = sphi %s926, %s1039
                %s957 = sphi %s937, %s1040
              $region55: #{adafocus_forward.10} parent=51 // loop_header_branch
                %954 = sbr.rel (%p951) target = $region59
              $region56: #{adafocus_forward.10} parent=51 // loop_body
                %v958 = vld [vmem:[%s956] sm:%s946]
                %959 = vst [vmem:[%s957] sm:%s946] %v958
                %v960 = vld [vmem:[%s956 + $0x4] sm:%s946]
                %961 = vst [vmem:[%s957 + $0x4] sm:%s946] %v960
                %v962 = vld [vmem:[%s956 + $0x8] sm:%s946]
                %963 = vst [vmem:[%s957 + $0x8] sm:%s946] %v962
                %v964 = vld [vmem:[%s956 + $0xc] sm:%s946]
                %965 = vst [vmem:[%s957 + $0xc] sm:%s946] %v964
                %v966 = vld [vmem:[%s956 + $0x10] sm:%s946]
                %967 = vst [vmem:[%s957 + $0x10] sm:%s946] %v966
                %v968 = vld [vmem:[%s956 + $0x14] sm:%s946]
                %969 = vst [vmem:[%s957 + $0x14] sm:%s946] %v968
                %v970 = vld [vmem:[%s956 + $0x18] sm:%s946]
                %971 = vst [vmem:[%s957 + $0x18] sm:%s946] %v970
                %v972 = vld [vmem:[%s956 + $0x1c] sm:%s946]
                %973 = vst [vmem:[%s957 + $0x1c] sm:%s946] %v972
                %v974 = vld [vmem:[%s956 + $0x20] sm:%s946]
                %975 = vst [vmem:[%s957 + $0x20] sm:%s946] %v974
                %v976 = vld [vmem:[%s956 + $0x24] sm:%s946]
                %977 = vst [vmem:[%s957 + $0x24] sm:%s946] %v976
                %v978 = vld [vmem:[%s956 + $0x28] sm:%s946]
                %979 = vst [vmem:[%s957 + $0x28] sm:%s946] %v978
                %v980 = vld [vmem:[%s956 + $0x2c] sm:%s946]
                %981 = vst [vmem:[%s957 + $0x2c] sm:%s946] %v980
                %v982 = vld [vmem:[%s956 + $0x30] sm:%s946]
                %983 = vst [vmem:[%s957 + $0x30] sm:%s946] %v982
                %v984 = vld [vmem:[%s956 + $0x34] sm:%s946]
                %985 = vst [vmem:[%s957 + $0x34] sm:%s946] %v984
                %v986 = vld [vmem:[%s956 + $0x38] sm:%s946]
                %987 = vst [vmem:[%s957 + $0x38] sm:%s946] %v986
                %v988 = vld [vmem:[%s956 + $0x3c] sm:%s946]
                %989 = vst [vmem:[%s957 + $0x3c] sm:%s946] %v988
                %v990 = vld [vmem:[%s956 + $0x40] sm:%s946]
                %991 = vst [vmem:[%s957 + $0x40] sm:%s946] %v990
                %v992 = vld [vmem:[%s956 + $0x44] sm:%s946]
                %993 = vst [vmem:[%s957 + $0x44] sm:%s946] %v992
                %v994 = vld [vmem:[%s956 + $0x48] sm:%s946]
                %995 = vst [vmem:[%s957 + $0x48] sm:%s946] %v994
                %v996 = vld [vmem:[%s956 + $0x4c] sm:%s946]
                %997 = vst [vmem:[%s957 + $0x4c] sm:%s946] %v996
                %v998 = vld [vmem:[%s956 + $0x50] sm:%s946]
                %999 = vst [vmem:[%s957 + $0x50] sm:%s946] %v998
                %v1000 = vld [vmem:[%s956 + $0x54] sm:%s946]
                %1001 = vst [vmem:[%s957 + $0x54] sm:%s946] %v1000
                %v1002 = vld [vmem:[%s956 + $0x58] sm:%s946]
                %1003 = vst [vmem:[%s957 + $0x58] sm:%s946] %v1002
                %v1004 = vld [vmem:[%s956 + $0x5c] sm:%s946]
                %1005 = vst [vmem:[%s957 + $0x5c] sm:%s946] %v1004
                %v1006 = vld [vmem:[%s956 + $0x60] sm:%s946]
                %1007 = vst [vmem:[%s957 + $0x60] sm:%s946] %v1006
                %v1008 = vld [vmem:[%s956 + $0x64] sm:%s946]
                %1009 = vst [vmem:[%s957 + $0x64] sm:%s946] %v1008
                %v1010 = vld [vmem:[%s956 + $0x68] sm:%s946]
                %1011 = vst [vmem:[%s957 + $0x68] sm:%s946] %v1010
                %v1012 = vld [vmem:[%s956 + $0x6c] sm:%s946]
                %1013 = vst [vmem:[%s957 + $0x6c] sm:%s946] %v1012
                %v1014 = vld [vmem:[%s956 + $0x70] sm:%s946]
                %1015 = vst [vmem:[%s957 + $0x70] sm:%s946] %v1014
                %v1016 = vld [vmem:[%s956 + $0x74] sm:%s946]
                %1017 = vst [vmem:[%s957 + $0x74] sm:%s946] %v1016
                %v1018 = vld [vmem:[%s956 + $0x78] sm:%s946]
                %1019 = vst [vmem:[%s957 + $0x78] sm:%s946] %v1018
                %v1020 = vld [vmem:[%s956 + $0x7c] sm:%s946]
                %1021 = vst [vmem:[%s957 + $0x7c] sm:%s946] %v1020
                %v1022 = vld [vmem:[%s956 + $0x80] sm:%s946]
                %1023 = vst [vmem:[%s957 + $0x80] sm:%s946] %v1022
                %v1024 = vld [vmem:[%s956 + $0x84] sm:%s946]
                %1025 = vst [vmem:[%s957 + $0x84] sm:%s946] %v1024
                %v1026 = vld [vmem:[%s956 + $0x88] sm:%s946]
                %1027 = vst [vmem:[%s957 + $0x88] sm:%s946] %v1026
                %v1028 = vld [vmem:[%s956 + $0x8c] sm:%s946]
                %1029 = vst [vmem:[%s957 + $0x8c] sm:%s946] %v1028
                %v1030 = vld [vmem:[%s956 + $0x90] sm:%s946]
                %1031 = vst [vmem:[%s957 + $0x90] sm:%s946] %v1030
                %v1032 = vld [vmem:[%s956 + $0x94] sm:%s946]
                %1033 = vst [vmem:[%s957 + $0x94] sm:%s946] %v1032
                %s1034 = sadd.s32 1, %s955
                %p1035 = scmp.ge.s32.totalorder %s1034, %s947
                %s1036 = scalar_select %p1035, 0, %s1034
                %s1037 = smul.u32 %s1036, 152
                %s1038 = smul.u32 %s1036, 152
                %s1039 = scalar_lea.vmem %s926, %s1037 [#allocation2]
                %s1040 = scalar_lea.vmem %s937, %s1038
              $region57: #{adafocus_forward.10} parent=51 // loop_footer
                %s952 = sadd.s32 %s950, 1
              $region58: #{adafocus_forward.10} parent=51 // loop_footer_branch
                %949 = sbr.rel target = $region54
              $region59: #{adafocus_forward.10} parent=51 // loop_exit
                _
              %s1041 = sdiv.u32.pop %s933, 38
              %s1042 = srem.u32.pop %s933, 38
              %s1043 = smul.u32 %s1041, 38
              %s1044 = smul.u32 4, %s1043
              %s1045 = scalar_lea.vmem %s926, %s1044 [#allocation2]
              %s1046 = smul.u32 4, %s1043
              %s1047 = scalar_lea.vmem %s937, %s1046
              // While loop
              $region60: #{adafocus_forward.10} parent=51 // loop_pre_header
                _
              $region61: #{adafocus_forward.10} parent=51 // loop_header
                %s1049 = sphi 0, %s1051
                %p1050 = scmp.ge.s32.totalorder %s1049, %s1042
                %s1054 = sphi 0, %s1061
                %s1055 = sphi %s1045, %s1064
                %s1056 = sphi %s1047, %s1065
              $region62: #{adafocus_forward.10} parent=51 // loop_header_branch
                %1053 = sbr.rel (%p1050) target = $region66
              $region63: #{adafocus_forward.10} parent=51 // loop_body
                %v1057 = vld [vmem:[%s1055] sm:%s946]
                %1058 = vst [vmem:[%s1056] sm:%s946] %v1057
                %s1059 = sadd.s32 1, %s1054
                %p1060 = scmp.ge.s32.totalorder %s1059, %s1042
                %s1061 = scalar_select %p1060, 0, %s1059
                %s1062 = smul.u32 %s1061, 4
                %s1063 = smul.u32 %s1061, 4
                %s1064 = scalar_lea.vmem %s1045, %s1062 [#allocation2]
                %s1065 = scalar_lea.vmem %s1047, %s1063
              $region64: #{adafocus_forward.10} parent=51 // loop_footer
                %s1051 = sadd.s32 %s1049, 1
              $region65: #{adafocus_forward.10} parent=51 // loop_footer_branch
                %1048 = sbr.rel target = $region61
              $region66: #{adafocus_forward.10} parent=51 // loop_exit
                _
            $region52: #{adafocus_forward.10} parent=43 // pred_fallthru
              _
          $region44: #{adafocus_forward.10} parent=39 // pred_fallthru
            _
          %1189 = vnop
        $region40: #{adafocus_forward.10} parent=35 // pred_fallthru
          _
      $region36: #{adafocus_forward.10} parent=5 // pred_fallthru
        _
      %p1190 = scmp.le.s32.totalorder 2, %s10
      // Predicated region
      $region85: #{adafocus_forward.10} parent=5 // pred_check
        %p1191 = pneg %p1190
      $region86: #{adafocus_forward.10} parent=5 // pred_check_branch
        %1193 = sbr.rel (%p1191) target = $region88
      $region87: #{adafocus_forward.10} parent=5 // pred_region
        %s1194 = ssub.s32 %s10, 2
        // Predicated region
        $region89: #{adafocus_forward.10} parent=87 // pred_check
          %p1195 = pneg %p128
        $region90: #{adafocus_forward.10} parent=87 // pred_check_branch
          %1197 = sbr.rel (%p1195) target = $region92
        $region91: #{adafocus_forward.10} parent=87 // pred_region
          %s1198 = sand.u32 %s113, 1
          %s1199 = sand.u32 %s113, 1
          %s1200 = smul.addr %s1199, 152
          %s1201 = scalar_lea.vmem [#allocation2], %s1200
        $region92: #{adafocus_forward.10} parent=87 // pred_fallthru
          _
      $region88: #{adafocus_forward.10} parent=5 // pred_fallthru
        _
    $region6: #{adafocus_forward.10} parent=1 // loop_footer
      %s14 = sadd.s32 1, %s10
    $region7: #{adafocus_forward.10} parent=1 // loop_footer_branch
      %9 = sbr.rel target = $region3
    $region8: #{adafocus_forward.10} parent=1 // loop_exit
      _

// kernel: adafocus_forward.11
$region0: #{adafocus_forward.11}
  #allocation0 [shape = 'u32[]', space=smem, size = 0x4, offset = 0x4, fixed_abs, tag = 'smem constant byte address 0x4 - core index']
  #allocation1 [shape = 'u32[144,128]{1,0:T(1,128)}', space=vmem, size = 0x12000, scoped, tag = 'internal scratch']
  %s0 = inlined_call_operand.vmem [shape: bf16[588,432], index: 0, kind: input, shape index: {}]
  %s1 = inlined_call_operand.vmem [shape: bf16[432,16], index: 1, kind: input, shape index: {}]
  %s2 = inlined_call_operand.vmem [shape: f32[1,16], index: 2, kind: input, shape index: {}]
  %s3 = inlined_call_operand.vmem [shape: f32[1,16], index: 3, kind: input, shape index: {}]
  %s4 = inlined_call_operand.vmem [shape: bf16[588,16], index: 4, kind: output, shape index: {}]
  %s5 = sld [smem:[#allocation0]]
  $region93: #{adafocus_forward.11} parent=0
    _
  %s7 = ssub.s32 1, %s5
  %s8 = scalar_select 0, %s7, %s5
  $region1: #{adafocus_forward.11} parent=0
    #allocation2 [shape = 'u8[155648]{0}', space=vmem, size = 0x26000, scoped, tag = 'output window, operand 0']
    loop: start=0, step=1, limit=4
    $region2: #{adafocus_forward.11} parent=1 // loop_pre_header
      _
    $region3: #{adafocus_forward.11} parent=1 // loop_header
      %s10 = sphi 0, %s14
      %p11 = scmp.ge.s32.totalorder %s10, 4
      %s20 = sphi 0, %s22
      %s23 = sphi 0, %s20
      %s24 = sphi 0, %s23
      %s40 = sphi 0, %s24
      %s44 = sphi 0, %s44
      %s46 = sphi 0, %s44
      %s47 = sphi 0, %s46
      %s61 = sphi 0, %s47
      %s65 = sphi 0, %s65
      %s67 = sphi 0, %s65
      %s68 = sphi 0, %s67
      %s82 = sphi 0, %s68
      %s86 = sphi 0, %s86
      %s88 = sphi 0, %s86
      %s89 = sphi 0, %s88
      %s103 = sphi 0, %s89
      %s109 = sphi 0, %s111
      %s112 = sphi 0, %s109
      %s113 = sphi 0, %s112
      %s129 = sphi 0, %s113
    $region4: #{adafocus_forward.11} parent=1 // loop_header_branch
      %13 = sbr.rel (%p11) target = $region8
    $region5: #{adafocus_forward.11} parent=1 // loop_body
      %s15 = ssub.s32 %s10, 1
      %s16 = ssub.s32 %s10, 2
      %s17 = sadd.s32 %s10, 1
      %s18 = ssub.s32 %s10, %s17
      %p19 = scmp.eq.s32.totalorder %s18, 0
      %s21 = sadd.s32 %s20, 1
      %s22 = scalar_select %p19, %s20, %s21
      %p25 = pneg %p19
      %p26 = scmp.eq.s32.totalorder %s10, 1
      %p27 = por %p25, %p26
      %p28 = scmp.ne.s32.totalorder %s20, %s23
      %p29 = scmp.eq.s32.totalorder %s10, 0
      %p30 = por %p28, %p29
      %p31 = scmp.ne.s32.totalorder %s20, %s23
      %p32 = scmp.eq.s32.totalorder %s15, 1
      %p33 = por %p31, %p32
      %p34 = scmp.ne.s32.totalorder %s23, %s24
      %p35 = scmp.eq.s32.totalorder %s15, 0
      %p36 = por %p34, %p35
      %p37 = scmp.ne.s32.totalorder %s23, %s24
      %p38 = scmp.eq.s32.totalorder %s16, 1
      %p39 = por %p37, %p38
      %p41 = scmp.ne.s32.totalorder %s24, %s40
      %p42 = scmp.eq.s32.totalorder %s16, 0
      %p43 = por %p41, %p42
      %s45 = sadd.s32 %s44, 1
      %p48 = scmp.eq.s32.totalorder %s10, 1
      %p49 = scmp.ne.s32.totalorder %s44, %s46
      %p50 = scmp.eq.s32.totalorder %s10, 0
      %p51 = por %p49, %p50
      %p52 = scmp.ne.s32.totalorder %s44, %s46
      %p53 = scmp.eq.s32.totalorder %s15, 1
      %p54 = por %p52, %p53
      %p55 = scmp.ne.s32.totalorder %s46, %s47
      %p56 = scmp.eq.s32.totalorder %s15, 0
      %p57 = por %p55, %p56
      %p58 = scmp.ne.s32.totalorder %s46, %s47
      %p59 = scmp.eq.s32.totalorder %s16, 1
      %p60 = por %p58, %p59
      %p62 = scmp.ne.s32.totalorder %s47, %s61
      %p63 = scmp.eq.s32.totalorder %s16, 0
      %p64 = por %p62, %p63
      %s66 = sadd.s32 %s65, 1
      %p69 = scmp.eq.s32.totalorder %s10, 1
      %p70 = scmp.ne.s32.totalorder %s65, %s67
      %p71 = scmp.eq.s32.totalorder %s10, 0
      %p72 = por %p70, %p71
      %p73 = scmp.ne.s32.totalorder %s65, %s67
      %p74 = scmp.eq.s32.totalorder %s15, 1
      %p75 = por %p73, %p74
      %p76 = scmp.ne.s32.totalorder %s67, %s68
      %p77 = scmp.eq.s32.totalorder %s15, 0
      %p78 = por %p76, %p77
      %p79 = scmp.ne.s32.totalorder %s67, %s68
      %p80 = scmp.eq.s32.totalorder %s16, 1
      %p81 = por %p79, %p80
      %p83 = scmp.ne.s32.totalorder %s68, %s82
      %p84 = scmp.eq.s32.totalorder %s16, 0
      %p85 = por %p83, %p84
      %s87 = sadd.s32 %s86, 1
      %p90 = scmp.eq.s32.totalorder %s10, 1
      %p91 = scmp.ne.s32.totalorder %s86, %s88
      %p92 = scmp.eq.s32.totalorder %s10, 0
      %p93 = por %p91, %p92
      %p94 = scmp.ne.s32.totalorder %s86, %s88
      %p95 = scmp.eq.s32.totalorder %s15, 1
      %p96 = por %p94, %p95
      %p97 = scmp.ne.s32.totalorder %s88, %s89
      %p98 = scmp.eq.s32.totalorder %s15, 0
      %p99 = por %p97, %p98
      %p100 = scmp.ne.s32.totalorder %s88, %s89
      %p101 = scmp.eq.s32.totalorder %s16, 1
      %p102 = por %p100, %p101
      %p104 = scmp.ne.s32.totalorder %s89, %s103
      %p105 = scmp.eq.s32.totalorder %s16, 0
      %p106 = por %p104, %p105
      %s107 = ssub.s32 %s10, %s17
      %p108 = scmp.eq.s32.totalorder %s107, 0
      %s110 = sadd.s32 %s109, 1
      %s111 = scalar_select %p108, %s109, %s110
      %p114 = pneg %p108
      %p115 = scmp.eq.s32.totalorder %s10, 1
      %p116 = por %p114, %p115
      %p117 = scmp.ne.s32.totalorder %s109, %s112
      %p118 = scmp.eq.s32.totalorder %s10, 0
      %p119 = por %p117, %p118
      %p120 = scmp.ne.s32.totalorder %s109, %s112
      %p121 = scmp.eq.s32.totalorder %s15, 1
      %p122 = por %p120, %p121
      %p123 = scmp.ne.s32.totalorder %s112, %s113
      %p124 = scmp.eq.s32.totalorder %s15, 0
      %p125 = por %p123, %p124
      %p126 = scmp.ne.s32.totalorder %s112, %s113
      %p127 = scmp.eq.s32.totalorder %s16, 1
      %p128 = por %p126, %p127
      %p130 = scmp.ne.s32.totalorder %s113, %s129
      %p131 = scmp.eq.s32.totalorder %s16, 0
      %p132 = por %p130, %p131
      %p133 = scmp.le.s32.totalorder 1, %s10
      %p134 = scmp.lt.s32.totalorder %s10, 3
      %p135 = pnand %p133, %p134
      %p136 = pneg %p135
      // Predicated region
      $region9: #{adafocus_forward.11} parent=5 // pred_check
        _
      $region10: #{adafocus_forward.11} parent=5 // pred_check_branch
        %138 = sbr.rel (%p135) target = $region12
      $region11: #{adafocus_forward.11} parent=5 // pred_region
        %s139 = ssub.s32 %s10, 1
        // Predicated region
        $region13: #{adafocus_forward.11} parent=11 // pred_check
          %p140 = pneg %p57
        $region14: #{adafocus_forward.11} parent=11 // pred_check_branch
          %142 = sbr.rel (%p140) target = $region16
        $region15: #{adafocus_forward.11} parent=11 // pred_region
          _
        $region16: #{adafocus_forward.11} parent=11 // pred_fallthru
          _
        // Predicated region
        $region17: #{adafocus_forward.11} parent=11 // pred_check
          %p143 = pneg %p78
        $region18: #{adafocus_forward.11} parent=11 // pred_check_branch
          %145 = sbr.rel (%p143) target = $region20
        $region19: #{adafocus_forward.11} parent=11 // pred_region
          _
        $region20: #{adafocus_forward.11} parent=11 // pred_fallthru
          _
        // Predicated region
        $region21: #{adafocus_forward.11} parent=11 // pred_check
          %p146 = pneg %p99
        $region22: #{adafocus_forward.11} parent=11 // pred_check_branch
          %148 = sbr.rel (%p146) target = $region24
        $region23: #{adafocus_forward.11} parent=11 // pred_region
          _
        $region24: #{adafocus_forward.11} parent=11 // pred_fallthru
          _
      $region12: #{adafocus_forward.11} parent=5 // pred_fallthru
        _
      %p149 = scmp.lt.s32.totalorder %s10, 2
      // Predicated region
      $region25: #{adafocus_forward.11} parent=5 // pred_check
        %p150 = pneg %p149
      $region26: #{adafocus_forward.11} parent=5 // pred_check_branch
        %152 = sbr.rel (%p150) target = $region28
      $region27: #{adafocus_forward.11} parent=5 // pred_region
        // Predicated region
        $region29: #{adafocus_forward.11} parent=27 // pred_check
          %p153 = pneg %p30
        $region30: #{adafocus_forward.11} parent=27 // pred_check_branch
          %155 = sbr.rel (%p153) target = $region32
        $region31: #{adafocus_forward.11} parent=27 // pred_region
          %s156 = smul.u32 38, %s10
          %s157 = ssub.s32 74, %s156
          %p158 = scmp.lt.s32.totalorder %s157, 38
          %s159 = scalar_select %p158, %s157, 38
          %s160 = smul.u32 64, %s159
          %s161 = smul.u32 %s160, 4
          %p162 = scmp.lt.s32.totalorder %s156, 73
          %s163 = scalar_select %p162, %s156, 73
          %s164 = smul.addr %s163, 4
          %s165 = smul.addr %s164, 4
          %s166 = scalar_lea.vmem %s0, %s165
          %s167 = smul.u32 38, %s10
          %s168 = ssub.s32 74, %s167
          %p169 = scmp.lt.s32.totalorder %s168, 38
          %s170 = scalar_select %p169, %s168, 38
          %s171 = smul.u32 64, %s170
          %s172 = smul.u32 %s171, 4
        $region32: #{adafocus_forward.11} parent=27 // pred_fallthru
          _
      $region28: #{adafocus_forward.11} parent=5 // pred_fallthru
        _
      %p173 = scmp.le.s32.totalorder 1, %s10
      %p174 = scmp.lt.s32.totalorder %s10, 3
      %p175 = pnand %p173, %p174
      %p176 = pneg %p175
      // Predicated region
      $region33: #{adafocus_forward.11} parent=5 // pred_check
        _
      $region34: #{adafocus_forward.11} parent=5 // pred_check_branch
        %178 = sbr.rel (%p175) target = $region36
      $region35: #{adafocus_forward.11} parent=5 // pred_region
        %s179 = ssub.s32 %s10, 1
        %s180 = smul.u32 38, %s15
        %s181 = ssub.s32 74, %s180
        %p182 = scmp.lt.s32.totalorder %s181, 38
        %s183 = scalar_select %p182, %s181, 38
        %s184 = smul.u32 64, %s183
        %s185 = smul.u32 %s184, 4
        %p186 = scmp.lt.s32.totalorder %s180, 73
        %s187 = scalar_select %p186, %s180, 73
        %s188 = smul.addr %s187, 4
        %s189 = smul.addr %s188, 4
        %s190 = scalar_lea.vmem %s0, %s189
        %p191 = pneg %p36
        %p192 = pneg %p33
        %p193 = pneg %p57
        %p194 = pneg %p54
        %p195 = pneg %p78
        %p196 = pneg %p75
        %p197 = pneg %p99
        %p198 = pneg %p96
        %p199 = pneg %p125
        %p200 = pneg %p122
        %s201 = sand.u32 %s112, 1
        %s202 = sand.u32 %s112, 1
        %s203 = smul.addr %s202, 152
        %s204 = scalar_lea.vmem [#allocation2], %s203
        %s205 = smul.u32 38, %s15
        %s206 = ssub.s32 74, %s205
        %p207 = scmp.lt.s32.totalorder %s206, 38
        %s208 = scalar_select %p207, %s206, 38
        %s209 = smul.u32 64, %s208
        %s210 = smul.u32 %s209, 4
        %p211 = scmp.lt.s32.totalorder %s205, 73
        %s212 = scalar_select %p211, %s205, 73
        %s213 = smul.addr %s212, 4
        %s214 = smul.addr %s213, 4
        %s215 = scalar_lea.vmem %s0, %s214
        %s216 = smul.u32 38, %s15
        %s217 = ssub.s32 74, %s216
        %p218 = scmp.lt.s32.totalorder %s217, 38
        %s219 = scalar_select %p218, %s217, 38
        %s220 = smul.u32 64, %s219
        %s221 = smul.u32 %s220, 4
        %s222 = smul.u32 38, %s15
        %s223 = ssub.s32 74, %s222
        %p224 = scmp.lt.s32.totalorder %s223, 38
        %s225 = scalar_select %p224, %s223, 38
        %s226 = smul.u32 64, %s225
        %v228 = vld [vmem:[%s215] sm:$0xff]
        %v229 = vld [vmem:[%s215 + $0x8] sm:$0xff]
        %v230 = vld [vmem:[%s215 + $0x10] sm:$0xff]
        %v231 = vld [vmem:[%s215 + $0x18] sm:$0xff]
        %v232 = vld [vmem:[%s215 + $0x20] sm:$0xff]
        %v233 = vld [vmem:[%s215 + $0x28] sm:$0xff]
        %v234 = vld [vmem:[%s215 + $0x30] sm:$0xff]
        %v235 = vld [vmem:[%s215 + $0x38] sm:$0xff]
        %v236 = vld [vmem:[%s215 + $0x40] sm:$0xff]
        %v237 = vld [vmem:[%s215 + $0x48] sm:$0xff]
        %v238 = vld [vmem:[%s215 + $0x50] sm:$0xff]
        %v239 = vld [vmem:[%s215 + $0x58] sm:$0xff]
        %v240 = vld [vmem:[%s215 + $0x60] sm:$0xff]
        %v241 = vld [vmem:[%s215 + $0x68] sm:$0xff]
        %v242 = vld [vmem:[%s215 + $0x70] sm:$0xff]
        %v243 = vld [vmem:[%s215 + $0x78] sm:$0xff]
        %v244 = vld [vmem:[%s215 + $0x80] sm:$0xff]
        %v245 = vld [vmem:[%s215 + $0x88] sm:$0xff]
        %v246 = vld [vmem:[%s215 + $0x90] sm:$0xff]
        %v247 = vld [vmem:[%s215 + $0x98] sm:$0xff]
        %v248 = vld [vmem:[%s215 + $0xa0] sm:$0xff]
        %v249 = vld [vmem:[%s215 + $0xa8] sm:$0xff]
        %v250 = vld [vmem:[%s215 + $0xb0] sm:$0xff]
        %v251 = vld [vmem:[%s215 + $0xb8] sm:$0xff]
        %v252 = vld [vmem:[%s215 + $0xc0] sm:$0xff]
        %v253 = vld [vmem:[%s215 + $0xc8] sm:$0xff]
        %v254 = vld [vmem:[%s215 + $0xd0] sm:$0xff]
        %v255 = vld [vmem:[%s215 + $0xd8] sm:$0xff]
        %v256 = vld [vmem:[%s215 + $0xe0] sm:$0xff]
        %v257 = vld [vmem:[%s215 + $0xe8] sm:$0xff]
        %v258 = vld [vmem:[%s215 + $0xf0] sm:$0xff]
        %v259 = vld [vmem:[%s215 + $0xf8] sm:$0xff]
        %v260 = vld [vmem:[%s215 + $0x100] sm:$0xff]
        %v261 = vld [vmem:[%s215 + $0x108] sm:$0xff]
        %v262 = vld [vmem:[%s215 + $0x110] sm:$0xff]
        %v263 = vld [vmem:[%s215 + $0x118] sm:$0xff]
        %v264 = vld [vmem:[%s215 + $0x120] sm:$0xff]
        %v265 = vld [vmem:[%s215 + $0x128] sm:$0xff]
        %v266 = vld [vmem:[%s215 + $0x130] sm:$0xff]
        %v267 = vld [vmem:[%s215 + $0x138] sm:$0xff]
        %v268 = vld [vmem:[%s215 + $0x140] sm:$0xff]
        %v269 = vld [vmem:[%s215 + $0x148] sm:$0xff]
        %v270 = vld [vmem:[%s215 + $0x150] sm:$0xff]
        %v271 = vld [vmem:[%s215 + $0x158] sm:$0xff]
        %v272 = vld [vmem:[%s215 + $0x160] sm:$0xff]
        %v273 = vld [vmem:[%s215 + $0x168] sm:$0xff]
        %v274 = vld [vmem:[%s215 + $0x170] sm:$0xff]
        %v275 = vld [vmem:[%s215 + $0x178] sm:$0xff]
        %v276 = vld [vmem:[%s215 + $0x180] sm:$0xff]
        %v277 = vld [vmem:[%s215 + $0x188] sm:$0xff]
        %v278 = vld [vmem:[%s215 + $0x190] sm:$0xff]
        %v279 = vld [vmem:[%s215 + $0x198] sm:$0xff]
        %v280 = vld [vmem:[%s215 + $0x1a0] sm:$0xff]
        %v281 = vld [vmem:[%s215 + $0x1a8] sm:$0xff]
        %v282 = vld [vmem:[%s215 + $0x1b0] sm:$0xff]
        %v283 = vld [vmem:[%s215 + $0x1b8] sm:$0xff]
        %v284 = vld [vmem:[%s215 + $0x1c0] sm:$0xff]
        %v285 = vld [vmem:[%s215 + $0x1c8] sm:$0xff]
        %v286 = vld [vmem:[%s215 + $0x1d0] sm:$0xff]
        %v287 = vld [vmem:[%s215 + $0x1d8] sm:$0xff]
        %v288 = vld [vmem:[%s215 + $0x1e0] sm:$0xff]
        %v289 = vld [vmem:[%s215 + $0x1e8] sm:$0xff]
        %v290 = vld [vmem:[%s215 + $0x1f0] sm:$0xff]
        %v291 = vld [vmem:[%s215 + $0x1f8] sm:$0xff]
        %v292 = vld [vmem:[%s215 + $0x200] sm:$0xff]
        %v293 = vld [vmem:[%s215 + $0x208] sm:$0xff]
        %v294 = vld [vmem:[%s215 + $0x210] sm:$0xff]
        %v295 = vld [vmem:[%s215 + $0x218] sm:$0xff]
        %v296 = vld [vmem:[%s215 + $0x220] sm:$0xff]
        %v297 = vld [vmem:[%s215 + $0x228] sm:$0xff]
        %v298 = vld [vmem:[%s215 + $0x230] sm:$0xff]
        %v299 = vld [vmem:[%s215 + $0x238] sm:$0xff]
        %v300 = vld [vmem:[%s215 + $0x240] sm:$0xff]
        %v301 = vld [vmem:[%s215 + $0x248] sm:$0xff]
        %v302 = vld [vmem:[%s215 + $0x250] sm:$0xff]
        %v303 = vld [vmem:[%s215 + $0x258] sm:$0xff]
        %v304 = vld [vmem:[%s1] sm:$0xf]
        %v305 = vld [vmem:[%s1 + $0x4] sm:$0xf]
        %v306 = vld [vmem:[%s1 + $0x8] sm:$0xf]
        %v307 = vld [vmem:[%s1 + $0xc] sm:$0xf]
        %v308 = vld [vmem:[%s1 + $0x10] sm:$0xf]
        %v309 = vld [vmem:[%s1 + $0x14] sm:$0xf]
        %v310 = vld [vmem:[%s1 + $0x18] sm:$0xf]
        %v311 = vld [vmem:[%s1 + $0x1c] sm:$0xf]
        %v312 = vld [vmem:[%s1 + $0x20] sm:$0xf]
        %v313 = vld [vmem:[%s1 + $0x24] sm:$0xf]
        %v314 = vld [vmem:[%s1 + $0x28] sm:$0xf]
        %v315 = vld [vmem:[%s1 + $0x2c] sm:$0xf]
        %v316 = vld [vmem:[%s1 + $0x30] sm:$0xf]
        %v317 = vld [vmem:[%s1 + $0x34] sm:$0xf]
        %v318 = vld [vmem:[%s1 + $0x38] sm:$0xf]
        %v319 = vld [vmem:[%s1 + $0x3c] sm:$0xf]
        %v320 = vld [vmem:[%s1 + $0x40] sm:$0xf]
        %v321 = vld [vmem:[%s1 + $0x44] sm:$0xf]
        %v322 = vld [vmem:[%s1 + $0x48] sm:$0xf]
        %v323 = vld [vmem:[%s1 + $0x4c] sm:$0xf]
        %v324 = vld [vmem:[%s1 + $0x50] sm:$0xf]
        %v325 = vld [vmem:[%s1 + $0x54] sm:$0xf]
        %v326 = vld [vmem:[%s1 + $0x58] sm:$0xf]
        %v327 = vld [vmem:[%s1 + $0x5c] sm:$0xf]
        %v328 = vld [vmem:[%s1 + $0x60] sm:$0xf]
        %v329 = vld [vmem:[%s1 + $0x64] sm:$0xf]
        %v330 = vld [vmem:[%s1 + $0x68] sm:$0xf]
        %v331 = vld [vmem:[%s1 + $0x6c] sm:$0xf]
        %v332 = vld [vmem:[%s1 + $0x70] sm:$0xf]
        %v333 = vld [vmem:[%s1 + $0x74] sm:$0xf]
        %v334 = vld [vmem:[%s1 + $0x78] sm:$0xf]
        %v335 = vld [vmem:[%s1 + $0x7c] sm:$0xf]
        %v336 = vld [vmem:[%s1 + $0x80] sm:$0xf]
        %v337 = vld [vmem:[%s1 + $0x84] sm:$0xf]
        %v338 = vld [vmem:[%s1 + $0x88] sm:$0xf]
        %v339 = vld [vmem:[%s1 + $0x8c] sm:$0xf]
        %v340 = vld [vmem:[%s1 + $0x90] sm:$0xf]
        %v341 = vld [vmem:[%s1 + $0x94] sm:$0xf]
        %v342 = vld [vmem:[%s1 + $0x98] sm:$0xf]
        %v343 = vld [vmem:[%s1 + $0x9c] sm:$0xf]
        %v344 = vld [vmem:[%s1 + $0xa0] sm:$0xf]
        %v345 = vld [vmem:[%s1 + $0xa4] sm:$0xf]
        %v346 = vld [vmem:[%s1 + $0xa8] sm:$0xf]
        %v347 = vld [vmem:[%s1 + $0xac] sm:$0xf]
        %v348 = vld [vmem:[%s1 + $0xb0] sm:$0xf]
        %v349 = vld [vmem:[%s1 + $0xb4] sm:$0xf]
        %v350 = vld [vmem:[%s1 + $0xb8] sm:$0xf]
        %v351 = vld [vmem:[%s1 + $0xbc] sm:$0xf]
        %v352 = vld [vmem:[%s1 + $0xc0] sm:$0xf]
        %v353 = vld [vmem:[%s1 + $0xc4] sm:$0xf]
        %v354 = vld [vmem:[%s1 + $0xc8] sm:$0xf]
        %v355 = vld [vmem:[%s1 + $0xcc] sm:$0xf]
        %v356 = vld [vmem:[%s1 + $0xd0] sm:$0xf]
        %v357 = vld [vmem:[%s1 + $0xd4] sm:$0xf]
        %v434 = vunpack.c.l.b16 %v228
        %v435 = vunpack.c.h.b16 %v228
        %v436 = vunpack.c.l.b16 %v229
        %v437 = vunpack.c.h.b16 %v229
        %v438 = vunpack.c.l.b16 %v230
        %v439 = vunpack.c.h.b16 %v230
        %v440 = vunpack.c.l.b16 %v231
        %v441 = vunpack.c.h.b16 %v231
        %v442 = vunpack.c.l.b16 %v232
        %v443 = vunpack.c.h.b16 %v232
        %v444 = vunpack.c.l.b16 %v233
        %v445 = vunpack.c.h.b16 %v233
        %v446 = vunpack.c.l.b16 %v234
        %v447 = vunpack.c.h.b16 %v234
        %v448 = vunpack.c.l.b16 %v235
        %v449 = vunpack.c.h.b16 %v235
        %v450 = vunpack.c.l.b16 %v236
        %v451 = vunpack.c.h.b16 %v236
        %v452 = vunpack.c.l.b16 %v237
        %v453 = vunpack.c.h.b16 %v237
        %v454 = vunpack.c.l.b16 %v238
        %v455 = vunpack.c.h.b16 %v238
        %v456 = vunpack.c.l.b16 %v239
        %v457 = vunpack.c.h.b16 %v239
        %v458 = vunpack.c.l.b16 %v240
        %v459 = vunpack.c.h.b16 %v240
        %v460 = vunpack.c.l.b16 %v241
        %v461 = vunpack.c.h.b16 %v241
        %v462 = vunpack.c.l.b16 %v242
        %v463 = vunpack.c.h.b16 %v242
        %v464 = vunpack.c.l.b16 %v243
        %v465 = vunpack.c.h.b16 %v243
        %v466 = vunpack.c.l.b16 %v244
        %v467 = vunpack.c.h.b16 %v244
        %v468 = vunpack.c.l.b16 %v245
        %v469 = vunpack.c.h.b16 %v245
        %v470 = vunpack.c.l.b16 %v246
        %v471 = vunpack.c.h.b16 %v246
        %v472 = vunpack.c.l.b16 %v247
        %v473 = vunpack.c.h.b16 %v247
        %v474 = vunpack.c.l.b16 %v248
        %v475 = vunpack.c.h.b16 %v248
        %v476 = vunpack.c.l.b16 %v249
        %v477 = vunpack.c.h.b16 %v249
        %v478 = vunpack.c.l.b16 %v250
        %v479 = vunpack.c.h.b16 %v250
        %v480 = vunpack.c.l.b16 %v251
        %v481 = vunpack.c.h.b16 %v251
        %v482 = vunpack.c.l.b16 %v252
        %v483 = vunpack.c.h.b16 %v252
        %v484 = vunpack.c.l.b16 %v253
        %v485 = vunpack.c.h.b16 %v253
        %v486 = vunpack.c.l.b16 %v254
        %v487 = vunpack.c.h.b16 %v254
        %v488 = vunpack.c.l.b16 %v255
        %v489 = vunpack.c.h.b16 %v255
        %v490 = vunpack.c.l.b16 %v256
        %v491 = vunpack.c.h.b16 %v256
        %v492 = vunpack.c.l.b16 %v257
        %v493 = vunpack.c.h.b16 %v257
        %v494 = vunpack.c.l.b16 %v258
        %v495 = vunpack.c.h.b16 %v258
        %v496 = vunpack.c.l.b16 %v259
        %v497 = vunpack.c.h.b16 %v259
        %v498 = vunpack.c.l.b16 %v260
        %v499 = vunpack.c.h.b16 %v260
        %v500 = vunpack.c.l.b16 %v261
        %v501 = vunpack.c.h.b16 %v261
        %v502 = vunpack.c.l.b16 %v262
        %v503 = vunpack.c.h.b16 %v262
        %v504 = vunpack.c.l.b16 %v263
        %v505 = vunpack.c.h.b16 %v263
        %v506 = vunpack.c.l.b16 %v264
        %v507 = vunpack.c.h.b16 %v264
        %v508 = vunpack.c.l.b16 %v265
        %v509 = vunpack.c.h.b16 %v265
        %v510 = vunpack.c.l.b16 %v266
        %v511 = vunpack.c.h.b16 %v266
        %v512 = vunpack.c.l.b16 %v267
        %v513 = vunpack.c.h.b16 %v267
        %v514 = vunpack.c.l.b16 %v268
        %v515 = vunpack.c.h.b16 %v268
        %v516 = vunpack.c.l.b16 %v269
        %v517 = vunpack.c.h.b16 %v269
        %v518 = vunpack.c.l.b16 %v270
        %v519 = vunpack.c.h.b16 %v270
        %v520 = vunpack.c.l.b16 %v271
        %v521 = vunpack.c.h.b16 %v271
        %v522 = vunpack.c.l.b16 %v272
        %v523 = vunpack.c.h.b16 %v272
        %v524 = vunpack.c.l.b16 %v273
        %v525 = vunpack.c.h.b16 %v273
        %v526 = vunpack.c.l.b16 %v274
        %v527 = vunpack.c.h.b16 %v274
        %v528 = vunpack.c.l.b16 %v275
        %v529 = vunpack.c.h.b16 %v275
        %v530 = vunpack.c.l.b16 %v276
        %v531 = vunpack.c.h.b16 %v276
        %v532 = vunpack.c.l.b16 %v277
        %v533 = vunpack.c.h.b16 %v277
        %v534 = vunpack.c.l.b16 %v278
        %v535 = vunpack.c.h.b16 %v278
        %v536 = vunpack.c.l.b16 %v279
        %v537 = vunpack.c.h.b16 %v279
        %v538 = vunpack.c.l.b16 %v280
        %v539 = vunpack.c.h.b16 %v280
        %v540 = vunpack.c.l.b16 %v281
        %v541 = vunpack.c.h.b16 %v281
        %v542 = vunpack.c.l.b16 %v282
        %v543 = vunpack.c.h.b16 %v282
        %v544 = vunpack.c.l.b16 %v283
        %v545 = vunpack.c.h.b16 %v283
        %v546 = vunpack.c.l.b16 %v284
        %v547 = vunpack.c.h.b16 %v284
        %v548 = vunpack.c.l.b16 %v285
        %v549 = vunpack.c.h.b16 %v285
        %v550 = vunpack.c.l.b16 %v286
        %v551 = vunpack.c.h.b16 %v286
        %v552 = vunpack.c.l.b16 %v287
        %v553 = vunpack.c.h.b16 %v287
        %v554 = vunpack.c.l.b16 %v288
        %v555 = vunpack.c.h.b16 %v288
        %v556 = vunpack.c.l.b16 %v289
        %v557 = vunpack.c.h.b16 %v289
        %v558 = vunpack.c.l.b16 %v290
        %v559 = vunpack.c.h.b16 %v290
        %v560 = vunpack.c.l.b16 %v291
        %v561 = vunpack.c.h.b16 %v291
        %v562 = vunpack.c.l.b16 %v292
        %v563 = vunpack.c.h.b16 %v292
        %v564 = vunpack.c.l.b16 %v293
        %v565 = vunpack.c.h.b16 %v293
        %v566 = vunpack.c.l.b16 %v294
        %v567 = vunpack.c.h.b16 %v294
        %v568 = vunpack.c.l.b16 %v295
        %v569 = vunpack.c.h.b16 %v295
        %v570 = vunpack.c.l.b16 %v296
        %v571 = vunpack.c.h.b16 %v296
        %v572 = vunpack.c.l.b16 %v297
        %v573 = vunpack.c.h.b16 %v297
        %v574 = vunpack.c.l.b16 %v298
        %v575 = vunpack.c.h.b16 %v298
        %v576 = vunpack.c.l.b16 %v299
        %v577 = vunpack.c.h.b16 %v299
        %v578 = vunpack.c.l.b16 %v300
        %v579 = vunpack.c.h.b16 %v300
        %v580 = vunpack.c.l.b16 %v301
        %v581 = vunpack.c.h.b16 %v301
        %v582 = vunpack.c.l.b16 %v302
        %v583 = vunpack.c.h.b16 %v302
        %v584 = vunpack.c.l.b16 %v303
        %v585 = vunpack.c.h.b16 %v303
        %v586 = vpack.c.b16 %v438, %v434
        %v587 = vpack.c.b16 %v439, %v435
        %v588 = vpack.c.b16 %v440, %v436
        %v589 = vpack.c.b16 %v441, %v437
        %v590 = vpack.c.b16 %v446, %v442
        %v591 = vpack.c.b16 %v447, %v443
        %v592 = vpack.c.b16 %v448, %v444
        %v593 = vpack.c.b16 %v449, %v445
        %v594 = vpack.c.b16 %v454, %v450
        %v595 = vpack.c.b16 %v455, %v451
        %v596 = vpack.c.b16 %v456, %v452
        %v597 = vpack.c.b16 %v457, %v453
        %v598 = vpack.c.b16 %v462, %v458
        %v599 = vpack.c.b16 %v463, %v459
        %v600 = vpack.c.b16 %v464, %v460
        %v601 = vpack.c.b16 %v465, %v461
        %v602 = vpack.c.b16 %v470, %v466
        %v603 = vpack.c.b16 %v471, %v467
        %v604 = vpack.c.b16 %v472, %v468
        %v605 = vpack.c.b16 %v473, %v469
        %v606 = vpack.c.b16 %v478, %v474
        %v607 = vpack.c.b16 %v479, %v475
        %v608 = vpack.c.b16 %v480, %v476
        %v609 = vpack.c.b16 %v481, %v477
        %v610 = vpack.c.b16 %v486, %v482
        %v611 = vpack.c.b16 %v487, %v483
        %v612 = vpack.c.b16 %v488, %v484
        %v613 = vpack.c.b16 %v489, %v485
        %v614 = vpack.c.b16 %v494, %v490
        %v615 = vpack.c.b16 %v495, %v491
        %v616 = vpack.c.b16 %v496, %v492
        %v617 = vpack.c.b16 %v497, %v493
        %v618 = vpack.c.b16 %v502, %v498
        %v619 = vpack.c.b16 %v503, %v499
        %v620 = vpack.c.b16 %v504, %v500
        %v621 = vpack.c.b16 %v505, %v501
        %v622 = vpack.c.b16 %v510, %v506
        %v623 = vpack.c.b16 %v511, %v507
        %v624 = vpack.c.b16 %v512, %v508
        %v625 = vpack.c.b16 %v513, %v509
        %v626 = vpack.c.b16 %v518, %v514
        %v627 = vpack.c.b16 %v519, %v515
        %v628 = vpack.c.b16 %v520, %v516
        %v629 = vpack.c.b16 %v521, %v517
        %v630 = vpack.c.b16 %v526, %v522
        %v631 = vpack.c.b16 %v527, %v523
        %v632 = vpack.c.b16 %v528, %v524
        %v633 = vpack.c.b16 %v529, %v525
        %v634 = vpack.c.b16 %v534, %v530
        %v635 = vpack.c.b16 %v535, %v531
        %v636 = vpack.c.b16 %v536, %v532
        %v637 = vpack.c.b16 %v537, %v533
        %v638 = vpack.c.b16 %v542, %v538
        %v639 = vpack.c.b16 %v543, %v539
        %v640 = vpack.c.b16 %v544, %v540
        %v641 = vpack.c.b16 %v545, %v541
        %v642 = vpack.c.b16 %v550, %v546
        %v643 = vpack.c.b16 %v551, %v547
        %v644 = vpack.c.b16 %v552, %v548
        %v645 = vpack.c.b16 %v553, %v549
        %v646 = vpack.c.b16 %v558, %v554
        %v647 = vpack.c.b16 %v559, %v555
        %v648 = vpack.c.b16 %v560, %v556
        %v649 = vpack.c.b16 %v561, %v557
        %v650 = vpack.c.b16 %v566, %v562
        %v651 = vpack.c.b16 %v567, %v563
        %v652 = vpack.c.b16 %v568, %v564
        %v653 = vpack.c.b16 %v569, %v565
        %v654 = vpack.c.b16 %v574, %v570
        %v655 = vpack.c.b16 %v575, %v571
        %v656 = vpack.c.b16 %v576, %v572
        %v657 = vpack.c.b16 %v577, %v573
        %v658 = vpack.c.b16 %v582, %v578
        %v659 = vpack.c.b16 %v583, %v579
        %v660 = vpack.c.b16 %v584, %v580
        %v661 = vpack.c.b16 %v585, %v581
        %v773 = vunpack.c.l.b16 %v304
        %v774 = vunpack.c.l.b16 %v305
        %v775 = vunpack.c.l.b16 %v306
        %v776 = vunpack.c.l.b16 %v307
        %v777 = vunpack.c.l.b16 %v308
        %v778 = vunpack.c.l.b16 %v309
        %v779 = vunpack.c.l.b16 %v310
        %v780 = vunpack.c.l.b16 %v311
        %v781 = vunpack.c.l.b16 %v312
        %v782 = vunpack.c.l.b16 %v313
        %v783 = vunpack.c.l.b16 %v314
        %v784 = vunpack.c.l.b16 %v315
        %v785 = vunpack.c.l.b16 %v316
        %v786 = vunpack.c.l.b16 %v317
        %v787 = vunpack.c.l.b16 %v318
        %v788 = vunpack.c.l.b16 %v319
        %v789 = vunpack.c.l.b16 %v320
        %v790 = vunpack.c.l.b16 %v321
        %v791 = vunpack.c.l.b16 %v322
        %v792 = vunpack.c.l.b16 %v323
        %v793 = vunpack.c.l.b16 %v324
        %v794 = vunpack.c.l.b16 %v325
        %v795 = vunpack.c.l.b16 %v326
        %v796 = vunpack.c.l.b16 %v327
        %v797 = vunpack.c.l.b16 %v328
        %v798 = vunpack.c.l.b16 %v329
        %v799 = vunpack.c.l.b16 %v330
        %v800 = vunpack.c.l.b16 %v331
        %v801 = vunpack.c.l.b16 %v332
        %v802 = vunpack.c.l.b16 %v333
        %v803 = vunpack.c.l.b16 %v334
        %v804 = vunpack.c.l.b16 %v335
        %v805 = vunpack.c.l.b16 %v336
        %v806 = vunpack.c.l.b16 %v337
        %v807 = vunpack.c.l.b16 %v338
        %v808 = vunpack.c.l.b16 %v339
        %v809 = vunpack.c.l.b16 %v340
        %v810 = vunpack.c.l.b16 %v341
        %v811 = vunpack.c.l.b16 %v342
        %v812 = vunpack.c.l.b16 %v343
        %v813 = vunpack.c.l.b16 %v344
        %v814 = vunpack.c.l.b16 %v345
        %v815 = vunpack.c.l.b16 %v346
        %v816 = vunpack.c.l.b16 %v347
        %v817 = vunpack.c.l.b16 %v348
        %v818 = vunpack.c.l.b16 %v349
        %v819 = vunpack.c.l.b16 %v350
        %v820 = vunpack.c.l.b16 %v351
        %v821 = vunpack.c.l.b16 %v352
        %v822 = vunpack.c.l.b16 %v353
        %v823 = vunpack.c.l.b16 %v354
        %v824 = vunpack.c.l.b16 %v355
        %v825 = vunpack.c.l.b16 %v356
        %v826 = vunpack.c.l.b16 %v357
        %v827 = vpack.c.b16 %v774, %v773
        %v828 = vpack.c.b16 %v776, %v775
        %v829 = vpack.c.b16 %v778, %v777
        %v830 = vpack.c.b16 %v780, %v779
        %v831 = vpack.c.b16 %v782, %v781
        %v832 = vpack.c.b16 %v784, %v783
        %v833 = vpack.c.b16 %v786, %v785
        %v834 = vpack.c.b16 %v788, %v787
        %v835 = vpack.c.b16 %v790, %v789
        %v836 = vpack.c.b16 %v792, %v791
        %v837 = vpack.c.b16 %v794, %v793
        %v838 = vpack.c.b16 %v796, %v795
        %v839 = vpack.c.b16 %v798, %v797
        %v840 = vpack.c.b16 %v800, %v799
        %v841 = vpack.c.b16 %v802, %v801
        %v842 = vpack.c.b16 %v804, %v803
        %v843 = vpack.c.b16 %v806, %v805
        %v844 = vpack.c.b16 %v808, %v807
        %v845 = vpack.c.b16 %v810, %v809
        %v846 = vpack.c.b16 %v812, %v811
        %v847 = vpack.c.b16 %v814, %v813
        %v848 = vpack.c.b16 %v816, %v815
        %v849 = vpack.c.b16 %v818, %v817
        %v850 = vpack.c.b16 %v820, %v819
        %v851 = vpack.c.b16 %v822, %v821
        %v852 = vpack.c.b16 %v824, %v823
        %v853 = vpack.c.b16 %v826, %v825
        %vm881 = vcmask 392192
        %v883 = vsel %vm881, %v589, 0
        %v886 = vsel %vm881, %v593, 0
        %v889 = vsel %vm881, %v597, 0
        %v892 = vsel %vm881, %v601, 0
        %v895 = vsel %vm881, %v605, 0
        %v898 = vsel %vm881, %v609, 0
        %v901 = vsel %vm881, %v613, 0
        %v904 = vsel %vm881, %v617, 0
        %v907 = vsel %vm881, %v621, 0
        %v910 = vsel %vm881, %v625, 0
        %v913 = vsel %vm881, %v629, 0
        %v916 = vsel %vm881, %v633, 0
        %v919 = vsel %vm881, %v637, 0
        %v922 = vsel %vm881, %v641, 0
        %v925 = vsel %vm881, %v645, 0
        %v928 = vsel %vm881, %v649, 0
        %v931 = vsel %vm881, %v653, 0
        %v934 = vsel %vm881, %v657, 0
        %v937 = vsel %vm881, %v661, 0
        %939 = vmatprep.subr.bf16.mxu0 0
        %940 = vmatpush1.bf16.msra.mxu0 %v834
        %941 = vmatprep.subr.bf16.mxu0 0
        %942 = vmatpush1.bf16.msra.mxu0 %v833
        %943 = vmatprep.subr.bf16.mxu0 0
        %944 = vmatpush1.bf16.msra.mxu0 %v832
        %945 = vmatprep.subr.bf16.mxu0 0
        %946 = vmatpush1.bf16.msra.mxu0 %v831
        %947 = vmatprep.subr.bf16.mxu0 0
        %948 = vmatpush1.bf16.msra.mxu0 %v830
        %949 = vmatprep.subr.bf16.mxu0 0
        %950 = vmatpush1.bf16.msra.mxu0 %v829
        %951 = vmatprep.subr.bf16.mxu0 0
        %952 = vmatpush1.bf16.msra.mxu0 %v828
        %953 = vmatprep.subr.bf16.mxu0 0
        %954 = vmatpush1.bf16.msra.mxu0 %v827
        %955 = vmatprep.subr.bf16.mxu0 0
        %956 = vmatpush2.bf16.msra.mxu0 %v842
        %957 = vmatprep.subr.bf16.mxu0 0
        %958 = vmatpush2.bf16.msra.mxu0 %v841
        %959 = vmatprep.subr.bf16.mxu0 0
        %960 = vmatpush2.bf16.msra.mxu0 %v840
        %961 = vmatprep.subr.bf16.mxu0 0
        %962 = vmatpush2.bf16.msra.mxu0 %v839
        %963 = vmatprep.subr.bf16.mxu0 0
        %964 = vmatpush2.bf16.msra.mxu0 %v838
        %965 = vmatprep.subr.bf16.mxu0 0
        %966 = vmatpush2.bf16.msra.mxu0 %v837
        %967 = vmatprep.subr.bf16.mxu0 0
        %968 = vmatpush2.bf16.msra.mxu0 %v836
        %969 = vmatprep.subr.bf16.mxu0 0
        %970 = vmatpush2.bf16.msra.mxu0 %v835
        %971 = vmatprep.mubr.bf16.mxu0 %v587
        %972 = vmatmul.mubr.bf16.gmra.mxu0 %v586
        %v973 = vpop.f32.mrf.mxu0
        %v974 = vadd.f32 0.0, %v973
        %v975 = vpop.f32.mrf.mxu0
        %v976 = vpop.f32.mrf.mxu0
        %v977 = vadd.f32 0.0, %v976
        %v978 = vpop.f32.mrf.mxu0
        %979 = vmatprep.mubr.bf16.mxu0 %v591
        %980 = vmatmul.mubr.bf16.gmra.mxu0 %v590
        %v981 = vpop.f32.mrf.mxu0
        %v982 = vadd.f32 0.0, %v981
        %v983 = vpop.f32.mrf.mxu0
        %v984 = vpop.f32.mrf.mxu0
        %v985 = vadd.f32 0.0, %v984
        %v986 = vpop.f32.mrf.mxu0
        %987 = vmatprep.mubr.bf16.mxu0 %v595
        %988 = vmatmul.mubr.bf16.gmra.mxu0 %v594
        %v989 = vpop.f32.mrf.mxu0
        %v990 = vadd.f32 0.0, %v989
        %v991 = vpop.f32.mrf.mxu0
        %v992 = vpop.f32.mrf.mxu0
        %v993 = vadd.f32 0.0, %v992
        %v994 = vpop.f32.mrf.mxu0
        %995 = vmatprep.mubr.bf16.mxu0 %v599
        %996 = vmatmul.mubr.bf16.gmra.mxu0 %v598
        %v997 = vpop.f32.mrf.mxu0
        %v998 = vadd.f32 0.0, %v997
        %v999 = vpop.f32.mrf.mxu0
        %v1000 = vpop.f32.mrf.mxu0
        %v1001 = vadd.f32 0.0, %v1000
        %v1002 = vpop.f32.mrf.mxu0
        %1003 = vmatprep.mubr.bf16.mxu0 %v603
        %1004 = vmatmul.mubr.bf16.gmra.mxu0 %v602
        %v1005 = vpop.f32.mrf.mxu0
        %v1006 = vadd.f32 0.0, %v1005
        %v1007 = vpop.f32.mrf.mxu0
        %v1008 = vpop.f32.mrf.mxu0
        %v1009 = vadd.f32 0.0, %v1008
        %v1010 = vpop.f32.mrf.mxu0
        %1011 = vmatprep.mubr.bf16.mxu0 %v607
        %1012 = vmatmul.mubr.bf16.gmra.mxu0 %v606
        %v1013 = vpop.f32.mrf.mxu0
        %v1014 = vadd.f32 0.0, %v1013
        %v1015 = vpop.f32.mrf.mxu0
        %v1016 = vpop.f32.mrf.mxu0
        %v1017 = vadd.f32 0.0, %v1016
        %v1018 = vpop.f32.mrf.mxu0
        %1019 = vmatprep.mubr.bf16.mxu0 %v611
        %1020 = vmatmul.mubr.bf16.gmra.mxu0 %v610
        %v1021 = vpop.f32.mrf.mxu0
        %v1022 = vadd.f32 0.0, %v1021
        %v1023 = vpop.f32.mrf.mxu0
        %v1024 = vpop.f32.mrf.mxu0
        %v1025 = vadd.f32 0.0, %v1024
        %v1026 = vpop.f32.mrf.mxu0
        %1027 = vmatprep.mubr.bf16.mxu0 %v615
        %1028 = vmatmul.mubr.bf16.gmra.mxu0 %v614
        %v1029 = vpop.f32.mrf.mxu0
        %v1030 = vadd.f32 0.0, %v1029
        %v1031 = vpop.f32.mrf.mxu0
        %v1032 = vpop.f32.mrf.mxu0
        %v1033 = vadd.f32 0.0, %v1032
        %v1034 = vpop.f32.mrf.mxu0
        %1035 = vmatprep.mubr.bf16.mxu0 %v619
        %1036 = vmatmul.mubr.bf16.gmra.mxu0 %v618
        %v1037 = vpop.f32.mrf.mxu0
        %v1038 = vadd.f32 0.0, %v1037
        %v1039 = vpop.f32.mrf.mxu0
        %v1040 = vpop.f32.mrf.mxu0
        %v1041 = vadd.f32 0.0, %v1040
        %v1042 = vpop.f32.mrf.mxu0
        %1043 = vmatprep.mubr.bf16.mxu0 %v623
        %1044 = vmatmul.mubr.bf16.gmra.mxu0 %v622
        %v1045 = vpop.f32.mrf.mxu0
        %v1046 = vadd.f32 0.0, %v1045
        %v1047 = vpop.f32.mrf.mxu0
        %v1048 = vpop.f32.mrf.mxu0
        %v1049 = vadd.f32 0.0, %v1048
        %v1050 = vpop.f32.mrf.mxu0
        %1051 = vmatprep.mubr.bf16.mxu0 %v627
        %1052 = vmatmul.mubr.bf16.gmra.mxu0 %v626
        %v1053 = vpop.f32.mrf.mxu0
        %v1054 = vadd.f32 0.0, %v1053
        %v1055 = vpop.f32.mrf.mxu0
        %v1056 = vpop.f32.mrf.mxu0
        %v1057 = vadd.f32 0.0, %v1056
        %v1058 = vpop.f32.mrf.mxu0
        %1059 = vmatprep.mubr.bf16.mxu0 %v631
        %1060 = vmatmul.mubr.bf16.gmra.mxu0 %v630
        %v1061 = vpop.f32.mrf.mxu0
        %v1062 = vadd.f32 0.0, %v1061
        %v1063 = vpop.f32.mrf.mxu0
        %v1064 = vpop.f32.mrf.mxu0
        %v1065 = vadd.f32 0.0, %v1064
        %v1066 = vpop.f32.mrf.mxu0
        %1067 = vmatprep.mubr.bf16.mxu0 %v635
        %1068 = vmatmul.mubr.bf16.gmra.mxu0 %v634
        %v1069 = vpop.f32.mrf.mxu0
        %v1070 = vadd.f32 0.0, %v1069
        %v1071 = vpop.f32.mrf.mxu0
        %v1072 = vpop.f32.mrf.mxu0
        %v1073 = vadd.f32 0.0, %v1072
        %v1074 = vpop.f32.mrf.mxu0
        %1075 = vmatprep.mubr.bf16.mxu0 %v639
        %1076 = vmatmul.mubr.bf16.gmra.mxu0 %v638
        %v1077 = vpop.f32.mrf.mxu0
        %v1078 = vadd.f32 0.0, %v1077
        %v1079 = vpop.f32.mrf.mxu0
        %v1080 = vpop.f32.mrf.mxu0
        %v1081 = vadd.f32 0.0, %v1080
        %v1082 = vpop.f32.mrf.mxu0
        %1083 = vmatprep.mubr.bf16.mxu0 %v643
        %1084 = vmatmul.mubr.bf16.gmra.mxu0 %v642
        %v1085 = vpop.f32.mrf.mxu0
        %v1086 = vadd.f32 0.0, %v1085
        %v1087 = vpop.f32.mrf.mxu0
        %v1088 = vpop.f32.mrf.mxu0
        %v1089 = vadd.f32 0.0, %v1088
        %v1090 = vpop.f32.mrf.mxu0
        %1091 = vmatprep.mubr.bf16.mxu0 %v647
        %1092 = vmatmul.mubr.bf16.gmra.mxu0 %v646
        %v1093 = vpop.f32.mrf.mxu0
        %v1094 = vadd.f32 0.0, %v1093
        %v1095 = vpop.f32.mrf.mxu0
        %v1096 = vpop.f32.mrf.mxu0
        %v1097 = vadd.f32 0.0, %v1096
        %v1098 = vpop.f32.mrf.mxu0
        %1099 = vmatprep.mubr.bf16.mxu0 %v651
        %1100 = vmatmul.mubr.bf16.gmra.mxu0 %v650
        %v1101 = vpop.f32.mrf.mxu0
        %v1102 = vadd.f32 0.0, %v1101
        %v1103 = vpop.f32.mrf.mxu0
        %v1104 = vpop.f32.mrf.mxu0
        %v1105 = vadd.f32 0.0, %v1104
        %v1106 = vpop.f32.mrf.mxu0
        %1107 = vmatprep.mubr.bf16.mxu0 %v655
        %1108 = vmatmul.mubr.bf16.gmra.mxu0 %v654
        %v1109 = vpop.f32.mrf.mxu0
        %v1110 = vadd.f32 0.0, %v1109
        %v1111 = vpop.f32.mrf.mxu0
        %v1112 = vpop.f32.mrf.mxu0
        %v1113 = vadd.f32 0.0, %v1112
        %v1114 = vpop.f32.mrf.mxu0
        %1115 = vmatprep.mubr.bf16.mxu0 %v659
        %1116 = vmatmul.mubr.bf16.gmra.mxu0 %v658
        %v1117 = vpop.f32.mrf.mxu0
        %v1118 = vadd.f32 0.0, %v1117
        %v1119 = vpop.f32.mrf.mxu0
        %v1120 = vpop.f32.mrf.mxu0
        %v1121 = vadd.f32 0.0, %v1120
        %v1122 = vpop.f32.mrf.mxu0
        %1123 = vdwg.mxu0
        %1124 = vmatprep.subr.bf16.mxu0 0
        %1125 = vmatpush1.bf16.msra.mxu0 %v850
        %1126 = vmatprep.subr.bf16.mxu0 0
        %1127 = vmatpush1.bf16.msra.mxu0 %v849
        %1128 = vmatprep.subr.bf16.mxu0 0
        %1129 = vmatpush1.bf16.msra.mxu0 %v848
        %1130 = vmatprep.subr.bf16.mxu0 0
        %1131 = vmatpush1.bf16.msra.mxu0 %v847
        %1132 = vmatprep.subr.bf16.mxu0 0
        %1133 = vmatpush1.bf16.msra.mxu0 %v846
        %1134 = vmatprep.subr.bf16.mxu0 0
        %1135 = vmatpush1.bf16.msra.mxu0 %v845
        %1136 = vmatprep.subr.bf16.mxu0 0
        %1137 = vmatpush1.bf16.msra.mxu0 %v844
        %1138 = vmatprep.subr.bf16.mxu0 0
        %1139 = vmatpush1.bf16.msra.mxu0 %v843
        %1140 = vmatprep.subr.bf16.mxu0 0
        %1141 = vmatpush2.bf16.msra.mxu0 0
        %1142 = vmatprep.subr.bf16.mxu0 0
        %1143 = vmatpush2.bf16.msra.mxu0 0
        %1144 = vmatprep.subr.bf16.mxu0 0
        %1145 = vmatpush2.bf16.msra.mxu0 0
        %1146 = vmatprep.subr.bf16.mxu0 0
        %1147 = vmatpush2.bf16.msra.mxu0 0
        %1148 = vmatprep.subr.bf16.mxu0 0
        %1149 = vmatpush2.bf16.msra.mxu0 0
        %1150 = vmatprep.subr.bf16.mxu0 0
        %1151 = vmatpush2.bf16.msra.mxu0 %v853
        %1152 = vmatprep.subr.bf16.mxu0 0
        %1153 = vmatpush2.bf16.msra.mxu0 %v852
        %1154 = vmatprep.subr.bf16.mxu0 0
        %1155 = vmatpush2.bf16.msra.mxu0 %v851
        %1156 = vmatprep.mubr.bf16.mxu0 %v883
        %1157 = vmatmul.mubr.bf16.gmra.mxu0 %v588
        %v1158 = vpop.f32.mrf.mxu0
        %v1159 = vadd.f32 %v974, %v1158
        %v1160 = vpop.f32.mrf.mxu0
        %v1161 = vpop.f32.mrf.mxu0
        %v1162 = vadd.f32 %v977, %v1161
        %v1163 = vpop.f32.mrf.mxu0
        %1164 = vmatprep.mubr.bf16.mxu0 %v886
        %1165 = vmatmul.mubr.bf16.gmra.mxu0 %v592
        %v1166 = vpop.f32.mrf.mxu0
        %v1167 = vadd.f32 %v982, %v1166
        %v1168 = vpop.f32.mrf.mxu0
        %v1169 = vpop.f32.mrf.mxu0
        %v1170 = vadd.f32 %v985, %v1169
        %v1171 = vpop.f32.mrf.mxu0
        %1172 = vmatprep.mubr.bf16.mxu0 %v889
        %1173 = vmatmul.mubr.bf16.gmra.mxu0 %v596
        %v1174 = vpop.f32.mrf.mxu0
        %v1175 = vadd.f32 %v990, %v1174
        %v1176 = vpop.f32.mrf.mxu0
        %v1177 = vpop.f32.mrf.mxu0
        %v1178 = vadd.f32 %v993, %v1177
        %v1179 = vpop.f32.mrf.mxu0
        %1180 = vmatprep.mubr.bf16.mxu0 %v892
        %1181 = vmatmul.mubr.bf16.gmra.mxu0 %v600
        %v1182 = vpop.f32.mrf.mxu0
        %v1183 = vadd.f32 %v998, %v1182
        %v1184 = vpop.f32.mrf.mxu0
        %v1185 = vpop.f32.mrf.mxu0
        %v1186 = vadd.f32 %v1001, %v1185
        %v1187 = vpop.f32.mrf.mxu0
        %1188 = vmatprep.mubr.bf16.mxu0 %v895
        %1189 = vmatmul.mubr.bf16.gmra.mxu0 %v604
        %v1190 = vpop.f32.mrf.mxu0
        %v1191 = vadd.f32 %v1006, %v1190
        %v1192 = vpop.f32.mrf.mxu0
        %v1193 = vpop.f32.mrf.mxu0
        %v1194 = vadd.f32 %v1009, %v1193
        %v1195 = vpop.f32.mrf.mxu0
        %1196 = vmatprep.mubr.bf16.mxu0 %v898
        %1197 = vmatmul.mubr.bf16.gmra.mxu0 %v608
        %v1198 = vpop.f32.mrf.mxu0
        %v1199 = vadd.f32 %v1014, %v1198
        %v1200 = vpop.f32.mrf.mxu0
        %v1201 = vpop.f32.mrf.mxu0
        %v1202 = vadd.f32 %v1017, %v1201
        %v1203 = vpop.f32.mrf.mxu0
        %1204 = vmatprep.mubr.bf16.mxu0 %v901
        %1205 = vmatmul.mubr.bf16.gmra.mxu0 %v612
        %v1206 = vpop.f32.mrf.mxu0
        %v1207 = vadd.f32 %v1022, %v1206
        %v1208 = vpop.f32.mrf.mxu0
        %v1209 = vpop.f32.mrf.mxu0
        %v1210 = vadd.f32 %v1025, %v1209
        %v1211 = vpop.f32.mrf.mxu0
        %1212 = vmatprep.mubr.bf16.mxu0 %v904
        %1213 = vmatmul.mubr.bf16.gmra.mxu0 %v616
        %v1214 = vpop.f32.mrf.mxu0
        %v1215 = vadd.f32 %v1030, %v1214
        %v1216 = vpop.f32.mrf.mxu0
        %v1217 = vpop.f32.mrf.mxu0
        %v1218 = vadd.f32 %v1033, %v1217
        %v1219 = vpop.f32.mrf.mxu0
        %1220 = vmatprep.mubr.bf16.mxu0 %v907
        %1221 = vmatmul.mubr.bf16.gmra.mxu0 %v620
        %v1222 = vpop.f32.mrf.mxu0
        %v1223 = vadd.f32 %v1038, %v1222
        %v1224 = vpop.f32.mrf.mxu0
        %v1225 = vpop.f32.mrf.mxu0
        %v1226 = vadd.f32 %v1041, %v1225
        %v1227 = vpop.f32.mrf.mxu0
        %1228 = vmatprep.mubr.bf16.mxu0 %v910
        %1229 = vmatmul.mubr.bf16.gmra.mxu0 %v624
        %v1230 = vpop.f32.mrf.mxu0
        %v1231 = vadd.f32 %v1046, %v1230
        %v1232 = vpop.f32.mrf.mxu0
        %v1233 = vpop.f32.mrf.mxu0
        %v1234 = vadd.f32 %v1049, %v1233
        %v1235 = vpop.f32.mrf.mxu0
        %1236 = vmatprep.mubr.bf16.mxu0 %v913
        %1237 = vmatmul.mubr.bf16.gmra.mxu0 %v628
        %v1238 = vpop.f32.mrf.mxu0
        %v1239 = vadd.f32 %v1054, %v1238
        %v1240 = vpop.f32.mrf.mxu0
        %v1241 = vpop.f32.mrf.mxu0
        %v1242 = vadd.f32 %v1057, %v1241
        %v1243 = vpop.f32.mrf.mxu0
        %1244 = vmatprep.mubr.bf16.mxu0 %v916
        %1245 = vmatmul.mubr.bf16.gmra.mxu0 %v632
        %v1246 = vpop.f32.mrf.mxu0
        %v1247 = vadd.f32 %v1062, %v1246
        %v1248 = vpop.f32.mrf.mxu0
        %v1249 = vpop.f32.mrf.mxu0
        %v1250 = vadd.f32 %v1065, %v1249
        %v1251 = vpop.f32.mrf.mxu0
        %1252 = vmatprep.mubr.bf16.mxu0 %v919
        %1253 = vmatmul.mubr.bf16.gmra.mxu0 %v636
        %v1254 = vpop.f32.mrf.mxu0
        %v1255 = vadd.f32 %v1070, %v1254
        %v1256 = vpop.f32.mrf.mxu0
        %v1257 = vpop.f32.mrf.mxu0
        %v1258 = vadd.f32 %v1073, %v1257
        %v1259 = vpop.f32.mrf.mxu0
        %1260 = vmatprep.mubr.bf16.mxu0 %v922
        %1261 = vmatmul.mubr.bf16.gmra.mxu0 %v640
        %v1262 = vpop.f32.mrf.mxu0
        %v1263 = vadd.f32 %v1078, %v1262
        %v1264 = vpop.f32.mrf.mxu0
        %v1265 = vpop.f32.mrf.mxu0
        %v1266 = vadd.f32 %v1081, %v1265
        %v1267 = vpop.f32.mrf.mxu0
        %1268 = vmatprep.mubr.bf16.mxu0 %v925
        %1269 = vmatmul.mubr.bf16.gmra.mxu0 %v644
        %v1270 = vpop.f32.mrf.mxu0
        %v1271 = vadd.f32 %v1086, %v1270
        %v1272 = vpop.f32.mrf.mxu0
        %v1273 = vpop.f32.mrf.mxu0
        %v1274 = vadd.f32 %v1089, %v1273
        %v1275 = vpop.f32.mrf.mxu0
        %1276 = vmatprep.mubr.bf16.mxu0 %v928
        %1277 = vmatmul.mubr.bf16.gmra.mxu0 %v648
        %v1278 = vpop.f32.mrf.mxu0
        %v1279 = vadd.f32 %v1094, %v1278
        %v1280 = vpop.f32.mrf.mxu0
        %v1281 = vpop.f32.mrf.mxu0
        %v1282 = vadd.f32 %v1097, %v1281
        %v1283 = vpop.f32.mrf.mxu0
        %1284 = vmatprep.mubr.bf16.mxu0 %v931
        %1285 = vmatmul.mubr.bf16.gmra.mxu0 %v652
        %v1286 = vpop.f32.mrf.mxu0
        %v1287 = vadd.f32 %v1102, %v1286
        %v1288 = vpop.f32.mrf.mxu0
        %v1289 = vpop.f32.mrf.mxu0
        %v1290 = vadd.f32 %v1105, %v1289
        %v1291 = vpop.f32.mrf.mxu0
        %1292 = vmatprep.mubr.bf16.mxu0 %v934
        %1293 = vmatmul.mubr.bf16.gmra.mxu0 %v656
        %v1294 = vpop.f32.mrf.mxu0
        %v1295 = vadd.f32 %v1110, %v1294
        %v1296 = vpop.f32.mrf.mxu0
        %v1297 = vpop.f32.mrf.mxu0
        %v1298 = vadd.f32 %v1113, %v1297
        %v1299 = vpop.f32.mrf.mxu0
        %1300 = vmatprep.mubr.bf16.mxu0 %v937
        %1301 = vmatmul.mubr.bf16.gmra.mxu0 %v660
        %v1302 = vpop.f32.mrf.mxu0
        %v1303 = vadd.f32 %v1118, %v1302
        %v1304 = vpop.f32.mrf.mxu0
        %v1305 = vpop.f32.mrf.mxu0
        %v1306 = vadd.f32 %v1121, %v1305
        %v1307 = vpop.f32.mrf.mxu0
        %1308 = vdwg.mxu0
        %v1309 = vld [vmem:[%s2] sm:$0x1]
        %v1311 = vlaneseq
        %v1312 = vshrl.u32 %v1311, 7
        %v1313 = vsub.s32 0, %v1312
        %v1314 = vrot.slane %v1309, %v1313
        %v1316 = vmul.f32 %v1159, %v1314
        %v1317 = vmul.f32 %v1162, %v1314
        %v1318 = vmul.f32 %v1167, %v1314
        %v1319 = vmul.f32 %v1170, %v1314
        %v1320 = vmul.f32 %v1175, %v1314
        %v1321 = vmul.f32 %v1178, %v1314
        %v1322 = vmul.f32 %v1183, %v1314
        %v1323 = vmul.f32 %v1186, %v1314
        %v1324 = vmul.f32 %v1191, %v1314
        %v1325 = vmul.f32 %v1194, %v1314
        %v1326 = vmul.f32 %v1199, %v1314
        %v1327 = vmul.f32 %v1202, %v1314
        %v1328 = vmul.f32 %v1207, %v1314
        %v1329 = vmul.f32 %v1210, %v1314
        %v1330 = vmul.f32 %v1215, %v1314
        %v1331 = vmul.f32 %v1218, %v1314
        %v1332 = vmul.f32 %v1223, %v1314
        %v1333 = vmul.f32 %v1226, %v1314
        %v1334 = vmul.f32 %v1231, %v1314
        %v1335 = vmul.f32 %v1234, %v1314
        %v1336 = vmul.f32 %v1239, %v1314
        %v1337 = vmul.f32 %v1242, %v1314
        %v1338 = vmul.f32 %v1247, %v1314
        %v1339 = vmul.f32 %v1250, %v1314
        %v1340 = vmul.f32 %v1255, %v1314
        %v1341 = vmul.f32 %v1258, %v1314
        %v1342 = vmul.f32 %v1263, %v1314
        %v1343 = vmul.f32 %v1266, %v1314
        %v1344 = vmul.f32 %v1271, %v1314
        %v1345 = vmul.f32 %v1274, %v1314
        %v1346 = vmul.f32 %v1279, %v1314
        %v1347 = vmul.f32 %v1282, %v1314
        %v1348 = vmul.f32 %v1287, %v1314
        %v1349 = vmul.f32 %v1290, %v1314
        %v1350 = vmul.f32 %v1295, %v1314
        %v1351 = vmul.f32 %v1298, %v1314
        %v1352 = vmul.f32 %v1303, %v1314
        %v1353 = vmul.f32 %v1306, %v1314
        %v1354 = vld [vmem:[%s3] sm:$0x1]
        %v1356 = vlaneseq
        %v1357 = vshrl.u32 %v1356, 7
        %v1358 = vsub.s32 0, %v1357
        %v1359 = vrot.slane %v1354, %v1358
        %v1361 = vadd.f32 %v1316, %v1359
        %v1362 = vadd.f32 %v1317, %v1359
        %v1363 = vadd.f32 %v1318, %v1359
        %v1364 = vadd.f32 %v1319, %v1359
        %v1365 = vadd.f32 %v1320, %v1359
        %v1366 = vadd.f32 %v1321, %v1359
        %v1367 = vadd.f32 %v1322, %v1359
        %v1368 = vadd.f32 %v1323, %v1359
        %v1369 = vadd.f32 %v1324, %v1359
        %v1370 = vadd.f32 %v1325, %v1359
        %v1371 = vadd.f32 %v1326, %v1359
        %v1372 = vadd.f32 %v1327, %v1359
        %v1373 = vadd.f32 %v1328, %v1359
        %v1374 = vadd.f32 %v1329, %v1359
        %v1375 = vadd.f32 %v1330, %v1359
        %v1376 = vadd.f32 %v1331, %v1359
        %v1377 = vadd.f32 %v1332, %v1359
        %v1378 = vadd.f32 %v1333, %v1359
        %v1379 = vadd.f32 %v1334, %v1359
        %v1380 = vadd.f32 %v1335, %v1359
        %v1381 = vadd.f32 %v1336, %v1359
        %v1382 = vadd.f32 %v1337, %v1359
        %v1383 = vadd.f32 %v1338, %v1359
        %v1384 = vadd.f32 %v1339, %v1359
        %v1385 = vadd.f32 %v1340, %v1359
        %v1386 = vadd.f32 %v1341, %v1359
        %v1387 = vadd.f32 %v1342, %v1359
        %v1388 = vadd.f32 %v1343, %v1359
        %v1389 = vadd.f32 %v1344, %v1359
        %v1390 = vadd.f32 %v1345, %v1359
        %v1391 = vadd.f32 %v1346, %v1359
        %v1392 = vadd.f32 %v1347, %v1359
        %v1393 = vadd.f32 %v1348, %v1359
        %v1394 = vadd.f32 %v1349, %v1359
        %v1395 = vadd.f32 %v1350, %v1359
        %v1396 = vadd.f32 %v1351, %v1359
        %v1397 = vadd.f32 %v1352, %v1359
        %v1398 = vadd.f32 %v1353, %v1359
        %v1399 = vmax.f32 %v1361, 0.0
        %v1400 = vmax.f32 %v1362, 0.0
        %v1401 = vmax.f32 %v1363, 0.0
        %v1402 = vmax.f32 %v1364, 0.0
        %v1403 = vmax.f32 %v1365, 0.0
        %v1404 = vmax.f32 %v1366, 0.0
        %v1405 = vmax.f32 %v1367, 0.0
        %v1406 = vmax.f32 %v1368, 0.0
        %v1407 = vmax.f32 %v1369, 0.0
        %v1408 = vmax.f32 %v1370, 0.0
        %v1409 = vmax.f32 %v1371, 0.0
        %v1410 = vmax.f32 %v1372, 0.0
        %v1411 = vmax.f32 %v1373, 0.0
        %v1412 = vmax.f32 %v1374, 0.0
        %v1413 = vmax.f32 %v1375, 0.0
        %v1414 = vmax.f32 %v1376, 0.0
        %v1415 = vmax.f32 %v1377, 0.0
        %v1416 = vmax.f32 %v1378, 0.0
        %v1417 = vmax.f32 %v1379, 0.0
        %v1418 = vmax.f32 %v1380, 0.0
        %v1419 = vmax.f32 %v1381, 0.0
        %v1420 = vmax.f32 %v1382, 0.0
        %v1421 = vmax.f32 %v1383, 0.0
        %v1422 = vmax.f32 %v1384, 0.0
        %v1423 = vmax.f32 %v1385, 0.0
        %v1424 = vmax.f32 %v1386, 0.0
        %v1425 = vmax.f32 %v1387, 0.0
        %v1426 = vmax.f32 %v1388, 0.0
        %v1427 = vmax.f32 %v1389, 0.0
        %v1428 = vmax.f32 %v1390, 0.0
        %v1429 = vmax.f32 %v1391, 0.0
        %v1430 = vmax.f32 %v1392, 0.0
        %v1431 = vmax.f32 %v1393, 0.0
        %v1432 = vmax.f32 %v1394, 0.0
        %v1433 = vmax.f32 %v1395, 0.0
        %v1434 = vmax.f32 %v1396, 0.0
        %v1435 = vmax.f32 %v1397, 0.0
        %v1436 = vmax.f32 %v1398, 0.0
        %v1437 = vpack.c.bf16 %v1400, %v1399
        %v1438 = vpack.c.bf16 %v1402, %v1401
        %v1439 = vpack.c.bf16 %v1404, %v1403
        %v1440 = vpack.c.bf16 %v1406, %v1405
        %v1441 = vpack.c.bf16 %v1408, %v1407
        %v1442 = vpack.c.bf16 %v1410, %v1409
        %v1443 = vpack.c.bf16 %v1412, %v1411
        %v1444 = vpack.c.bf16 %v1414, %v1413
        %v1445 = vpack.c.bf16 %v1416, %v1415
        %v1446 = vpack.c.bf16 %v1418, %v1417
        %v1447 = vpack.c.bf16 %v1420, %v1419
        %v1448 = vpack.c.bf16 %v1422, %v1421
        %v1449 = vpack.c.bf16 %v1424, %v1423
        %v1450 = vpack.c.bf16 %v1426, %v1425
        %v1451 = vpack.c.bf16 %v1428, %v1427
        %v1452 = vpack.c.bf16 %v1430, %v1429
        %v1453 = vpack.c.bf16 %v1432, %v1431
        %v1454 = vpack.c.bf16 %v1434, %v1433
        %v1455 = vpack.c.bf16 %v1436, %v1435
        %v1475 = vunpack.c.l.b16 %v1437
        %v1476 = vunpack.c.h.b16 %v1437
        %v1477 = vunpack.c.l.b16 %v1438
        %v1478 = vunpack.c.h.b16 %v1438
        %v1479 = vunpack.c.l.b16 %v1439
        %v1480 = vunpack.c.h.b16 %v1439
        %v1481 = vunpack.c.l.b16 %v1440
        %v1482 = vunpack.c.h.b16 %v1440
        %v1483 = vunpack.c.l.b16 %v1441
        %v1484 = vunpack.c.h.b16 %v1441
        %v1485 = vunpack.c.l.b16 %v1442
        %v1486 = vunpack.c.h.b16 %v1442
        %v1487 = vunpack.c.l.b16 %v1443
        %v1488 = vunpack.c.h.b16 %v1443
        %v1489 = vunpack.c.l.b16 %v1444
        %v1490 = vunpack.c.h.b16 %v1444
        %v1491 = vunpack.c.l.b16 %v1445
        %v1492 = vunpack.c.h.b16 %v1445
        %v1493 = vunpack.c.l.b16 %v1446
        %v1494 = vunpack.c.h.b16 %v1446
        %v1495 = vunpack.c.l.b16 %v1447
        %v1496 = vunpack.c.h.b16 %v1447
        %v1497 = vunpack.c.l.b16 %v1448
        %v1498 = vunpack.c.h.b16 %v1448
        %v1499 = vunpack.c.l.b16 %v1449
        %v1500 = vunpack.c.h.b16 %v1449
        %v1501 = vunpack.c.l.b16 %v1450
        %v1502 = vunpack.c.h.b16 %v1450
        %v1503 = vunpack.c.l.b16 %v1451
        %v1504 = vunpack.c.h.b16 %v1451
        %v1505 = vunpack.c.l.b16 %v1452
        %v1506 = vunpack.c.h.b16 %v1452
        %v1507 = vunpack.c.l.b16 %v1453
        %v1508 = vunpack.c.h.b16 %v1453
        %v1509 = vunpack.c.l.b16 %v1454
        %v1510 = vunpack.c.h.b16 %v1454
        %v1511 = vunpack.c.l.b16 %v1455
        %v1512 = vunpack.c.h.b16 %v1455
        %v1513 = vpack.c.b16 %v1475, %v1475
        %v1514 = vpack.c.b16 %v1476, %v1476
        %v1515 = vpack.c.b16 %v1477, %v1477
        %v1516 = vpack.c.b16 %v1478, %v1478
        %v1517 = vpack.c.b16 %v1479, %v1479
        %v1518 = vpack.c.b16 %v1480, %v1480
        %v1519 = vpack.c.b16 %v1481, %v1481
        %v1520 = vpack.c.b16 %v1482, %v1482
        %v1521 = vpack.c.b16 %v1483, %v1483
        %v1522 = vpack.c.b16 %v1484, %v1484
        %v1523 = vpack.c.b16 %v1485, %v1485
        %v1524 = vpack.c.b16 %v1486, %v1486
        %v1525 = vpack.c.b16 %v1487, %v1487
        %v1526 = vpack.c.b16 %v1488, %v1488
        %v1527 = vpack.c.b16 %v1489, %v1489
        %v1528 = vpack.c.b16 %v1490, %v1490
        %v1529 = vpack.c.b16 %v1491, %v1491
        %v1530 = vpack.c.b16 %v1492, %v1492
        %v1531 = vpack.c.b16 %v1493, %v1493
        %v1532 = vpack.c.b16 %v1494, %v1494
        %v1533 = vpack.c.b16 %v1495, %v1495
        %v1534 = vpack.c.b16 %v1496, %v1496
        %v1535 = vpack.c.b16 %v1497, %v1497
        %v1536 = vpack.c.b16 %v1498, %v1498
        %v1537 = vpack.c.b16 %v1499, %v1499
        %v1538 = vpack.c.b16 %v1500, %v1500
        %v1539 = vpack.c.b16 %v1501, %v1501
        %v1540 = vpack.c.b16 %v1502, %v1502
        %v1541 = vpack.c.b16 %v1503, %v1503
        %v1542 = vpack.c.b16 %v1504, %v1504
        %v1543 = vpack.c.b16 %v1505, %v1505
        %v1544 = vpack.c.b16 %v1506, %v1506
        %v1545 = vpack.c.b16 %v1507, %v1507
        %v1546 = vpack.c.b16 %v1508, %v1508
        %v1547 = vpack.c.b16 %v1509, %v1509
        %v1548 = vpack.c.b16 %v1510, %v1510
        %v1549 = vpack.c.b16 %v1511, %v1511
        %v1550 = vpack.c.b16 %v1512, %v1512
        %vm1589 = vcmask 125952
        %1590 = vst.msk [vmem:[%s204] sm:$0xf] %vm1589, %v1513
        %1591 = vst.msk [vmem:[%s204 + $0x4] sm:$0xf] %vm1589, %v1514
        %1592 = vst.msk [vmem:[%s204 + $0x8] sm:$0xf] %vm1589, %v1515
        %1593 = vst.msk [vmem:[%s204 + $0xc] sm:$0xf] %vm1589, %v1516
        %1594 = vst.msk [vmem:[%s204 + $0x10] sm:$0xf] %vm1589, %v1517
        %1595 = vst.msk [vmem:[%s204 + $0x14] sm:$0xf] %vm1589, %v1518
        %1596 = vst.msk [vmem:[%s204 + $0x18] sm:$0xf] %vm1589, %v1519
        %1597 = vst.msk [vmem:[%s204 + $0x1c] sm:$0xf] %vm1589, %v1520
        %1598 = vst.msk [vmem:[%s204 + $0x20] sm:$0xf] %vm1589, %v1521
        %1599 = vst.msk [vmem:[%s204 + $0x24] sm:$0xf] %vm1589, %v1522
        %1600 = vst.msk [vmem:[%s204 + $0x28] sm:$0xf] %vm1589, %v1523
        %1601 = vst.msk [vmem:[%s204 + $0x2c] sm:$0xf] %vm1589, %v1524
        %1602 = vst.msk [vmem:[%s204 + $0x30] sm:$0xf] %vm1589, %v1525
        %1603 = vst.msk [vmem:[%s204 + $0x34] sm:$0xf] %vm1589, %v1526
        %1604 = vst.msk [vmem:[%s204 + $0x38] sm:$0xf] %vm1589, %v1527
        %1605 = vst.msk [vmem:[%s204 + $0x3c] sm:$0xf] %vm1589, %v1528
        %1606 = vst.msk [vmem:[%s204 + $0x40] sm:$0xf] %vm1589, %v1529
        %1607 = vst.msk [vmem:[%s204 + $0x44] sm:$0xf] %vm1589, %v1530
        %1608 = vst.msk [vmem:[%s204 + $0x48] sm:$0xf] %vm1589, %v1531
        %1609 = vst.msk [vmem:[%s204 + $0x4c] sm:$0xf] %vm1589, %v1532
        %1610 = vst.msk [vmem:[%s204 + $0x50] sm:$0xf] %vm1589, %v1533
        %1611 = vst.msk [vmem:[%s204 + $0x54] sm:$0xf] %vm1589, %v1534
        %1612 = vst.msk [vmem:[%s204 + $0x58] sm:$0xf] %vm1589, %v1535
        %1613 = vst.msk [vmem:[%s204 + $0x5c] sm:$0xf] %vm1589, %v1536
        %1614 = vst.msk [vmem:[%s204 + $0x60] sm:$0xf] %vm1589, %v1537
        %1615 = vst.msk [vmem:[%s204 + $0x64] sm:$0xf] %vm1589, %v1538
        %1616 = vst.msk [vmem:[%s204 + $0x68] sm:$0xf] %vm1589, %v1539
        %1617 = vst.msk [vmem:[%s204 + $0x6c] sm:$0xf] %vm1589, %v1540
        %1618 = vst.msk [vmem:[%s204 + $0x70] sm:$0xf] %vm1589, %v1541
        %1619 = vst.msk [vmem:[%s204 + $0x74] sm:$0xf] %vm1589, %v1542
        %1620 = vst.msk [vmem:[%s204 + $0x78] sm:$0xf] %vm1589, %v1543
        %1621 = vst.msk [vmem:[%s204 + $0x7c] sm:$0xf] %vm1589, %v1544
        %1622 = vst.msk [vmem:[%s204 + $0x80] sm:$0xf] %vm1589, %v1545
        %1623 = vst.msk [vmem:[%s204 + $0x84] sm:$0xf] %vm1589, %v1546
        %1624 = vst.msk [vmem:[%s204 + $0x88] sm:$0xf] %vm1589, %v1547
        %1625 = vst.msk [vmem:[%s204 + $0x8c] sm:$0xf] %vm1589, %v1548
        %1626 = vst.msk [vmem:[%s204 + $0x90] sm:$0xf] %vm1589, %v1549
        %1627 = vst.msk [vmem:[%s204 + $0x94] sm:$0xf] %vm1589, %v1550
        %s1628 = sand.u32 %s112, 1
        %s1629 = sand.u32 %s112, 1
        %s1630 = smul.addr %s1629, 152
        %s1631 = scalar_lea.vmem [#allocation2], %s1630
        // Predicated region
        $region37: #{adafocus_forward.11} parent=35 // pred_check
          %p1632 = pneg %p122
        $region38: #{adafocus_forward.11} parent=35 // pred_check_branch
          %1634 = sbr.rel (%p1632) target = $region40
        $region39: #{adafocus_forward.11} parent=35 // pred_region
          %s1635 = smul.u32 38, %s15
          %s1636 = ssub.s32 74, %s1635
          %p1637 = scmp.lt.s32.totalorder %s1636, 38
          %s1638 = scalar_select %p1637, %s1636, 38
          %s1639 = smul.u32 64, %s1638
          %p1640 = scmp.ne.s32.totalorder 0, %s1639
          %s1641 = smul.addr %s1635, 4
          %s1642 = scalar_lea.vmem %s4, %s1641
          // Predicated region
          $region41: #{adafocus_forward.11} parent=39 // pred_check
            %p1643 = pneg %p1640
          $region42: #{adafocus_forward.11} parent=39 // pred_check_branch
            %1645 = sbr.rel (%p1643) target = $region44
          $region43: #{adafocus_forward.11} parent=39 // pred_region
            // Predicated region
            $region45: #{adafocus_forward.11} parent=43 // pred_check
              _
            $region46: #{adafocus_forward.11} parent=43 // pred_check_branch
              %1647 = sbr.rel target = $region48
            $region47: #{adafocus_forward.11} parent=43 // pred_region
              // Predicated region
              $region67: #{adafocus_forward.11} parent=47 // pred_check
                _
              $region68: #{adafocus_forward.11} parent=47 // pred_check_branch
                %1772 = sbr.rel (0) target = $region70
              $region69: #{adafocus_forward.11} parent=47 // pred_region
                %s1774 = ssub.s32 16, 1
                %s1775 = sdiv.u32.pop %s1638, 38
                %s1776 = srem.u32.pop %s1638, 38
                // While loop
                $region71: #{adafocus_forward.11} parent=69 // loop_pre_header
                  _
                $region72: #{adafocus_forward.11} parent=69 // loop_header
                  %s1778 = sphi 0, %s1780
                  %p1779 = scmp.ge.s32.totalorder %s1778, %s1775
                  %s1783 = sphi 0, %s1864
                  %s1784 = sphi %s1631, %s1867
                  %s1785 = sphi %s1642, %s1868
                $region73: #{adafocus_forward.11} parent=69 // loop_header_branch
                  %1782 = sbr.rel (%p1779) target = $region77
                $region74: #{adafocus_forward.11} parent=69 // loop_body
                  %v1786 = vld [vmem:[%s1784] sm:%s1774]
                  %1787 = vst [vmem:[%s1785] sm:%s1774] %v1786
                  %v1788 = vld [vmem:[%s1784 + $0x4] sm:%s1774]
                  %1789 = vst [vmem:[%s1785 + $0x4] sm:%s1774] %v1788
                  %v1790 = vld [vmem:[%s1784 + $0x8] sm:%s1774]
                  %1791 = vst [vmem:[%s1785 + $0x8] sm:%s1774] %v1790
                  %v1792 = vld [vmem:[%s1784 + $0xc] sm:%s1774]
                  %1793 = vst [vmem:[%s1785 + $0xc] sm:%s1774] %v1792
                  %v1794 = vld [vmem:[%s1784 + $0x10] sm:%s1774]
                  %1795 = vst [vmem:[%s1785 + $0x10] sm:%s1774] %v1794
                  %v1796 = vld [vmem:[%s1784 + $0x14] sm:%s1774]
                  %1797 = vst [vmem:[%s1785 + $0x14] sm:%s1774] %v1796
                  %v1798 = vld [vmem:[%s1784 + $0x18] sm:%s1774]
                  %1799 = vst [vmem:[%s1785 + $0x18] sm:%s1774] %v1798
                  %v1800 = vld [vmem:[%s1784 + $0x1c] sm:%s1774]
                  %1801 = vst [vmem:[%s1785 + $0x1c] sm:%s1774] %v1800
                  %v1802 = vld [vmem:[%s1784 + $0x20] sm:%s1774]
                  %1803 = vst [vmem:[%s1785 + $0x20] sm:%s1774] %v1802
                  %v1804 = vld [vmem:[%s1784 + $0x24] sm:%s1774]
                  %1805 = vst [vmem:[%s1785 + $0x24] sm:%s1774] %v1804
                  %v1806 = vld [vmem:[%s1784 + $0x28] sm:%s1774]
                  %1807 = vst [vmem:[%s1785 + $0x28] sm:%s1774] %v1806
                  %v1808 = vld [vmem:[%s1784 + $0x2c] sm:%s1774]
                  %1809 = vst [vmem:[%s1785 + $0x2c] sm:%s1774] %v1808
                  %v1810 = vld [vmem:[%s1784 + $0x30] sm:%s1774]
                  %1811 = vst [vmem:[%s1785 + $0x30] sm:%s1774] %v1810
                  %v1812 = vld [vmem:[%s1784 + $0x34] sm:%s1774]
                  %1813 = vst [vmem:[%s1785 + $0x34] sm:%s1774] %v1812
                  %v1814 = vld [vmem:[%s1784 + $0x38] sm:%s1774]
                  %1815 = vst [vmem:[%s1785 + $0x38] sm:%s1774] %v1814
                  %v1816 = vld [vmem:[%s1784 + $0x3c] sm:%s1774]
                  %1817 = vst [vmem:[%s1785 + $0x3c] sm:%s1774] %v1816
                  %v1818 = vld [vmem:[%s1784 + $0x40] sm:%s1774]
                  %1819 = vst [vmem:[%s1785 + $0x40] sm:%s1774] %v1818
                  %v1820 = vld [vmem:[%s1784 + $0x44] sm:%s1774]
                  %1821 = vst [vmem:[%s1785 + $0x44] sm:%s1774] %v1820
                  %v1822 = vld [vmem:[%s1784 + $0x48] sm:%s1774]
                  %1823 = vst [vmem:[%s1785 + $0x48] sm:%s1774] %v1822
                  %v1824 = vld [vmem:[%s1784 + $0x4c] sm:%s1774]
                  %1825 = vst [vmem:[%s1785 + $0x4c] sm:%s1774] %v1824
                  %v1826 = vld [vmem:[%s1784 + $0x50] sm:%s1774]
                  %1827 = vst [vmem:[%s1785 + $0x50] sm:%s1774] %v1826
                  %v1828 = vld [vmem:[%s1784 + $0x54] sm:%s1774]
                  %1829 = vst [vmem:[%s1785 + $0x54] sm:%s1774] %v1828
                  %v1830 = vld [vmem:[%s1784 + $0x58] sm:%s1774]
                  %1831 = vst [vmem:[%s1785 + $0x58] sm:%s1774] %v1830
                  %v1832 = vld [vmem:[%s1784 + $0x5c] sm:%s1774]
                  %1833 = vst [vmem:[%s1785 + $0x5c] sm:%s1774] %v1832
                  %v1834 = vld [vmem:[%s1784 + $0x60] sm:%s1774]
                  %1835 = vst [vmem:[%s1785 + $0x60] sm:%s1774] %v1834
                  %v1836 = vld [vmem:[%s1784 + $0x64] sm:%s1774]
                  %1837 = vst [vmem:[%s1785 + $0x64] sm:%s1774] %v1836
                  %v1838 = vld [vmem:[%s1784 + $0x68] sm:%s1774]
                  %1839 = vst [vmem:[%s1785 + $0x68] sm:%s1774] %v1838
                  %v1840 = vld [vmem:[%s1784 + $0x6c] sm:%s1774]
                  %1841 = vst [vmem:[%s1785 + $0x6c] sm:%s1774] %v1840
                  %v1842 = vld [vmem:[%s1784 + $0x70] sm:%s1774]
                  %1843 = vst [vmem:[%s1785 + $0x70] sm:%s1774] %v1842
                  %v1844 = vld [vmem:[%s1784 + $0x74] sm:%s1774]
                  %1845 = vst [vmem:[%s1785 + $0x74] sm:%s1774] %v1844
                  %v1846 = vld [vmem:[%s1784 + $0x78] sm:%s1774]
                  %1847 = vst [vmem:[%s1785 + $0x78] sm:%s1774] %v1846
                  %v1848 = vld [vmem:[%s1784 + $0x7c] sm:%s1774]
                  %1849 = vst [vmem:[%s1785 + $0x7c] sm:%s1774] %v1848
                  %v1850 = vld [vmem:[%s1784 + $0x80] sm:%s1774]
                  %1851 = vst [vmem:[%s1785 + $0x80] sm:%s1774] %v1850
                  %v1852 = vld [vmem:[%s1784 + $0x84] sm:%s1774]
                  %1853 = vst [vmem:[%s1785 + $0x84] sm:%s1774] %v1852
                  %v1854 = vld [vmem:[%s1784 + $0x88] sm:%s1774]
                  %1855 = vst [vmem:[%s1785 + $0x88] sm:%s1774] %v1854
                  %v1856 = vld [vmem:[%s1784 + $0x8c] sm:%s1774]
                  %1857 = vst [vmem:[%s1785 + $0x8c] sm:%s1774] %v1856
                  %v1858 = vld [vmem:[%s1784 + $0x90] sm:%s1774]
                  %1859 = vst [vmem:[%s1785 + $0x90] sm:%s1774] %v1858
                  %v1860 = vld [vmem:[%s1784 + $0x94] sm:%s1774]
                  %1861 = vst [vmem:[%s1785 + $0x94] sm:%s1774] %v1860
                  %s1862 = sadd.s32 1, %s1783
                  %p1863 = scmp.ge.s32.totalorder %s1862, %s1775
                  %s1864 = scalar_select %p1863, 0, %s1862
                  %s1865 = smul.u32 %s1864, 152
                  %s1866 = smul.u32 %s1864, 152
                  %s1867 = scalar_lea.vmem %s1631, %s1865 [#allocation2]
                  %s1868 = scalar_lea.vmem %s1642, %s1866
                $region75: #{adafocus_forward.11} parent=69 // loop_footer
                  %s1780 = sadd.s32 %s1778, 1
                $region76: #{adafocus_forward.11} parent=69 // loop_footer_branch
                  %1777 = sbr.rel target = $region72
                $region77: #{adafocus_forward.11} parent=69 // loop_exit
                  _
                %s1869 = sdiv.u32.pop %s1638, 38
                %s1870 = srem.u32.pop %s1638, 38
                %s1871 = smul.u32 %s1869, 38
                %s1872 = smul.u32 4, %s1871
                %s1873 = scalar_lea.vmem %s1631, %s1872 [#allocation2]
                %s1874 = smul.u32 4, %s1871
                %s1875 = scalar_lea.vmem %s1642, %s1874
                // While loop
                $region78: #{adafocus_forward.11} parent=69 // loop_pre_header
                  _
                $region79: #{adafocus_forward.11} parent=69 // loop_header
                  %s1877 = sphi 0, %s1879
                  %p1878 = scmp.ge.s32.totalorder %s1877, %s1870
                  %s1882 = sphi 0, %s1889
                  %s1883 = sphi %s1873, %s1892
                  %s1884 = sphi %s1875, %s1893
                $region80: #{adafocus_forward.11} parent=69 // loop_header_branch
                  %1881 = sbr.rel (%p1878) target = $region84
                $region81: #{adafocus_forward.11} parent=69 // loop_body
                  %v1885 = vld [vmem:[%s1883] sm:%s1774]
                  %1886 = vst [vmem:[%s1884] sm:%s1774] %v1885
                  %s1887 = sadd.s32 1, %s1882
                  %p1888 = scmp.ge.s32.totalorder %s1887, %s1870
                  %s1889 = scalar_select %p1888, 0, %s1887
                  %s1890 = smul.u32 %s1889, 4
                  %s1891 = smul.u32 %s1889, 4
                  %s1892 = scalar_lea.vmem %s1873, %s1890 [#allocation2]
                  %s1893 = scalar_lea.vmem %s1875, %s1891
                $region82: #{adafocus_forward.11} parent=69 // loop_footer
                  %s1879 = sadd.s32 %s1877, 1
                $region83: #{adafocus_forward.11} parent=69 // loop_footer_branch
                  %1876 = sbr.rel target = $region79
                $region84: #{adafocus_forward.11} parent=69 // loop_exit
                  _
              $region70: #{adafocus_forward.11} parent=47 // pred_fallthru
                _
            $region48: #{adafocus_forward.11} parent=43 // pred_fallthru
              _
            // Predicated region
            $region49: #{adafocus_forward.11} parent=43 // pred_check
              _
            $region50: #{adafocus_forward.11} parent=43 // pred_check_branch
              %1649 = sbr.rel (0) target = $region52
            $region51: #{adafocus_forward.11} parent=43 // pred_region
              %s1651 = ssub.s32 16, 1
              %s1652 = sdiv.u32.pop %s1638, 38
              %s1653 = srem.u32.pop %s1638, 38
              // While loop
              $region53: #{adafocus_forward.11} parent=51 // loop_pre_header
                _
              $region54: #{adafocus_forward.11} parent=51 // loop_header
                %s1655 = sphi 0, %s1657
                %p1656 = scmp.ge.s32.totalorder %s1655, %s1652
                %s1660 = sphi 0, %s1741
                %s1661 = sphi %s1631, %s1744
                %s1662 = sphi %s1642, %s1745
              $region55: #{adafocus_forward.11} parent=51 // loop_header_branch
                %1659 = sbr.rel (%p1656) target = $region59
              $region56: #{adafocus_forward.11} parent=51 // loop_body
                %v1663 = vld [vmem:[%s1661] sm:%s1651]
                %1664 = vst [vmem:[%s1662] sm:%s1651] %v1663
                %v1665 = vld [vmem:[%s1661 + $0x4] sm:%s1651]
                %1666 = vst [vmem:[%s1662 + $0x4] sm:%s1651] %v1665
                %v1667 = vld [vmem:[%s1661 + $0x8] sm:%s1651]
                %1668 = vst [vmem:[%s1662 + $0x8] sm:%s1651] %v1667
                %v1669 = vld [vmem:[%s1661 + $0xc] sm:%s1651]
                %1670 = vst [vmem:[%s1662 + $0xc] sm:%s1651] %v1669
                %v1671 = vld [vmem:[%s1661 + $0x10] sm:%s1651]
                %1672 = vst [vmem:[%s1662 + $0x10] sm:%s1651] %v1671
                %v1673 = vld [vmem:[%s1661 + $0x14] sm:%s1651]
                %1674 = vst [vmem:[%s1662 + $0x14] sm:%s1651] %v1673
                %v1675 = vld [vmem:[%s1661 + $0x18] sm:%s1651]
                %1676 = vst [vmem:[%s1662 + $0x18] sm:%s1651] %v1675
                %v1677 = vld [vmem:[%s1661 + $0x1c] sm:%s1651]
                %1678 = vst [vmem:[%s1662 + $0x1c] sm:%s1651] %v1677
                %v1679 = vld [vmem:[%s1661 + $0x20] sm:%s1651]
                %1680 = vst [vmem:[%s1662 + $0x20] sm:%s1651] %v1679
                %v1681 = vld [vmem:[%s1661 + $0x24] sm:%s1651]
                %1682 = vst [vmem:[%s1662 + $0x24] sm:%s1651] %v1681
                %v1683 = vld [vmem:[%s1661 + $0x28] sm:%s1651]
                %1684 = vst [vmem:[%s1662 + $0x28] sm:%s1651] %v1683
                %v1685 = vld [vmem:[%s1661 + $0x2c] sm:%s1651]
                %1686 = vst [vmem:[%s1662 + $0x2c] sm:%s1651] %v1685
                %v1687 = vld [vmem:[%s1661 + $0x30] sm:%s1651]
                %1688 = vst [vmem:[%s1662 + $0x30] sm:%s1651] %v1687
                %v1689 = vld [vmem:[%s1661 + $0x34] sm:%s1651]
                %1690 = vst [vmem:[%s1662 + $0x34] sm:%s1651] %v1689
                %v1691 = vld [vmem:[%s1661 + $0x38] sm:%s1651]
                %1692 = vst [vmem:[%s1662 + $0x38] sm:%s1651] %v1691
                %v1693 = vld [vmem:[%s1661 + $0x3c] sm:%s1651]
                %1694 = vst [vmem:[%s1662 + $0x3c] sm:%s1651] %v1693
                %v1695 = vld [vmem:[%s1661 + $0x40] sm:%s1651]
                %1696 = vst [vmem:[%s1662 + $0x40] sm:%s1651] %v1695
                %v1697 = vld [vmem:[%s1661 + $0x44] sm:%s1651]
                %1698 = vst [vmem:[%s1662 + $0x44] sm:%s1651] %v1697
                %v1699 = vld [vmem:[%s1661 + $0x48] sm:%s1651]
                %1700 = vst [vmem:[%s1662 + $0x48] sm:%s1651] %v1699
                %v1701 = vld [vmem:[%s1661 + $0x4c] sm:%s1651]
                %1702 = vst [vmem:[%s1662 + $0x4c] sm:%s1651] %v1701
                %v1703 = vld [vmem:[%s1661 + $0x50] sm:%s1651]
                %1704 = vst [vmem:[%s1662 + $0x50] sm:%s1651] %v1703
                %v1705 = vld [vmem:[%s1661 + $0x54] sm:%s1651]
                %1706 = vst [vmem:[%s1662 + $0x54] sm:%s1651] %v1705
                %v1707 = vld [vmem:[%s1661 + $0x58] sm:%s1651]
                %1708 = vst [vmem:[%s1662 + $0x58] sm:%s1651] %v1707
                %v1709 = vld [vmem:[%s1661 + $0x5c] sm:%s1651]
                %1710 = vst [vmem:[%s1662 + $0x5c] sm:%s1651] %v1709
                %v1711 = vld [vmem:[%s1661 + $0x60] sm:%s1651]
                %1712 = vst [vmem:[%s1662 + $0x60] sm:%s1651] %v1711
                %v1713 = vld [vmem:[%s1661 + $0x64] sm:%s1651]
                %1714 = vst [vmem:[%s1662 + $0x64] sm:%s1651] %v1713
                %v1715 = vld [vmem:[%s1661 + $0x68] sm:%s1651]
                %1716 = vst [vmem:[%s1662 + $0x68] sm:%s1651] %v1715
                %v1717 = vld [vmem:[%s1661 + $0x6c] sm:%s1651]
                %1718 = vst [vmem:[%s1662 + $0x6c] sm:%s1651] %v1717
                %v1719 = vld [vmem:[%s1661 + $0x70] sm:%s1651]
                %1720 = vst [vmem:[%s1662 + $0x70] sm:%s1651] %v1719
                %v1721 = vld [vmem:[%s1661 + $0x74] sm:%s1651]
                %1722 = vst [vmem:[%s1662 + $0x74] sm:%s1651] %v1721
                %v1723 = vld [vmem:[%s1661 + $0x78] sm:%s1651]
                %1724 = vst [vmem:[%s1662 + $0x78] sm:%s1651] %v1723
                %v1725 = vld [vmem:[%s1661 + $0x7c] sm:%s1651]
                %1726 = vst [vmem:[%s1662 + $0x7c] sm:%s1651] %v1725
                %v1727 = vld [vmem:[%s1661 + $0x80] sm:%s1651]
                %1728 = vst [vmem:[%s1662 + $0x80] sm:%s1651] %v1727
                %v1729 = vld [vmem:[%s1661 + $0x84] sm:%s1651]
                %1730 = vst [vmem:[%s1662 + $0x84] sm:%s1651] %v1729
                %v1731 = vld [vmem:[%s1661 + $0x88] sm:%s1651]
                %1732 = vst [vmem:[%s1662 + $0x88] sm:%s1651] %v1731
                %v1733 = vld [vmem:[%s1661 + $0x8c] sm:%s1651]
                %1734 = vst [vmem:[%s1662 + $0x8c] sm:%s1651] %v1733
                %v1735 = vld [vmem:[%s1661 + $0x90] sm:%s1651]
                %1736 = vst [vmem:[%s1662 + $0x90] sm:%s1651] %v1735
                %v1737 = vld [vmem:[%s1661 + $0x94] sm:%s1651]
                %1738 = vst [vmem:[%s1662 + $0x94] sm:%s1651] %v1737
                %s1739 = sadd.s32 1, %s1660
                %p1740 = scmp.ge.s32.totalorder %s1739, %s1652
                %s1741 = scalar_select %p1740, 0, %s1739
                %s1742 = smul.u32 %s1741, 152
                %s1743 = smul.u32 %s1741, 152
                %s1744 = scalar_lea.vmem %s1631, %s1742 [#allocation2]
                %s1745 = scalar_lea.vmem %s1642, %s1743
              $region57: #{adafocus_forward.11} parent=51 // loop_footer
                %s1657 = sadd.s32 %s1655, 1
              $region58: #{adafocus_forward.11} parent=51 // loop_footer_branch
                %1654 = sbr.rel target = $region54
              $region59: #{adafocus_forward.11} parent=51 // loop_exit
                _
              %s1746 = sdiv.u32.pop %s1638, 38
              %s1747 = srem.u32.pop %s1638, 38
              %s1748 = smul.u32 %s1746, 38
              %s1749 = smul.u32 4, %s1748
              %s1750 = scalar_lea.vmem %s1631, %s1749 [#allocation2]
              %s1751 = smul.u32 4, %s1748
              %s1752 = scalar_lea.vmem %s1642, %s1751
              // While loop
              $region60: #{adafocus_forward.11} parent=51 // loop_pre_header
                _
              $region61: #{adafocus_forward.11} parent=51 // loop_header
                %s1754 = sphi 0, %s1756
                %p1755 = scmp.ge.s32.totalorder %s1754, %s1747
                %s1759 = sphi 0, %s1766
                %s1760 = sphi %s1750, %s1769
                %s1761 = sphi %s1752, %s1770
              $region62: #{adafocus_forward.11} parent=51 // loop_header_branch
                %1758 = sbr.rel (%p1755) target = $region66
              $region63: #{adafocus_forward.11} parent=51 // loop_body
                %v1762 = vld [vmem:[%s1760] sm:%s1651]
                %1763 = vst [vmem:[%s1761] sm:%s1651] %v1762
                %s1764 = sadd.s32 1, %s1759
                %p1765 = scmp.ge.s32.totalorder %s1764, %s1747
                %s1766 = scalar_select %p1765, 0, %s1764
                %s1767 = smul.u32 %s1766, 4
                %s1768 = smul.u32 %s1766, 4
                %s1769 = scalar_lea.vmem %s1750, %s1767 [#allocation2]
                %s1770 = scalar_lea.vmem %s1752, %s1768
              $region64: #{adafocus_forward.11} parent=51 // loop_footer
                %s1756 = sadd.s32 %s1754, 1
              $region65: #{adafocus_forward.11} parent=51 // loop_footer_branch
                %1753 = sbr.rel target = $region61
              $region66: #{adafocus_forward.11} parent=51 // loop_exit
                _
            $region52: #{adafocus_forward.11} parent=43 // pred_fallthru
              _
          $region44: #{adafocus_forward.11} parent=39 // pred_fallthru
            _
          %1894 = vnop
        $region40: #{adafocus_forward.11} parent=35 // pred_fallthru
          _
      $region36: #{adafocus_forward.11} parent=5 // pred_fallthru
        _
      %p1895 = scmp.le.s32.totalorder 2, %s10
      // Predicated region
      $region85: #{adafocus_forward.11} parent=5 // pred_check
        %p1896 = pneg %p1895
      $region86: #{adafocus_forward.11} parent=5 // pred_check_branch
        %1898 = sbr.rel (%p1896) target = $region88
      $region87: #{adafocus_forward.11} parent=5 // pred_region
        %s1899 = ssub.s32 %s10, 2
        // Predicated region
        $region89: #{adafocus_forward.11} parent=87 // pred_check
          %p1900 = pneg %p128
        $region90: #{adafocus_forward.11} parent=87 // pred_check_branch
          %1902 = sbr.rel (%p1900) target = $region92
        $region91: #{adafocus_forward.11} parent=87 // pred_region
          %s1903 = sand.u32 %s113, 1
          %s1904 = sand.u32 %s113, 1
          %s1905 = smul.addr %s1904, 152
          %s1906 = scalar_lea.vmem [#allocation2], %s1905
        $region92: #{adafocus_forward.11} parent=87 // pred_fallthru
          _
      $region88: #{adafocus_forward.11} parent=5 // pred_fallthru
        _
    $region6: #{adafocus_forward.11} parent=1 // loop_footer
      %s14 = sadd.s32 1, %s10
    $region7: #{adafocus_forward.11} parent=1 // loop_footer_branch
      %9 = sbr.rel target = $region3
    $region8: #{adafocus_forward.11} parent=1 // loop_exit
      _

// kernel: adafocus_forward.13
$region0: #{adafocus_forward.13}
  #allocation0 [shape = 'u32[]', space=smem, size = 0x4, offset = 0x4, fixed_abs, tag = 'smem constant byte address 0x4 - core index']
  #allocation1 [shape = 'u32[144,128]{1,0:T(1,128)}', space=vmem, size = 0x12000, scoped, tag = 'internal scratch']
  %s0 = inlined_call_operand.vmem [shape: bf16[2,4704], index: 0, kind: input, shape index: {}]
  %s1 = inlined_call_operand.vmem [shape: bf16[4704,4], index: 1, kind: input, shape index: {}]
  %s2 = inlined_call_operand.vmem [shape: f32[1,4], index: 2, kind: input, shape index: {}]
  %s3 = inlined_call_operand.vmem [shape: f32[1,4], index: 3, kind: input, shape index: {}]
  %s4 = inlined_call_operand.vmem [shape: f32[2,4], index: 4, kind: output, shape index: {}]
  %s5 = sld [smem:[#allocation0]]
  $region26: #{adafocus_forward.13} parent=0
    _
  %s7 = ssub.s32 1, %s5
  %s8 = scalar_select 0, %s7, %s5
  // Predicated region
  $region2: #{adafocus_forward.13} parent=0 // pred_check
    _
  $region3: #{adafocus_forward.13} parent=0 // pred_check_branch
    %10 = sbr.rel (0) target = $region5
  $region4: #{adafocus_forward.13} parent=0 // pred_region
    _
  $region5: #{adafocus_forward.13} parent=0 // pred_fallthru
    _
  // Predicated region
  $region6: #{adafocus_forward.13} parent=0 // pred_check
    _
  $region7: #{adafocus_forward.13} parent=0 // pred_check_branch
    %12 = sbr.rel (0) target = $region9
  $region8: #{adafocus_forward.13} parent=0 // pred_region
    _
  $region9: #{adafocus_forward.13} parent=0 // pred_fallthru
    _
  // Predicated region
  $region10: #{adafocus_forward.13} parent=0 // pred_check
    _
  $region11: #{adafocus_forward.13} parent=0 // pred_check_branch
    %14 = sbr.rel (0) target = $region13
  $region12: #{adafocus_forward.13} parent=0 // pred_region
    _
  $region13: #{adafocus_forward.13} parent=0 // pred_fallthru
    _
  // Predicated region
  $region14: #{adafocus_forward.13} parent=0 // pred_check
    _
  $region15: #{adafocus_forward.13} parent=0 // pred_check_branch
    %16 = sbr.rel (0) target = $region17
  $region16: #{adafocus_forward.13} parent=0 // pred_region
    _
  $region17: #{adafocus_forward.13} parent=0 // pred_fallthru
    _
  %v18 = vld [vmem:[%s0] sm:$0xff]
  %v19 = vld [vmem:[%s0 + $0x8] sm:$0xff]
  %v20 = vld [vmem:[%s0 + $0x10] sm:$0xff]
  %v21 = vld [vmem:[%s0 + $0x18] sm:$0xff]
  %v22 = vld [vmem:[%s0 + $0x20] sm:$0x1f]
  %v23 = vld [vmem:[%s1] sm:$0xf]
  %v24 = vld [vmem:[%s1 + $0x4] sm:$0xf]
  %v25 = vld [vmem:[%s1 + $0x8] sm:$0xf]
  %v26 = vld [vmem:[%s1 + $0xc] sm:$0xf]
  %v27 = vld [vmem:[%s1 + $0x10] sm:$0xf]
  %v28 = vld [vmem:[%s1 + $0x14] sm:$0xf]
  %v29 = vld [vmem:[%s1 + $0x18] sm:$0xf]
  %v30 = vld [vmem:[%s1 + $0x1c] sm:$0xf]
  %v31 = vld [vmem:[%s1 + $0x20] sm:$0xf]
  %v32 = vld [vmem:[%s1 + $0x24] sm:$0xf]
  %v33 = vld [vmem:[%s1 + $0x28] sm:$0xf]
  %v34 = vld [vmem:[%s1 + $0x2c] sm:$0xf]
  %v35 = vld [vmem:[%s1 + $0x30] sm:$0xf]
  %v36 = vld [vmem:[%s1 + $0x34] sm:$0xf]
  %v37 = vld [vmem:[%s1 + $0x38] sm:$0xf]
  %v38 = vld [vmem:[%s1 + $0x3c] sm:$0xf]
  %v39 = vld [vmem:[%s1 + $0x40] sm:$0xf]
  %v40 = vld [vmem:[%s1 + $0x44] sm:$0xf]
  %v41 = vld [vmem:[%s1 + $0x48] sm:$0xf]
  %v42 = vld [vmem:[%s1 + $0x4c] sm:$0xf]
  %v43 = vld [vmem:[%s1 + $0x50] sm:$0xf]
  %v44 = vld [vmem:[%s1 + $0x54] sm:$0xf]
  %v45 = vld [vmem:[%s1 + $0x58] sm:$0xf]
  %v46 = vld [vmem:[%s1 + $0x5c] sm:$0xf]
  %v47 = vld [vmem:[%s1 + $0x60] sm:$0xf]
  %v48 = vld [vmem:[%s1 + $0x64] sm:$0xf]
  %v49 = vld [vmem:[%s1 + $0x68] sm:$0xf]
  %v50 = vld [vmem:[%s1 + $0x6c] sm:$0xf]
  %v51 = vld [vmem:[%s1 + $0x70] sm:$0xf]
  %v52 = vld [vmem:[%s1 + $0x74] sm:$0xf]
  %v53 = vld [vmem:[%s1 + $0x78] sm:$0xf]
  %v54 = vld [vmem:[%s1 + $0x7c] sm:$0xf]
  %v55 = vld [vmem:[%s1 + $0x80] sm:$0xf]
  %v56 = vld [vmem:[%s1 + $0x84] sm:$0xf]
  %v57 = vld [vmem:[%s1 + $0x88] sm:$0xf]
  %v58 = vld [vmem:[%s1 + $0x8c] sm:$0xf]
  %v59 = vld [vmem:[%s1 + $0x90] sm:$0xf]
  %v60 = vld [vmem:[%s1 + $0x94] sm:$0xf]
  %v61 = vld [vmem:[%s1 + $0x98] sm:$0xf]
  %v62 = vld [vmem:[%s1 + $0x9c] sm:$0xf]
  %v63 = vld [vmem:[%s1 + $0xa0] sm:$0xf]
  %v64 = vld [vmem:[%s1 + $0xa4] sm:$0xf]
  %v65 = vld [vmem:[%s1 + $0xa8] sm:$0xf]
  %v66 = vld [vmem:[%s1 + $0xac] sm:$0xf]
  %v67 = vld [vmem:[%s1 + $0xb0] sm:$0xf]
  %v68 = vld [vmem:[%s1 + $0xb4] sm:$0xf]
  %v69 = vld [vmem:[%s1 + $0xb8] sm:$0xf]
  %v70 = vld [vmem:[%s1 + $0xbc] sm:$0xf]
  %v71 = vld [vmem:[%s1 + $0xc0] sm:$0xf]
  %v72 = vld [vmem:[%s1 + $0xc4] sm:$0xf]
  %v73 = vld [vmem:[%s1 + $0xc8] sm:$0xf]
  %v74 = vld [vmem:[%s1 + $0xcc] sm:$0xf]
  %v75 = vld [vmem:[%s1 + $0xd0] sm:$0xf]
  %v76 = vld [vmem:[%s1 + $0xd4] sm:$0xf]
  %v77 = vld [vmem:[%s1 + $0xd8] sm:$0xf]
  %v78 = vld [vmem:[%s1 + $0xdc] sm:$0xf]
  %v79 = vld [vmem:[%s1 + $0xe0] sm:$0xf]
  %v80 = vld [vmem:[%s1 + $0xe4] sm:$0xf]
  %v81 = vld [vmem:[%s1 + $0xe8] sm:$0xf]
  %v82 = vld [vmem:[%s1 + $0xec] sm:$0xf]
  %v83 = vld [vmem:[%s1 + $0xf0] sm:$0xf]
  %v84 = vld [vmem:[%s1 + $0xf4] sm:$0xf]
  %v85 = vld [vmem:[%s1 + $0xf8] sm:$0xf]
  %v86 = vld [vmem:[%s1 + $0xfc] sm:$0xf]
  %v87 = vld [vmem:[%s1 + $0x100] sm:$0xf]
  %v88 = vld [vmem:[%s1 + $0x104] sm:$0xf]
  %v89 = vld [vmem:[%s1 + $0x108] sm:$0xf]
  %v90 = vld [vmem:[%s1 + $0x10c] sm:$0xf]
  %v91 = vld [vmem:[%s1 + $0x110] sm:$0xf]
  %v92 = vld [vmem:[%s1 + $0x114] sm:$0xf]
  %v93 = vld [vmem:[%s1 + $0x118] sm:$0xf]
  %v94 = vld [vmem:[%s1 + $0x11c] sm:$0xf]
  %v95 = vld [vmem:[%s1 + $0x120] sm:$0xf]
  %v96 = vld [vmem:[%s1 + $0x124] sm:$0xf]
  %v97 = vld [vmem:[%s1 + $0x128] sm:$0xf]
  %v98 = vld [vmem:[%s1 + $0x12c] sm:$0xf]
  %v99 = vld [vmem:[%s1 + $0x130] sm:$0xf]
  %v100 = vld [vmem:[%s1 + $0x134] sm:$0xf]
  %v101 = vld [vmem:[%s1 + $0x138] sm:$0xf]
  %v102 = vld [vmem:[%s1 + $0x13c] sm:$0xf]
  %v103 = vld [vmem:[%s1 + $0x140] sm:$0xf]
  %v104 = vld [vmem:[%s1 + $0x144] sm:$0xf]
  %v105 = vld [vmem:[%s1 + $0x148] sm:$0xf]
  %v106 = vld [vmem:[%s1 + $0x14c] sm:$0xf]
  %v107 = vld [vmem:[%s1 + $0x150] sm:$0xf]
  %v108 = vld [vmem:[%s1 + $0x154] sm:$0xf]
  %v109 = vld [vmem:[%s1 + $0x158] sm:$0xf]
  %v110 = vld [vmem:[%s1 + $0x15c] sm:$0xf]
  %v111 = vld [vmem:[%s1 + $0x160] sm:$0xf]
  %v112 = vld [vmem:[%s1 + $0x164] sm:$0xf]
  %v113 = vld [vmem:[%s1 + $0x168] sm:$0xf]
  %v114 = vld [vmem:[%s1 + $0x16c] sm:$0xf]
  %v115 = vld [vmem:[%s1 + $0x170] sm:$0xf]
  %v116 = vld [vmem:[%s1 + $0x174] sm:$0xf]
  %v117 = vld [vmem:[%s1 + $0x178] sm:$0xf]
  %v118 = vld [vmem:[%s1 + $0x17c] sm:$0xf]
  %v119 = vld [vmem:[%s1 + $0x180] sm:$0xf]
  %v120 = vld [vmem:[%s1 + $0x184] sm:$0xf]
  %v121 = vld [vmem:[%s1 + $0x188] sm:$0xf]
  %v122 = vld [vmem:[%s1 + $0x18c] sm:$0xf]
  %v123 = vld [vmem:[%s1 + $0x190] sm:$0xf]
  %v124 = vld [vmem:[%s1 + $0x194] sm:$0xf]
  %v125 = vld [vmem:[%s1 + $0x198] sm:$0xf]
  %v126 = vld [vmem:[%s1 + $0x19c] sm:$0xf]
  %v127 = vld [vmem:[%s1 + $0x1a0] sm:$0xf]
  %v128 = vld [vmem:[%s1 + $0x1a4] sm:$0xf]
  %v129 = vld [vmem:[%s1 + $0x1a8] sm:$0xf]
  %v130 = vld [vmem:[%s1 + $0x1ac] sm:$0xf]
  %v131 = vld [vmem:[%s1 + $0x1b0] sm:$0xf]
  %v132 = vld [vmem:[%s1 + $0x1b4] sm:$0xf]
  %v133 = vld [vmem:[%s1 + $0x1b8] sm:$0xf]
  %v134 = vld [vmem:[%s1 + $0x1bc] sm:$0xf]
  %v135 = vld [vmem:[%s1 + $0x1c0] sm:$0xf]
  %v136 = vld [vmem:[%s1 + $0x1c4] sm:$0xf]
  %v137 = vld [vmem:[%s1 + $0x1c8] sm:$0xf]
  %v138 = vld [vmem:[%s1 + $0x1cc] sm:$0xf]
  %v139 = vld [vmem:[%s1 + $0x1d0] sm:$0xf]
  %v140 = vld [vmem:[%s1 + $0x1d4] sm:$0xf]
  %v141 = vld [vmem:[%s1 + $0x1d8] sm:$0xf]
  %v142 = vld [vmem:[%s1 + $0x1dc] sm:$0xf]
  %v143 = vld [vmem:[%s1 + $0x1e0] sm:$0xf]
  %v144 = vld [vmem:[%s1 + $0x1e4] sm:$0xf]
  %v145 = vld [vmem:[%s1 + $0x1e8] sm:$0xf]
  %v146 = vld [vmem:[%s1 + $0x1ec] sm:$0xf]
  %v147 = vld [vmem:[%s1 + $0x1f0] sm:$0xf]
  %v148 = vld [vmem:[%s1 + $0x1f4] sm:$0xf]
  %v149 = vld [vmem:[%s1 + $0x1f8] sm:$0xf]
  %v150 = vld [vmem:[%s1 + $0x1fc] sm:$0xf]
  %v151 = vld [vmem:[%s1 + $0x200] sm:$0xf]
  %v152 = vld [vmem:[%s1 + $0x204] sm:$0xf]
  %v153 = vld [vmem:[%s1 + $0x208] sm:$0xf]
  %v154 = vld [vmem:[%s1 + $0x20c] sm:$0xf]
  %v155 = vld [vmem:[%s1 + $0x210] sm:$0xf]
  %v156 = vld [vmem:[%s1 + $0x214] sm:$0xf]
  %v157 = vld [vmem:[%s1 + $0x218] sm:$0xf]
  %v158 = vld [vmem:[%s1 + $0x21c] sm:$0xf]
  %v159 = vld [vmem:[%s1 + $0x220] sm:$0xf]
  %v160 = vld [vmem:[%s1 + $0x224] sm:$0xf]
  %v161 = vld [vmem:[%s1 + $0x228] sm:$0xf]
  %v162 = vld [vmem:[%s1 + $0x22c] sm:$0xf]
  %v163 = vld [vmem:[%s1 + $0x230] sm:$0xf]
  %v164 = vld [vmem:[%s1 + $0x234] sm:$0xf]
  %v165 = vld [vmem:[%s1 + $0x238] sm:$0xf]
  %v166 = vld [vmem:[%s1 + $0x23c] sm:$0xf]
  %v167 = vld [vmem:[%s1 + $0x240] sm:$0xf]
  %v168 = vld [vmem:[%s1 + $0x244] sm:$0xf]
  %v169 = vld [vmem:[%s1 + $0x248] sm:$0xf]
  %v170 = vld [vmem:[%s1 + $0x24c] sm:$0xf]
  %v171 = vld [vmem:[%s1 + $0x250] sm:$0xf]
  %v172 = vld [vmem:[%s1 + $0x254] sm:$0xf]
  %v173 = vld [vmem:[%s1 + $0x258] sm:$0xf]
  %v174 = vld [vmem:[%s1 + $0x25c] sm:$0xf]
  %v175 = vld [vmem:[%s1 + $0x260] sm:$0xf]
  %v176 = vld [vmem:[%s1 + $0x264] sm:$0xf]
  %v177 = vld [vmem:[%s1 + $0x268] sm:$0xf]
  %v178 = vld [vmem:[%s1 + $0x26c] sm:$0xf]
  %v179 = vld [vmem:[%s1 + $0x270] sm:$0xf]
  %v180 = vld [vmem:[%s1 + $0x274] sm:$0xf]
  %v181 = vld [vmem:[%s1 + $0x278] sm:$0xf]
  %v182 = vld [vmem:[%s1 + $0x27c] sm:$0xf]
  %v183 = vld [vmem:[%s1 + $0x280] sm:$0xf]
  %v184 = vld [vmem:[%s1 + $0x284] sm:$0xf]
  %v185 = vld [vmem:[%s1 + $0x288] sm:$0xf]
  %v186 = vld [vmem:[%s1 + $0x28c] sm:$0xf]
  %v187 = vld [vmem:[%s1 + $0x290] sm:$0xf]
  %v188 = vld [vmem:[%s1 + $0x294] sm:$0xf]
  %v189 = vld [vmem:[%s1 + $0x298] sm:$0xf]
  %v190 = vld [vmem:[%s1 + $0x29c] sm:$0xf]
  %v191 = vld [vmem:[%s1 + $0x2a0] sm:$0xf]
  %v192 = vld [vmem:[%s1 + $0x2a4] sm:$0xf]
  %v193 = vld [vmem:[%s1 + $0x2a8] sm:$0xf]
  %v194 = vld [vmem:[%s1 + $0x2ac] sm:$0xf]
  %v195 = vld [vmem:[%s1 + $0x2b0] sm:$0xf]
  %v196 = vld [vmem:[%s1 + $0x2b4] sm:$0xf]
  %v197 = vld [vmem:[%s1 + $0x2b8] sm:$0xf]
  %v198 = vld [vmem:[%s1 + $0x2bc] sm:$0xf]
  %v199 = vld [vmem:[%s1 + $0x2c0] sm:$0xf]
  %v200 = vld [vmem:[%s1 + $0x2c4] sm:$0xf]
  %v201 = vld [vmem:[%s1 + $0x2c8] sm:$0xf]
  %v202 = vld [vmem:[%s1 + $0x2cc] sm:$0xf]
  %v203 = vld [vmem:[%s1 + $0x2d0] sm:$0xf]
  %v204 = vld [vmem:[%s1 + $0x2d4] sm:$0xf]
  %v205 = vld [vmem:[%s1 + $0x2d8] sm:$0xf]
  %v206 = vld [vmem:[%s1 + $0x2dc] sm:$0xf]
  %v207 = vld [vmem:[%s1 + $0x2e0] sm:$0xf]
  %v208 = vld [vmem:[%s1 + $0x2e4] sm:$0xf]
  %v209 = vld [vmem:[%s1 + $0x2e8] sm:$0xf]
  %v210 = vld [vmem:[%s1 + $0x2ec] sm:$0xf]
  %v211 = vld [vmem:[%s1 + $0x2f0] sm:$0xf]
  %v212 = vld [vmem:[%s1 + $0x2f4] sm:$0xf]
  %v213 = vld [vmem:[%s1 + $0x2f8] sm:$0xf]
  %v214 = vld [vmem:[%s1 + $0x2fc] sm:$0xf]
  %v215 = vld [vmem:[%s1 + $0x300] sm:$0xf]
  %v216 = vld [vmem:[%s1 + $0x304] sm:$0xf]
  %v217 = vld [vmem:[%s1 + $0x308] sm:$0xf]
  %v218 = vld [vmem:[%s1 + $0x30c] sm:$0xf]
  %v219 = vld [vmem:[%s1 + $0x310] sm:$0xf]
  %v220 = vld [vmem:[%s1 + $0x314] sm:$0xf]
  %v221 = vld [vmem:[%s1 + $0x318] sm:$0xf]
  %v222 = vld [vmem:[%s1 + $0x31c] sm:$0xf]
  %v223 = vld [vmem:[%s1 + $0x320] sm:$0xf]
  %v224 = vld [vmem:[%s1 + $0x324] sm:$0xf]
  %v225 = vld [vmem:[%s1 + $0x328] sm:$0xf]
  %v226 = vld [vmem:[%s1 + $0x32c] sm:$0xf]
  %v227 = vld [vmem:[%s1 + $0x330] sm:$0xf]
  %v228 = vld [vmem:[%s1 + $0x334] sm:$0xf]
  %v229 = vld [vmem:[%s1 + $0x338] sm:$0xf]
  %v230 = vld [vmem:[%s1 + $0x33c] sm:$0xf]
  %v231 = vld [vmem:[%s1 + $0x340] sm:$0xf]
  %v232 = vld [vmem:[%s1 + $0x344] sm:$0xf]
  %v233 = vld [vmem:[%s1 + $0x348] sm:$0xf]
  %v234 = vld [vmem:[%s1 + $0x34c] sm:$0xf]
  %v235 = vld [vmem:[%s1 + $0x350] sm:$0xf]
  %v236 = vld [vmem:[%s1 + $0x354] sm:$0xf]
  %v237 = vld [vmem:[%s1 + $0x358] sm:$0xf]
  %v238 = vld [vmem:[%s1 + $0x35c] sm:$0xf]
  %v239 = vld [vmem:[%s1 + $0x360] sm:$0xf]
  %v240 = vld [vmem:[%s1 + $0x364] sm:$0xf]
  %v241 = vld [vmem:[%s1 + $0x368] sm:$0xf]
  %v242 = vld [vmem:[%s1 + $0x36c] sm:$0xf]
  %v243 = vld [vmem:[%s1 + $0x370] sm:$0xf]
  %v244 = vld [vmem:[%s1 + $0x374] sm:$0xf]
  %v245 = vld [vmem:[%s1 + $0x378] sm:$0xf]
  %v246 = vld [vmem:[%s1 + $0x37c] sm:$0xf]
  %v247 = vld [vmem:[%s1 + $0x380] sm:$0xf]
  %v248 = vld [vmem:[%s1 + $0x384] sm:$0xf]
  %v249 = vld [vmem:[%s1 + $0x388] sm:$0xf]
  %v250 = vld [vmem:[%s1 + $0x38c] sm:$0xf]
  %v251 = vld [vmem:[%s1 + $0x390] sm:$0xf]
  %v252 = vld [vmem:[%s1 + $0x394] sm:$0xf]
  %v253 = vld [vmem:[%s1 + $0x398] sm:$0xf]
  %v254 = vld [vmem:[%s1 + $0x39c] sm:$0xf]
  %v255 = vld [vmem:[%s1 + $0x3a0] sm:$0xf]
  %v256 = vld [vmem:[%s1 + $0x3a4] sm:$0xf]
  %v257 = vld [vmem:[%s1 + $0x3a8] sm:$0xf]
  %v258 = vld [vmem:[%s1 + $0x3ac] sm:$0xf]
  %v259 = vld [vmem:[%s1 + $0x3b0] sm:$0xf]
  %v260 = vld [vmem:[%s1 + $0x3b4] sm:$0xf]
  %v261 = vld [vmem:[%s1 + $0x3b8] sm:$0xf]
  %v262 = vld [vmem:[%s1 + $0x3bc] sm:$0xf]
  %v263 = vld [vmem:[%s1 + $0x3c0] sm:$0xf]
  %v264 = vld [vmem:[%s1 + $0x3c4] sm:$0xf]
  %v265 = vld [vmem:[%s1 + $0x3c8] sm:$0xf]
  %v266 = vld [vmem:[%s1 + $0x3cc] sm:$0xf]
  %v267 = vld [vmem:[%s1 + $0x3d0] sm:$0xf]
  %v268 = vld [vmem:[%s1 + $0x3d4] sm:$0xf]
  %v269 = vld [vmem:[%s1 + $0x3d8] sm:$0xf]
  %v270 = vld [vmem:[%s1 + $0x3dc] sm:$0xf]
  %v271 = vld [vmem:[%s1 + $0x3e0] sm:$0xf]
  %v272 = vld [vmem:[%s1 + $0x3e4] sm:$0xf]
  %v273 = vld [vmem:[%s1 + $0x3e8] sm:$0xf]
  %v274 = vld [vmem:[%s1 + $0x3ec] sm:$0xf]
  %v275 = vld [vmem:[%s1 + $0x3f0] sm:$0xf]
  %v276 = vld [vmem:[%s1 + $0x3f4] sm:$0xf]
  %v277 = vld [vmem:[%s1 + $0x3f8] sm:$0xf]
  %v278 = vld [vmem:[%s1 + $0x3fc] sm:$0xf]
  %v279 = vld [vmem:[%s1 + $0x400] sm:$0xf]
  %v280 = vld [vmem:[%s1 + $0x404] sm:$0xf]
  %v281 = vld [vmem:[%s1 + $0x408] sm:$0xf]
  %v282 = vld [vmem:[%s1 + $0x40c] sm:$0xf]
  %v283 = vld [vmem:[%s1 + $0x410] sm:$0xf]
  %v284 = vld [vmem:[%s1 + $0x414] sm:$0xf]
  %v285 = vld [vmem:[%s1 + $0x418] sm:$0xf]
  %v286 = vld [vmem:[%s1 + $0x41c] sm:$0xf]
  %v287 = vld [vmem:[%s1 + $0x420] sm:$0xf]
  %v288 = vld [vmem:[%s1 + $0x424] sm:$0xf]
  %v289 = vld [vmem:[%s1 + $0x428] sm:$0xf]
  %v290 = vld [vmem:[%s1 + $0x42c] sm:$0xf]
  %v291 = vld [vmem:[%s1 + $0x430] sm:$0xf]
  %v292 = vld [vmem:[%s1 + $0x434] sm:$0xf]
  %v293 = vld [vmem:[%s1 + $0x438] sm:$0xf]
  %v294 = vld [vmem:[%s1 + $0x43c] sm:$0xf]
  %v295 = vld [vmem:[%s1 + $0x440] sm:$0xf]
  %v296 = vld [vmem:[%s1 + $0x444] sm:$0xf]
  %v297 = vld [vmem:[%s1 + $0x448] sm:$0xf]
  %v298 = vld [vmem:[%s1 + $0x44c] sm:$0xf]
  %v299 = vld [vmem:[%s1 + $0x450] sm:$0xf]
  %v300 = vld [vmem:[%s1 + $0x454] sm:$0xf]
  %v301 = vld [vmem:[%s1 + $0x458] sm:$0xf]
  %v302 = vld [vmem:[%s1 + $0x45c] sm:$0xf]
  %v303 = vld [vmem:[%s1 + $0x460] sm:$0xf]
  %v304 = vld [vmem:[%s1 + $0x464] sm:$0xf]
  %v305 = vld [vmem:[%s1 + $0x468] sm:$0xf]
  %v306 = vld [vmem:[%s1 + $0x46c] sm:$0xf]
  %v307 = vld [vmem:[%s1 + $0x470] sm:$0xf]
  %v308 = vld [vmem:[%s1 + $0x474] sm:$0xf]
  %v309 = vld [vmem:[%s1 + $0x478] sm:$0xf]
  %v310 = vld [vmem:[%s1 + $0x47c] sm:$0xf]
  %v311 = vld [vmem:[%s1 + $0x480] sm:$0xf]
  %v312 = vld [vmem:[%s1 + $0x484] sm:$0xf]
  %v313 = vld [vmem:[%s1 + $0x488] sm:$0xf]
  %v314 = vld [vmem:[%s1 + $0x48c] sm:$0xf]
  %v315 = vld [vmem:[%s1 + $0x490] sm:$0xf]
  %v316 = vld [vmem:[%s1 + $0x494] sm:$0xf]
  %v317 = vld [vmem:[%s1 + $0x498] sm:$0xf]
  %v318 = vld [vmem:[%s1 + $0x49c] sm:$0xf]
  %v319 = vld [vmem:[%s1 + $0x4a0] sm:$0xf]
  %v320 = vld [vmem:[%s1 + $0x4a4] sm:$0xf]
  %v321 = vld [vmem:[%s1 + $0x4a8] sm:$0xf]
  %v322 = vld [vmem:[%s1 + $0x4ac] sm:$0xf]
  %v323 = vld [vmem:[%s1 + $0x4b0] sm:$0xf]
  %v324 = vld [vmem:[%s1 + $0x4b4] sm:$0xf]
  %v325 = vld [vmem:[%s1 + $0x4b8] sm:$0xf]
  %v326 = vld [vmem:[%s1 + $0x4bc] sm:$0xf]
  %v327 = vld [vmem:[%s1 + $0x4c0] sm:$0xf]
  %v328 = vld [vmem:[%s1 + $0x4c4] sm:$0xf]
  %v329 = vld [vmem:[%s1 + $0x4c8] sm:$0xf]
  %v330 = vld [vmem:[%s1 + $0x4cc] sm:$0xf]
  %v331 = vld [vmem:[%s1 + $0x4d0] sm:$0xf]
  %v332 = vld [vmem:[%s1 + $0x4d4] sm:$0xf]
  %v333 = vld [vmem:[%s1 + $0x4d8] sm:$0xf]
  %v334 = vld [vmem:[%s1 + $0x4dc] sm:$0xf]
  %v335 = vld [vmem:[%s1 + $0x4e0] sm:$0xf]
  %v336 = vld [vmem:[%s1 + $0x4e4] sm:$0xf]
  %v337 = vld [vmem:[%s1 + $0x4e8] sm:$0xf]
  %v338 = vld [vmem:[%s1 + $0x4ec] sm:$0xf]
  %v339 = vld [vmem:[%s1 + $0x4f0] sm:$0xf]
  %v340 = vld [vmem:[%s1 + $0x4f4] sm:$0xf]
  %v341 = vld [vmem:[%s1 + $0x4f8] sm:$0xf]
  %v342 = vld [vmem:[%s1 + $0x4fc] sm:$0xf]
  %v343 = vld [vmem:[%s1 + $0x500] sm:$0xf]
  %v344 = vld [vmem:[%s1 + $0x504] sm:$0xf]
  %v345 = vld [vmem:[%s1 + $0x508] sm:$0xf]
  %v346 = vld [vmem:[%s1 + $0x50c] sm:$0xf]
  %v347 = vld [vmem:[%s1 + $0x510] sm:$0xf]
  %v348 = vld [vmem:[%s1 + $0x514] sm:$0xf]
  %v349 = vld [vmem:[%s1 + $0x518] sm:$0xf]
  %v350 = vld [vmem:[%s1 + $0x51c] sm:$0xf]
  %v351 = vld [vmem:[%s1 + $0x520] sm:$0xf]
  %v352 = vld [vmem:[%s1 + $0x524] sm:$0xf]
  %v353 = vld [vmem:[%s1 + $0x528] sm:$0xf]
  %v354 = vld [vmem:[%s1 + $0x52c] sm:$0xf]
  %v355 = vld [vmem:[%s1 + $0x530] sm:$0xf]
  %v356 = vld [vmem:[%s1 + $0x534] sm:$0xf]
  %v357 = vld [vmem:[%s1 + $0x538] sm:$0xf]
  %v358 = vld [vmem:[%s1 + $0x53c] sm:$0xf]
  %v359 = vld [vmem:[%s1 + $0x540] sm:$0xf]
  %v360 = vld [vmem:[%s1 + $0x544] sm:$0xf]
  %v361 = vld [vmem:[%s1 + $0x548] sm:$0xf]
  %v362 = vld [vmem:[%s1 + $0x54c] sm:$0xf]
  %v363 = vld [vmem:[%s1 + $0x550] sm:$0xf]
  %v364 = vld [vmem:[%s1 + $0x554] sm:$0xf]
  %v365 = vld [vmem:[%s1 + $0x558] sm:$0xf]
  %v366 = vld [vmem:[%s1 + $0x55c] sm:$0xf]
  %v367 = vld [vmem:[%s1 + $0x560] sm:$0xf]
  %v368 = vld [vmem:[%s1 + $0x564] sm:$0xf]
  %v369 = vld [vmem:[%s1 + $0x568] sm:$0xf]
  %v370 = vld [vmem:[%s1 + $0x56c] sm:$0xf]
  %v371 = vld [vmem:[%s1 + $0x570] sm:$0xf]
  %v372 = vld [vmem:[%s1 + $0x574] sm:$0xf]
  %v373 = vld [vmem:[%s1 + $0x578] sm:$0xf]
  %v374 = vld [vmem:[%s1 + $0x57c] sm:$0xf]
  %v375 = vld [vmem:[%s1 + $0x580] sm:$0xf]
  %v376 = vld [vmem:[%s1 + $0x584] sm:$0xf]
  %v377 = vld [vmem:[%s1 + $0x588] sm:$0xf]
  %v378 = vld [vmem:[%s1 + $0x58c] sm:$0xf]
  %v379 = vld [vmem:[%s1 + $0x590] sm:$0xf]
  %v380 = vld [vmem:[%s1 + $0x594] sm:$0xf]
  %v381 = vld [vmem:[%s1 + $0x598] sm:$0xf]
  %v382 = vld [vmem:[%s1 + $0x59c] sm:$0xf]
  %v383 = vld [vmem:[%s1 + $0x5a0] sm:$0xf]
  %v384 = vld [vmem:[%s1 + $0x5a4] sm:$0xf]
  %v385 = vld [vmem:[%s1 + $0x5a8] sm:$0xf]
  %v386 = vld [vmem:[%s1 + $0x5ac] sm:$0xf]
  %v387 = vld [vmem:[%s1 + $0x5b0] sm:$0xf]
  %v388 = vld [vmem:[%s1 + $0x5b4] sm:$0xf]
  %v389 = vld [vmem:[%s1 + $0x5b8] sm:$0xf]
  %v390 = vld [vmem:[%s1 + $0x5bc] sm:$0xf]
  %v391 = vld [vmem:[%s1 + $0x5c0] sm:$0xf]
  %v392 = vld [vmem:[%s1 + $0x5c4] sm:$0xf]
  %v393 = vld [vmem:[%s1 + $0x5c8] sm:$0xf]
  %v394 = vld [vmem:[%s1 + $0x5cc] sm:$0xf]
  %v395 = vld [vmem:[%s1 + $0x5d0] sm:$0xf]
  %v396 = vld [vmem:[%s1 + $0x5d4] sm:$0xf]
  %v397 = vld [vmem:[%s1 + $0x5d8] sm:$0xf]
  %v398 = vld [vmem:[%s1 + $0x5dc] sm:$0xf]
  %v399 = vld [vmem:[%s1 + $0x5e0] sm:$0xf]
  %v400 = vld [vmem:[%s1 + $0x5e4] sm:$0xf]
  %v401 = vld [vmem:[%s1 + $0x5e8] sm:$0xf]
  %v402 = vld [vmem:[%s1 + $0x5ec] sm:$0xf]
  %v403 = vld [vmem:[%s1 + $0x5f0] sm:$0xf]
  %v404 = vld [vmem:[%s1 + $0x5f4] sm:$0xf]
  %v405 = vld [vmem:[%s1 + $0x5f8] sm:$0xf]
  %v406 = vld [vmem:[%s1 + $0x5fc] sm:$0xf]
  %v407 = vld [vmem:[%s1 + $0x600] sm:$0xf]
  %v408 = vld [vmem:[%s1 + $0x604] sm:$0xf]
  %v409 = vld [vmem:[%s1 + $0x608] sm:$0xf]
  %v410 = vld [vmem:[%s1 + $0x60c] sm:$0xf]
  %v411 = vld [vmem:[%s1 + $0x610] sm:$0xf]
  %v412 = vld [vmem:[%s1 + $0x614] sm:$0xf]
  %v413 = vld [vmem:[%s1 + $0x618] sm:$0xf]
  %v414 = vld [vmem:[%s1 + $0x61c] sm:$0xf]
  %v415 = vld [vmem:[%s1 + $0x620] sm:$0xf]
  %v416 = vld [vmem:[%s1 + $0x624] sm:$0xf]
  %v417 = vld [vmem:[%s1 + $0x628] sm:$0xf]
  %v418 = vld [vmem:[%s1 + $0x62c] sm:$0xf]
  %v419 = vld [vmem:[%s1 + $0x630] sm:$0xf]
  %v420 = vld [vmem:[%s1 + $0x634] sm:$0xf]
  %v421 = vld [vmem:[%s1 + $0x638] sm:$0xf]
  %v422 = vld [vmem:[%s1 + $0x63c] sm:$0xf]
  %v423 = vld [vmem:[%s1 + $0x640] sm:$0xf]
  %v424 = vld [vmem:[%s1 + $0x644] sm:$0xf]
  %v425 = vld [vmem:[%s1 + $0x648] sm:$0xf]
  %v426 = vld [vmem:[%s1 + $0x64c] sm:$0xf]
  %v427 = vld [vmem:[%s1 + $0x650] sm:$0xf]
  %v428 = vld [vmem:[%s1 + $0x654] sm:$0xf]
  %v429 = vld [vmem:[%s1 + $0x658] sm:$0xf]
  %v430 = vld [vmem:[%s1 + $0x65c] sm:$0xf]
  %v431 = vld [vmem:[%s1 + $0x660] sm:$0xf]
  %v432 = vld [vmem:[%s1 + $0x664] sm:$0xf]
  %v433 = vld [vmem:[%s1 + $0x668] sm:$0xf]
  %v434 = vld [vmem:[%s1 + $0x66c] sm:$0xf]
  %v435 = vld [vmem:[%s1 + $0x670] sm:$0xf]
  %v436 = vld [vmem:[%s1 + $0x674] sm:$0xf]
  %v437 = vld [vmem:[%s1 + $0x678] sm:$0xf]
  %v438 = vld [vmem:[%s1 + $0x67c] sm:$0xf]
  %v439 = vld [vmem:[%s1 + $0x680] sm:$0xf]
  %v440 = vld [vmem:[%s1 + $0x684] sm:$0xf]
  %v441 = vld [vmem:[%s1 + $0x688] sm:$0xf]
  %v442 = vld [vmem:[%s1 + $0x68c] sm:$0xf]
  %v443 = vld [vmem:[%s1 + $0x690] sm:$0xf]
  %v444 = vld [vmem:[%s1 + $0x694] sm:$0xf]
  %v445 = vld [vmem:[%s1 + $0x698] sm:$0xf]
  %v446 = vld [vmem:[%s1 + $0x69c] sm:$0xf]
  %v447 = vld [vmem:[%s1 + $0x6a0] sm:$0xf]
  %v448 = vld [vmem:[%s1 + $0x6a4] sm:$0xf]
  %v449 = vld [vmem:[%s1 + $0x6a8] sm:$0xf]
  %v450 = vld [vmem:[%s1 + $0x6ac] sm:$0xf]
  %v451 = vld [vmem:[%s1 + $0x6b0] sm:$0xf]
  %v452 = vld [vmem:[%s1 + $0x6b4] sm:$0xf]
  %v453 = vld [vmem:[%s1 + $0x6b8] sm:$0xf]
  %v454 = vld [vmem:[%s1 + $0x6bc] sm:$0xf]
  %v455 = vld [vmem:[%s1 + $0x6c0] sm:$0xf]
  %v456 = vld [vmem:[%s1 + $0x6c4] sm:$0xf]
  %v457 = vld [vmem:[%s1 + $0x6c8] sm:$0xf]
  %v458 = vld [vmem:[%s1 + $0x6cc] sm:$0xf]
  %v459 = vld [vmem:[%s1 + $0x6d0] sm:$0xf]
  %v460 = vld [vmem:[%s1 + $0x6d4] sm:$0xf]
  %v461 = vld [vmem:[%s1 + $0x6d8] sm:$0xf]
  %v462 = vld [vmem:[%s1 + $0x6dc] sm:$0xf]
  %v463 = vld [vmem:[%s1 + $0x6e0] sm:$0xf]
  %v464 = vld [vmem:[%s1 + $0x6e4] sm:$0xf]
  %v465 = vld [vmem:[%s1 + $0x6e8] sm:$0xf]
  %v466 = vld [vmem:[%s1 + $0x6ec] sm:$0xf]
  %v467 = vld [vmem:[%s1 + $0x6f0] sm:$0xf]
  %v468 = vld [vmem:[%s1 + $0x6f4] sm:$0xf]
  %v469 = vld [vmem:[%s1 + $0x6f8] sm:$0xf]
  %v470 = vld [vmem:[%s1 + $0x6fc] sm:$0xf]
  %v471 = vld [vmem:[%s1 + $0x700] sm:$0xf]
  %v472 = vld [vmem:[%s1 + $0x704] sm:$0xf]
  %v473 = vld [vmem:[%s1 + $0x708] sm:$0xf]
  %v474 = vld [vmem:[%s1 + $0x70c] sm:$0xf]
  %v475 = vld [vmem:[%s1 + $0x710] sm:$0xf]
  %v476 = vld [vmem:[%s1 + $0x714] sm:$0xf]
  %v477 = vld [vmem:[%s1 + $0x718] sm:$0xf]
  %v478 = vld [vmem:[%s1 + $0x71c] sm:$0xf]
  %v479 = vld [vmem:[%s1 + $0x720] sm:$0xf]
  %v480 = vld [vmem:[%s1 + $0x724] sm:$0xf]
  %v481 = vld [vmem:[%s1 + $0x728] sm:$0xf]
  %v482 = vld [vmem:[%s1 + $0x72c] sm:$0xf]
  %v483 = vld [vmem:[%s1 + $0x730] sm:$0xf]
  %v484 = vld [vmem:[%s1 + $0x734] sm:$0xf]
  %v485 = vld [vmem:[%s1 + $0x738] sm:$0xf]
  %v486 = vld [vmem:[%s1 + $0x73c] sm:$0xf]
  %v487 = vld [vmem:[%s1 + $0x740] sm:$0xf]
  %v488 = vld [vmem:[%s1 + $0x744] sm:$0xf]
  %v489 = vld [vmem:[%s1 + $0x748] sm:$0xf]
  %v490 = vld [vmem:[%s1 + $0x74c] sm:$0xf]
  %v491 = vld [vmem:[%s1 + $0x750] sm:$0xf]
  %v492 = vld [vmem:[%s1 + $0x754] sm:$0xf]
  %v493 = vld [vmem:[%s1 + $0x758] sm:$0xf]
  %v494 = vld [vmem:[%s1 + $0x75c] sm:$0xf]
  %v495 = vld [vmem:[%s1 + $0x760] sm:$0xf]
  %v496 = vld [vmem:[%s1 + $0x764] sm:$0xf]
  %v497 = vld [vmem:[%s1 + $0x768] sm:$0xf]
  %v498 = vld [vmem:[%s1 + $0x76c] sm:$0xf]
  %v499 = vld [vmem:[%s1 + $0x770] sm:$0xf]
  %v500 = vld [vmem:[%s1 + $0x774] sm:$0xf]
  %v501 = vld [vmem:[%s1 + $0x778] sm:$0xf]
  %v502 = vld [vmem:[%s1 + $0x77c] sm:$0xf]
  %v503 = vld [vmem:[%s1 + $0x780] sm:$0xf]
  %v504 = vld [vmem:[%s1 + $0x784] sm:$0xf]
  %v505 = vld [vmem:[%s1 + $0x788] sm:$0xf]
  %v506 = vld [vmem:[%s1 + $0x78c] sm:$0xf]
  %v507 = vld [vmem:[%s1 + $0x790] sm:$0xf]
  %v508 = vld [vmem:[%s1 + $0x794] sm:$0xf]
  %v509 = vld [vmem:[%s1 + $0x798] sm:$0xf]
  %v510 = vld [vmem:[%s1 + $0x79c] sm:$0xf]
  %v511 = vld [vmem:[%s1 + $0x7a0] sm:$0xf]
  %v512 = vld [vmem:[%s1 + $0x7a4] sm:$0xf]
  %v513 = vld [vmem:[%s1 + $0x7a8] sm:$0xf]
  %v514 = vld [vmem:[%s1 + $0x7ac] sm:$0xf]
  %v515 = vld [vmem:[%s1 + $0x7b0] sm:$0xf]
  %v516 = vld [vmem:[%s1 + $0x7b4] sm:$0xf]
  %v517 = vld [vmem:[%s1 + $0x7b8] sm:$0xf]
  %v518 = vld [vmem:[%s1 + $0x7bc] sm:$0xf]
  %v519 = vld [vmem:[%s1 + $0x7c0] sm:$0xf]
  %v520 = vld [vmem:[%s1 + $0x7c4] sm:$0xf]
  %v521 = vld [vmem:[%s1 + $0x7c8] sm:$0xf]
  %v522 = vld [vmem:[%s1 + $0x7cc] sm:$0xf]
  %v523 = vld [vmem:[%s1 + $0x7d0] sm:$0xf]
  %v524 = vld [vmem:[%s1 + $0x7d4] sm:$0xf]
  %v525 = vld [vmem:[%s1 + $0x7d8] sm:$0xf]
  %v526 = vld [vmem:[%s1 + $0x7dc] sm:$0xf]
  %v527 = vld [vmem:[%s1 + $0x7e0] sm:$0xf]
  %v528 = vld [vmem:[%s1 + $0x7e4] sm:$0xf]
  %v529 = vld [vmem:[%s1 + $0x7e8] sm:$0xf]
  %v530 = vld [vmem:[%s1 + $0x7ec] sm:$0xf]
  %v531 = vld [vmem:[%s1 + $0x7f0] sm:$0xf]
  %v532 = vld [vmem:[%s1 + $0x7f4] sm:$0xf]
  %v533 = vld [vmem:[%s1 + $0x7f8] sm:$0xf]
  %v534 = vld [vmem:[%s1 + $0x7fc] sm:$0xf]
  %v535 = vld [vmem:[%s1 + $0x800] sm:$0xf]
  %v536 = vld [vmem:[%s1 + $0x804] sm:$0xf]
  %v537 = vld [vmem:[%s1 + $0x808] sm:$0xf]
  %v538 = vld [vmem:[%s1 + $0x80c] sm:$0xf]
  %v539 = vld [vmem:[%s1 + $0x810] sm:$0xf]
  %v540 = vld [vmem:[%s1 + $0x814] sm:$0xf]
  %v541 = vld [vmem:[%s1 + $0x818] sm:$0xf]
  %v542 = vld [vmem:[%s1 + $0x81c] sm:$0xf]
  %v543 = vld [vmem:[%s1 + $0x820] sm:$0xf]
  %v544 = vld [vmem:[%s1 + $0x824] sm:$0xf]
  %v545 = vld [vmem:[%s1 + $0x828] sm:$0xf]
  %v546 = vld [vmem:[%s1 + $0x82c] sm:$0xf]
  %v547 = vld [vmem:[%s1 + $0x830] sm:$0xf]
  %v548 = vld [vmem:[%s1 + $0x834] sm:$0xf]
  %v549 = vld [vmem:[%s1 + $0x838] sm:$0xf]
  %v550 = vld [vmem:[%s1 + $0x83c] sm:$0xf]
  %v551 = vld [vmem:[%s1 + $0x840] sm:$0xf]
  %v552 = vld [vmem:[%s1 + $0x844] sm:$0xf]
  %v553 = vld [vmem:[%s1 + $0x848] sm:$0xf]
  %v554 = vld [vmem:[%s1 + $0x84c] sm:$0xf]
  %v555 = vld [vmem:[%s1 + $0x850] sm:$0xf]
  %v556 = vld [vmem:[%s1 + $0x854] sm:$0xf]
  %v557 = vld [vmem:[%s1 + $0x858] sm:$0xf]
  %v558 = vld [vmem:[%s1 + $0x85c] sm:$0xf]
  %v559 = vld [vmem:[%s1 + $0x860] sm:$0xf]
  %v560 = vld [vmem:[%s1 + $0x864] sm:$0xf]
  %v561 = vld [vmem:[%s1 + $0x868] sm:$0xf]
  %v562 = vld [vmem:[%s1 + $0x86c] sm:$0xf]
  %v563 = vld [vmem:[%s1 + $0x870] sm:$0xf]
  %v564 = vld [vmem:[%s1 + $0x874] sm:$0xf]
  %v565 = vld [vmem:[%s1 + $0x878] sm:$0xf]
  %v566 = vld [vmem:[%s1 + $0x87c] sm:$0xf]
  %v567 = vld [vmem:[%s1 + $0x880] sm:$0xf]
  %v568 = vld [vmem:[%s1 + $0x884] sm:$0xf]
  %v569 = vld [vmem:[%s1 + $0x888] sm:$0xf]
  %v570 = vld [vmem:[%s1 + $0x88c] sm:$0xf]
  %v571 = vld [vmem:[%s1 + $0x890] sm:$0xf]
  %v572 = vld [vmem:[%s1 + $0x894] sm:$0xf]
  %v573 = vld [vmem:[%s1 + $0x898] sm:$0xf]
  %v574 = vld [vmem:[%s1 + $0x89c] sm:$0xf]
  %v575 = vld [vmem:[%s1 + $0x8a0] sm:$0xf]
  %v576 = vld [vmem:[%s1 + $0x8a4] sm:$0xf]
  %v577 = vld [vmem:[%s1 + $0x8a8] sm:$0xf]
  %v578 = vld [vmem:[%s1 + $0x8ac] sm:$0xf]
  %v579 = vld [vmem:[%s1 + $0x8b0] sm:$0xf]
  %v580 = vld [vmem:[%s1 + $0x8b4] sm:$0xf]
  %v581 = vld [vmem:[%s1 + $0x8b8] sm:$0xf]
  %v582 = vld [vmem:[%s1 + $0x8bc] sm:$0xf]
  %v583 = vld [vmem:[%s1 + $0x8c0] sm:$0xf]
  %v584 = vld [vmem:[%s1 + $0x8c4] sm:$0xf]
  %v585 = vld [vmem:[%s1 + $0x8c8] sm:$0xf]
  %v586 = vld [vmem:[%s1 + $0x8cc] sm:$0xf]
  %v587 = vld [vmem:[%s1 + $0x8d0] sm:$0xf]
  %v588 = vld [vmem:[%s1 + $0x8d4] sm:$0xf]
  %v589 = vld [vmem:[%s1 + $0x8d8] sm:$0xf]
  %v590 = vld [vmem:[%s1 + $0x8dc] sm:$0xf]
  %v591 = vld [vmem:[%s1 + $0x8e0] sm:$0xf]
  %v592 = vld [vmem:[%s1 + $0x8e4] sm:$0xf]
  %v593 = vld [vmem:[%s1 + $0x8e8] sm:$0xf]
  %v594 = vld [vmem:[%s1 + $0x8ec] sm:$0xf]
  %v595 = vld [vmem:[%s1 + $0x8f0] sm:$0xf]
  %v596 = vld [vmem:[%s1 + $0x8f4] sm:$0xf]
  %v597 = vld [vmem:[%s1 + $0x8f8] sm:$0xf]
  %v598 = vld [vmem:[%s1 + $0x8fc] sm:$0xf]
  %v599 = vld [vmem:[%s1 + $0x900] sm:$0xf]
  %v600 = vld [vmem:[%s1 + $0x904] sm:$0xf]
  %v601 = vld [vmem:[%s1 + $0x908] sm:$0xf]
  %v602 = vld [vmem:[%s1 + $0x90c] sm:$0xf]
  %v603 = vld [vmem:[%s1 + $0x910] sm:$0xf]
  %v604 = vld [vmem:[%s1 + $0x914] sm:$0xf]
  %v605 = vld [vmem:[%s1 + $0x918] sm:$0xf]
  %v606 = vld [vmem:[%s1 + $0x91c] sm:$0xf]
  %v607 = vld [vmem:[%s1 + $0x920] sm:$0xf]
  %v608 = vld [vmem:[%s1 + $0x924] sm:$0xf]
  %v609 = vld [vmem:[%s1 + $0x928] sm:$0xf]
  %v610 = vld [vmem:[%s1 + $0x92c] sm:$0xf]
  %v616 = vcombine.high %v18, %v18
  %v618 = vunpack.c.l.s4 1966171168
  %v619 = vunpack.c.0.s8 %v618
  %v620 = vlaneseq
  %v621 = vshrl.u32 %v620, 7
  %v622 = vsub.s32 %v619, %v621
  %v623 = vrot.slane %v18, %v622
  %v625 = vunpack.c.l.s4 1966171168
  %v626 = vunpack.c.0.s8 %v625
  %v627 = vlaneseq
  %v628 = vshrl.u32 %v627, 7
  %v629 = vsub.s32 %v626, %v628
  %v630 = vrot.slane %v616, %v629
  %v631 = vcombine.high %v623, %v623
  %v632 = vcombine.high %v630, %v630
  %v634 = vunpack.c.l.s4 1966171168
  %v635 = vunpack.c.0.s8 %v634
  %v636 = vlaneseq
  %v637 = vshrl.u32 %v636, 7
  %v638 = vsub.s32 %v635, %v637
  %v639 = vrot.slane %v623, %v638
  %v641 = vunpack.c.l.s4 1966171168
  %v642 = vunpack.c.0.s8 %v641
  %v643 = vlaneseq
  %v644 = vshrl.u32 %v643, 7
  %v645 = vsub.s32 %v642, %v644
  %v646 = vrot.slane %v630, %v645
  %v648 = vunpack.c.l.s4 1966171168
  %v649 = vunpack.c.0.s8 %v648
  %v650 = vlaneseq
  %v651 = vshrl.u32 %v650, 7
  %v652 = vsub.s32 %v649, %v651
  %v653 = vrot.slane %v631, %v652
  %v655 = vunpack.c.l.s4 1966171168
  %v656 = vunpack.c.0.s8 %v655
  %v657 = vlaneseq
  %v658 = vshrl.u32 %v657, 7
  %v659 = vsub.s32 %v656, %v658
  %v660 = vrot.slane %v632, %v659
  %v661 = vcombine.high %v639, %v639
  %v662 = vcombine.high %v646, %v646
  %v663 = vcombine.high %v653, %v653
  %v664 = vcombine.high %v660, %v660
  %v665 = vcombine.high %v19, %v19
  %v667 = vunpack.c.l.s4 1966171168
  %v668 = vunpack.c.0.s8 %v667
  %v669 = vlaneseq
  %v670 = vshrl.u32 %v669, 7
  %v671 = vsub.s32 %v668, %v670
  %v672 = vrot.slane %v19, %v671
  %v674 = vunpack.c.l.s4 1966171168
  %v675 = vunpack.c.0.s8 %v674
  %v676 = vlaneseq
  %v677 = vshrl.u32 %v676, 7
  %v678 = vsub.s32 %v675, %v677
  %v679 = vrot.slane %v665, %v678
  %v680 = vcombine.high %v672, %v672
  %v681 = vcombine.high %v679, %v679
  %v683 = vunpack.c.l.s4 1966171168
  %v684 = vunpack.c.0.s8 %v683
  %v685 = vlaneseq
  %v686 = vshrl.u32 %v685, 7
  %v687 = vsub.s32 %v684, %v686
  %v688 = vrot.slane %v672, %v687
  %v690 = vunpack.c.l.s4 1966171168
  %v691 = vunpack.c.0.s8 %v690
  %v692 = vlaneseq
  %v693 = vshrl.u32 %v692, 7
  %v694 = vsub.s32 %v691, %v693
  %v695 = vrot.slane %v679, %v694
  %v697 = vunpack.c.l.s4 1966171168
  %v698 = vunpack.c.0.s8 %v697
  %v699 = vlaneseq
  %v700 = vshrl.u32 %v699, 7
  %v701 = vsub.s32 %v698, %v700
  %v702 = vrot.slane %v680, %v701
  %v704 = vunpack.c.l.s4 1966171168
  %v705 = vunpack.c.0.s8 %v704
  %v706 = vlaneseq
  %v707 = vshrl.u32 %v706, 7
  %v708 = vsub.s32 %v705, %v707
  %v709 = vrot.slane %v681, %v708
  %v710 = vcombine.high %v688, %v688
  %v711 = vcombine.high %v695, %v695
  %v712 = vcombine.high %v702, %v702
  %v713 = vcombine.high %v709, %v709
  %v714 = vcombine.high %v20, %v20
  %v716 = vunpack.c.l.s4 1966171168
  %v717 = vunpack.c.0.s8 %v716
  %v718 = vlaneseq
  %v719 = vshrl.u32 %v718, 7
  %v720 = vsub.s32 %v717, %v719
  %v721 = vrot.slane %v20, %v720
  %v723 = vunpack.c.l.s4 1966171168
  %v724 = vunpack.c.0.s8 %v723
  %v725 = vlaneseq
  %v726 = vshrl.u32 %v725, 7
  %v727 = vsub.s32 %v724, %v726
  %v728 = vrot.slane %v714, %v727
  %v729 = vcombine.high %v721, %v721
  %v730 = vcombine.high %v728, %v728
  %v732 = vunpack.c.l.s4 1966171168
  %v733 = vunpack.c.0.s8 %v732
  %v734 = vlaneseq
  %v735 = vshrl.u32 %v734, 7
  %v736 = vsub.s32 %v733, %v735
  %v737 = vrot.slane %v721, %v736
  %v739 = vunpack.c.l.s4 1966171168
  %v740 = vunpack.c.0.s8 %v739
  %v741 = vlaneseq
  %v742 = vshrl.u32 %v741, 7
  %v743 = vsub.s32 %v740, %v742
  %v744 = vrot.slane %v728, %v743
  %v746 = vunpack.c.l.s4 1966171168
  %v747 = vunpack.c.0.s8 %v746
  %v748 = vlaneseq
  %v749 = vshrl.u32 %v748, 7
  %v750 = vsub.s32 %v747, %v749
  %v751 = vrot.slane %v729, %v750
  %v753 = vunpack.c.l.s4 1966171168
  %v754 = vunpack.c.0.s8 %v753
  %v755 = vlaneseq
  %v756 = vshrl.u32 %v755, 7
  %v757 = vsub.s32 %v754, %v756
  %v758 = vrot.slane %v730, %v757
  %v759 = vcombine.high %v737, %v737
  %v760 = vcombine.high %v744, %v744
  %v761 = vcombine.high %v751, %v751
  %v762 = vcombine.high %v758, %v758
  %v763 = vcombine.high %v21, %v21
  %v765 = vunpack.c.l.s4 1966171168
  %v766 = vunpack.c.0.s8 %v765
  %v767 = vlaneseq
  %v768 = vshrl.u32 %v767, 7
  %v769 = vsub.s32 %v766, %v768
  %v770 = vrot.slane %v21, %v769
  %v772 = vunpack.c.l.s4 1966171168
  %v773 = vunpack.c.0.s8 %v772
  %v774 = vlaneseq
  %v775 = vshrl.u32 %v774, 7
  %v776 = vsub.s32 %v773, %v775
  %v777 = vrot.slane %v763, %v776
  %v778 = vcombine.high %v770, %v770
  %v779 = vcombine.high %v777, %v777
  %v781 = vunpack.c.l.s4 1966171168
  %v782 = vunpack.c.0.s8 %v781
  %v783 = vlaneseq
  %v784 = vshrl.u32 %v783, 7
  %v785 = vsub.s32 %v782, %v784
  %v786 = vrot.slane %v770, %v785
  %v788 = vunpack.c.l.s4 1966171168
  %v789 = vunpack.c.0.s8 %v788
  %v790 = vlaneseq
  %v791 = vshrl.u32 %v790, 7
  %v792 = vsub.s32 %v789, %v791
  %v793 = vrot.slane %v777, %v792
  %v795 = vunpack.c.l.s4 1966171168
  %v796 = vunpack.c.0.s8 %v795
  %v797 = vlaneseq
  %v798 = vshrl.u32 %v797, 7
  %v799 = vsub.s32 %v796, %v798
  %v800 = vrot.slane %v778, %v799
  %v802 = vunpack.c.l.s4 1966171168
  %v803 = vunpack.c.0.s8 %v802
  %v804 = vlaneseq
  %v805 = vshrl.u32 %v804, 7
  %v806 = vsub.s32 %v803, %v805
  %v807 = vrot.slane %v779, %v806
  %v808 = vcombine.high %v786, %v786
  %v809 = vcombine.high %v793, %v793
  %v810 = vcombine.high %v800, %v800
  %v811 = vcombine.high %v807, %v807
  %v812 = vcombine.high %v22, %v22
  %v814 = vunpack.c.l.s4 1966171168
  %v815 = vunpack.c.0.s8 %v814
  %v816 = vlaneseq
  %v817 = vshrl.u32 %v816, 7
  %v818 = vsub.s32 %v815, %v817
  %v819 = vrot.slane %v22, %v818
  %v821 = vunpack.c.l.s4 1966171168
  %v822 = vunpack.c.0.s8 %v821
  %v823 = vlaneseq
  %v824 = vshrl.u32 %v823, 7
  %v825 = vsub.s32 %v822, %v824
  %v826 = vrot.slane %v812, %v825
  %v827 = vcombine.high %v819, %v819
  %v829 = vunpack.c.l.s4 1966171168
  %v830 = vunpack.c.0.s8 %v829
  %v831 = vlaneseq
  %v832 = vshrl.u32 %v831, 7
  %v833 = vsub.s32 %v830, %v832
  %v834 = vrot.slane %v819, %v833
  %v836 = vunpack.c.l.s4 1966171168
  %v837 = vunpack.c.0.s8 %v836
  %v838 = vlaneseq
  %v839 = vshrl.u32 %v838, 7
  %v840 = vsub.s32 %v837, %v839
  %v841 = vrot.slane %v826, %v840
  %v843 = vunpack.c.l.s4 1966171168
  %v844 = vunpack.c.0.s8 %v843
  %v845 = vlaneseq
  %v846 = vshrl.u32 %v845, 7
  %v847 = vsub.s32 %v844, %v846
  %v848 = vrot.slane %v827, %v847
  %v849 = vcombine.high %v834, %v834
  %v850 = vcombine.high %v848, %v848
  %v1475 = vunpack.c.l.b16 %v23
  %v1476 = vunpack.c.l.b16 %v24
  %v1477 = vunpack.c.l.b16 %v25
  %v1478 = vunpack.c.l.b16 %v26
  %v1479 = vunpack.c.l.b16 %v27
  %v1480 = vunpack.c.l.b16 %v28
  %v1481 = vunpack.c.l.b16 %v29
  %v1482 = vunpack.c.l.b16 %v30
  %v1483 = vunpack.c.l.b16 %v31
  %v1484 = vunpack.c.l.b16 %v32
  %v1485 = vunpack.c.l.b16 %v33
  %v1486 = vunpack.c.l.b16 %v34
  %v1487 = vunpack.c.l.b16 %v35
  %v1488 = vunpack.c.l.b16 %v36
  %v1489 = vunpack.c.l.b16 %v37
  %v1490 = vunpack.c.l.b16 %v38
  %v1491 = vunpack.c.l.b16 %v39
  %v1492 = vunpack.c.l.b16 %v40
  %v1493 = vunpack.c.l.b16 %v41
  %v1494 = vunpack.c.l.b16 %v42
  %v1495 = vunpack.c.l.b16 %v43
  %v1496 = vunpack.c.l.b16 %v44
  %v1497 = vunpack.c.l.b16 %v45
  %v1498 = vunpack.c.l.b16 %v46
  %v1499 = vunpack.c.l.b16 %v47
  %v1500 = vunpack.c.l.b16 %v48
  %v1501 = vunpack.c.l.b16 %v49
  %v1502 = vunpack.c.l.b16 %v50
  %v1503 = vunpack.c.l.b16 %v51
  %v1504 = vunpack.c.l.b16 %v52
  %v1505 = vunpack.c.l.b16 %v53
  %v1506 = vunpack.c.l.b16 %v54
  %v1507 = vunpack.c.l.b16 %v55
  %v1508 = vunpack.c.l.b16 %v56
  %v1509 = vunpack.c.l.b16 %v57
  %v1510 = vunpack.c.l.b16 %v58
  %v1511 = vunpack.c.l.b16 %v59
  %v1512 = vunpack.c.l.b16 %v60
  %v1513 = vunpack.c.l.b16 %v61
  %v1514 = vunpack.c.l.b16 %v62
  %v1515 = vunpack.c.l.b16 %v63
  %v1516 = vunpack.c.l.b16 %v64
  %v1517 = vunpack.c.l.b16 %v65
  %v1518 = vunpack.c.l.b16 %v66
  %v1519 = vunpack.c.l.b16 %v67
  %v1520 = vunpack.c.l.b16 %v68
  %v1521 = vunpack.c.l.b16 %v69
  %v1522 = vunpack.c.l.b16 %v70
  %v1523 = vunpack.c.l.b16 %v71
  %v1524 = vunpack.c.l.b16 %v72
  %v1525 = vunpack.c.l.b16 %v73
  %v1526 = vunpack.c.l.b16 %v74
  %v1527 = vunpack.c.l.b16 %v75
  %v1528 = vunpack.c.l.b16 %v76
  %v1529 = vunpack.c.l.b16 %v77
  %v1530 = vunpack.c.l.b16 %v78
  %v1531 = vunpack.c.l.b16 %v79
  %v1532 = vunpack.c.l.b16 %v80
  %v1533 = vunpack.c.l.b16 %v81
  %v1534 = vunpack.c.l.b16 %v82
  %v1535 = vunpack.c.l.b16 %v83
  %v1536 = vunpack.c.l.b16 %v84
  %v1537 = vunpack.c.l.b16 %v85
  %v1538 = vunpack.c.l.b16 %v86
  %v1539 = vunpack.c.l.b16 %v87
  %v1540 = vunpack.c.l.b16 %v88
  %v1541 = vunpack.c.l.b16 %v89
  %v1542 = vunpack.c.l.b16 %v90
  %v1543 = vunpack.c.l.b16 %v91
  %v1544 = vunpack.c.l.b16 %v92
  %v1545 = vunpack.c.l.b16 %v93
  %v1546 = vunpack.c.l.b16 %v94
  %v1547 = vunpack.c.l.b16 %v95
  %v1548 = vunpack.c.l.b16 %v96
  %v1549 = vunpack.c.l.b16 %v97
  %v1550 = vunpack.c.l.b16 %v98
  %v1551 = vunpack.c.l.b16 %v99
  %v1552 = vunpack.c.l.b16 %v100
  %v1553 = vunpack.c.l.b16 %v101
  %v1554 = vunpack.c.l.b16 %v102
  %v1555 = vunpack.c.l.b16 %v103
  %v1556 = vunpack.c.l.b16 %v104
  %v1557 = vunpack.c.l.b16 %v105
  %v1558 = vunpack.c.l.b16 %v106
  %v1559 = vunpack.c.l.b16 %v107
  %v1560 = vunpack.c.l.b16 %v108
  %v1561 = vunpack.c.l.b16 %v109
  %v1562 = vunpack.c.l.b16 %v110
  %v1563 = vunpack.c.l.b16 %v111
  %v1564 = vunpack.c.l.b16 %v112
  %v1565 = vunpack.c.l.b16 %v113
  %v1566 = vunpack.c.l.b16 %v114
  %v1567 = vunpack.c.l.b16 %v115
  %v1568 = vunpack.c.l.b16 %v116
  %v1569 = vunpack.c.l.b16 %v117
  %v1570 = vunpack.c.l.b16 %v118
  %v1571 = vunpack.c.l.b16 %v119
  %v1572 = vunpack.c.l.b16 %v120
  %v1573 = vunpack.c.l.b16 %v121
  %v1574 = vunpack.c.l.b16 %v122
  %v1575 = vunpack.c.l.b16 %v123
  %v1576 = vunpack.c.l.b16 %v124
  %v1577 = vunpack.c.l.b16 %v125
  %v1578 = vunpack.c.l.b16 %v126
  %v1579 = vunpack.c.l.b16 %v127
  %v1580 = vunpack.c.l.b16 %v128
  %v1581 = vunpack.c.l.b16 %v129
  %v1582 = vunpack.c.l.b16 %v130
  %v1583 = vunpack.c.l.b16 %v131
  %v1584 = vunpack.c.l.b16 %v132
  %v1585 = vunpack.c.l.b16 %v133
  %v1586 = vunpack.c.l.b16 %v134
  %v1587 = vunpack.c.l.b16 %v135
  %v1588 = vunpack.c.l.b16 %v136
  %v1589 = vunpack.c.l.b16 %v137
  %v1590 = vunpack.c.l.b16 %v138
  %v1591 = vunpack.c.l.b16 %v139
  %v1592 = vunpack.c.l.b16 %v140
  %v1593 = vunpack.c.l.b16 %v141
  %v1594 = vunpack.c.l.b16 %v142
  %v1595 = vunpack.c.l.b16 %v143
  %v1596 = vunpack.c.l.b16 %v144
  %v1597 = vunpack.c.l.b16 %v145
  %v1598 = vunpack.c.l.b16 %v146
  %v1599 = vunpack.c.l.b16 %v147
  %v1600 = vunpack.c.l.b16 %v148
  %v1601 = vunpack.c.l.b16 %v149
  %v1602 = vunpack.c.l.b16 %v150
  %v1603 = vunpack.c.l.b16 %v151
  %v1604 = vunpack.c.l.b16 %v152
  %v1605 = vunpack.c.l.b16 %v153
  %v1606 = vunpack.c.l.b16 %v154
  %v1607 = vunpack.c.l.b16 %v155
  %v1608 = vunpack.c.l.b16 %v156
  %v1609 = vunpack.c.l.b16 %v157
  %v1610 = vunpack.c.l.b16 %v158
  %v1611 = vunpack.c.l.b16 %v159
  %v1612 = vunpack.c.l.b16 %v160
  %v1613 = vunpack.c.l.b16 %v161
  %v1614 = vunpack.c.l.b16 %v162
  %v1615 = vunpack.c.l.b16 %v163
  %v1616 = vunpack.c.l.b16 %v164
  %v1617 = vunpack.c.l.b16 %v165
  %v1618 = vunpack.c.l.b16 %v166
  %v1619 = vunpack.c.l.b16 %v167
  %v1620 = vunpack.c.l.b16 %v168
  %v1621 = vunpack.c.l.b16 %v169
  %v1622 = vunpack.c.l.b16 %v170
  %v1623 = vunpack.c.l.b16 %v171
  %v1624 = vunpack.c.l.b16 %v172
  %v1625 = vunpack.c.l.b16 %v173
  %v1626 = vunpack.c.l.b16 %v174
  %v1627 = vunpack.c.l.b16 %v175
  %v1628 = vunpack.c.l.b16 %v176
  %v1629 = vunpack.c.l.b16 %v177
  %v1630 = vunpack.c.l.b16 %v178
  %v1631 = vunpack.c.l.b16 %v179
  %v1632 = vunpack.c.l.b16 %v180
  %v1633 = vunpack.c.l.b16 %v181
  %v1634 = vunpack.c.l.b16 %v182
  %v1635 = vunpack.c.l.b16 %v183
  %v1636 = vunpack.c.l.b16 %v184
  %v1637 = vunpack.c.l.b16 %v185
  %v1638 = vunpack.c.l.b16 %v186
  %v1639 = vunpack.c.l.b16 %v187
  %v1640 = vunpack.c.l.b16 %v188
  %v1641 = vunpack.c.l.b16 %v189
  %v1642 = vunpack.c.l.b16 %v190
  %v1643 = vunpack.c.l.b16 %v191
  %v1644 = vunpack.c.l.b16 %v192
  %v1645 = vunpack.c.l.b16 %v193
  %v1646 = vunpack.c.l.b16 %v194
  %v1647 = vunpack.c.l.b16 %v195
  %v1648 = vunpack.c.l.b16 %v196
  %v1649 = vunpack.c.l.b16 %v197
  %v1650 = vunpack.c.l.b16 %v198
  %v1651 = vunpack.c.l.b16 %v199
  %v1652 = vunpack.c.l.b16 %v200
  %v1653 = vunpack.c.l.b16 %v201
  %v1654 = vunpack.c.l.b16 %v202
  %v1655 = vunpack.c.l.b16 %v203
  %v1656 = vunpack.c.l.b16 %v204
  %v1657 = vunpack.c.l.b16 %v205
  %v1658 = vunpack.c.l.b16 %v206
  %v1659 = vunpack.c.l.b16 %v207
  %v1660 = vunpack.c.l.b16 %v208
  %v1661 = vunpack.c.l.b16 %v209
  %v1662 = vunpack.c.l.b16 %v210
  %v1663 = vunpack.c.l.b16 %v211
  %v1664 = vunpack.c.l.b16 %v212
  %v1665 = vunpack.c.l.b16 %v213
  %v1666 = vunpack.c.l.b16 %v214
  %v1667 = vunpack.c.l.b16 %v215
  %v1668 = vunpack.c.l.b16 %v216
  %v1669 = vunpack.c.l.b16 %v217
  %v1670 = vunpack.c.l.b16 %v218
  %v1671 = vunpack.c.l.b16 %v219
  %v1672 = vunpack.c.l.b16 %v220
  %v1673 = vunpack.c.l.b16 %v221
  %v1674 = vunpack.c.l.b16 %v222
  %v1675 = vunpack.c.l.b16 %v223
  %v1676 = vunpack.c.l.b16 %v224
  %v1677 = vunpack.c.l.b16 %v225
  %v1678 = vunpack.c.l.b16 %v226
  %v1679 = vunpack.c.l.b16 %v227
  %v1680 = vunpack.c.l.b16 %v228
  %v1681 = vunpack.c.l.b16 %v229
  %v1682 = vunpack.c.l.b16 %v230
  %v1683 = vunpack.c.l.b16 %v231
  %v1684 = vunpack.c.l.b16 %v232
  %v1685 = vunpack.c.l.b16 %v233
  %v1686 = vunpack.c.l.b16 %v234
  %v1687 = vunpack.c.l.b16 %v235
  %v1688 = vunpack.c.l.b16 %v236
  %v1689 = vunpack.c.l.b16 %v237
  %v1690 = vunpack.c.l.b16 %v238
  %v1691 = vunpack.c.l.b16 %v239
  %v1692 = vunpack.c.l.b16 %v240
  %v1693 = vunpack.c.l.b16 %v241
  %v1694 = vunpack.c.l.b16 %v242
  %v1695 = vunpack.c.l.b16 %v243
  %v1696 = vunpack.c.l.b16 %v244
  %v1697 = vunpack.c.l.b16 %v245
  %v1698 = vunpack.c.l.b16 %v246
  %v1699 = vunpack.c.l.b16 %v247
  %v1700 = vunpack.c.l.b16 %v248
  %v1701 = vunpack.c.l.b16 %v249
  %v1702 = vunpack.c.l.b16 %v250
  %v1703 = vunpack.c.l.b16 %v251
  %v1704 = vunpack.c.l.b16 %v252
  %v1705 = vunpack.c.l.b16 %v253
  %v1706 = vunpack.c.l.b16 %v254
  %v1707 = vunpack.c.l.b16 %v255
  %v1708 = vunpack.c.l.b16 %v256
  %v1709 = vunpack.c.l.b16 %v257
  %v1710 = vunpack.c.l.b16 %v258
  %v1711 = vunpack.c.l.b16 %v259
  %v1712 = vunpack.c.l.b16 %v260
  %v1713 = vunpack.c.l.b16 %v261
  %v1714 = vunpack.c.l.b16 %v262
  %v1715 = vunpack.c.l.b16 %v263
  %v1716 = vunpack.c.l.b16 %v264
  %v1717 = vunpack.c.l.b16 %v265
  %v1718 = vunpack.c.l.b16 %v266
  %v1719 = vunpack.c.l.b16 %v267
  %v1720 = vunpack.c.l.b16 %v268
  %v1721 = vunpack.c.l.b16 %v269
  %v1722 = vunpack.c.l.b16 %v270
  %v1723 = vunpack.c.l.b16 %v271
  %v1724 = vunpack.c.l.b16 %v272
  %v1725 = vunpack.c.l.b16 %v273
  %v1726 = vunpack.c.l.b16 %v274
  %v1727 = vunpack.c.l.b16 %v275
  %v1728 = vunpack.c.l.b16 %v276
  %v1729 = vunpack.c.l.b16 %v277
  %v1730 = vunpack.c.l.b16 %v278
  %v1731 = vunpack.c.l.b16 %v279
  %v1732 = vunpack.c.l.b16 %v280
  %v1733 = vunpack.c.l.b16 %v281
  %v1734 = vunpack.c.l.b16 %v282
  %v1735 = vunpack.c.l.b16 %v283
  %v1736 = vunpack.c.l.b16 %v284
  %v1737 = vunpack.c.l.b16 %v285
  %v1738 = vunpack.c.l.b16 %v286
  %v1739 = vunpack.c.l.b16 %v287
  %v1740 = vunpack.c.l.b16 %v288
  %v1741 = vunpack.c.l.b16 %v289
  %v1742 = vunpack.c.l.b16 %v290
  %v1743 = vunpack.c.l.b16 %v291
  %v1744 = vunpack.c.l.b16 %v292
  %v1745 = vunpack.c.l.b16 %v293
  %v1746 = vunpack.c.l.b16 %v294
  %v1747 = vunpack.c.l.b16 %v295
  %v1748 = vunpack.c.l.b16 %v296
  %v1749 = vunpack.c.l.b16 %v297
  %v1750 = vunpack.c.l.b16 %v298
  %v1751 = vunpack.c.l.b16 %v299
  %v1752 = vunpack.c.l.b16 %v300
  %v1753 = vunpack.c.l.b16 %v301
  %v1754 = vunpack.c.l.b16 %v302
  %v1755 = vunpack.c.l.b16 %v303
  %v1756 = vunpack.c.l.b16 %v304
  %v1757 = vunpack.c.l.b16 %v305
  %v1758 = vunpack.c.l.b16 %v306
  %v1759 = vunpack.c.l.b16 %v307
  %v1760 = vunpack.c.l.b16 %v308
  %v1761 = vunpack.c.l.b16 %v309
  %v1762 = vunpack.c.l.b16 %v310
  %v1763 = vunpack.c.l.b16 %v311
  %v1764 = vunpack.c.l.b16 %v312
  %v1765 = vunpack.c.l.b16 %v313
  %v1766 = vunpack.c.l.b16 %v314
  %v1767 = vunpack.c.l.b16 %v315
  %v1768 = vunpack.c.l.b16 %v316
  %v1769 = vunpack.c.l.b16 %v317
  %v1770 = vunpack.c.l.b16 %v318
  %v1771 = vunpack.c.l.b16 %v319
  %v1772 = vunpack.c.l.b16 %v320
  %v1773 = vunpack.c.l.b16 %v321
  %v1774 = vunpack.c.l.b16 %v322
  %v1775 = vunpack.c.l.b16 %v323
  %v1776 = vunpack.c.l.b16 %v324
  %v1777 = vunpack.c.l.b16 %v325
  %v1778 = vunpack.c.l.b16 %v326
  %v1779 = vunpack.c.l.b16 %v327
  %v1780 = vunpack.c.l.b16 %v328
  %v1781 = vunpack.c.l.b16 %v329
  %v1782 = vunpack.c.l.b16 %v330
  %v1783 = vunpack.c.l.b16 %v331
  %v1784 = vunpack.c.l.b16 %v332
  %v1785 = vunpack.c.l.b16 %v333
  %v1786 = vunpack.c.l.b16 %v334
  %v1787 = vunpack.c.l.b16 %v335
  %v1788 = vunpack.c.l.b16 %v336
  %v1789 = vunpack.c.l.b16 %v337
  %v1790 = vunpack.c.l.b16 %v338
  %v1791 = vunpack.c.l.b16 %v339
  %v1792 = vunpack.c.l.b16 %v340
  %v1793 = vunpack.c.l.b16 %v341
  %v1794 = vunpack.c.l.b16 %v342
  %v1795 = vunpack.c.l.b16 %v343
  %v1796 = vunpack.c.l.b16 %v344
  %v1797 = vunpack.c.l.b16 %v345
  %v1798 = vunpack.c.l.b16 %v346
  %v1799 = vunpack.c.l.b16 %v347
  %v1800 = vunpack.c.l.b16 %v348
  %v1801 = vunpack.c.l.b16 %v349
  %v1802 = vunpack.c.l.b16 %v350
  %v1803 = vunpack.c.l.b16 %v351
  %v1804 = vunpack.c.l.b16 %v352
  %v1805 = vunpack.c.l.b16 %v353
  %v1806 = vunpack.c.l.b16 %v354
  %v1807 = vunpack.c.l.b16 %v355
  %v1808 = vunpack.c.l.b16 %v356
  %v1809 = vunpack.c.l.b16 %v357
  %v1810 = vunpack.c.l.b16 %v358
  %v1811 = vunpack.c.l.b16 %v359
  %v1812 = vunpack.c.l.b16 %v360
  %v1813 = vunpack.c.l.b16 %v361
  %v1814 = vunpack.c.l.b16 %v362
  %v1815 = vunpack.c.l.b16 %v363
  %v1816 = vunpack.c.l.b16 %v364
  %v1817 = vunpack.c.l.b16 %v365
  %v1818 = vunpack.c.l.b16 %v366
  %v1819 = vunpack.c.l.b16 %v367
  %v1820 = vunpack.c.l.b16 %v368
  %v1821 = vunpack.c.l.b16 %v369
  %v1822 = vunpack.c.l.b16 %v370
  %v1823 = vunpack.c.l.b16 %v371
  %v1824 = vunpack.c.l.b16 %v372
  %v1825 = vunpack.c.l.b16 %v373
  %v1826 = vunpack.c.l.b16 %v374
  %v1827 = vunpack.c.l.b16 %v375
  %v1828 = vunpack.c.l.b16 %v376
  %v1829 = vunpack.c.l.b16 %v377
  %v1830 = vunpack.c.l.b16 %v378
  %v1831 = vunpack.c.l.b16 %v379
  %v1832 = vunpack.c.l.b16 %v380
  %v1833 = vunpack.c.l.b16 %v381
  %v1834 = vunpack.c.l.b16 %v382
  %v1835 = vunpack.c.l.b16 %v383
  %v1836 = vunpack.c.l.b16 %v384
  %v1837 = vunpack.c.l.b16 %v385
  %v1838 = vunpack.c.l.b16 %v386
  %v1839 = vunpack.c.l.b16 %v387
  %v1840 = vunpack.c.l.b16 %v388
  %v1841 = vunpack.c.l.b16 %v389
  %v1842 = vunpack.c.l.b16 %v390
  %v1843 = vunpack.c.l.b16 %v391
  %v1844 = vunpack.c.l.b16 %v392
  %v1845 = vunpack.c.l.b16 %v393
  %v1846 = vunpack.c.l.b16 %v394
  %v1847 = vunpack.c.l.b16 %v395
  %v1848 = vunpack.c.l.b16 %v396
  %v1849 = vunpack.c.l.b16 %v397
  %v1850 = vunpack.c.l.b16 %v398
  %v1851 = vunpack.c.l.b16 %v399
  %v1852 = vunpack.c.l.b16 %v400
  %v1853 = vunpack.c.l.b16 %v401
  %v1854 = vunpack.c.l.b16 %v402
  %v1855 = vunpack.c.l.b16 %v403
  %v1856 = vunpack.c.l.b16 %v404
  %v1857 = vunpack.c.l.b16 %v405
  %v1858 = vunpack.c.l.b16 %v406
  %v1859 = vunpack.c.l.b16 %v407
  %v1860 = vunpack.c.l.b16 %v408
  %v1861 = vunpack.c.l.b16 %v409
  %v1862 = vunpack.c.l.b16 %v410
  %v1863 = vunpack.c.l.b16 %v411
  %v1864 = vunpack.c.l.b16 %v412
  %v1865 = vunpack.c.l.b16 %v413
  %v1866 = vunpack.c.l.b16 %v414
  %v1867 = vunpack.c.l.b16 %v415
  %v1868 = vunpack.c.l.b16 %v416
  %v1869 = vunpack.c.l.b16 %v417
  %v1870 = vunpack.c.l.b16 %v418
  %v1871 = vunpack.c.l.b16 %v419
  %v1872 = vunpack.c.l.b16 %v420
  %v1873 = vunpack.c.l.b16 %v421
  %v1874 = vunpack.c.l.b16 %v422
  %v1875 = vunpack.c.l.b16 %v423
  %v1876 = vunpack.c.l.b16 %v424
  %v1877 = vunpack.c.l.b16 %v425
  %v1878 = vunpack.c.l.b16 %v426
  %v1879 = vunpack.c.l.b16 %v427
  %v1880 = vunpack.c.l.b16 %v428
  %v1881 = vunpack.c.l.b16 %v429
  %v1882 = vunpack.c.l.b16 %v430
  %v1883 = vunpack.c.l.b16 %v431
  %v1884 = vunpack.c.l.b16 %v432
  %v1885 = vunpack.c.l.b16 %v433
  %v1886 = vunpack.c.l.b16 %v434
  %v1887 = vunpack.c.l.b16 %v435
  %v1888 = vunpack.c.l.b16 %v436
  %v1889 = vunpack.c.l.b16 %v437
  %v1890 = vunpack.c.l.b16 %v438
  %v1891 = vunpack.c.l.b16 %v439
  %v1892 = vunpack.c.l.b16 %v440
  %v1893 = vunpack.c.l.b16 %v441
  %v1894 = vunpack.c.l.b16 %v442
  %v1895 = vunpack.c.l.b16 %v443
  %v1896 = vunpack.c.l.b16 %v444
  %v1897 = vunpack.c.l.b16 %v445
  %v1898 = vunpack.c.l.b16 %v446
  %v1899 = vunpack.c.l.b16 %v447
  %v1900 = vunpack.c.l.b16 %v448
  %v1901 = vunpack.c.l.b16 %v449
  %v1902 = vunpack.c.l.b16 %v450
  %v1903 = vunpack.c.l.b16 %v451
  %v1904 = vunpack.c.l.b16 %v452
  %v1905 = vunpack.c.l.b16 %v453
  %v1906 = vunpack.c.l.b16 %v454
  %v1907 = vunpack.c.l.b16 %v455
  %v1908 = vunpack.c.l.b16 %v456
  %v1909 = vunpack.c.l.b16 %v457
  %v1910 = vunpack.c.l.b16 %v458
  %v1911 = vunpack.c.l.b16 %v459
  %v1912 = vunpack.c.l.b16 %v460
  %v1913 = vunpack.c.l.b16 %v461
  %v1914 = vunpack.c.l.b16 %v462
  %v1915 = vunpack.c.l.b16 %v463
  %v1916 = vunpack.c.l.b16 %v464
  %v1917 = vunpack.c.l.b16 %v465
  %v1918 = vunpack.c.l.b16 %v466
  %v1919 = vunpack.c.l.b16 %v467
  %v1920 = vunpack.c.l.b16 %v468
  %v1921 = vunpack.c.l.b16 %v469
  %v1922 = vunpack.c.l.b16 %v470
  %v1923 = vunpack.c.l.b16 %v471
  %v1924 = vunpack.c.l.b16 %v472
  %v1925 = vunpack.c.l.b16 %v473
  %v1926 = vunpack.c.l.b16 %v474
  %v1927 = vunpack.c.l.b16 %v475
  %v1928 = vunpack.c.l.b16 %v476
  %v1929 = vunpack.c.l.b16 %v477
  %v1930 = vunpack.c.l.b16 %v478
  %v1931 = vunpack.c.l.b16 %v479
  %v1932 = vunpack.c.l.b16 %v480
  %v1933 = vunpack.c.l.b16 %v481
  %v1934 = vunpack.c.l.b16 %v482
  %v1935 = vunpack.c.l.b16 %v483
  %v1936 = vunpack.c.l.b16 %v484
  %v1937 = vunpack.c.l.b16 %v485
  %v1938 = vunpack.c.l.b16 %v486
  %v1939 = vunpack.c.l.b16 %v487
  %v1940 = vunpack.c.l.b16 %v488
  %v1941 = vunpack.c.l.b16 %v489
  %v1942 = vunpack.c.l.b16 %v490
  %v1943 = vunpack.c.l.b16 %v491
  %v1944 = vunpack.c.l.b16 %v492
  %v1945 = vunpack.c.l.b16 %v493
  %v1946 = vunpack.c.l.b16 %v494
  %v1947 = vunpack.c.l.b16 %v495
  %v1948 = vunpack.c.l.b16 %v496
  %v1949 = vunpack.c.l.b16 %v497
  %v1950 = vunpack.c.l.b16 %v498
  %v1951 = vunpack.c.l.b16 %v499
  %v1952 = vunpack.c.l.b16 %v500
  %v1953 = vunpack.c.l.b16 %v501
  %v1954 = vunpack.c.l.b16 %v502
  %v1955 = vunpack.c.l.b16 %v503
  %v1956 = vunpack.c.l.b16 %v504
  %v1957 = vunpack.c.l.b16 %v505
  %v1958 = vunpack.c.l.b16 %v506
  %v1959 = vunpack.c.l.b16 %v507
  %v1960 = vunpack.c.l.b16 %v508
  %v1961 = vunpack.c.l.b16 %v509
  %v1962 = vunpack.c.l.b16 %v510
  %v1963 = vunpack.c.l.b16 %v511
  %v1964 = vunpack.c.l.b16 %v512
  %v1965 = vunpack.c.l.b16 %v513
  %v1966 = vunpack.c.l.b16 %v514
  %v1967 = vunpack.c.l.b16 %v515
  %v1968 = vunpack.c.l.b16 %v516
  %v1969 = vunpack.c.l.b16 %v517
  %v1970 = vunpack.c.l.b16 %v518
  %v1971 = vunpack.c.l.b16 %v519
  %v1972 = vunpack.c.l.b16 %v520
  %v1973 = vunpack.c.l.b16 %v521
  %v1974 = vunpack.c.l.b16 %v522
  %v1975 = vunpack.c.l.b16 %v523
  %v1976 = vunpack.c.l.b16 %v524
  %v1977 = vunpack.c.l.b16 %v525
  %v1978 = vunpack.c.l.b16 %v526
  %v1979 = vunpack.c.l.b16 %v527
  %v1980 = vunpack.c.l.b16 %v528
  %v1981 = vunpack.c.l.b16 %v529
  %v1982 = vunpack.c.l.b16 %v530
  %v1983 = vunpack.c.l.b16 %v531
  %v1984 = vunpack.c.l.b16 %v532
  %v1985 = vunpack.c.l.b16 %v533
  %v1986 = vunpack.c.l.b16 %v534
  %v1987 = vunpack.c.l.b16 %v535
  %v1988 = vunpack.c.l.b16 %v536
  %v1989 = vunpack.c.l.b16 %v537
  %v1990 = vunpack.c.l.b16 %v538
  %v1991 = vunpack.c.l.b16 %v539
  %v1992 = vunpack.c.l.b16 %v540
  %v1993 = vunpack.c.l.b16 %v541
  %v1994 = vunpack.c.l.b16 %v542
  %v1995 = vunpack.c.l.b16 %v543
  %v1996 = vunpack.c.l.b16 %v544
  %v1997 = vunpack.c.l.b16 %v545
  %v1998 = vunpack.c.l.b16 %v546
  %v1999 = vunpack.c.l.b16 %v547
  %v2000 = vunpack.c.l.b16 %v548
  %v2001 = vunpack.c.l.b16 %v549
  %v2002 = vunpack.c.l.b16 %v550
  %v2003 = vunpack.c.l.b16 %v551
  %v2004 = vunpack.c.l.b16 %v552
  %v2005 = vunpack.c.l.b16 %v553
  %v2006 = vunpack.c.l.b16 %v554
  %v2007 = vunpack.c.l.b16 %v555
  %v2008 = vunpack.c.l.b16 %v556
  %v2009 = vunpack.c.l.b16 %v557
  %v2010 = vunpack.c.l.b16 %v558
  %v2011 = vunpack.c.l.b16 %v559
  %v2012 = vunpack.c.l.b16 %v560
  %v2013 = vunpack.c.l.b16 %v561
  %v2014 = vunpack.c.l.b16 %v562
  %v2015 = vunpack.c.l.b16 %v563
  %v2016 = vunpack.c.l.b16 %v564
  %v2017 = vunpack.c.l.b16 %v565
  %v2018 = vunpack.c.l.b16 %v566
  %v2019 = vunpack.c.l.b16 %v567
  %v2020 = vunpack.c.l.b16 %v568
  %v2021 = vunpack.c.l.b16 %v569
  %v2022 = vunpack.c.l.b16 %v570
  %v2023 = vunpack.c.l.b16 %v571
  %v2024 = vunpack.c.l.b16 %v572
  %v2025 = vunpack.c.l.b16 %v573
  %v2026 = vunpack.c.l.b16 %v574
  %v2027 = vunpack.c.l.b16 %v575
  %v2028 = vunpack.c.l.b16 %v576
  %v2029 = vunpack.c.l.b16 %v577
  %v2030 = vunpack.c.l.b16 %v578
  %v2031 = vunpack.c.l.b16 %v579
  %v2032 = vunpack.c.l.b16 %v580
  %v2033 = vunpack.c.l.b16 %v581
  %v2034 = vunpack.c.l.b16 %v582
  %v2035 = vunpack.c.l.b16 %v583
  %v2036 = vunpack.c.l.b16 %v584
  %v2037 = vunpack.c.l.b16 %v585
  %v2038 = vunpack.c.l.b16 %v586
  %v2039 = vunpack.c.l.b16 %v587
  %v2040 = vunpack.c.l.b16 %v588
  %v2041 = vunpack.c.l.b16 %v589
  %v2042 = vunpack.c.l.b16 %v590
  %v2043 = vunpack.c.l.b16 %v591
  %v2044 = vunpack.c.l.b16 %v592
  %v2045 = vunpack.c.l.b16 %v593
  %v2046 = vunpack.c.l.b16 %v594
  %v2047 = vunpack.c.l.b16 %v595
  %v2048 = vunpack.c.l.b16 %v596
  %v2049 = vunpack.c.l.b16 %v597
  %v2050 = vunpack.c.l.b16 %v598
  %v2051 = vunpack.c.l.b16 %v599
  %v2052 = vunpack.c.l.b16 %v600
  %v2053 = vunpack.c.l.b16 %v601
  %v2054 = vunpack.c.l.b16 %v602
  %v2055 = vunpack.c.l.b16 %v603
  %v2056 = vunpack.c.l.b16 %v604
  %v2057 = vunpack.c.l.b16 %v605
  %v2058 = vunpack.c.l.b16 %v606
  %v2059 = vunpack.c.l.b16 %v607
  %v2060 = vunpack.c.l.b16 %v608
  %v2061 = vunpack.c.l.b16 %v609
  %v2062 = vunpack.c.l.b16 %v610
  %v2063 = vpack.c.b16 %v1476, %v1475
  %v2064 = vpack.c.b16 %v1478, %v1477
  %v2065 = vpack.c.b16 %v1480, %v1479
  %v2066 = vpack.c.b16 %v1482, %v1481
  %v2067 = vpack.c.b16 %v1484, %v1483
  %v2068 = vpack.c.b16 %v1486, %v1485
  %v2069 = vpack.c.b16 %v1488, %v1487
  %v2070 = vpack.c.b16 %v1490, %v1489
  %v2071 = vpack.c.b16 %v1492, %v1491
  %v2072 = vpack.c.b16 %v1494, %v1493
  %v2073 = vpack.c.b16 %v1496, %v1495
  %v2074 = vpack.c.b16 %v1498, %v1497
  %v2075 = vpack.c.b16 %v1500, %v1499
  %v2076 = vpack.c.b16 %v1502, %v1501
  %v2077 = vpack.c.b16 %v1504, %v1503
  %v2078 = vpack.c.b16 %v1506, %v1505
  %v2079 = vpack.c.b16 %v1508, %v1507
  %v2080 = vpack.c.b16 %v1510, %v1509
  %v2081 = vpack.c.b16 %v1512, %v1511
  %v2082 = vpack.c.b16 %v1514, %v1513
  %v2083 = vpack.c.b16 %v1516, %v1515
  %v2084 = vpack.c.b16 %v1518, %v1517
  %v2085 = vpack.c.b16 %v1520, %v1519
  %v2086 = vpack.c.b16 %v1522, %v1521
  %v2087 = vpack.c.b16 %v1524, %v1523
  %v2088 = vpack.c.b16 %v1526, %v1525
  %v2089 = vpack.c.b16 %v1528, %v1527
  %v2090 = vpack.c.b16 %v1530, %v1529
  %v2091 = vpack.c.b16 %v1532, %v1531
  %v2092 = vpack.c.b16 %v1534, %v1533
  %v2093 = vpack.c.b16 %v1536, %v1535
  %v2094 = vpack.c.b16 %v1538, %v1537
  %v2095 = vpack.c.b16 %v1540, %v1539
  %v2096 = vpack.c.b16 %v1542, %v1541
  %v2097 = vpack.c.b16 %v1544, %v1543
  %v2098 = vpack.c.b16 %v1546, %v1545
  %v2099 = vpack.c.b16 %v1548, %v1547
  %v2100 = vpack.c.b16 %v1550, %v1549
  %v2101 = vpack.c.b16 %v1552, %v1551
  %v2102 = vpack.c.b16 %v1554, %v1553
  %v2103 = vpack.c.b16 %v1556, %v1555
  %v2104 = vpack.c.b16 %v1558, %v1557
  %v2105 = vpack.c.b16 %v1560, %v1559
  %v2106 = vpack.c.b16 %v1562, %v1561
  %v2107 = vpack.c.b16 %v1564, %v1563
  %v2108 = vpack.c.b16 %v1566, %v1565
  %v2109 = vpack.c.b16 %v1568, %v1567
  %v2110 = vpack.c.b16 %v1570, %v1569
  %v2111 = vpack.c.b16 %v1572, %v1571
  %v2112 = vpack.c.b16 %v1574, %v1573
  %v2113 = vpack.c.b16 %v1576, %v1575
  %v2114 = vpack.c.b16 %v1578, %v1577
  %v2115 = vpack.c.b16 %v1580, %v1579
  %v2116 = vpack.c.b16 %v1582, %v1581
  %v2117 = vpack.c.b16 %v1584, %v1583
  %v2118 = vpack.c.b16 %v1586, %v1585
  %v2119 = vpack.c.b16 %v1588, %v1587
  %v2120 = vpack.c.b16 %v1590, %v1589
  %v2121 = vpack.c.b16 %v1592, %v1591
  %v2122 = vpack.c.b16 %v1594, %v1593
  %v2123 = vpack.c.b16 %v1596, %v1595
  %v2124 = vpack.c.b16 %v1598, %v1597
  %v2125 = vpack.c.b16 %v1600, %v1599
  %v2126 = vpack.c.b16 %v1602, %v1601
  %v2127 = vpack.c.b16 %v1604, %v1603
  %v2128 = vpack.c.b16 %v1606, %v1605
  %v2129 = vpack.c.b16 %v1608, %v1607
  %v2130 = vpack.c.b16 %v1610, %v1609
  %v2131 = vpack.c.b16 %v1612, %v1611
  %v2132 = vpack.c.b16 %v1614, %v1613
  %v2133 = vpack.c.b16 %v1616, %v1615
  %v2134 = vpack.c.b16 %v1618, %v1617
  %v2135 = vpack.c.b16 %v1620, %v1619
  %v2136 = vpack.c.b16 %v1622, %v1621
  %v2137 = vpack.c.b16 %v1624, %v1623
  %v2138 = vpack.c.b16 %v1626, %v1625
  %v2139 = vpack.c.b16 %v1628, %v1627
  %v2140 = vpack.c.b16 %v1630, %v1629
  %v2141 = vpack.c.b16 %v1632, %v1631
  %v2142 = vpack.c.b16 %v1634, %v1633
  %v2143 = vpack.c.b16 %v1636, %v1635
  %v2144 = vpack.c.b16 %v1638, %v1637
  %v2145 = vpack.c.b16 %v1640, %v1639
  %v2146 = vpack.c.b16 %v1642, %v1641
  %v2147 = vpack.c.b16 %v1644, %v1643
  %v2148 = vpack.c.b16 %v1646, %v1645
  %v2149 = vpack.c.b16 %v1648, %v1647
  %v2150 = vpack.c.b16 %v1650, %v1649
  %v2151 = vpack.c.b16 %v1652, %v1651
  %v2152 = vpack.c.b16 %v1654, %v1653
  %v2153 = vpack.c.b16 %v1656, %v1655
  %v2154 = vpack.c.b16 %v1658, %v1657
  %v2155 = vpack.c.b16 %v1660, %v1659
  %v2156 = vpack.c.b16 %v1662, %v1661
  %v2157 = vpack.c.b16 %v1664, %v1663
  %v2158 = vpack.c.b16 %v1666, %v1665
  %v2159 = vpack.c.b16 %v1668, %v1667
  %v2160 = vpack.c.b16 %v1670, %v1669
  %v2161 = vpack.c.b16 %v1672, %v1671
  %v2162 = vpack.c.b16 %v1674, %v1673
  %v2163 = vpack.c.b16 %v1676, %v1675
  %v2164 = vpack.c.b16 %v1678, %v1677
  %v2165 = vpack.c.b16 %v1680, %v1679
  %v2166 = vpack.c.b16 %v1682, %v1681
  %v2167 = vpack.c.b16 %v1684, %v1683
  %v2168 = vpack.c.b16 %v1686, %v1685
  %v2169 = vpack.c.b16 %v1688, %v1687
  %v2170 = vpack.c.b16 %v1690, %v1689
  %v2171 = vpack.c.b16 %v1692, %v1691
  %v2172 = vpack.c.b16 %v1694, %v1693
  %v2173 = vpack.c.b16 %v1696, %v1695
  %v2174 = vpack.c.b16 %v1698, %v1697
  %v2175 = vpack.c.b16 %v1700, %v1699
  %v2176 = vpack.c.b16 %v1702, %v1701
  %v2177 = vpack.c.b16 %v1704, %v1703
  %v2178 = vpack.c.b16 %v1706, %v1705
  %v2179 = vpack.c.b16 %v1708, %v1707
  %v2180 = vpack.c.b16 %v1710, %v1709
  %v2181 = vpack.c.b16 %v1712, %v1711
  %v2182 = vpack.c.b16 %v1714, %v1713
  %v2183 = vpack.c.b16 %v1716, %v1715
  %v2184 = vpack.c.b16 %v1718, %v1717
  %v2185 = vpack.c.b16 %v1720, %v1719
  %v2186 = vpack.c.b16 %v1722, %v1721
  %v2187 = vpack.c.b16 %v1724, %v1723
  %v2188 = vpack.c.b16 %v1726, %v1725
  %v2189 = vpack.c.b16 %v1728, %v1727
  %v2190 = vpack.c.b16 %v1730, %v1729
  %v2191 = vpack.c.b16 %v1732, %v1731
  %v2192 = vpack.c.b16 %v1734, %v1733
  %v2193 = vpack.c.b16 %v1736, %v1735
  %v2194 = vpack.c.b16 %v1738, %v1737
  %v2195 = vpack.c.b16 %v1740, %v1739
  %v2196 = vpack.c.b16 %v1742, %v1741
  %v2197 = vpack.c.b16 %v1744, %v1743
  %v2198 = vpack.c.b16 %v1746, %v1745
  %v2199 = vpack.c.b16 %v1748, %v1747
  %v2200 = vpack.c.b16 %v1750, %v1749
  %v2201 = vpack.c.b16 %v1752, %v1751
  %v2202 = vpack.c.b16 %v1754, %v1753
  %v2203 = vpack.c.b16 %v1756, %v1755
  %v2204 = vpack.c.b16 %v1758, %v1757
  %v2205 = vpack.c.b16 %v1760, %v1759
  %v2206 = vpack.c.b16 %v1762, %v1761
  %v2207 = vpack.c.b16 %v1764, %v1763
  %v2208 = vpack.c.b16 %v1766, %v1765
  %v2209 = vpack.c.b16 %v1768, %v1767
  %v2210 = vpack.c.b16 %v1770, %v1769
  %v2211 = vpack.c.b16 %v1772, %v1771
  %v2212 = vpack.c.b16 %v1774, %v1773
  %v2213 = vpack.c.b16 %v1776, %v1775
  %v2214 = vpack.c.b16 %v1778, %v1777
  %v2215 = vpack.c.b16 %v1780, %v1779
  %v2216 = vpack.c.b16 %v1782, %v1781
  %v2217 = vpack.c.b16 %v1784, %v1783
  %v2218 = vpack.c.b16 %v1786, %v1785
  %v2219 = vpack.c.b16 %v1788, %v1787
  %v2220 = vpack.c.b16 %v1790, %v1789
  %v2221 = vpack.c.b16 %v1792, %v1791
  %v2222 = vpack.c.b16 %v1794, %v1793
  %v2223 = vpack.c.b16 %v1796, %v1795
  %v2224 = vpack.c.b16 %v1798, %v1797
  %v2225 = vpack.c.b16 %v1800, %v1799
  %v2226 = vpack.c.b16 %v1802, %v1801
  %v2227 = vpack.c.b16 %v1804, %v1803
  %v2228 = vpack.c.b16 %v1806, %v1805
  %v2229 = vpack.c.b16 %v1808, %v1807
  %v2230 = vpack.c.b16 %v1810, %v1809
  %v2231 = vpack.c.b16 %v1812, %v1811
  %v2232 = vpack.c.b16 %v1814, %v1813
  %v2233 = vpack.c.b16 %v1816, %v1815
  %v2234 = vpack.c.b16 %v1818, %v1817
  %v2235 = vpack.c.b16 %v1820, %v1819
  %v2236 = vpack.c.b16 %v1822, %v1821
  %v2237 = vpack.c.b16 %v1824, %v1823
  %v2238 = vpack.c.b16 %v1826, %v1825
  %v2239 = vpack.c.b16 %v1828, %v1827
  %v2240 = vpack.c.b16 %v1830, %v1829
  %v2241 = vpack.c.b16 %v1832, %v1831
  %v2242 = vpack.c.b16 %v1834, %v1833
  %v2243 = vpack.c.b16 %v1836, %v1835
  %v2244 = vpack.c.b16 %v1838, %v1837
  %v2245 = vpack.c.b16 %v1840, %v1839
  %v2246 = vpack.c.b16 %v1842, %v1841
  %v2247 = vpack.c.b16 %v1844, %v1843
  %v2248 = vpack.c.b16 %v1846, %v1845
  %v2249 = vpack.c.b16 %v1848, %v1847
  %v2250 = vpack.c.b16 %v1850, %v1849
  %v2251 = vpack.c.b16 %v1852, %v1851
  %v2252 = vpack.c.b16 %v1854, %v1853
  %v2253 = vpack.c.b16 %v1856, %v1855
  %v2254 = vpack.c.b16 %v1858, %v1857
  %v2255 = vpack.c.b16 %v1860, %v1859
  %v2256 = vpack.c.b16 %v1862, %v1861
  %v2257 = vpack.c.b16 %v1864, %v1863
  %v2258 = vpack.c.b16 %v1866, %v1865
  %v2259 = vpack.c.b16 %v1868, %v1867
  %v2260 = vpack.c.b16 %v1870, %v1869
  %v2261 = vpack.c.b16 %v1872, %v1871
  %v2262 = vpack.c.b16 %v1874, %v1873
  %v2263 = vpack.c.b16 %v1876, %v1875
  %v2264 = vpack.c.b16 %v1878, %v1877
  %v2265 = vpack.c.b16 %v1880, %v1879
  %v2266 = vpack.c.b16 %v1882, %v1881
  %v2267 = vpack.c.b16 %v1884, %v1883
  %v2268 = vpack.c.b16 %v1886, %v1885
  %v2269 = vpack.c.b16 %v1888, %v1887
  %v2270 = vpack.c.b16 %v1890, %v1889
  %v2271 = vpack.c.b16 %v1892, %v1891
  %v2272 = vpack.c.b16 %v1894, %v1893
  %v2273 = vpack.c.b16 %v1896, %v1895
  %v2274 = vpack.c.b16 %v1898, %v1897
  %v2275 = vpack.c.b16 %v1900, %v1899
  %v2276 = vpack.c.b16 %v1902, %v1901
  %v2277 = vpack.c.b16 %v1904, %v1903
  %v2278 = vpack.c.b16 %v1906, %v1905
  %v2279 = vpack.c.b16 %v1908, %v1907
  %v2280 = vpack.c.b16 %v1910, %v1909
  %v2281 = vpack.c.b16 %v1912, %v1911
  %v2282 = vpack.c.b16 %v1914, %v1913
  %v2283 = vpack.c.b16 %v1916, %v1915
  %v2284 = vpack.c.b16 %v1918, %v1917
  %v2285 = vpack.c.b16 %v1920, %v1919
  %v2286 = vpack.c.b16 %v1922, %v1921
  %v2287 = vpack.c.b16 %v1924, %v1923
  %v2288 = vpack.c.b16 %v1926, %v1925
  %v2289 = vpack.c.b16 %v1928, %v1927
  %v2290 = vpack.c.b16 %v1930, %v1929
  %v2291 = vpack.c.b16 %v1932, %v1931
  %v2292 = vpack.c.b16 %v1934, %v1933
  %v2293 = vpack.c.b16 %v1936, %v1935
  %v2294 = vpack.c.b16 %v1938, %v1937
  %v2295 = vpack.c.b16 %v1940, %v1939
  %v2296 = vpack.c.b16 %v1942, %v1941
  %v2297 = vpack.c.b16 %v1944, %v1943
  %v2298 = vpack.c.b16 %v1946, %v1945
  %v2299 = vpack.c.b16 %v1948, %v1947
  %v2300 = vpack.c.b16 %v1950, %v1949
  %v2301 = vpack.c.b16 %v1952, %v1951
  %v2302 = vpack.c.b16 %v1954, %v1953
  %v2303 = vpack.c.b16 %v1956, %v1955
  %v2304 = vpack.c.b16 %v1958, %v1957
  %v2305 = vpack.c.b16 %v1960, %v1959
  %v2306 = vpack.c.b16 %v1962, %v1961
  %v2307 = vpack.c.b16 %v1964, %v1963
  %v2308 = vpack.c.b16 %v1966, %v1965
  %v2309 = vpack.c.b16 %v1968, %v1967
  %v2310 = vpack.c.b16 %v1970, %v1969
  %v2311 = vpack.c.b16 %v1972, %v1971
  %v2312 = vpack.c.b16 %v1974, %v1973
  %v2313 = vpack.c.b16 %v1976, %v1975
  %v2314 = vpack.c.b16 %v1978, %v1977
  %v2315 = vpack.c.b16 %v1980, %v1979
  %v2316 = vpack.c.b16 %v1982, %v1981
  %v2317 = vpack.c.b16 %v1984, %v1983
  %v2318 = vpack.c.b16 %v1986, %v1985
  %v2319 = vpack.c.b16 %v1988, %v1987
  %v2320 = vpack.c.b16 %v1990, %v1989
  %v2321 = vpack.c.b16 %v1992, %v1991
  %v2322 = vpack.c.b16 %v1994, %v1993
  %v2323 = vpack.c.b16 %v1996, %v1995
  %v2324 = vpack.c.b16 %v1998, %v1997
  %v2325 = vpack.c.b16 %v2000, %v1999
  %v2326 = vpack.c.b16 %v2002, %v2001
  %v2327 = vpack.c.b16 %v2004, %v2003
  %v2328 = vpack.c.b16 %v2006, %v2005
  %v2329 = vpack.c.b16 %v2008, %v2007
  %v2330 = vpack.c.b16 %v2010, %v2009
  %v2331 = vpack.c.b16 %v2012, %v2011
  %v2332 = vpack.c.b16 %v2014, %v2013
  %v2333 = vpack.c.b16 %v2016, %v2015
  %v2334 = vpack.c.b16 %v2018, %v2017
  %v2335 = vpack.c.b16 %v2020, %v2019
  %v2336 = vpack.c.b16 %v2022, %v2021
  %v2337 = vpack.c.b16 %v2024, %v2023
  %v2338 = vpack.c.b16 %v2026, %v2025
  %v2339 = vpack.c.b16 %v2028, %v2027
  %v2340 = vpack.c.b16 %v2030, %v2029
  %v2341 = vpack.c.b16 %v2032, %v2031
  %v2342 = vpack.c.b16 %v2034, %v2033
  %v2343 = vpack.c.b16 %v2036, %v2035
  %v2344 = vpack.c.b16 %v2038, %v2037
  %v2345 = vpack.c.b16 %v2040, %v2039
  %v2346 = vpack.c.b16 %v2042, %v2041
  %v2347 = vpack.c.b16 %v2044, %v2043
  %v2348 = vpack.c.b16 %v2046, %v2045
  %v2349 = vpack.c.b16 %v2048, %v2047
  %v2350 = vpack.c.b16 %v2050, %v2049
  %v2351 = vpack.c.b16 %v2052, %v2051
  %v2352 = vpack.c.b16 %v2054, %v2053
  %v2353 = vpack.c.b16 %v2056, %v2055
  %v2354 = vpack.c.b16 %v2058, %v2057
  %v2355 = vpack.c.b16 %v2060, %v2059
  %v2356 = vpack.c.b16 %v2062, %v2061
  %vm2651 = vcmask 785408
  %v2653 = vsel %vm2651, %v841, 0
  %2655 = vmatprep.subr.bf16.mxu0 0
  %2656 = vmatpush1.bf16.msra.mxu0 %v2070
  %2657 = vmatprep.subr.bf16.mxu0 0
  %2658 = vmatpush1.bf16.msra.mxu0 %v2069
  %2659 = vmatprep.subr.bf16.mxu0 0
  %2660 = vmatpush1.bf16.msra.mxu0 %v2068
  %2661 = vmatprep.subr.bf16.mxu0 0
  %2662 = vmatpush1.bf16.msra.mxu0 %v2067
  %2663 = vmatprep.subr.bf16.mxu0 0
  %2664 = vmatpush1.bf16.msra.mxu0 %v2066
  %2665 = vmatprep.subr.bf16.mxu0 0
  %2666 = vmatpush1.bf16.msra.mxu0 %v2065
  %2667 = vmatprep.subr.bf16.mxu0 0
  %2668 = vmatpush1.bf16.msra.mxu0 %v2064
  %2669 = vmatprep.subr.bf16.mxu0 0
  %2670 = vmatpush1.bf16.msra.mxu0 %v2063
  %2671 = vmatprep.subr.bf16.mxu0 0
  %2672 = vmatpush2.bf16.msra.mxu0 %v2078
  %2673 = vmatprep.subr.bf16.mxu0 0
  %2674 = vmatpush2.bf16.msra.mxu0 %v2077
  %2675 = vmatprep.subr.bf16.mxu0 0
  %2676 = vmatpush2.bf16.msra.mxu0 %v2076
  %2677 = vmatprep.subr.bf16.mxu0 0
  %2678 = vmatpush2.bf16.msra.mxu0 %v2075
  %2679 = vmatprep.subr.bf16.mxu0 0
  %2680 = vmatpush2.bf16.msra.mxu0 %v2074
  %2681 = vmatprep.subr.bf16.mxu0 0
  %2682 = vmatpush2.bf16.msra.mxu0 %v2073
  %2683 = vmatprep.subr.bf16.mxu0 0
  %2684 = vmatpush2.bf16.msra.mxu0 %v2072
  %2685 = vmatprep.subr.bf16.mxu0 0
  %2686 = vmatpush2.bf16.msra.mxu0 %v2071
  %2687 = vmatprep.mubr.bf16.mxu0 %v653
  %2688 = vmatmul.mubr.bf16.gmra.mxu0 %v639
  %v2689 = vpop.f32.mrf.mxu0
  %v2690 = vadd.f32 0.0, %v2689
  %v2691 = vpop.f32.mrf.mxu0
  %v2692 = vpop.f32.mrf.mxu0
  %v2693 = vpop.f32.mrf.mxu0
  %2694 = vdwg.mxu0
  %2695 = vmatprep.subr.bf16.mxu0 0
  %2696 = vmatpush1.bf16.msra.mxu0 %v2086
  %2697 = vmatprep.subr.bf16.mxu0 0
  %2698 = vmatpush1.bf16.msra.mxu0 %v2085
  %2699 = vmatprep.subr.bf16.mxu0 0
  %2700 = vmatpush1.bf16.msra.mxu0 %v2084
  %2701 = vmatprep.subr.bf16.mxu0 0
  %2702 = vmatpush1.bf16.msra.mxu0 %v2083
  %2703 = vmatprep.subr.bf16.mxu0 0
  %2704 = vmatpush1.bf16.msra.mxu0 %v2082
  %2705 = vmatprep.subr.bf16.mxu0 0
  %2706 = vmatpush1.bf16.msra.mxu0 %v2081
  %2707 = vmatprep.subr.bf16.mxu0 0
  %2708 = vmatpush1.bf16.msra.mxu0 %v2080
  %2709 = vmatprep.subr.bf16.mxu0 0
  %2710 = vmatpush1.bf16.msra.mxu0 %v2079
  %2711 = vmatprep.subr.bf16.mxu0 0
  %2712 = vmatpush2.bf16.msra.mxu0 %v2094
  %2713 = vmatprep.subr.bf16.mxu0 0
  %2714 = vmatpush2.bf16.msra.mxu0 %v2093
  %2715 = vmatprep.subr.bf16.mxu0 0
  %2716 = vmatpush2.bf16.msra.mxu0 %v2092
  %2717 = vmatprep.subr.bf16.mxu0 0
  %2718 = vmatpush2.bf16.msra.mxu0 %v2091
  %2719 = vmatprep.subr.bf16.mxu0 0
  %2720 = vmatpush2.bf16.msra.mxu0 %v2090
  %2721 = vmatprep.subr.bf16.mxu0 0
  %2722 = vmatpush2.bf16.msra.mxu0 %v2089
  %2723 = vmatprep.subr.bf16.mxu0 0
  %2724 = vmatpush2.bf16.msra.mxu0 %v2088
  %2725 = vmatprep.subr.bf16.mxu0 0
  %2726 = vmatpush2.bf16.msra.mxu0 %v2087
  %2727 = vmatprep.mubr.bf16.mxu0 %v663
  %2728 = vmatmul.mubr.bf16.gmra.mxu0 %v661
  %v2729 = vpop.f32.mrf.mxu0
  %v2730 = vadd.f32 %v2690, %v2729
  %v2731 = vpop.f32.mrf.mxu0
  %v2732 = vpop.f32.mrf.mxu0
  %v2733 = vpop.f32.mrf.mxu0
  %2734 = vdwg.mxu0
  %2735 = vmatprep.subr.bf16.mxu0 0
  %2736 = vmatpush1.bf16.msra.mxu0 %v2102
  %2737 = vmatprep.subr.bf16.mxu0 0
  %2738 = vmatpush1.bf16.msra.mxu0 %v2101
  %2739 = vmatprep.subr.bf16.mxu0 0
  %2740 = vmatpush1.bf16.msra.mxu0 %v2100
  %2741 = vmatprep.subr.bf16.mxu0 0
  %2742 = vmatpush1.bf16.msra.mxu0 %v2099
  %2743 = vmatprep.subr.bf16.mxu0 0
  %2744 = vmatpush1.bf16.msra.mxu0 %v2098
  %2745 = vmatprep.subr.bf16.mxu0 0
  %2746 = vmatpush1.bf16.msra.mxu0 %v2097
  %2747 = vmatprep.subr.bf16.mxu0 0
  %2748 = vmatpush1.bf16.msra.mxu0 %v2096
  %2749 = vmatprep.subr.bf16.mxu0 0
  %2750 = vmatpush1.bf16.msra.mxu0 %v2095
  %2751 = vmatprep.subr.bf16.mxu0 0
  %2752 = vmatpush2.bf16.msra.mxu0 %v2110
  %2753 = vmatprep.subr.bf16.mxu0 0
  %2754 = vmatpush2.bf16.msra.mxu0 %v2109
  %2755 = vmatprep.subr.bf16.mxu0 0
  %2756 = vmatpush2.bf16.msra.mxu0 %v2108
  %2757 = vmatprep.subr.bf16.mxu0 0
  %2758 = vmatpush2.bf16.msra.mxu0 %v2107
  %2759 = vmatprep.subr.bf16.mxu0 0
  %2760 = vmatpush2.bf16.msra.mxu0 %v2106
  %2761 = vmatprep.subr.bf16.mxu0 0
  %2762 = vmatpush2.bf16.msra.mxu0 %v2105
  %2763 = vmatprep.subr.bf16.mxu0 0
  %2764 = vmatpush2.bf16.msra.mxu0 %v2104
  %2765 = vmatprep.subr.bf16.mxu0 0
  %2766 = vmatpush2.bf16.msra.mxu0 %v2103
  %2767 = vmatprep.mubr.bf16.mxu0 %v660
  %2768 = vmatmul.mubr.bf16.gmra.mxu0 %v646
  %v2769 = vpop.f32.mrf.mxu0
  %v2770 = vadd.f32 %v2730, %v2769
  %v2771 = vpop.f32.mrf.mxu0
  %v2772 = vpop.f32.mrf.mxu0
  %v2773 = vpop.f32.mrf.mxu0
  %2774 = vdwg.mxu0
  %2775 = vmatprep.subr.bf16.mxu0 0
  %2776 = vmatpush1.bf16.msra.mxu0 %v2118
  %2777 = vmatprep.subr.bf16.mxu0 0
  %2778 = vmatpush1.bf16.msra.mxu0 %v2117
  %2779 = vmatprep.subr.bf16.mxu0 0
  %2780 = vmatpush1.bf16.msra.mxu0 %v2116
  %2781 = vmatprep.subr.bf16.mxu0 0
  %2782 = vmatpush1.bf16.msra.mxu0 %v2115
  %2783 = vmatprep.subr.bf16.mxu0 0
  %2784 = vmatpush1.bf16.msra.mxu0 %v2114
  %2785 = vmatprep.subr.bf16.mxu0 0
  %2786 = vmatpush1.bf16.msra.mxu0 %v2113
  %2787 = vmatprep.subr.bf16.mxu0 0
  %2788 = vmatpush1.bf16.msra.mxu0 %v2112
  %2789 = vmatprep.subr.bf16.mxu0 0
  %2790 = vmatpush1.bf16.msra.mxu0 %v2111
  %2791 = vmatprep.subr.bf16.mxu0 0
  %2792 = vmatpush2.bf16.msra.mxu0 %v2126
  %2793 = vmatprep.subr.bf16.mxu0 0
  %2794 = vmatpush2.bf16.msra.mxu0 %v2125
  %2795 = vmatprep.subr.bf16.mxu0 0
  %2796 = vmatpush2.bf16.msra.mxu0 %v2124
  %2797 = vmatprep.subr.bf16.mxu0 0
  %2798 = vmatpush2.bf16.msra.mxu0 %v2123
  %2799 = vmatprep.subr.bf16.mxu0 0
  %2800 = vmatpush2.bf16.msra.mxu0 %v2122
  %2801 = vmatprep.subr.bf16.mxu0 0
  %2802 = vmatpush2.bf16.msra.mxu0 %v2121
  %2803 = vmatprep.subr.bf16.mxu0 0
  %2804 = vmatpush2.bf16.msra.mxu0 %v2120
  %2805 = vmatprep.subr.bf16.mxu0 0
  %2806 = vmatpush2.bf16.msra.mxu0 %v2119
  %2807 = vmatprep.mubr.bf16.mxu0 %v664
  %2808 = vmatmul.mubr.bf16.gmra.mxu0 %v662
  %v2809 = vpop.f32.mrf.mxu0
  %v2810 = vadd.f32 %v2770, %v2809
  %v2811 = vpop.f32.mrf.mxu0
  %v2812 = vpop.f32.mrf.mxu0
  %v2813 = vpop.f32.mrf.mxu0
  %2814 = vdwg.mxu0
  %2815 = vmatprep.subr.bf16.mxu0 0
  %2816 = vmatpush1.bf16.msra.mxu0 %v2134
  %2817 = vmatprep.subr.bf16.mxu0 0
  %2818 = vmatpush1.bf16.msra.mxu0 %v2133
  %2819 = vmatprep.subr.bf16.mxu0 0
  %2820 = vmatpush1.bf16.msra.mxu0 %v2132
  %2821 = vmatprep.subr.bf16.mxu0 0
  %2822 = vmatpush1.bf16.msra.mxu0 %v2131
  %2823 = vmatprep.subr.bf16.mxu0 0
  %2824 = vmatpush1.bf16.msra.mxu0 %v2130
  %2825 = vmatprep.subr.bf16.mxu0 0
  %2826 = vmatpush1.bf16.msra.mxu0 %v2129
  %2827 = vmatprep.subr.bf16.mxu0 0
  %2828 = vmatpush1.bf16.msra.mxu0 %v2128
  %2829 = vmatprep.subr.bf16.mxu0 0
  %2830 = vmatpush1.bf16.msra.mxu0 %v2127
  %2831 = vmatprep.subr.bf16.mxu0 0
  %2832 = vmatpush2.bf16.msra.mxu0 %v2142
  %2833 = vmatprep.subr.bf16.mxu0 0
  %2834 = vmatpush2.bf16.msra.mxu0 %v2141
  %2835 = vmatprep.subr.bf16.mxu0 0
  %2836 = vmatpush2.bf16.msra.mxu0 %v2140
  %2837 = vmatprep.subr.bf16.mxu0 0
  %2838 = vmatpush2.bf16.msra.mxu0 %v2139
  %2839 = vmatprep.subr.bf16.mxu0 0
  %2840 = vmatpush2.bf16.msra.mxu0 %v2138
  %2841 = vmatprep.subr.bf16.mxu0 0
  %2842 = vmatpush2.bf16.msra.mxu0 %v2137
  %2843 = vmatprep.subr.bf16.mxu0 0
  %2844 = vmatpush2.bf16.msra.mxu0 %v2136
  %2845 = vmatprep.subr.bf16.mxu0 0
  %2846 = vmatpush2.bf16.msra.mxu0 %v2135
  %2847 = vmatprep.mubr.bf16.mxu0 %v702
  %2848 = vmatmul.mubr.bf16.gmra.mxu0 %v688
  %v2849 = vpop.f32.mrf.mxu0
  %v2850 = vadd.f32 %v2810, %v2849
  %v2851 = vpop.f32.mrf.mxu0
  %v2852 = vpop.f32.mrf.mxu0
  %v2853 = vpop.f32.mrf.mxu0
  %2854 = vdwg.mxu0
  %2855 = vmatprep.subr.bf16.mxu0 0
  %2856 = vmatpush1.bf16.msra.mxu0 %v2150
  %2857 = vmatprep.subr.bf16.mxu0 0
  %2858 = vmatpush1.bf16.msra.mxu0 %v2149
  %2859 = vmatprep.subr.bf16.mxu0 0
  %2860 = vmatpush1.bf16.msra.mxu0 %v2148
  %2861 = vmatprep.subr.bf16.mxu0 0
  %2862 = vmatpush1.bf16.msra.mxu0 %v2147
  %2863 = vmatprep.subr.bf16.mxu0 0
  %2864 = vmatpush1.bf16.msra.mxu0 %v2146
  %2865 = vmatprep.subr.bf16.mxu0 0
  %2866 = vmatpush1.bf16.msra.mxu0 %v2145
  %2867 = vmatprep.subr.bf16.mxu0 0
  %2868 = vmatpush1.bf16.msra.mxu0 %v2144
  %2869 = vmatprep.subr.bf16.mxu0 0
  %2870 = vmatpush1.bf16.msra.mxu0 %v2143
  %2871 = vmatprep.subr.bf16.mxu0 0
  %2872 = vmatpush2.bf16.msra.mxu0 %v2158
  %2873 = vmatprep.subr.bf16.mxu0 0
  %2874 = vmatpush2.bf16.msra.mxu0 %v2157
  %2875 = vmatprep.subr.bf16.mxu0 0
  %2876 = vmatpush2.bf16.msra.mxu0 %v2156
  %2877 = vmatprep.subr.bf16.mxu0 0
  %2878 = vmatpush2.bf16.msra.mxu0 %v2155
  %2879 = vmatprep.subr.bf16.mxu0 0
  %2880 = vmatpush2.bf16.msra.mxu0 %v2154
  %2881 = vmatprep.subr.bf16.mxu0 0
  %2882 = vmatpush2.bf16.msra.mxu0 %v2153
  %2883 = vmatprep.subr.bf16.mxu0 0
  %2884 = vmatpush2.bf16.msra.mxu0 %v2152
  %2885 = vmatprep.subr.bf16.mxu0 0
  %2886 = vmatpush2.bf16.msra.mxu0 %v2151
  %2887 = vmatprep.mubr.bf16.mxu0 %v712
  %2888 = vmatmul.mubr.bf16.gmra.mxu0 %v710
  %v2889 = vpop.f32.mrf.mxu0
  %v2890 = vadd.f32 %v2850, %v2889
  %v2891 = vpop.f32.mrf.mxu0
  %v2892 = vpop.f32.mrf.mxu0
  %v2893 = vpop.f32.mrf.mxu0
  %2894 = vdwg.mxu0
  %2895 = vmatprep.subr.bf16.mxu0 0
  %2896 = vmatpush1.bf16.msra.mxu0 %v2166
  %2897 = vmatprep.subr.bf16.mxu0 0
  %2898 = vmatpush1.bf16.msra.mxu0 %v2165
  %2899 = vmatprep.subr.bf16.mxu0 0
  %2900 = vmatpush1.bf16.msra.mxu0 %v2164
  %2901 = vmatprep.subr.bf16.mxu0 0
  %2902 = vmatpush1.bf16.msra.mxu0 %v2163
  %2903 = vmatprep.subr.bf16.mxu0 0
  %2904 = vmatpush1.bf16.msra.mxu0 %v2162
  %2905 = vmatprep.subr.bf16.mxu0 0
  %2906 = vmatpush1.bf16.msra.mxu0 %v2161
  %2907 = vmatprep.subr.bf16.mxu0 0
  %2908 = vmatpush1.bf16.msra.mxu0 %v2160
  %2909 = vmatprep.subr.bf16.mxu0 0
  %2910 = vmatpush1.bf16.msra.mxu0 %v2159
  %2911 = vmatprep.subr.bf16.mxu0 0
  %2912 = vmatpush2.bf16.msra.mxu0 %v2174
  %2913 = vmatprep.subr.bf16.mxu0 0
  %2914 = vmatpush2.bf16.msra.mxu0 %v2173
  %2915 = vmatprep.subr.bf16.mxu0 0
  %2916 = vmatpush2.bf16.msra.mxu0 %v2172
  %2917 = vmatprep.subr.bf16.mxu0 0
  %2918 = vmatpush2.bf16.msra.mxu0 %v2171
  %2919 = vmatprep.subr.bf16.mxu0 0
  %2920 = vmatpush2.bf16.msra.mxu0 %v2170
  %2921 = vmatprep.subr.bf16.mxu0 0
  %2922 = vmatpush2.bf16.msra.mxu0 %v2169
  %2923 = vmatprep.subr.bf16.mxu0 0
  %2924 = vmatpush2.bf16.msra.mxu0 %v2168
  %2925 = vmatprep.subr.bf16.mxu0 0
  %2926 = vmatpush2.bf16.msra.mxu0 %v2167
  %2927 = vmatprep.mubr.bf16.mxu0 %v709
  %2928 = vmatmul.mubr.bf16.gmra.mxu0 %v695
  %v2929 = vpop.f32.mrf.mxu0
  %v2930 = vadd.f32 %v2890, %v2929
  %v2931 = vpop.f32.mrf.mxu0
  %v2932 = vpop.f32.mrf.mxu0
  %v2933 = vpop.f32.mrf.mxu0
  %2934 = vdwg.mxu0
  %2935 = vmatprep.subr.bf16.mxu0 0
  %2936 = vmatpush1.bf16.msra.mxu0 %v2182
  %2937 = vmatprep.subr.bf16.mxu0 0
  %2938 = vmatpush1.bf16.msra.mxu0 %v2181
  %2939 = vmatprep.subr.bf16.mxu0 0
  %2940 = vmatpush1.bf16.msra.mxu0 %v2180
  %2941 = vmatprep.subr.bf16.mxu0 0
  %2942 = vmatpush1.bf16.msra.mxu0 %v2179
  %2943 = vmatprep.subr.bf16.mxu0 0
  %2944 = vmatpush1.bf16.msra.mxu0 %v2178
  %2945 = vmatprep.subr.bf16.mxu0 0
  %2946 = vmatpush1.bf16.msra.mxu0 %v2177
  %2947 = vmatprep.subr.bf16.mxu0 0
  %2948 = vmatpush1.bf16.msra.mxu0 %v2176
  %2949 = vmatprep.subr.bf16.mxu0 0
  %2950 = vmatpush1.bf16.msra.mxu0 %v2175
  %2951 = vmatprep.subr.bf16.mxu0 0
  %2952 = vmatpush2.bf16.msra.mxu0 %v2190
  %2953 = vmatprep.subr.bf16.mxu0 0
  %2954 = vmatpush2.bf16.msra.mxu0 %v2189
  %2955 = vmatprep.subr.bf16.mxu0 0
  %2956 = vmatpush2.bf16.msra.mxu0 %v2188
  %2957 = vmatprep.subr.bf16.mxu0 0
  %2958 = vmatpush2.bf16.msra.mxu0 %v2187
  %2959 = vmatprep.subr.bf16.mxu0 0
  %2960 = vmatpush2.bf16.msra.mxu0 %v2186
  %2961 = vmatprep.subr.bf16.mxu0 0
  %2962 = vmatpush2.bf16.msra.mxu0 %v2185
  %2963 = vmatprep.subr.bf16.mxu0 0
  %2964 = vmatpush2.bf16.msra.mxu0 %v2184
  %2965 = vmatprep.subr.bf16.mxu0 0
  %2966 = vmatpush2.bf16.msra.mxu0 %v2183
  %2967 = vmatprep.mubr.bf16.mxu0 %v713
  %2968 = vmatmul.mubr.bf16.gmra.mxu0 %v711
  %v2969 = vpop.f32.mrf.mxu0
  %v2970 = vadd.f32 %v2930, %v2969
  %v2971 = vpop.f32.mrf.mxu0
  %v2972 = vpop.f32.mrf.mxu0
  %v2973 = vpop.f32.mrf.mxu0
  %2974 = vdwg.mxu0
  %2975 = vmatprep.subr.bf16.mxu0 0
  %2976 = vmatpush1.bf16.msra.mxu0 %v2198
  %2977 = vmatprep.subr.bf16.mxu0 0
  %2978 = vmatpush1.bf16.msra.mxu0 %v2197
  %2979 = vmatprep.subr.bf16.mxu0 0
  %2980 = vmatpush1.bf16.msra.mxu0 %v2196
  %2981 = vmatprep.subr.bf16.mxu0 0
  %2982 = vmatpush1.bf16.msra.mxu0 %v2195
  %2983 = vmatprep.subr.bf16.mxu0 0
  %2984 = vmatpush1.bf16.msra.mxu0 %v2194
  %2985 = vmatprep.subr.bf16.mxu0 0
  %2986 = vmatpush1.bf16.msra.mxu0 %v2193
  %2987 = vmatprep.subr.bf16.mxu0 0
  %2988 = vmatpush1.bf16.msra.mxu0 %v2192
  %2989 = vmatprep.subr.bf16.mxu0 0
  %2990 = vmatpush1.bf16.msra.mxu0 %v2191
  %2991 = vmatprep.subr.bf16.mxu0 0
  %2992 = vmatpush2.bf16.msra.mxu0 %v2206
  %2993 = vmatprep.subr.bf16.mxu0 0
  %2994 = vmatpush2.bf16.msra.mxu0 %v2205
  %2995 = vmatprep.subr.bf16.mxu0 0
  %2996 = vmatpush2.bf16.msra.mxu0 %v2204
  %2997 = vmatprep.subr.bf16.mxu0 0
  %2998 = vmatpush2.bf16.msra.mxu0 %v2203
  %2999 = vmatprep.subr.bf16.mxu0 0
  %3000 = vmatpush2.bf16.msra.mxu0 %v2202
  %3001 = vmatprep.subr.bf16.mxu0 0
  %3002 = vmatpush2.bf16.msra.mxu0 %v2201
  %3003 = vmatprep.subr.bf16.mxu0 0
  %3004 = vmatpush2.bf16.msra.mxu0 %v2200
  %3005 = vmatprep.subr.bf16.mxu0 0
  %3006 = vmatpush2.bf16.msra.mxu0 %v2199
  %3007 = vmatprep.mubr.bf16.mxu0 %v751
  %3008 = vmatmul.mubr.bf16.gmra.mxu0 %v737
  %v3009 = vpop.f32.mrf.mxu0
  %v3010 = vadd.f32 %v2970, %v3009
  %v3011 = vpop.f32.mrf.mxu0
  %v3012 = vpop.f32.mrf.mxu0
  %v3013 = vpop.f32.mrf.mxu0
  %3014 = vdwg.mxu0
  %3015 = vmatprep.subr.bf16.mxu0 0
  %3016 = vmatpush1.bf16.msra.mxu0 %v2214
  %3017 = vmatprep.subr.bf16.mxu0 0
  %3018 = vmatpush1.bf16.msra.mxu0 %v2213
  %3019 = vmatprep.subr.bf16.mxu0 0
  %3020 = vmatpush1.bf16.msra.mxu0 %v2212
  %3021 = vmatprep.subr.bf16.mxu0 0
  %3022 = vmatpush1.bf16.msra.mxu0 %v2211
  %3023 = vmatprep.subr.bf16.mxu0 0
  %3024 = vmatpush1.bf16.msra.mxu0 %v2210
  %3025 = vmatprep.subr.bf16.mxu0 0
  %3026 = vmatpush1.bf16.msra.mxu0 %v2209
  %3027 = vmatprep.subr.bf16.mxu0 0
  %3028 = vmatpush1.bf16.msra.mxu0 %v2208
  %3029 = vmatprep.subr.bf16.mxu0 0
  %3030 = vmatpush1.bf16.msra.mxu0 %v2207
  %3031 = vmatprep.subr.bf16.mxu0 0
  %3032 = vmatpush2.bf16.msra.mxu0 %v2222
  %3033 = vmatprep.subr.bf16.mxu0 0
  %3034 = vmatpush2.bf16.msra.mxu0 %v2221
  %3035 = vmatprep.subr.bf16.mxu0 0
  %3036 = vmatpush2.bf16.msra.mxu0 %v2220
  %3037 = vmatprep.subr.bf16.mxu0 0
  %3038 = vmatpush2.bf16.msra.mxu0 %v2219
  %3039 = vmatprep.subr.bf16.mxu0 0
  %3040 = vmatpush2.bf16.msra.mxu0 %v2218
  %3041 = vmatprep.subr.bf16.mxu0 0
  %3042 = vmatpush2.bf16.msra.mxu0 %v2217
  %3043 = vmatprep.subr.bf16.mxu0 0
  %3044 = vmatpush2.bf16.msra.mxu0 %v2216
  %3045 = vmatprep.subr.bf16.mxu0 0
  %3046 = vmatpush2.bf16.msra.mxu0 %v2215
  %3047 = vmatprep.mubr.bf16.mxu0 %v761
  %3048 = vmatmul.mubr.bf16.gmra.mxu0 %v759
  %v3049 = vpop.f32.mrf.mxu0
  %v3050 = vadd.f32 %v3010, %v3049
  %v3051 = vpop.f32.mrf.mxu0
  %v3052 = vpop.f32.mrf.mxu0
  %v3053 = vpop.f32.mrf.mxu0
  %3054 = vdwg.mxu0
  %3055 = vmatprep.subr.bf16.mxu0 0
  %3056 = vmatpush1.bf16.msra.mxu0 %v2230
  %3057 = vmatprep.subr.bf16.mxu0 0
  %3058 = vmatpush1.bf16.msra.mxu0 %v2229
  %3059 = vmatprep.subr.bf16.mxu0 0
  %3060 = vmatpush1.bf16.msra.mxu0 %v2228
  %3061 = vmatprep.subr.bf16.mxu0 0
  %3062 = vmatpush1.bf16.msra.mxu0 %v2227
  %3063 = vmatprep.subr.bf16.mxu0 0
  %3064 = vmatpush1.bf16.msra.mxu0 %v2226
  %3065 = vmatprep.subr.bf16.mxu0 0
  %3066 = vmatpush1.bf16.msra.mxu0 %v2225
  %3067 = vmatprep.subr.bf16.mxu0 0
  %3068 = vmatpush1.bf16.msra.mxu0 %v2224
  %3069 = vmatprep.subr.bf16.mxu0 0
  %3070 = vmatpush1.bf16.msra.mxu0 %v2223
  %3071 = vmatprep.subr.bf16.mxu0 0
  %3072 = vmatpush2.bf16.msra.mxu0 %v2238
  %3073 = vmatprep.subr.bf16.mxu0 0
  %3074 = vmatpush2.bf16.msra.mxu0 %v2237
  %3075 = vmatprep.subr.bf16.mxu0 0
  %3076 = vmatpush2.bf16.msra.mxu0 %v2236
  %3077 = vmatprep.subr.bf16.mxu0 0
  %3078 = vmatpush2.bf16.msra.mxu0 %v2235
  %3079 = vmatprep.subr.bf16.mxu0 0
  %3080 = vmatpush2.bf16.msra.mxu0 %v2234
  %3081 = vmatprep.subr.bf16.mxu0 0
  %3082 = vmatpush2.bf16.msra.mxu0 %v2233
  %3083 = vmatprep.subr.bf16.mxu0 0
  %3084 = vmatpush2.bf16.msra.mxu0 %v2232
  %3085 = vmatprep.subr.bf16.mxu0 0
  %3086 = vmatpush2.bf16.msra.mxu0 %v2231
  %3087 = vmatprep.mubr.bf16.mxu0 %v758
  %3088 = vmatmul.mubr.bf16.gmra.mxu0 %v744
  %v3089 = vpop.f32.mrf.mxu0
  %v3090 = vadd.f32 %v3050, %v3089
  %v3091 = vpop.f32.mrf.mxu0
  %v3092 = vpop.f32.mrf.mxu0
  %v3093 = vpop.f32.mrf.mxu0
  %3094 = vdwg.mxu0
  %3095 = vmatprep.subr.bf16.mxu0 0
  %3096 = vmatpush1.bf16.msra.mxu0 %v2246
  %3097 = vmatprep.subr.bf16.mxu0 0
  %3098 = vmatpush1.bf16.msra.mxu0 %v2245
  %3099 = vmatprep.subr.bf16.mxu0 0
  %3100 = vmatpush1.bf16.msra.mxu0 %v2244
  %3101 = vmatprep.subr.bf16.mxu0 0
  %3102 = vmatpush1.bf16.msra.mxu0 %v2243
  %3103 = vmatprep.subr.bf16.mxu0 0
  %3104 = vmatpush1.bf16.msra.mxu0 %v2242
  %3105 = vmatprep.subr.bf16.mxu0 0
  %3106 = vmatpush1.bf16.msra.mxu0 %v2241
  %3107 = vmatprep.subr.bf16.mxu0 0
  %3108 = vmatpush1.bf16.msra.mxu0 %v2240
  %3109 = vmatprep.subr.bf16.mxu0 0
  %3110 = vmatpush1.bf16.msra.mxu0 %v2239
  %3111 = vmatprep.subr.bf16.mxu0 0
  %3112 = vmatpush2.bf16.msra.mxu0 %v2254
  %3113 = vmatprep.subr.bf16.mxu0 0
  %3114 = vmatpush2.bf16.msra.mxu0 %v2253
  %3115 = vmatprep.subr.bf16.mxu0 0
  %3116 = vmatpush2.bf16.msra.mxu0 %v2252
  %3117 = vmatprep.subr.bf16.mxu0 0
  %3118 = vmatpush2.bf16.msra.mxu0 %v2251
  %3119 = vmatprep.subr.bf16.mxu0 0
  %3120 = vmatpush2.bf16.msra.mxu0 %v2250
  %3121 = vmatprep.subr.bf16.mxu0 0
  %3122 = vmatpush2.bf16.msra.mxu0 %v2249
  %3123 = vmatprep.subr.bf16.mxu0 0
  %3124 = vmatpush2.bf16.msra.mxu0 %v2248
  %3125 = vmatprep.subr.bf16.mxu0 0
  %3126 = vmatpush2.bf16.msra.mxu0 %v2247
  %3127 = vmatprep.mubr.bf16.mxu0 %v762
  %3128 = vmatmul.mubr.bf16.gmra.mxu0 %v760
  %v3129 = vpop.f32.mrf.mxu0
  %v3130 = vadd.f32 %v3090, %v3129
  %v3131 = vpop.f32.mrf.mxu0
  %v3132 = vpop.f32.mrf.mxu0
  %v3133 = vpop.f32.mrf.mxu0
  %3134 = vdwg.mxu0
  %3135 = vmatprep.subr.bf16.mxu0 0
  %3136 = vmatpush1.bf16.msra.mxu0 %v2262
  %3137 = vmatprep.subr.bf16.mxu0 0
  %3138 = vmatpush1.bf16.msra.mxu0 %v2261
  %3139 = vmatprep.subr.bf16.mxu0 0
  %3140 = vmatpush1.bf16.msra.mxu0 %v2260
  %3141 = vmatprep.subr.bf16.mxu0 0
  %3142 = vmatpush1.bf16.msra.mxu0 %v2259
  %3143 = vmatprep.subr.bf16.mxu0 0
  %3144 = vmatpush1.bf16.msra.mxu0 %v2258
  %3145 = vmatprep.subr.bf16.mxu0 0
  %3146 = vmatpush1.bf16.msra.mxu0 %v2257
  %3147 = vmatprep.subr.bf16.mxu0 0
  %3148 = vmatpush1.bf16.msra.mxu0 %v2256
  %3149 = vmatprep.subr.bf16.mxu0 0
  %3150 = vmatpush1.bf16.msra.mxu0 %v2255
  %3151 = vmatprep.subr.bf16.mxu0 0
  %3152 = vmatpush2.bf16.msra.mxu0 %v2270
  %3153 = vmatprep.subr.bf16.mxu0 0
  %3154 = vmatpush2.bf16.msra.mxu0 %v2269
  %3155 = vmatprep.subr.bf16.mxu0 0
  %3156 = vmatpush2.bf16.msra.mxu0 %v2268
  %3157 = vmatprep.subr.bf16.mxu0 0
  %3158 = vmatpush2.bf16.msra.mxu0 %v2267
  %3159 = vmatprep.subr.bf16.mxu0 0
  %3160 = vmatpush2.bf16.msra.mxu0 %v2266
  %3161 = vmatprep.subr.bf16.mxu0 0
  %3162 = vmatpush2.bf16.msra.mxu0 %v2265
  %3163 = vmatprep.subr.bf16.mxu0 0
  %3164 = vmatpush2.bf16.msra.mxu0 %v2264
  %3165 = vmatprep.subr.bf16.mxu0 0
  %3166 = vmatpush2.bf16.msra.mxu0 %v2263
  %3167 = vmatprep.mubr.bf16.mxu0 %v800
  %3168 = vmatmul.mubr.bf16.gmra.mxu0 %v786
  %v3169 = vpop.f32.mrf.mxu0
  %v3170 = vadd.f32 %v3130, %v3169
  %v3171 = vpop.f32.mrf.mxu0
  %v3172 = vpop.f32.mrf.mxu0
  %v3173 = vpop.f32.mrf.mxu0
  %3174 = vdwg.mxu0
  %3175 = vmatprep.subr.bf16.mxu0 0
  %3176 = vmatpush1.bf16.msra.mxu0 %v2278
  %3177 = vmatprep.subr.bf16.mxu0 0
  %3178 = vmatpush1.bf16.msra.mxu0 %v2277
  %3179 = vmatprep.subr.bf16.mxu0 0
  %3180 = vmatpush1.bf16.msra.mxu0 %v2276
  %3181 = vmatprep.subr.bf16.mxu0 0
  %3182 = vmatpush1.bf16.msra.mxu0 %v2275
  %3183 = vmatprep.subr.bf16.mxu0 0
  %3184 = vmatpush1.bf16.msra.mxu0 %v2274
  %3185 = vmatprep.subr.bf16.mxu0 0
  %3186 = vmatpush1.bf16.msra.mxu0 %v2273
  %3187 = vmatprep.subr.bf16.mxu0 0
  %3188 = vmatpush1.bf16.msra.mxu0 %v2272
  %3189 = vmatprep.subr.bf16.mxu0 0
  %3190 = vmatpush1.bf16.msra.mxu0 %v2271
  %3191 = vmatprep.subr.bf16.mxu0 0
  %3192 = vmatpush2.bf16.msra.mxu0 %v2286
  %3193 = vmatprep.subr.bf16.mxu0 0
  %3194 = vmatpush2.bf16.msra.mxu0 %v2285
  %3195 = vmatprep.subr.bf16.mxu0 0
  %3196 = vmatpush2.bf16.msra.mxu0 %v2284
  %3197 = vmatprep.subr.bf16.mxu0 0
  %3198 = vmatpush2.bf16.msra.mxu0 %v2283
  %3199 = vmatprep.subr.bf16.mxu0 0
  %3200 = vmatpush2.bf16.msra.mxu0 %v2282
  %3201 = vmatprep.subr.bf16.mxu0 0
  %3202 = vmatpush2.bf16.msra.mxu0 %v2281
  %3203 = vmatprep.subr.bf16.mxu0 0
  %3204 = vmatpush2.bf16.msra.mxu0 %v2280
  %3205 = vmatprep.subr.bf16.mxu0 0
  %3206 = vmatpush2.bf16.msra.mxu0 %v2279
  %3207 = vmatprep.mubr.bf16.mxu0 %v810
  %3208 = vmatmul.mubr.bf16.gmra.mxu0 %v808
  %v3209 = vpop.f32.mrf.mxu0
  %v3210 = vadd.f32 %v3170, %v3209
  %v3211 = vpop.f32.mrf.mxu0
  %v3212 = vpop.f32.mrf.mxu0
  %v3213 = vpop.f32.mrf.mxu0
  %3214 = vdwg.mxu0
  %3215 = vmatprep.subr.bf16.mxu0 0
  %3216 = vmatpush1.bf16.msra.mxu0 %v2294
  %3217 = vmatprep.subr.bf16.mxu0 0
  %3218 = vmatpush1.bf16.msra.mxu0 %v2293
  %3219 = vmatprep.subr.bf16.mxu0 0
  %3220 = vmatpush1.bf16.msra.mxu0 %v2292
  %3221 = vmatprep.subr.bf16.mxu0 0
  %3222 = vmatpush1.bf16.msra.mxu0 %v2291
  %3223 = vmatprep.subr.bf16.mxu0 0
  %3224 = vmatpush1.bf16.msra.mxu0 %v2290
  %3225 = vmatprep.subr.bf16.mxu0 0
  %3226 = vmatpush1.bf16.msra.mxu0 %v2289
  %3227 = vmatprep.subr.bf16.mxu0 0
  %3228 = vmatpush1.bf16.msra.mxu0 %v2288
  %3229 = vmatprep.subr.bf16.mxu0 0
  %3230 = vmatpush1.bf16.msra.mxu0 %v2287
  %3231 = vmatprep.subr.bf16.mxu0 0
  %3232 = vmatpush2.bf16.msra.mxu0 %v2302
  %3233 = vmatprep.subr.bf16.mxu0 0
  %3234 = vmatpush2.bf16.msra.mxu0 %v2301
  %3235 = vmatprep.subr.bf16.mxu0 0
  %3236 = vmatpush2.bf16.msra.mxu0 %v2300
  %3237 = vmatprep.subr.bf16.mxu0 0
  %3238 = vmatpush2.bf16.msra.mxu0 %v2299
  %3239 = vmatprep.subr.bf16.mxu0 0
  %3240 = vmatpush2.bf16.msra.mxu0 %v2298
  %3241 = vmatprep.subr.bf16.mxu0 0
  %3242 = vmatpush2.bf16.msra.mxu0 %v2297
  %3243 = vmatprep.subr.bf16.mxu0 0
  %3244 = vmatpush2.bf16.msra.mxu0 %v2296
  %3245 = vmatprep.subr.bf16.mxu0 0
  %3246 = vmatpush2.bf16.msra.mxu0 %v2295
  %3247 = vmatprep.mubr.bf16.mxu0 %v807
  %3248 = vmatmul.mubr.bf16.gmra.mxu0 %v793
  %v3249 = vpop.f32.mrf.mxu0
  %v3250 = vadd.f32 %v3210, %v3249
  %v3251 = vpop.f32.mrf.mxu0
  %v3252 = vpop.f32.mrf.mxu0
  %v3253 = vpop.f32.mrf.mxu0
  %3254 = vdwg.mxu0
  %3255 = vmatprep.subr.bf16.mxu0 0
  %3256 = vmatpush1.bf16.msra.mxu0 %v2310
  %3257 = vmatprep.subr.bf16.mxu0 0
  %3258 = vmatpush1.bf16.msra.mxu0 %v2309
  %3259 = vmatprep.subr.bf16.mxu0 0
  %3260 = vmatpush1.bf16.msra.mxu0 %v2308
  %3261 = vmatprep.subr.bf16.mxu0 0
  %3262 = vmatpush1.bf16.msra.mxu0 %v2307
  %3263 = vmatprep.subr.bf16.mxu0 0
  %3264 = vmatpush1.bf16.msra.mxu0 %v2306
  %3265 = vmatprep.subr.bf16.mxu0 0
  %3266 = vmatpush1.bf16.msra.mxu0 %v2305
  %3267 = vmatprep.subr.bf16.mxu0 0
  %3268 = vmatpush1.bf16.msra.mxu0 %v2304
  %3269 = vmatprep.subr.bf16.mxu0 0
  %3270 = vmatpush1.bf16.msra.mxu0 %v2303
  %3271 = vmatprep.subr.bf16.mxu0 0
  %3272 = vmatpush2.bf16.msra.mxu0 %v2318
  %3273 = vmatprep.subr.bf16.mxu0 0
  %3274 = vmatpush2.bf16.msra.mxu0 %v2317
  %3275 = vmatprep.subr.bf16.mxu0 0
  %3276 = vmatpush2.bf16.msra.mxu0 %v2316
  %3277 = vmatprep.subr.bf16.mxu0 0
  %3278 = vmatpush2.bf16.msra.mxu0 %v2315
  %3279 = vmatprep.subr.bf16.mxu0 0
  %3280 = vmatpush2.bf16.msra.mxu0 %v2314
  %3281 = vmatprep.subr.bf16.mxu0 0
  %3282 = vmatpush2.bf16.msra.mxu0 %v2313
  %3283 = vmatprep.subr.bf16.mxu0 0
  %3284 = vmatpush2.bf16.msra.mxu0 %v2312
  %3285 = vmatprep.subr.bf16.mxu0 0
  %3286 = vmatpush2.bf16.msra.mxu0 %v2311
  %3287 = vmatprep.mubr.bf16.mxu0 %v811
  %3288 = vmatmul.mubr.bf16.gmra.mxu0 %v809
  %v3289 = vpop.f32.mrf.mxu0
  %v3290 = vadd.f32 %v3250, %v3289
  %v3291 = vpop.f32.mrf.mxu0
  %v3292 = vpop.f32.mrf.mxu0
  %v3293 = vpop.f32.mrf.mxu0
  %3294 = vdwg.mxu0
  %3295 = vmatprep.subr.bf16.mxu0 0
  %3296 = vmatpush1.bf16.msra.mxu0 %v2326
  %3297 = vmatprep.subr.bf16.mxu0 0
  %3298 = vmatpush1.bf16.msra.mxu0 %v2325
  %3299 = vmatprep.subr.bf16.mxu0 0
  %3300 = vmatpush1.bf16.msra.mxu0 %v2324
  %3301 = vmatprep.subr.bf16.mxu0 0
  %3302 = vmatpush1.bf16.msra.mxu0 %v2323
  %3303 = vmatprep.subr.bf16.mxu0 0
  %3304 = vmatpush1.bf16.msra.mxu0 %v2322
  %3305 = vmatprep.subr.bf16.mxu0 0
  %3306 = vmatpush1.bf16.msra.mxu0 %v2321
  %3307 = vmatprep.subr.bf16.mxu0 0
  %3308 = vmatpush1.bf16.msra.mxu0 %v2320
  %3309 = vmatprep.subr.bf16.mxu0 0
  %3310 = vmatpush1.bf16.msra.mxu0 %v2319
  %3311 = vmatprep.subr.bf16.mxu0 0
  %3312 = vmatpush2.bf16.msra.mxu0 %v2334
  %3313 = vmatprep.subr.bf16.mxu0 0
  %3314 = vmatpush2.bf16.msra.mxu0 %v2333
  %3315 = vmatprep.subr.bf16.mxu0 0
  %3316 = vmatpush2.bf16.msra.mxu0 %v2332
  %3317 = vmatprep.subr.bf16.mxu0 0
  %3318 = vmatpush2.bf16.msra.mxu0 %v2331
  %3319 = vmatprep.subr.bf16.mxu0 0
  %3320 = vmatpush2.bf16.msra.mxu0 %v2330
  %3321 = vmatprep.subr.bf16.mxu0 0
  %3322 = vmatpush2.bf16.msra.mxu0 %v2329
  %3323 = vmatprep.subr.bf16.mxu0 0
  %3324 = vmatpush2.bf16.msra.mxu0 %v2328
  %3325 = vmatprep.subr.bf16.mxu0 0
  %3326 = vmatpush2.bf16.msra.mxu0 %v2327
  %3327 = vmatprep.mubr.bf16.mxu0 %v848
  %3328 = vmatmul.mubr.bf16.gmra.mxu0 %v834
  %v3329 = vpop.f32.mrf.mxu0
  %v3330 = vadd.f32 %v3290, %v3329
  %v3331 = vpop.f32.mrf.mxu0
  %v3332 = vpop.f32.mrf.mxu0
  %v3333 = vpop.f32.mrf.mxu0
  %3334 = vdwg.mxu0
  %3335 = vmatprep.subr.bf16.mxu0 0
  %3336 = vmatpush1.bf16.msra.mxu0 %v2342
  %3337 = vmatprep.subr.bf16.mxu0 0
  %3338 = vmatpush1.bf16.msra.mxu0 %v2341
  %3339 = vmatprep.subr.bf16.mxu0 0
  %3340 = vmatpush1.bf16.msra.mxu0 %v2340
  %3341 = vmatprep.subr.bf16.mxu0 0
  %3342 = vmatpush1.bf16.msra.mxu0 %v2339
  %3343 = vmatprep.subr.bf16.mxu0 0
  %3344 = vmatpush1.bf16.msra.mxu0 %v2338
  %3345 = vmatprep.subr.bf16.mxu0 0
  %3346 = vmatpush1.bf16.msra.mxu0 %v2337
  %3347 = vmatprep.subr.bf16.mxu0 0
  %3348 = vmatpush1.bf16.msra.mxu0 %v2336
  %3349 = vmatprep.subr.bf16.mxu0 0
  %3350 = vmatpush1.bf16.msra.mxu0 %v2335
  %3351 = vmatprep.subr.bf16.mxu0 0
  %3352 = vmatpush2.bf16.msra.mxu0 %v2350
  %3353 = vmatprep.subr.bf16.mxu0 0
  %3354 = vmatpush2.bf16.msra.mxu0 %v2349
  %3355 = vmatprep.subr.bf16.mxu0 0
  %3356 = vmatpush2.bf16.msra.mxu0 %v2348
  %3357 = vmatprep.subr.bf16.mxu0 0
  %3358 = vmatpush2.bf16.msra.mxu0 %v2347
  %3359 = vmatprep.subr.bf16.mxu0 0
  %3360 = vmatpush2.bf16.msra.mxu0 %v2346
  %3361 = vmatprep.subr.bf16.mxu0 0
  %3362 = vmatpush2.bf16.msra.mxu0 %v2345
  %3363 = vmatprep.subr.bf16.mxu0 0
  %3364 = vmatpush2.bf16.msra.mxu0 %v2344
  %3365 = vmatprep.subr.bf16.mxu0 0
  %3366 = vmatpush2.bf16.msra.mxu0 %v2343
  %3367 = vmatprep.mubr.bf16.mxu0 %v850
  %3368 = vmatmul.mubr.bf16.gmra.mxu0 %v849
  %v3369 = vpop.f32.mrf.mxu0
  %v3370 = vadd.f32 %v3330, %v3369
  %v3371 = vpop.f32.mrf.mxu0
  %v3372 = vpop.f32.mrf.mxu0
  %v3373 = vpop.f32.mrf.mxu0
  %3374 = vdwg.mxu0
  %3375 = vmatprep.subr.bf16.mxu0 0
  %3376 = vmatpush1.bf16.msra.mxu0 0
  %3377 = vmatprep.subr.bf16.mxu0 0
  %3378 = vmatpush1.bf16.msra.mxu0 0
  %3379 = vmatprep.subr.bf16.mxu0 0
  %3380 = vmatpush1.bf16.msra.mxu0 %v2356
  %3381 = vmatprep.subr.bf16.mxu0 0
  %3382 = vmatpush1.bf16.msra.mxu0 %v2355
  %3383 = vmatprep.subr.bf16.mxu0 0
  %3384 = vmatpush1.bf16.msra.mxu0 %v2354
  %3385 = vmatprep.subr.bf16.mxu0 0
  %3386 = vmatpush1.bf16.msra.mxu0 %v2353
  %3387 = vmatprep.subr.bf16.mxu0 0
  %3388 = vmatpush1.bf16.msra.mxu0 %v2352
  %3389 = vmatprep.subr.bf16.mxu0 0
  %3390 = vmatpush1.bf16.msra.mxu0 %v2351
  %3391 = vmatprep.subr.bf16.mxu0 0
  %3392 = vmatpush2.bf16.msra.mxu0 0
  %3393 = vmatprep.subr.bf16.mxu0 0
  %3394 = vmatpush2.bf16.msra.mxu0 0
  %3395 = vmatprep.subr.bf16.mxu0 0
  %3396 = vmatpush2.bf16.msra.mxu0 0
  %3397 = vmatprep.subr.bf16.mxu0 0
  %3398 = vmatpush2.bf16.msra.mxu0 0
  %3399 = vmatprep.subr.bf16.mxu0 0
  %3400 = vmatpush2.bf16.msra.mxu0 0
  %3401 = vmatprep.subr.bf16.mxu0 0
  %3402 = vmatpush2.bf16.msra.mxu0 0
  %3403 = vmatprep.subr.bf16.mxu0 0
  %3404 = vmatpush2.bf16.msra.mxu0 0
  %3405 = vmatprep.subr.bf16.mxu0 0
  %3406 = vmatpush2.bf16.msra.mxu0 0
  %3407 = vmatprep.mubr.bf16.mxu0 0
  %3408 = vmatmul.mubr.bf16.gmra.mxu0 %v2653
  %v3409 = vpop.f32.mrf.mxu0
  %v3410 = vadd.f32 %v3370, %v3409
  %v3411 = vpop.f32.mrf.mxu0
  %v3412 = vpop.f32.mrf.mxu0
  %v3413 = vpop.f32.mrf.mxu0
  %3414 = vdwg.mxu0
  %v3415 = vld [vmem:[%s2] sm:$0x1]
  %v3417 = vlaneseq
  %v3418 = vshrl.u32 %v3417, 7
  %v3419 = vsub.s32 0, %v3418
  %v3420 = vrot.slane %v3415, %v3419
  %v3422 = vmul.f32 %v3410, %v3420
  %v3423 = vld [vmem:[%s3] sm:$0x1]
  %v3425 = vlaneseq
  %v3426 = vshrl.u32 %v3425, 7
  %v3427 = vsub.s32 0, %v3426
  %v3428 = vrot.slane %v3423, %v3427
  %v3430 = vadd.f32 %v3422, %v3428
  %v3431 = vsub.f32 0.0, %v3430
  %v3432 = vmul.f32 %v3431, 1.442695
  %v3433 = vpow.pop %v3432
  %v3434 = vadd.f32 %v3433, 1.0
  %v3435 = vrcp.pop %v3434
  %v3436 = vmul.f32 1.0, %v3435
  %vm3437 = vcmask 25600
  %3438 = vst.msk [vmem:[%s4] sm:$0x3] %vm3437, %v3436
  // Predicated region
  $region18: #{adafocus_forward.13} parent=0 // pred_check
    _
  $region19: #{adafocus_forward.13} parent=0 // pred_check_branch
    %3440 = sbr.rel (0) target = $region21
  $region20: #{adafocus_forward.13} parent=0 // pred_region
    _
  $region21: #{adafocus_forward.13} parent=0 // pred_fallthru
    _
  // Predicated region
  $region22: #{adafocus_forward.13} parent=0 // pred_check
    _
  $region23: #{adafocus_forward.13} parent=0 // pred_check_branch
    %3442 = sbr.rel (0) target = $region25
  $region24: #{adafocus_forward.13} parent=0 // pred_region
    _
  $region25: #{adafocus_forward.13} parent=0 // pred_fallthru
    _

// kernel: adafocus_forward.9
$region0: #{adafocus_forward.9}
  #allocation0 [shape = 'u32[]', space=smem, size = 0x4, offset = 0x4, fixed_abs, tag = 'smem constant byte address 0x4 - core index']
  #allocation1 [shape = 'u32[144,128]{1,0:T(1,128)}', space=vmem, size = 0x12000, scoped, tag = 'internal scratch']
  %s0 = inlined_call_operand.vmem [shape: f32[2,6,16], index: 0, kind: input, shape index: {}]
  %s1 = inlined_call_operand.vmem [shape: f32[6,6], index: 1, kind: input, shape index: {}]
  %s2 = inlined_call_operand.vmem [shape: f32[6,6], index: 2, kind: input, shape index: {}]
  %s3 = inlined_call_operand.vmem [shape: f32[48,16], index: 3, kind: input, shape index: {}]
  %s4 = inlined_call_operand.vmem [shape: f32[1,16], index: 4, kind: input, shape index: {}]
  %s5 = inlined_call_operand.vmem [shape: f32[48,16], index: 5, kind: input, shape index: {}]
  %s6 = inlined_call_operand.vmem [shape: f32[1,16], index: 6, kind: input, shape index: {}]
  %s7 = inlined_call_operand.vmem [shape: f32[1,16], index: 7, kind: input, shape index: {}]
  %s8 = inlined_call_operand.vmem [shape: f32[2,6,1], index: 8, kind: output, shape index: {0}]
  %s9 = inlined_call_operand.vmem [shape: f32[2,6,1], index: 9, kind: output, shape index: {1}]
  %10 = xla_tuple %s8, %s9
  %s11 = sld [smem:[#allocation0]]
  $region73: #{adafocus_forward.9} parent=0
    _
  %s13 = ssub.s32 1, %s11
  %s14 = scalar_select 0, %s13, %s11
  loop: start=0, step=1, limit=4
  $region2: #{adafocus_forward.9} parent=0 // loop_pre_header
    _
  $region3: #{adafocus_forward.9} parent=0 // loop_header
    %s16 = sphi 0, %s20
    %p17 = scmp.ge.s32.totalorder %s16, 4
    %s26 = sphi 0, %s28
    %s29 = sphi 0, %s26
    %s30 = sphi 0, %s29
    %s46 = sphi 0, %s30
    %s50 = sphi 0, %s50
    %s52 = sphi 0, %s50
    %s53 = sphi 0, %s52
    %s67 = sphi 0, %s53
    %s71 = sphi 0, %s71
    %s73 = sphi 0, %s71
    %s74 = sphi 0, %s73
    %s88 = sphi 0, %s74
    %s92 = sphi 0, %s92
    %s94 = sphi 0, %s92
    %s95 = sphi 0, %s94
    %s109 = sphi 0, %s95
    %s113 = sphi 0, %s113
    %s115 = sphi 0, %s113
    %s116 = sphi 0, %s115
    %s130 = sphi 0, %s116
    %s134 = sphi 0, %s134
    %s136 = sphi 0, %s134
    %s137 = sphi 0, %s136
    %s151 = sphi 0, %s137
    %s155 = sphi 0, %s155
    %s157 = sphi 0, %s155
    %s158 = sphi 0, %s157
    %s172 = sphi 0, %s158
    %s176 = sphi 0, %s176
    %s178 = sphi 0, %s176
    %s179 = sphi 0, %s178
    %s193 = sphi 0, %s179
    %s199 = sphi 0, %s201
    %s202 = sphi 0, %s199
    %s203 = sphi 0, %s202
    %s219 = sphi 0, %s203
    %s225 = sphi 0, %s227
    %s228 = sphi 0, %s225
    %s229 = sphi 0, %s228
    %s245 = sphi 0, %s229
  $region4: #{adafocus_forward.9} parent=0 // loop_header_branch
    %19 = sbr.rel (%p17) target = $region8
  $region5: #{adafocus_forward.9} parent=0 // loop_body
    %s21 = ssub.s32 %s16, 1
    %s22 = ssub.s32 %s16, 2
    %s23 = sadd.s32 %s16, 1
    %s24 = ssub.s32 %s16, %s23
    %p25 = scmp.eq.s32.totalorder %s24, 0
    %s27 = sadd.s32 %s26, 1
    %s28 = scalar_select %p25, %s26, %s27
    %p31 = pneg %p25
    %p32 = scmp.eq.s32.totalorder %s16, 1
    %p33 = por %p31, %p32
    %p34 = scmp.ne.s32.totalorder %s26, %s29
    %p35 = scmp.eq.s32.totalorder %s16, 0
    %p36 = por %p34, %p35
    %p37 = scmp.ne.s32.totalorder %s26, %s29
    %p38 = scmp.eq.s32.totalorder %s21, 1
    %p39 = por %p37, %p38
    %p40 = scmp.ne.s32.totalorder %s29, %s30
    %p41 = scmp.eq.s32.totalorder %s21, 0
    %p42 = por %p40, %p41
    %p43 = scmp.ne.s32.totalorder %s29, %s30
    %p44 = scmp.eq.s32.totalorder %s22, 1
    %p45 = por %p43, %p44
    %p47 = scmp.ne.s32.totalorder %s30, %s46
    %p48 = scmp.eq.s32.totalorder %s22, 0
    %p49 = por %p47, %p48
    %s51 = sadd.s32 %s50, 1
    %p54 = scmp.eq.s32.totalorder %s16, 1
    %p55 = scmp.ne.s32.totalorder %s50, %s52
    %p56 = scmp.eq.s32.totalorder %s16, 0
    %p57 = por %p55, %p56
    %p58 = scmp.ne.s32.totalorder %s50, %s52
    %p59 = scmp.eq.s32.totalorder %s21, 1
    %p60 = por %p58, %p59
    %p61 = scmp.ne.s32.totalorder %s52, %s53
    %p62 = scmp.eq.s32.totalorder %s21, 0
    %p63 = por %p61, %p62
    %p64 = scmp.ne.s32.totalorder %s52, %s53
    %p65 = scmp.eq.s32.totalorder %s22, 1
    %p66 = por %p64, %p65
    %p68 = scmp.ne.s32.totalorder %s53, %s67
    %p69 = scmp.eq.s32.totalorder %s22, 0
    %p70 = por %p68, %p69
    %s72 = sadd.s32 %s71, 1
    %p75 = scmp.eq.s32.totalorder %s16, 1
    %p76 = scmp.ne.s32.totalorder %s71, %s73
    %p77 = scmp.eq.s32.totalorder %s16, 0
    %p78 = por %p76, %p77
    %p79 = scmp.ne.s32.totalorder %s71, %s73
    %p80 = scmp.eq.s32.totalorder %s21, 1
    %p81 = por %p79, %p80
    %p82 = scmp.ne.s32.totalorder %s73, %s74
    %p83 = scmp.eq.s32.totalorder %s21, 0
    %p84 = por %p82, %p83
    %p85 = scmp.ne.s32.totalorder %s73, %s74
    %p86 = scmp.eq.s32.totalorder %s22, 1
    %p87 = por %p85, %p86
    %p89 = scmp.ne.s32.totalorder %s74, %s88
    %p90 = scmp.eq.s32.totalorder %s22, 0
    %p91 = por %p89, %p90
    %s93 = sadd.s32 %s92, 1
    %p96 = scmp.eq.s32.totalorder %s16, 1
    %p97 = scmp.ne.s32.totalorder %s92, %s94
    %p98 = scmp.eq.s32.totalorder %s16, 0
    %p99 = por %p97, %p98
    %p100 = scmp.ne.s32.totalorder %s92, %s94
    %p101 = scmp.eq.s32.totalorder %s21, 1
    %p102 = por %p100, %p101
    %p103 = scmp.ne.s32.totalorder %s94, %s95
    %p104 = scmp.eq.s32.totalorder %s21, 0
    %p105 = por %p103, %p104
    %p106 = scmp.ne.s32.totalorder %s94, %s95
    %p107 = scmp.eq.s32.totalorder %s22, 1
    %p108 = por %p106, %p107
    %p110 = scmp.ne.s32.totalorder %s95, %s109
    %p111 = scmp.eq.s32.totalorder %s22, 0
    %p112 = por %p110, %p111
    %s114 = sadd.s32 %s113, 1
    %p117 = scmp.eq.s32.totalorder %s16, 1
    %p118 = scmp.ne.s32.totalorder %s113, %s115
    %p119 = scmp.eq.s32.totalorder %s16, 0
    %p120 = por %p118, %p119
    %p121 = scmp.ne.s32.totalorder %s113, %s115
    %p122 = scmp.eq.s32.totalorder %s21, 1
    %p123 = por %p121, %p122
    %p124 = scmp.ne.s32.totalorder %s115, %s116
    %p125 = scmp.eq.s32.totalorder %s21, 0
    %p126 = por %p124, %p125
    %p127 = scmp.ne.s32.totalorder %s115, %s116
    %p128 = scmp.eq.s32.totalorder %s22, 1
    %p129 = por %p127, %p128
    %p131 = scmp.ne.s32.totalorder %s116, %s130
    %p132 = scmp.eq.s32.totalorder %s22, 0
    %p133 = por %p131, %p132
    %s135 = sadd.s32 %s134, 1
    %p138 = scmp.eq.s32.totalorder %s16, 1
    %p139 = scmp.ne.s32.totalorder %s134, %s136
    %p140 = scmp.eq.s32.totalorder %s16, 0
    %p141 = por %p139, %p140
    %p142 = scmp.ne.s32.totalorder %s134, %s136
    %p143 = scmp.eq.s32.totalorder %s21, 1
    %p144 = por %p142, %p143
    %p145 = scmp.ne.s32.totalorder %s136, %s137
    %p146 = scmp.eq.s32.totalorder %s21, 0
    %p147 = por %p145, %p146
    %p148 = scmp.ne.s32.totalorder %s136, %s137
    %p149 = scmp.eq.s32.totalorder %s22, 1
    %p150 = por %p148, %p149
    %p152 = scmp.ne.s32.totalorder %s137, %s151
    %p153 = scmp.eq.s32.totalorder %s22, 0
    %p154 = por %p152, %p153
    %s156 = sadd.s32 %s155, 1
    %p159 = scmp.eq.s32.totalorder %s16, 1
    %p160 = scmp.ne.s32.totalorder %s155, %s157
    %p161 = scmp.eq.s32.totalorder %s16, 0
    %p162 = por %p160, %p161
    %p163 = scmp.ne.s32.totalorder %s155, %s157
    %p164 = scmp.eq.s32.totalorder %s21, 1
    %p165 = por %p163, %p164
    %p166 = scmp.ne.s32.totalorder %s157, %s158
    %p167 = scmp.eq.s32.totalorder %s21, 0
    %p168 = por %p166, %p167
    %p169 = scmp.ne.s32.totalorder %s157, %s158
    %p170 = scmp.eq.s32.totalorder %s22, 1
    %p171 = por %p169, %p170
    %p173 = scmp.ne.s32.totalorder %s158, %s172
    %p174 = scmp.eq.s32.totalorder %s22, 0
    %p175 = por %p173, %p174
    %s177 = sadd.s32 %s176, 1
    %p180 = scmp.eq.s32.totalorder %s16, 1
    %p181 = scmp.ne.s32.totalorder %s176, %s178
    %p182 = scmp.eq.s32.totalorder %s16, 0
    %p183 = por %p181, %p182
    %p184 = scmp.ne.s32.totalorder %s176, %s178
    %p185 = scmp.eq.s32.totalorder %s21, 1
    %p186 = por %p184, %p185
    %p187 = scmp.ne.s32.totalorder %s178, %s179
    %p188 = scmp.eq.s32.totalorder %s21, 0
    %p189 = por %p187, %p188
    %p190 = scmp.ne.s32.totalorder %s178, %s179
    %p191 = scmp.eq.s32.totalorder %s22, 1
    %p192 = por %p190, %p191
    %p194 = scmp.ne.s32.totalorder %s179, %s193
    %p195 = scmp.eq.s32.totalorder %s22, 0
    %p196 = por %p194, %p195
    %s197 = ssub.s32 %s16, %s23
    %p198 = scmp.eq.s32.totalorder %s197, 0
    %s200 = sadd.s32 %s199, 1
    %s201 = scalar_select %p198, %s199, %s200
    %p204 = pneg %p198
    %p205 = scmp.eq.s32.totalorder %s16, 1
    %p206 = por %p204, %p205
    %p207 = scmp.ne.s32.totalorder %s199, %s202
    %p208 = scmp.eq.s32.totalorder %s16, 0
    %p209 = por %p207, %p208
    %p210 = scmp.ne.s32.totalorder %s199, %s202
    %p211 = scmp.eq.s32.totalorder %s21, 1
    %p212 = por %p210, %p211
    %p213 = scmp.ne.s32.totalorder %s202, %s203
    %p214 = scmp.eq.s32.totalorder %s21, 0
    %p215 = por %p213, %p214
    %p216 = scmp.ne.s32.totalorder %s202, %s203
    %p217 = scmp.eq.s32.totalorder %s22, 1
    %p218 = por %p216, %p217
    %p220 = scmp.ne.s32.totalorder %s203, %s219
    %p221 = scmp.eq.s32.totalorder %s22, 0
    %p222 = por %p220, %p221
    %s223 = ssub.s32 %s16, %s23
    %p224 = scmp.eq.s32.totalorder %s223, 0
    %s226 = sadd.s32 %s225, 1
    %s227 = scalar_select %p224, %s225, %s226
    %p230 = pneg %p224
    %p231 = scmp.eq.s32.totalorder %s16, 1
    %p232 = por %p230, %p231
    %p233 = scmp.ne.s32.totalorder %s225, %s228
    %p234 = scmp.eq.s32.totalorder %s16, 0
    %p235 = por %p233, %p234
    %p236 = scmp.ne.s32.totalorder %s225, %s228
    %p237 = scmp.eq.s32.totalorder %s21, 1
    %p238 = por %p236, %p237
    %p239 = scmp.ne.s32.totalorder %s228, %s229
    %p240 = scmp.eq.s32.totalorder %s21, 0
    %p241 = por %p239, %p240
    %p242 = scmp.ne.s32.totalorder %s228, %s229
    %p243 = scmp.eq.s32.totalorder %s22, 1
    %p244 = por %p242, %p243
    %p246 = scmp.ne.s32.totalorder %s229, %s245
    %p247 = scmp.eq.s32.totalorder %s22, 0
    %p248 = por %p246, %p247
    %p249 = scmp.le.s32.totalorder 1, %s16
    %p250 = scmp.lt.s32.totalorder %s16, 3
    %p251 = pnand %p249, %p250
    %p252 = pneg %p251
    // Predicated region
    $region9: #{adafocus_forward.9} parent=5 // pred_check
      _
    $region10: #{adafocus_forward.9} parent=5 // pred_check_branch
      %254 = sbr.rel (%p251) target = $region12
    $region11: #{adafocus_forward.9} parent=5 // pred_region
      %s255 = ssub.s32 %s16, 1
      // Predicated region
      $region13: #{adafocus_forward.9} parent=11 // pred_check
        %p256 = pneg %p63
      $region14: #{adafocus_forward.9} parent=11 // pred_check_branch
        %258 = sbr.rel (%p256) target = $region16
      $region15: #{adafocus_forward.9} parent=11 // pred_region
        _
      $region16: #{adafocus_forward.9} parent=11 // pred_fallthru
        _
      // Predicated region
      $region17: #{adafocus_forward.9} parent=11 // pred_check
        %p259 = pneg %p84
      $region18: #{adafocus_forward.9} parent=11 // pred_check_branch
        %261 = sbr.rel (%p259) target = $region20
      $region19: #{adafocus_forward.9} parent=11 // pred_region
        _
      $region20: #{adafocus_forward.9} parent=11 // pred_fallthru
        _
      // Predicated region
      $region21: #{adafocus_forward.9} parent=11 // pred_check
        %p262 = pneg %p105
      $region22: #{adafocus_forward.9} parent=11 // pred_check_branch
        %264 = sbr.rel (%p262) target = $region24
      $region23: #{adafocus_forward.9} parent=11 // pred_region
        _
      $region24: #{adafocus_forward.9} parent=11 // pred_fallthru
        _
      // Predicated region
      $region25: #{adafocus_forward.9} parent=11 // pred_check
        %p265 = pneg %p126
      $region26: #{adafocus_forward.9} parent=11 // pred_check_branch
        %267 = sbr.rel (%p265) target = $region28
      $region27: #{adafocus_forward.9} parent=11 // pred_region
        _
      $region28: #{adafocus_forward.9} parent=11 // pred_fallthru
        _
      // Predicated region
      $region29: #{adafocus_forward.9} parent=11 // pred_check
        %p268 = pneg %p147
      $region30: #{adafocus_forward.9} parent=11 // pred_check_branch
        %270 = sbr.rel (%p268) target = $region32
      $region31: #{adafocus_forward.9} parent=11 // pred_region
        _
      $region32: #{adafocus_forward.9} parent=11 // pred_fallthru
        _
      // Predicated region
      $region33: #{adafocus_forward.9} parent=11 // pred_check
        %p271 = pneg %p168
      $region34: #{adafocus_forward.9} parent=11 // pred_check_branch
        %273 = sbr.rel (%p271) target = $region36
      $region35: #{adafocus_forward.9} parent=11 // pred_region
        _
      $region36: #{adafocus_forward.9} parent=11 // pred_fallthru
        _
      // Predicated region
      $region37: #{adafocus_forward.9} parent=11 // pred_check
        %p274 = pneg %p189
      $region38: #{adafocus_forward.9} parent=11 // pred_check_branch
        %276 = sbr.rel (%p274) target = $region40
      $region39: #{adafocus_forward.9} parent=11 // pred_region
        _
      $region40: #{adafocus_forward.9} parent=11 // pred_fallthru
        _
    $region12: #{adafocus_forward.9} parent=5 // pred_fallthru
      _
    %p277 = scmp.lt.s32.totalorder %s16, 2
    // Predicated region
    $region41: #{adafocus_forward.9} parent=5 // pred_check
      %p278 = pneg %p277
    $region42: #{adafocus_forward.9} parent=5 // pred_check_branch
      %280 = sbr.rel (%p278) target = $region44
    $region43: #{adafocus_forward.9} parent=5 // pred_region
      // Predicated region
      $region45: #{adafocus_forward.9} parent=43 // pred_check
        %p281 = pneg %p36
      $region46: #{adafocus_forward.9} parent=43 // pred_check_branch
        %283 = sbr.rel (%p281) target = $region48
      $region47: #{adafocus_forward.9} parent=43 // pred_region
        %p284 = scmp.lt.s32.totalorder %s16, 1
        %s285 = scalar_select %p284, %s16, 1
        %s286 = smul.addr %s285, 8
        %s287 = scalar_lea.vmem %s0, %s286
      $region48: #{adafocus_forward.9} parent=43 // pred_fallthru
        _
    $region44: #{adafocus_forward.9} parent=5 // pred_fallthru
      _
    %p288 = scmp.le.s32.totalorder 1, %s16
    %p289 = scmp.lt.s32.totalorder %s16, 3
    %p290 = pnand %p288, %p289
    %p291 = pneg %p290
    // Predicated region
    $region49: #{adafocus_forward.9} parent=5 // pred_check
      _
    $region50: #{adafocus_forward.9} parent=5 // pred_check_branch
      %293 = sbr.rel (%p290) target = $region52
    $region51: #{adafocus_forward.9} parent=5 // pred_region
      %s294 = ssub.s32 %s16, 1
      %p295 = scmp.lt.s32.totalorder %s21, 1
      %s296 = scalar_select %p295, %s21, 1
      %s297 = smul.addr %s296, 8
      %s298 = scalar_lea.vmem %s0, %s297
      %p299 = pneg %p42
      %p300 = pneg %p39
      %p301 = pneg %p63
      %p302 = pneg %p60
      %p303 = pneg %p84
      %p304 = pneg %p81
      %p305 = pneg %p105
      %p306 = pneg %p102
      %p307 = pneg %p126
      %p308 = pneg %p123
      %p309 = pneg %p147
      %p310 = pneg %p144
      %p311 = pneg %p168
      %p312 = pneg %p165
      %p313 = pneg %p189
      %p314 = pneg %p186
      %p315 = pneg %p215
      %p316 = pneg %p212
      %p317 = scmp.lt.s32.totalorder %s21, 1
      %s318 = scalar_select %p317, %s21, 1
      %s319 = smul.addr %s318, 8
      %s320 = scalar_lea.vmem %s8, %s319
      %p321 = pneg %p241
      %p322 = pneg %p238
      %p323 = scmp.lt.s32.totalorder %s21, 1
      %s324 = scalar_select %p323, %s21, 1
      %s325 = smul.addr %s324, 8
      %s326 = scalar_lea.vmem %s9, %s325
      %p327 = scmp.lt.s32.totalorder %s21, 1
      %s328 = scalar_select %p327, %s21, 1
      %s329 = smul.addr %s328, 8
      %s330 = scalar_lea.vmem %s0, %s329
      %p331 = scmp.lt.s32.totalorder %s21, 1
      %s332 = scalar_select %p331, %s21, 1
      %s333 = smul.addr %s332, 8
      %s334 = scalar_lea.vmem %s8, %s333
      %p335 = scmp.lt.s32.totalorder %s21, 1
      %s336 = scalar_select %p335, %s21, 1
      %s337 = smul.addr %s336, 8
      %s338 = scalar_lea.vmem %s9, %s337
      %v339 = vld [vmem:[%s330] sm:$0x3f]
      %v340 = vld [vmem:[%s1] sm:$0x3f]
      %v341 = vld [vmem:[%s2] sm:$0x3f]
      %v342 = vld [vmem:[%s3] sm:$0xff]
      %v343 = vld [vmem:[%s3 + $0x8] sm:$0xff]
      %v344 = vld [vmem:[%s3 + $0x10] sm:$0xff]
      %v345 = vld [vmem:[%s3 + $0x18] sm:$0xff]
      %v346 = vld [vmem:[%s3 + $0x20] sm:$0xff]
      %v347 = vld [vmem:[%s3 + $0x28] sm:$0xff]
      %v348 = vld [vmem:[%s4] sm:$0x1]
      %vm349 = vcmask 48128
      %v351 = vsel %vm349, %v340, 0
      %vm353 = vcmask 1045504
      %v355 = vsel %vm353, %v339, 0
      %357 = vmatprep.subr.mxu0 0.0
      %358 = vmatpush1.msra.mxu0 0.0
      %359 = vmatprep.subr.mxu0 0.0
      %360 = vmatpush1.msra.mxu0 0.0
      %361 = vmatprep.subr.mxu0 0.0
      %362 = vmatpush1.msra.mxu0 0.0
      %363 = vmatprep.subr.mxu0 0.0
      %364 = vmatpush1.msra.mxu0 0.0
      %365 = vmatprep.subr.mxu0 0.0
      %366 = vmatpush1.msra.mxu0 0.0
      %367 = vmatprep.subr.mxu0 0.0
      %368 = vmatpush1.msra.mxu0 0.0
      %369 = vmatprep.subr.mxu0 0.0
      %370 = vmatpush1.msra.mxu0 0.0
      %371 = vmatprep.subr.mxu0 0.0
      %372 = vmatpush1.msra.mxu0 0.0
      %373 = vmatprep.subr.mxu0 0.0
      %374 = vmatpush1.msra.mxu0 0.0
      %375 = vmatprep.subr.mxu0 0.0
      %376 = vmatpush1.msra.mxu0 0.0
      %377 = vmatprep.subr.mxu0 0.0
      %378 = vmatpush1.msra.mxu0 0.0
      %379 = vmatprep.subr.mxu0 0.0
      %380 = vmatpush1.msra.mxu0 0.0
      %381 = vmatprep.subr.mxu0 0.0
      %382 = vmatpush1.msra.mxu0 0.0
      %383 = vmatprep.subr.mxu0 0.0
      %384 = vmatpush1.msra.mxu0 0.0
      %385 = vmatprep.subr.mxu0 0.0
      %386 = vmatpush1.msra.mxu0 0.0
      %387 = vmatprep.subr.mxu0 0.0
      %388 = vmatpush1.msra.mxu0 %v355
      %389 = vmatprep.subr.mxu0 0.0
      %390 = vmatpush2.msra.mxu0 0.0
      %391 = vmatprep.subr.mxu0 0.0
      %392 = vmatpush2.msra.mxu0 0.0
      %393 = vmatprep.subr.mxu0 0.0
      %394 = vmatpush2.msra.mxu0 0.0
      %395 = vmatprep.subr.mxu0 0.0
      %396 = vmatpush2.msra.mxu0 0.0
      %397 = vmatprep.subr.mxu0 0.0
      %398 = vmatpush2.msra.mxu0 0.0
      %399 = vmatprep.subr.mxu0 0.0
      %400 = vmatpush2.msra.mxu0 0.0
      %401 = vmatprep.subr.mxu0 0.0
      %402 = vmatpush2.msra.mxu0 0.0
      %403 = vmatprep.subr.mxu0 0.0
      %404 = vmatpush2.msra.mxu0 0.0
      %405 = vmatprep.subr.mxu0 0.0
      %406 = vmatpush2.msra.mxu0 0.0
      %407 = vmatprep.subr.mxu0 0.0
      %408 = vmatpush2.msra.mxu0 0.0
      %409 = vmatprep.subr.mxu0 0.0
      %410 = vmatpush2.msra.mxu0 0.0
      %411 = vmatprep.subr.mxu0 0.0
      %412 = vmatpush2.msra.mxu0 0.0
      %413 = vmatprep.subr.mxu0 0.0
      %414 = vmatpush2.msra.mxu0 0.0
      %415 = vmatprep.subr.mxu0 0.0
      %416 = vmatpush2.msra.mxu0 0.0
      %417 = vmatprep.subr.mxu0 0.0
      %418 = vmatpush2.msra.mxu0 0.0
      %419 = vmatprep.subr.mxu0 0.0
      %420 = vmatpush2.msra.mxu0 0.0
      %421 = vmatprep.mubr.f32.mxu0 0.0
      %422 = vmatmul.mubr.f32.gmra.mxu0 %v351
      %v423 = vpop.f32.mrf.mxu0
      %v424 = vadd.f32 0.0, %v423
      %v425 = vpop.f32.mrf.mxu0
      %426 = vdwg.mxu0
      %v428 = vsel %vm349, %v341, 0
      %430 = vmatprep.subr.mxu0 0.0
      %431 = vmatpush1.msra.mxu0 0.0
      %432 = vmatprep.subr.mxu0 0.0
      %433 = vmatpush1.msra.mxu0 0.0
      %434 = vmatprep.subr.mxu0 0.0
      %435 = vmatpush1.msra.mxu0 0.0
      %436 = vmatprep.subr.mxu0 0.0
      %437 = vmatpush1.msra.mxu0 0.0
      %438 = vmatprep.subr.mxu0 0.0
      %439 = vmatpush1.msra.mxu0 0.0
      %440 = vmatprep.subr.mxu0 0.0
      %441 = vmatpush1.msra.mxu0 0.0
      %442 = vmatprep.subr.mxu0 0.0
      %443 = vmatpush1.msra.mxu0 0.0
      %444 = vmatprep.subr.mxu0 0.0
      %445 = vmatpush1.msra.mxu0 0.0
      %446 = vmatprep.subr.mxu0 0.0
      %447 = vmatpush1.msra.mxu0 0.0
      %448 = vmatprep.subr.mxu0 0.0
      %449 = vmatpush1.msra.mxu0 0.0
      %450 = vmatprep.subr.mxu0 0.0
      %451 = vmatpush1.msra.mxu0 0.0
      %452 = vmatprep.subr.mxu0 0.0
      %453 = vmatpush1.msra.mxu0 0.0
      %454 = vmatprep.subr.mxu0 0.0
      %455 = vmatpush1.msra.mxu0 0.0
      %456 = vmatprep.subr.mxu0 0.0
      %457 = vmatpush1.msra.mxu0 0.0
      %458 = vmatprep.subr.mxu0 0.0
      %459 = vmatpush1.msra.mxu0 0.0
      %460 = vmatprep.subr.mxu0 0.0
      %461 = vmatpush1.msra.mxu0 %v355
      %462 = vmatprep.subr.mxu0 0.0
      %463 = vmatpush2.msra.mxu0 0.0
      %464 = vmatprep.subr.mxu0 0.0
      %465 = vmatpush2.msra.mxu0 0.0
      %466 = vmatprep.subr.mxu0 0.0
      %467 = vmatpush2.msra.mxu0 0.0
      %468 = vmatprep.subr.mxu0 0.0
      %469 = vmatpush2.msra.mxu0 0.0
      %470 = vmatprep.subr.mxu0 0.0
      %471 = vmatpush2.msra.mxu0 0.0
      %472 = vmatprep.subr.mxu0 0.0
      %473 = vmatpush2.msra.mxu0 0.0
      %474 = vmatprep.subr.mxu0 0.0
      %475 = vmatpush2.msra.mxu0 0.0
      %476 = vmatprep.subr.mxu0 0.0
      %477 = vmatpush2.msra.mxu0 0.0
      %478 = vmatprep.subr.mxu0 0.0
      %479 = vmatpush2.msra.mxu0 0.0
      %480 = vmatprep.subr.mxu0 0.0
      %481 = vmatpush2.msra.mxu0 0.0
      %482 = vmatprep.subr.mxu0 0.0
      %483 = vmatpush2.msra.mxu0 0.0
      %484 = vmatprep.subr.mxu0 0.0
      %485 = vmatpush2.msra.mxu0 0.0
      %486 = vmatprep.subr.mxu0 0.0
      %487 = vmatpush2.msra.mxu0 0.0
      %488 = vmatprep.subr.mxu0 0.0
      %489 = vmatpush2.msra.mxu0 0.0
      %490 = vmatprep.subr.mxu0 0.0
      %491 = vmatpush2.msra.mxu0 0.0
      %492 = vmatprep.subr.mxu0 0.0
      %493 = vmatpush2.msra.mxu0 0.0
      %494 = vmatprep.mubr.f32.mxu0 0.0
      %495 = vmatmul.mubr.f32.gmra.mxu0 %v428
      %v496 = vpop.f32.mrf.mxu0
      %v497 = vadd.f32 0.0, %v496
      %v498 = vpop.f32.mrf.mxu0
      %499 = vdwg.mxu0
      %vm500 = vcmask 130048
      %v501 = vsel %vm500, %v339, 0
      %503 = vmatprep.subr.mxu0 0.0
      %504 = vmatpush1.msra.mxu0 0.0
      %505 = vmatprep.subr.mxu0 0.0
      %506 = vmatpush1.msra.mxu0 0.0
      %507 = vmatprep.subr.mxu0 0.0
      %508 = vmatpush1.msra.mxu0 0.0
      %509 = vmatprep.subr.mxu0 0.0
      %510 = vmatpush1.msra.mxu0 0.0
      %511 = vmatprep.subr.mxu0 0.0
      %512 = vmatpush1.msra.mxu0 0.0
      %513 = vmatprep.subr.mxu0 0.0
      %514 = vmatpush1.msra.mxu0 0.0
      %515 = vmatprep.subr.mxu0 0.0
      %516 = vmatpush1.msra.mxu0 0.0
      %517 = vmatprep.subr.mxu0 0.0
      %518 = vmatpush1.msra.mxu0 0.0
      %519 = vmatprep.subr.mxu0 0.0
      %520 = vmatpush1.msra.mxu0 0.0
      %521 = vmatprep.subr.mxu0 0.0
      %522 = vmatpush1.msra.mxu0 0.0
      %523 = vmatprep.subr.mxu0 0.0
      %524 = vmatpush1.msra.mxu0 0.0
      %525 = vmatprep.subr.mxu0 0.0
      %526 = vmatpush1.msra.mxu0 0.0
      %527 = vmatprep.subr.mxu0 0.0
      %528 = vmatpush1.msra.mxu0 0.0
      %529 = vmatprep.subr.mxu0 0.0
      %530 = vmatpush1.msra.mxu0 0.0
      %531 = vmatprep.subr.mxu0 0.0
      %532 = vmatpush1.msra.mxu0 %v345
      %533 = vmatprep.subr.mxu0 0.0
      %534 = vmatpush1.msra.mxu0 %v344
      %535 = vmatprep.subr.mxu0 0.0
      %536 = vmatpush2.msra.mxu0 0.0
      %537 = vmatprep.subr.mxu0 0.0
      %538 = vmatpush2.msra.mxu0 0.0
      %539 = vmatprep.subr.mxu0 0.0
      %540 = vmatpush2.msra.mxu0 0.0
      %541 = vmatprep.subr.mxu0 0.0
      %542 = vmatpush2.msra.mxu0 0.0
      %543 = vmatprep.subr.mxu0 0.0
      %544 = vmatpush2.msra.mxu0 0.0
      %545 = vmatprep.subr.mxu0 0.0
      %546 = vmatpush2.msra.mxu0 0.0
      %547 = vmatprep.subr.mxu0 0.0
      %548 = vmatpush2.msra.mxu0 0.0
      %549 = vmatprep.subr.mxu0 0.0
      %550 = vmatpush2.msra.mxu0 0.0
      %551 = vmatprep.subr.mxu0 0.0
      %552 = vmatpush2.msra.mxu0 0.0
      %553 = vmatprep.subr.mxu0 0.0
      %554 = vmatpush2.msra.mxu0 0.0
      %555 = vmatprep.subr.mxu0 0.0
      %556 = vmatpush2.msra.mxu0 0.0
      %557 = vmatprep.subr.mxu0 0.0
      %558 = vmatpush2.msra.mxu0 0.0
      %559 = vmatprep.subr.mxu0 0.0
      %560 = vmatpush2.msra.mxu0 0.0
      %561 = vmatprep.subr.mxu0 0.0
      %562 = vmatpush2.msra.mxu0 0.0
      %563 = vmatprep.subr.mxu0 0.0
      %564 = vmatpush2.msra.mxu0 0.0
      %565 = vmatprep.subr.mxu0 0.0
      %566 = vmatpush2.msra.mxu0 0.0
      %567 = vmatprep.mubr.f32.mxu0 0.0
      %568 = vmatmul.mubr.f32.gmra.mxu0 %v501
      %v569 = vpop.f32.mrf.mxu0
      %v570 = vadd.f32 0.0, %v569
      %v571 = vpop.f32.mrf.mxu0
      %572 = vdwg.mxu0
      %v574 = vsel %vm500, %v424, 0
      %576 = vmatprep.subr.mxu0 0.0
      %577 = vmatpush1.msra.mxu0 0.0
      %578 = vmatprep.subr.mxu0 0.0
      %579 = vmatpush1.msra.mxu0 0.0
      %580 = vmatprep.subr.mxu0 0.0
      %581 = vmatpush1.msra.mxu0 0.0
      %582 = vmatprep.subr.mxu0 0.0
      %583 = vmatpush1.msra.mxu0 0.0
      %584 = vmatprep.subr.mxu0 0.0
      %585 = vmatpush1.msra.mxu0 0.0
      %586 = vmatprep.subr.mxu0 0.0
      %587 = vmatpush1.msra.mxu0 0.0
      %588 = vmatprep.subr.mxu0 0.0
      %589 = vmatpush1.msra.mxu0 0.0
      %590 = vmatprep.subr.mxu0 0.0
      %591 = vmatpush1.msra.mxu0 0.0
      %592 = vmatprep.subr.mxu0 0.0
      %593 = vmatpush1.msra.mxu0 0.0
      %594 = vmatprep.subr.mxu0 0.0
      %595 = vmatpush1.msra.mxu0 0.0
      %596 = vmatprep.subr.mxu0 0.0
      %597 = vmatpush1.msra.mxu0 0.0
      %598 = vmatprep.subr.mxu0 0.0
      %599 = vmatpush1.msra.mxu0 0.0
      %600 = vmatprep.subr.mxu0 0.0
      %601 = vmatpush1.msra.mxu0 0.0
      %602 = vmatprep.subr.mxu0 0.0
      %603 = vmatpush1.msra.mxu0 0.0
      %604 = vmatprep.subr.mxu0 0.0
      %605 = vmatpush1.msra.mxu0 %v343
      %606 = vmatprep.subr.mxu0 0.0
      %607 = vmatpush1.msra.mxu0 %v342
      %608 = vmatprep.subr.mxu0 0.0
      %609 = vmatpush2.msra.mxu0 0.0
      %610 = vmatprep.subr.mxu0 0.0
      %611 = vmatpush2.msra.mxu0 0.0
      %612 = vmatprep.subr.mxu0 0.0
      %613 = vmatpush2.msra.mxu0 0.0
      %614 = vmatprep.subr.mxu0 0.0
      %615 = vmatpush2.msra.mxu0 0.0
      %616 = vmatprep.subr.mxu0 0.0
      %617 = vmatpush2.msra.mxu0 0.0
      %618 = vmatprep.subr.mxu0 0.0
      %619 = vmatpush2.msra.mxu0 0.0
      %620 = vmatprep.subr.mxu0 0.0
      %621 = vmatpush2.msra.mxu0 0.0
      %622 = vmatprep.subr.mxu0 0.0
      %623 = vmatpush2.msra.mxu0 0.0
      %624 = vmatprep.subr.mxu0 0.0
      %625 = vmatpush2.msra.mxu0 0.0
      %626 = vmatprep.subr.mxu0 0.0
      %627 = vmatpush2.msra.mxu0 0.0
      %628 = vmatprep.subr.mxu0 0.0
      %629 = vmatpush2.msra.mxu0 0.0
      %630 = vmatprep.subr.mxu0 0.0
      %631 = vmatpush2.msra.mxu0 0.0
      %632 = vmatprep.subr.mxu0 0.0
      %633 = vmatpush2.msra.mxu0 0.0
      %634 = vmatprep.subr.mxu0 0.0
      %635 = vmatpush2.msra.mxu0 0.0
      %636 = vmatprep.subr.mxu0 0.0
      %637 = vmatpush2.msra.mxu0 0.0
      %638 = vmatprep.subr.mxu0 0.0
      %639 = vmatpush2.msra.mxu0 0.0
      %640 = vmatprep.mubr.f32.mxu0 0.0
      %641 = vmatmul.mubr.f32.gmra.mxu0 %v574
      %v642 = vpop.f32.mrf.mxu0
      %v643 = vadd.f32 %v570, %v642
      %v644 = vpop.f32.mrf.mxu0
      %645 = vdwg.mxu0
      %v647 = vsel %vm500, %v497, 0
      %649 = vmatprep.subr.mxu0 0.0
      %650 = vmatpush1.msra.mxu0 0.0
      %651 = vmatprep.subr.mxu0 0.0
      %652 = vmatpush1.msra.mxu0 0.0
      %653 = vmatprep.subr.mxu0 0.0
      %654 = vmatpush1.msra.mxu0 0.0
      %655 = vmatprep.subr.mxu0 0.0
      %656 = vmatpush1.msra.mxu0 0.0
      %657 = vmatprep.subr.mxu0 0.0
      %658 = vmatpush1.msra.mxu0 0.0
      %659 = vmatprep.subr.mxu0 0.0
      %660 = vmatpush1.msra.mxu0 0.0
      %661 = vmatprep.subr.mxu0 0.0
      %662 = vmatpush1.msra.mxu0 0.0
      %663 = vmatprep.subr.mxu0 0.0
      %664 = vmatpush1.msra.mxu0 0.0
      %665 = vmatprep.subr.mxu0 0.0
      %666 = vmatpush1.msra.mxu0 0.0
      %667 = vmatprep.subr.mxu0 0.0
      %668 = vmatpush1.msra.mxu0 0.0
      %669 = vmatprep.subr.mxu0 0.0
      %670 = vmatpush1.msra.mxu0 0.0
      %671 = vmatprep.subr.mxu0 0.0
      %672 = vmatpush1.msra.mxu0 0.0
      %673 = vmatprep.subr.mxu0 0.0
      %674 = vmatpush1.msra.mxu0 0.0
      %675 = vmatprep.subr.mxu0 0.0
      %676 = vmatpush1.msra.mxu0 0.0
      %677 = vmatprep.subr.mxu0 0.0
      %678 = vmatpush1.msra.mxu0 %v347
      %679 = vmatprep.subr.mxu0 0.0
      %680 = vmatpush1.msra.mxu0 %v346
      %681 = vmatprep.subr.mxu0 0.0
      %682 = vmatpush2.msra.mxu0 0.0
      %683 = vmatprep.subr.mxu0 0.0
      %684 = vmatpush2.msra.mxu0 0.0
      %685 = vmatprep.subr.mxu0 0.0
      %686 = vmatpush2.msra.mxu0 0.0
      %687 = vmatprep.subr.mxu0 0.0
      %688 = vmatpush2.msra.mxu0 0.0
      %689 = vmatprep.subr.mxu0 0.0
      %690 = vmatpush2.msra.mxu0 0.0
      %691 = vmatprep.subr.mxu0 0.0
      %692 = vmatpush2.msra.mxu0 0.0
      %693 = vmatprep.subr.mxu0 0.0
      %694 = vmatpush2.msra.mxu0 0.0
      %695 = vmatprep.subr.mxu0 0.0
      %696 = vmatpush2.msra.mxu0 0.0
      %697 = vmatprep.subr.mxu0 0.0
      %698 = vmatpush2.msra.mxu0 0.0
      %699 = vmatprep.subr.mxu0 0.0
      %700 = vmatpush2.msra.mxu0 0.0
      %701 = vmatprep.subr.mxu0 0.0
      %702 = vmatpush2.msra.mxu0 0.0
      %703 = vmatprep.subr.mxu0 0.0
      %704 = vmatpush2.msra.mxu0 0.0
      %705 = vmatprep.subr.mxu0 0.0
      %706 = vmatpush2.msra.mxu0 0.0
      %707 = vmatprep.subr.mxu0 0.0
      %708 = vmatpush2.msra.mxu0 0.0
      %709 = vmatprep.subr.mxu0 0.0
      %710 = vmatpush2.msra.mxu0 0.0
      %711 = vmatprep.subr.mxu0 0.0
      %712 = vmatpush2.msra.mxu0 0.0
      %713 = vmatprep.mubr.f32.mxu0 0.0
      %714 = vmatmul.mubr.f32.gmra.mxu0 %v647
      %v715 = vpop.f32.mrf.mxu0
      %v716 = vadd.f32 0.0, %v715
      %v717 = vpop.f32.mrf.mxu0
      %718 = vdwg.mxu0
      %v719 = vadd.f32 %v643, %v716
      %v721 = vlaneseq
      %v722 = vshrl.u32 %v721, 7
      %v723 = vsub.s32 0, %v722
      %v724 = vrot.slane %v348, %v723
      %v726 = vadd.f32 %v719, %v724
      %v727 = vmax.f32 %v726, 0.0
      %v728 = vld [vmem:[%s5] sm:$0xff]
      %v729 = vld [vmem:[%s5 + $0x8] sm:$0xff]
      %v730 = vld [vmem:[%s5 + $0x10] sm:$0xff]
      %v731 = vld [vmem:[%s5 + $0x18] sm:$0xff]
      %v732 = vld [vmem:[%s5 + $0x20] sm:$0xff]
      %v733 = vld [vmem:[%s5 + $0x28] sm:$0xff]
      %v734 = vld [vmem:[%s6] sm:$0x1]
      %v736 = vsel %vm353, %v727, 0
      %738 = vmatprep.subr.mxu0 0.0
      %739 = vmatpush1.msra.mxu0 0.0
      %740 = vmatprep.subr.mxu0 0.0
      %741 = vmatpush1.msra.mxu0 0.0
      %742 = vmatprep.subr.mxu0 0.0
      %743 = vmatpush1.msra.mxu0 0.0
      %744 = vmatprep.subr.mxu0 0.0
      %745 = vmatpush1.msra.mxu0 0.0
      %746 = vmatprep.subr.mxu0 0.0
      %747 = vmatpush1.msra.mxu0 0.0
      %748 = vmatprep.subr.mxu0 0.0
      %749 = vmatpush1.msra.mxu0 0.0
      %750 = vmatprep.subr.mxu0 0.0
      %751 = vmatpush1.msra.mxu0 0.0
      %752 = vmatprep.subr.mxu0 0.0
      %753 = vmatpush1.msra.mxu0 0.0
      %754 = vmatprep.subr.mxu0 0.0
      %755 = vmatpush1.msra.mxu0 0.0
      %756 = vmatprep.subr.mxu0 0.0
      %757 = vmatpush1.msra.mxu0 0.0
      %758 = vmatprep.subr.mxu0 0.0
      %759 = vmatpush1.msra.mxu0 0.0
      %760 = vmatprep.subr.mxu0 0.0
      %761 = vmatpush1.msra.mxu0 0.0
      %762 = vmatprep.subr.mxu0 0.0
      %763 = vmatpush1.msra.mxu0 0.0
      %764 = vmatprep.subr.mxu0 0.0
      %765 = vmatpush1.msra.mxu0 0.0
      %766 = vmatprep.subr.mxu0 0.0
      %767 = vmatpush1.msra.mxu0 0.0
      %768 = vmatprep.subr.mxu0 0.0
      %769 = vmatpush1.msra.mxu0 %v736
      %770 = vmatprep.subr.mxu0 0.0
      %771 = vmatpush2.msra.mxu0 0.0
      %772 = vmatprep.subr.mxu0 0.0
      %773 = vmatpush2.msra.mxu0 0.0
      %774 = vmatprep.subr.mxu0 0.0
      %775 = vmatpush2.msra.mxu0 0.0
      %776 = vmatprep.subr.mxu0 0.0
      %777 = vmatpush2.msra.mxu0 0.0
      %778 = vmatprep.subr.mxu0 0.0
      %779 = vmatpush2.msra.mxu0 0.0
      %780 = vmatprep.subr.mxu0 0.0
      %781 = vmatpush2.msra.mxu0 0.0
      %782 = vmatprep.subr.mxu0 0.0
      %783 = vmatpush2.msra.mxu0 0.0
      %784 = vmatprep.subr.mxu0 0.0
      %785 = vmatpush2.msra.mxu0 0.0
      %786 = vmatprep.subr.mxu0 0.0
      %787 = vmatpush2.msra.mxu0 0.0
      %788 = vmatprep.subr.mxu0 0.0
      %789 = vmatpush2.msra.mxu0 0.0
      %790 = vmatprep.subr.mxu0 0.0
      %791 = vmatpush2.msra.mxu0 0.0
      %792 = vmatprep.subr.mxu0 0.0
      %793 = vmatpush2.msra.mxu0 0.0
      %794 = vmatprep.subr.mxu0 0.0
      %795 = vmatpush2.msra.mxu0 0.0
      %796 = vmatprep.subr.mxu0 0.0
      %797 = vmatpush2.msra.mxu0 0.0
      %798 = vmatprep.subr.mxu0 0.0
      %799 = vmatpush2.msra.mxu0 0.0
      %800 = vmatprep.subr.mxu0 0.0
      %801 = vmatpush2.msra.mxu0 0.0
      %802 = vmatprep.mubr.f32.mxu0 0.0
      %803 = vmatmul.mubr.f32.gmra.mxu0 %v351
      %v804 = vpop.f32.mrf.mxu0
      %v805 = vadd.f32 0.0, %v804
      %v806 = vpop.f32.mrf.mxu0
      %807 = vdwg.mxu0
      %808 = vmatprep.subr.mxu0 0.0
      %809 = vmatpush1.msra.mxu0 0.0
      %810 = vmatprep.subr.mxu0 0.0
      %811 = vmatpush1.msra.mxu0 0.0
      %812 = vmatprep.subr.mxu0 0.0
      %813 = vmatpush1.msra.mxu0 0.0
      %814 = vmatprep.subr.mxu0 0.0
      %815 = vmatpush1.msra.mxu0 0.0
      %816 = vmatprep.subr.mxu0 0.0
      %817 = vmatpush1.msra.mxu0 0.0
      %818 = vmatprep.subr.mxu0 0.0
      %819 = vmatpush1.msra.mxu0 0.0
      %820 = vmatprep.subr.mxu0 0.0
      %821 = vmatpush1.msra.mxu0 0.0
      %822 = vmatprep.subr.mxu0 0.0
      %823 = vmatpush1.msra.mxu0 0.0
      %824 = vmatprep.subr.mxu0 0.0
      %825 = vmatpush1.msra.mxu0 0.0
      %826 = vmatprep.subr.mxu0 0.0
      %827 = vmatpush1.msra.mxu0 0.0
      %828 = vmatprep.subr.mxu0 0.0
      %829 = vmatpush1.msra.mxu0 0.0
      %830 = vmatprep.subr.mxu0 0.0
      %831 = vmatpush1.msra.mxu0 0.0
      %832 = vmatprep.subr.mxu0 0.0
      %833 = vmatpush1.msra.mxu0 0.0
      %834 = vmatprep.subr.mxu0 0.0
      %835 = vmatpush1.msra.mxu0 0.0
      %836 = vmatprep.subr.mxu0 0.0
      %837 = vmatpush1.msra.mxu0 0.0
      %838 = vmatprep.subr.mxu0 0.0
      %839 = vmatpush1.msra.mxu0 %v736
      %840 = vmatprep.subr.mxu0 0.0
      %841 = vmatpush2.msra.mxu0 0.0
      %842 = vmatprep.subr.mxu0 0.0
      %843 = vmatpush2.msra.mxu0 0.0
      %844 = vmatprep.subr.mxu0 0.0
      %845 = vmatpush2.msra.mxu0 0.0
      %846 = vmatprep.subr.mxu0 0.0
      %847 = vmatpush2.msra.mxu0 0.0
      %848 = vmatprep.subr.mxu0 0.0
      %849 = vmatpush2.msra.mxu0 0.0
      %850 = vmatprep.subr.mxu0 0.0
      %851 = vmatpush2.msra.mxu0 0.0
      %852 = vmatprep.subr.mxu0 0.0
      %853 = vmatpush2.msra.mxu0 0.0
      %854 = vmatprep.subr.mxu0 0.0
      %855 = vmatpush2.msra.mxu0 0.0
      %856 = vmatprep.subr.mxu0 0.0
      %857 = vmatpush2.msra.mxu0 0.0
      %858 = vmatprep.subr.mxu0 0.0
      %859 = vmatpush2.msra.mxu0 0.0
      %860 = vmatprep.subr.mxu0 0.0
      %861 = vmatpush2.msra.mxu0 0.0
      %862 = vmatprep.subr.mxu0 0.0
      %863 = vmatpush2.msra.mxu0 0.0
      %864 = vmatprep.subr.mxu0 0.0
      %865 = vmatpush2.msra.mxu0 0.0
      %866 = vmatprep.subr.mxu0 0.0
      %867 = vmatpush2.msra.mxu0 0.0
      %868 = vmatprep.subr.mxu0 0.0
      %869 = vmatpush2.msra.mxu0 0.0
      %870 = vmatprep.subr.mxu0 0.0
      %871 = vmatpush2.msra.mxu0 0.0
      %872 = vmatprep.mubr.f32.mxu0 0.0
      %873 = vmatmul.mubr.f32.gmra.mxu0 %v428
      %v874 = vpop.f32.mrf.mxu0
      %v875 = vadd.f32 0.0, %v874
      %v876 = vpop.f32.mrf.mxu0
      %877 = vdwg.mxu0
      %v878 = vsel %vm500, %v727, 0
      %880 = vmatprep.subr.mxu0 0.0
      %881 = vmatpush1.msra.mxu0 0.0
      %882 = vmatprep.subr.mxu0 0.0
      %883 = vmatpush1.msra.mxu0 0.0
      %884 = vmatprep.subr.mxu0 0.0
      %885 = vmatpush1.msra.mxu0 0.0
      %886 = vmatprep.subr.mxu0 0.0
      %887 = vmatpush1.msra.mxu0 0.0
      %888 = vmatprep.subr.mxu0 0.0
      %889 = vmatpush1.msra.mxu0 0.0
      %890 = vmatprep.subr.mxu0 0.0
      %891 = vmatpush1.msra.mxu0 0.0
      %892 = vmatprep.subr.mxu0 0.0
      %893 = vmatpush1.msra.mxu0 0.0
      %894 = vmatprep.subr.mxu0 0.0
      %895 = vmatpush1.msra.mxu0 0.0
      %896 = vmatprep.subr.mxu0 0.0
      %897 = vmatpush1.msra.mxu0 0.0
      %898 = vmatprep.subr.mxu0 0.0
      %899 = vmatpush1.msra.mxu0 0.0
      %900 = vmatprep.subr.mxu0 0.0
      %901 = vmatpush1.msra.mxu0 0.0
      %902 = vmatprep.subr.mxu0 0.0
      %903 = vmatpush1.msra.mxu0 0.0
      %904 = vmatprep.subr.mxu0 0.0
      %905 = vmatpush1.msra.mxu0 0.0
      %906 = vmatprep.subr.mxu0 0.0
      %907 = vmatpush1.msra.mxu0 0.0
      %908 = vmatprep.subr.mxu0 0.0
      %909 = vmatpush1.msra.mxu0 %v731
      %910 = vmatprep.subr.mxu0 0.0
      %911 = vmatpush1.msra.mxu0 %v730
      %912 = vmatprep.subr.mxu0 0.0
      %913 = vmatpush2.msra.mxu0 0.0
      %914 = vmatprep.subr.mxu0 0.0
      %915 = vmatpush2.msra.mxu0 0.0
      %916 = vmatprep.subr.mxu0 0.0
      %917 = vmatpush2.msra.mxu0 0.0
      %918 = vmatprep.subr.mxu0 0.0
      %919 = vmatpush2.msra.mxu0 0.0
      %920 = vmatprep.subr.mxu0 0.0
      %921 = vmatpush2.msra.mxu0 0.0
      %922 = vmatprep.subr.mxu0 0.0
      %923 = vmatpush2.msra.mxu0 0.0
      %924 = vmatprep.subr.mxu0 0.0
      %925 = vmatpush2.msra.mxu0 0.0
      %926 = vmatprep.subr.mxu0 0.0
      %927 = vmatpush2.msra.mxu0 0.0
      %928 = vmatprep.subr.mxu0 0.0
      %929 = vmatpush2.msra.mxu0 0.0
      %930 = vmatprep.subr.mxu0 0.0
      %931 = vmatpush2.msra.mxu0 0.0
      %932 = vmatprep.subr.mxu0 0.0
      %933 = vmatpush2.msra.mxu0 0.0
      %934 = vmatprep.subr.mxu0 0.0
      %935 = vmatpush2.msra.mxu0 0.0
      %936 = vmatprep.subr.mxu0 0.0
      %937 = vmatpush2.msra.mxu0 0.0
      %938 = vmatprep.subr.mxu0 0.0
      %939 = vmatpush2.msra.mxu0 0.0
      %940 = vmatprep.subr.mxu0 0.0
      %941 = vmatpush2.msra.mxu0 0.0
      %942 = vmatprep.subr.mxu0 0.0
      %943 = vmatpush2.msra.mxu0 0.0
      %944 = vmatprep.mubr.f32.mxu0 0.0
      %945 = vmatmul.mubr.f32.gmra.mxu0 %v878
      %v946 = vpop.f32.mrf.mxu0
      %v947 = vadd.f32 0.0, %v946
      %v948 = vpop.f32.mrf.mxu0
      %949 = vdwg.mxu0
      %v951 = vsel %vm500, %v805, 0
      %953 = vmatprep.subr.mxu0 0.0
      %954 = vmatpush1.msra.mxu0 0.0
      %955 = vmatprep.subr.mxu0 0.0
      %956 = vmatpush1.msra.mxu0 0.0
      %957 = vmatprep.subr.mxu0 0.0
      %958 = vmatpush1.msra.mxu0 0.0
      %959 = vmatprep.subr.mxu0 0.0
      %960 = vmatpush1.msra.mxu0 0.0
      %961 = vmatprep.subr.mxu0 0.0
      %962 = vmatpush1.msra.mxu0 0.0
      %963 = vmatprep.subr.mxu0 0.0
      %964 = vmatpush1.msra.mxu0 0.0
      %965 = vmatprep.subr.mxu0 0.0
      %966 = vmatpush1.msra.mxu0 0.0
      %967 = vmatprep.subr.mxu0 0.0
      %968 = vmatpush1.msra.mxu0 0.0
      %969 = vmatprep.subr.mxu0 0.0
      %970 = vmatpush1.msra.mxu0 0.0
      %971 = vmatprep.subr.mxu0 0.0
      %972 = vmatpush1.msra.mxu0 0.0
      %973 = vmatprep.subr.mxu0 0.0
      %974 = vmatpush1.msra.mxu0 0.0
      %975 = vmatprep.subr.mxu0 0.0
      %976 = vmatpush1.msra.mxu0 0.0
      %977 = vmatprep.subr.mxu0 0.0
      %978 = vmatpush1.msra.mxu0 0.0
      %979 = vmatprep.subr.mxu0 0.0
      %980 = vmatpush1.msra.mxu0 0.0
      %981 = vmatprep.subr.mxu0 0.0
      %982 = vmatpush1.msra.mxu0 %v729
      %983 = vmatprep.subr.mxu0 0.0
      %984 = vmatpush1.msra.mxu0 %v728
      %985 = vmatprep.subr.mxu0 0.0
      %986 = vmatpush2.msra.mxu0 0.0
      %987 = vmatprep.subr.mxu0 0.0
      %988 = vmatpush2.msra.mxu0 0.0
      %989 = vmatprep.subr.mxu0 0.0
      %990 = vmatpush2.msra.mxu0 0.0
      %991 = vmatprep.subr.mxu0 0.0
      %992 = vmatpush2.msra.mxu0 0.0
      %993 = vmatprep.subr.mxu0 0.0
      %994 = vmatpush2.msra.mxu0 0.0
      %995 = vmatprep.subr.mxu0 0.0
      %996 = vmatpush2.msra.mxu0 0.0
      %997 = vmatprep.subr.mxu0 0.0
      %998 = vmatpush2.msra.mxu0 0.0
      %999 = vmatprep.subr.mxu0 0.0
      %1000 = vmatpush2.msra.mxu0 0.0
      %1001 = vmatprep.subr.mxu0 0.0
      %1002 = vmatpush2.msra.mxu0 0.0
      %1003 = vmatprep.subr.mxu0 0.0
      %1004 = vmatpush2.msra.mxu0 0.0
      %1005 = vmatprep.subr.mxu0 0.0
      %1006 = vmatpush2.msra.mxu0 0.0
      %1007 = vmatprep.subr.mxu0 0.0
      %1008 = vmatpush2.msra.mxu0 0.0
      %1009 = vmatprep.subr.mxu0 0.0
      %1010 = vmatpush2.msra.mxu0 0.0
      %1011 = vmatprep.subr.mxu0 0.0
      %1012 = vmatpush2.msra.mxu0 0.0
      %1013 = vmatprep.subr.mxu0 0.0
      %1014 = vmatpush2.msra.mxu0 0.0
      %1015 = vmatprep.subr.mxu0 0.0
      %1016 = vmatpush2.msra.mxu0 0.0
      %1017 = vmatprep.mubr.f32.mxu0 0.0
      %1018 = vmatmul.mubr.f32.gmra.mxu0 %v951
      %v1019 = vpop.f32.mrf.mxu0
      %v1020 = vadd.f32 %v947, %v1019
      %v1021 = vpop.f32.mrf.mxu0
      %1022 = vdwg.mxu0
      %v1024 = vsel %vm500, %v875, 0
      %1026 = vmatprep.subr.mxu0 0.0
      %1027 = vmatpush1.msra.mxu0 0.0
      %1028 = vmatprep.subr.mxu0 0.0
      %1029 = vmatpush1.msra.mxu0 0.0
      %1030 = vmatprep.subr.mxu0 0.0
      %1031 = vmatpush1.msra.mxu0 0.0
      %1032 = vmatprep.subr.mxu0 0.0
      %1033 = vmatpush1.msra.mxu0 0.0
      %1034 = vmatprep.subr.mxu0 0.0
      %1035 = vmatpush1.msra.mxu0 0.0
      %1036 = vmatprep.subr.mxu0 0.0
      %1037 = vmatpush1.msra.mxu0 0.0
      %1038 = vmatprep.subr.mxu0 0.0
      %1039 = vmatpush1.msra.mxu0 0.0
      %1040 = vmatprep.subr.mxu0 0.0
      %1041 = vmatpush1.msra.mxu0 0.0
      %1042 = vmatprep.subr.mxu0 0.0
      %1043 = vmatpush1.msra.mxu0 0.0
      %1044 = vmatprep.subr.mxu0 0.0
      %1045 = vmatpush1.msra.mxu0 0.0
      %1046 = vmatprep.subr.mxu0 0.0
      %1047 = vmatpush1.msra.mxu0 0.0
      %1048 = vmatprep.subr.mxu0 0.0
      %1049 = vmatpush1.msra.mxu0 0.0
      %1050 = vmatprep.subr.mxu0 0.0
      %1051 = vmatpush1.msra.mxu0 0.0
      %1052 = vmatprep.subr.mxu0 0.0
      %1053 = vmatpush1.msra.mxu0 0.0
      %1054 = vmatprep.subr.mxu0 0.0
      %1055 = vmatpush1.msra.mxu0 %v733
      %1056 = vmatprep.subr.mxu0 0.0
      %1057 = vmatpush1.msra.mxu0 %v732
      %1058 = vmatprep.subr.mxu0 0.0
      %1059 = vmatpush2.msra.mxu0 0.0
      %1060 = vmatprep.subr.mxu0 0.0
      %1061 = vmatpush2.msra.mxu0 0.0
      %1062 = vmatprep.subr.mxu0 0.0
      %1063 = vmatpush2.msra.mxu0 0.0
      %1064 = vmatprep.subr.mxu0 0.0
      %1065 = vmatpush2.msra.mxu0 0.0
      %1066 = vmatprep.subr.mxu0 0.0
      %1067 = vmatpush2.msra.mxu0 0.0
      %1068 = vmatprep.subr.mxu0 0.0
      %1069 = vmatpush2.msra.mxu0 0.0
      %1070 = vmatprep.subr.mxu0 0.0
      %1071 = vmatpush2.msra.mxu0 0.0
      %1072 = vmatprep.subr.mxu0 0.0
      %1073 = vmatpush2.msra.mxu0 0.0
      %1074 = vmatprep.subr.mxu0 0.0
      %1075 = vmatpush2.msra.mxu0 0.0
      %1076 = vmatprep.subr.mxu0 0.0
      %1077 = vmatpush2.msra.mxu0 0.0
      %1078 = vmatprep.subr.mxu0 0.0
      %1079 = vmatpush2.msra.mxu0 0.0
      %1080 = vmatprep.subr.mxu0 0.0
      %1081 = vmatpush2.msra.mxu0 0.0
      %1082 = vmatprep.subr.mxu0 0.0
      %1083 = vmatpush2.msra.mxu0 0.0
      %1084 = vmatprep.subr.mxu0 0.0
      %1085 = vmatpush2.msra.mxu0 0.0
      %1086 = vmatprep.subr.mxu0 0.0
      %1087 = vmatpush2.msra.mxu0 0.0
      %1088 = vmatprep.subr.mxu0 0.0
      %1089 = vmatpush2.msra.mxu0 0.0
      %1090 = vmatprep.mubr.f32.mxu0 0.0
      %1091 = vmatmul.mubr.f32.gmra.mxu0 %v1024
      %v1092 = vpop.f32.mrf.mxu0
      %v1093 = vadd.f32 0.0, %v1092
      %v1094 = vpop.f32.mrf.mxu0
      %1095 = vdwg.mxu0
      %v1096 = vadd.f32 %v1020, %v1093
      %v1098 = vlaneseq
      %v1099 = vshrl.u32 %v1098, 7
      %v1100 = vsub.s32 0, %v1099
      %v1101 = vrot.slane %v734, %v1100
      %v1103 = vadd.f32 %v1096, %v1101
      %v1104 = vmax.f32 %v1103, 0.0
      %v1105 = vld [vmem:[%s7] sm:$0x1]
      %v1107 = vlaneseq
      %v1108 = vshrl.u32 %v1107, 7
      %v1109 = vsub.s32 0, %v1108
      %v1110 = vrot.slane %v1105, %v1109
      %v1112 = vmul.f32 %v1104, %v1110
      %vm1113 = vcmask 128000
      %v1114 = vsel %vm1113, %v1112, 0.0
      %1115 = vadd.xlane.f32.xlu0 %v1114
      %v1116 = vpop.xlane.xlu0 %1115
      %v1117 = vsel %vm353, %v1116, -inf
      %v1118 = vrot.slane %v1117, 4
      %v1119 = vmax.f32 %v1117, %v1118
      %v1120 = vrot.slane %v1119, 2
      %v1121 = vmax.f32 %v1119, %v1120
      %v1122 = vrot.slane %v1121, 1
      %v1123 = vmax.f32 %v1121, %v1122
      %v1124 = vsub.f32 %v1116, %v1123
      %v1125 = vmul.f32 %v1124, 1.442695
      %v1126 = vpow.pop %v1125
      %v1127 = vsel %vm353, %v1126, 0.0
      %v1128 = vrot.slane %v1127, 4
      %v1129 = vadd.f32 %v1127, %v1128
      %v1130 = vrot.slane %v1129, 2
      %v1131 = vadd.f32 %v1129, %v1130
      %v1132 = vrot.slane %v1131, 1
      %v1133 = vadd.f32 %v1131, %v1132
      %v1134 = vrcp.pop %v1133
      %v1135 = vmul.f32 %v1126, %v1134
      %vm1136 = vcmask 5120
      %1137 = vst.msk [vmem:[%s334] sm:$0x3f] %vm1136, %v1135
      %1138 = vst.msk [vmem:[%s338] sm:$0x3f] %vm1136, %v1135
      %p1139 = scmp.lt.s32.totalorder %s21, 1
      %s1140 = scalar_select %p1139, %s21, 1
      %s1141 = smul.addr %s1140, 8
      %s1142 = scalar_lea.vmem %s8, %s1141
      %p1143 = scmp.lt.s32.totalorder %s21, 1
      %s1144 = scalar_select %p1143, %s21, 1
      %s1145 = smul.addr %s1144, 8
      %s1146 = scalar_lea.vmem %s9, %s1145
      // Predicated region
      $region53: #{adafocus_forward.9} parent=51 // pred_check
        %p1147 = pneg %p212
      $region54: #{adafocus_forward.9} parent=51 // pred_check_branch
        %1149 = sbr.rel (%p1147) target = $region56
      $region55: #{adafocus_forward.9} parent=51 // pred_region
        _
      $region56: #{adafocus_forward.9} parent=51 // pred_fallthru
        _
      // Predicated region
      $region57: #{adafocus_forward.9} parent=51 // pred_check
        %p1150 = pneg %p238
      $region58: #{adafocus_forward.9} parent=51 // pred_check_branch
        %1152 = sbr.rel (%p1150) target = $region60
      $region59: #{adafocus_forward.9} parent=51 // pred_region
        _
      $region60: #{adafocus_forward.9} parent=51 // pred_fallthru
        _
    $region52: #{adafocus_forward.9} parent=5 // pred_fallthru
      _
    %p1153 = scmp.le.s32.totalorder 2, %s16
    // Predicated region
    $region61: #{adafocus_forward.9} parent=5 // pred_check
      %p1154 = pneg %p1153
    $region62: #{adafocus_forward.9} parent=5 // pred_check_branch
      %1156 = sbr.rel (%p1154) target = $region64
    $region63: #{adafocus_forward.9} parent=5 // pred_region
      %s1157 = ssub.s32 %s16, 2
      // Predicated region
      $region65: #{adafocus_forward.9} parent=63 // pred_check
        %p1158 = pneg %p218
      $region66: #{adafocus_forward.9} parent=63 // pred_check_branch
        %1160 = sbr.rel (%p1158) target = $region68
      $region67: #{adafocus_forward.9} parent=63 // pred_region
        %p1161 = scmp.lt.s32.totalorder %s22, 1
        %s1162 = scalar_select %p1161, %s22, 1
        %s1163 = smul.addr %s1162, 8
        %s1164 = scalar_lea.vmem %s8, %s1163
      $region68: #{adafocus_forward.9} parent=63 // pred_fallthru
        _
      // Predicated region
      $region69: #{adafocus_forward.9} parent=63 // pred_check
        %p1165 = pneg %p244
      $region70: #{adafocus_forward.9} parent=63 // pred_check_branch
        %1167 = sbr.rel (%p1165) target = $region72
      $region71: #{adafocus_forward.9} parent=63 // pred_region
        %p1168 = scmp.lt.s32.totalorder %s22, 1
        %s1169 = scalar_select %p1168, %s22, 1
        %s1170 = smul.addr %s1169, 8
        %s1171 = scalar_lea.vmem %s9, %s1170
      $region72: #{adafocus_forward.9} parent=63 // pred_fallthru
        _
    $region64: #{adafocus_forward.9} parent=5 // pred_fallthru
      _
  $region6: #{adafocus_forward.9} parent=0 // loop_footer
    %s20 = sadd.s32 1, %s16
  $region7: #{adafocus_forward.9} parent=0 // loop_footer_branch
    %15 = sbr.rel target = $region3
  $region8: #{adafocus_forward.9} parent=0 // loop_exit
    _

// kernel: adafocus_forward.14
$region0: #{adafocus_forward.14}
  #allocation0 [shape = 'u32[]', space=smem, size = 0x4, offset = 0x4, fixed_abs, tag = 'smem constant byte address 0x4 - core index']
  #allocation1 [shape = 'u32[144,128]{1,0:T(1,128)}', space=vmem, size = 0x12000, scoped, tag = 'internal scratch']
  %s0 = inlined_call_operand.vmem [shape: bf16[128,192], index: 0, kind: input, shape index: {}]
  %s1 = inlined_call_operand.vmem [shape: bf16[192,16], index: 1, kind: input, shape index: {}]
  %s2 = inlined_call_operand.vmem [shape: f32[1,16], index: 2, kind: input, shape index: {}]
  %s3 = inlined_call_operand.vmem [shape: f32[1,16], index: 3, kind: input, shape index: {}]
  %s4 = inlined_call_operand.vmem [shape: f32[128,16], index: 4, kind: output, shape index: {}]
  %s5 = sld [smem:[#allocation0]]
  $region26: #{adafocus_forward.14} parent=0
    _
  %s7 = ssub.s32 1, %s5
  %s8 = scalar_select 0, %s7, %s5
  // Predicated region
  $region2: #{adafocus_forward.14} parent=0 // pred_check
    _
  $region3: #{adafocus_forward.14} parent=0 // pred_check_branch
    %10 = sbr.rel (0) target = $region5
  $region4: #{adafocus_forward.14} parent=0 // pred_region
    _
  $region5: #{adafocus_forward.14} parent=0 // pred_fallthru
    _
  // Predicated region
  $region6: #{adafocus_forward.14} parent=0 // pred_check
    _
  $region7: #{adafocus_forward.14} parent=0 // pred_check_branch
    %12 = sbr.rel (0) target = $region9
  $region8: #{adafocus_forward.14} parent=0 // pred_region
    _
  $region9: #{adafocus_forward.14} parent=0 // pred_fallthru
    _
  // Predicated region
  $region10: #{adafocus_forward.14} parent=0 // pred_check
    _
  $region11: #{adafocus_forward.14} parent=0 // pred_check_branch
    %14 = sbr.rel (0) target = $region13
  $region12: #{adafocus_forward.14} parent=0 // pred_region
    _
  $region13: #{adafocus_forward.14} parent=0 // pred_fallthru
    _
  // Predicated region
  $region14: #{adafocus_forward.14} parent=0 // pred_check
    _
  $region15: #{adafocus_forward.14} parent=0 // pred_check_branch
    %16 = sbr.rel (0) target = $region17
  $region16: #{adafocus_forward.14} parent=0 // pred_region
    _
  $region17: #{adafocus_forward.14} parent=0 // pred_fallthru
    _
  %v18 = vld [vmem:[%s0] sm:$0xff]
  %v19 = vld [vmem:[%s0 + $0x8] sm:$0xff]
  %v20 = vld [vmem:[%s0 + $0x10] sm:$0xff]
  %v21 = vld [vmem:[%s0 + $0x18] sm:$0xff]
  %v22 = vld [vmem:[%s0 + $0x20] sm:$0xff]
  %v23 = vld [vmem:[%s0 + $0x28] sm:$0xff]
  %v24 = vld [vmem:[%s0 + $0x30] sm:$0xff]
  %v25 = vld [vmem:[%s0 + $0x38] sm:$0xff]
  %v26 = vld [vmem:[%s0 + $0x40] sm:$0xff]
  %v27 = vld [vmem:[%s0 + $0x48] sm:$0xff]
  %v28 = vld [vmem:[%s0 + $0x50] sm:$0xff]
  %v29 = vld [vmem:[%s0 + $0x58] sm:$0xff]
  %v30 = vld [vmem:[%s0 + $0x60] sm:$0xff]
  %v31 = vld [vmem:[%s0 + $0x68] sm:$0xff]
  %v32 = vld [vmem:[%s0 + $0x70] sm:$0xff]
  %v33 = vld [vmem:[%s0 + $0x78] sm:$0xff]
  %v34 = vld [vmem:[%s1] sm:$0xf]
  %v35 = vld [vmem:[%s1 + $0x4] sm:$0xf]
  %v36 = vld [vmem:[%s1 + $0x8] sm:$0xf]
  %v37 = vld [vmem:[%s1 + $0xc] sm:$0xf]
  %v38 = vld [vmem:[%s1 + $0x10] sm:$0xf]
  %v39 = vld [vmem:[%s1 + $0x14] sm:$0xf]
  %v40 = vld [vmem:[%s1 + $0x18] sm:$0xf]
  %v41 = vld [vmem:[%s1 + $0x1c] sm:$0xf]
  %v42 = vld [vmem:[%s1 + $0x20] sm:$0xf]
  %v43 = vld [vmem:[%s1 + $0x24] sm:$0xf]
  %v44 = vld [vmem:[%s1 + $0x28] sm:$0xf]
  %v45 = vld [vmem:[%s1 + $0x2c] sm:$0xf]
  %v46 = vld [vmem:[%s1 + $0x30] sm:$0xf]
  %v47 = vld [vmem:[%s1 + $0x34] sm:$0xf]
  %v48 = vld [vmem:[%s1 + $0x38] sm:$0xf]
  %v49 = vld [vmem:[%s1 + $0x3c] sm:$0xf]
  %v50 = vld [vmem:[%s1 + $0x40] sm:$0xf]
  %v51 = vld [vmem:[%s1 + $0x44] sm:$0xf]
  %v52 = vld [vmem:[%s1 + $0x48] sm:$0xf]
  %v53 = vld [vmem:[%s1 + $0x4c] sm:$0xf]
  %v54 = vld [vmem:[%s1 + $0x50] sm:$0xf]
  %v55 = vld [vmem:[%s1 + $0x54] sm:$0xf]
  %v56 = vld [vmem:[%s1 + $0x58] sm:$0xf]
  %v57 = vld [vmem:[%s1 + $0x5c] sm:$0xf]
  %v74 = vunpack.c.l.b16 %v18
  %v75 = vunpack.c.h.b16 %v18
  %v76 = vunpack.c.l.b16 %v19
  %v77 = vunpack.c.h.b16 %v19
  %v78 = vunpack.c.l.b16 %v20
  %v79 = vunpack.c.h.b16 %v20
  %v80 = vunpack.c.l.b16 %v21
  %v81 = vunpack.c.h.b16 %v21
  %v82 = vunpack.c.l.b16 %v22
  %v83 = vunpack.c.h.b16 %v22
  %v84 = vunpack.c.l.b16 %v23
  %v85 = vunpack.c.h.b16 %v23
  %v86 = vunpack.c.l.b16 %v24
  %v87 = vunpack.c.h.b16 %v24
  %v88 = vunpack.c.l.b16 %v25
  %v89 = vunpack.c.h.b16 %v25
  %v90 = vunpack.c.l.b16 %v26
  %v91 = vunpack.c.h.b16 %v26
  %v92 = vunpack.c.l.b16 %v27
  %v93 = vunpack.c.h.b16 %v27
  %v94 = vunpack.c.l.b16 %v28
  %v95 = vunpack.c.h.b16 %v28
  %v96 = vunpack.c.l.b16 %v29
  %v97 = vunpack.c.h.b16 %v29
  %v98 = vunpack.c.l.b16 %v30
  %v99 = vunpack.c.h.b16 %v30
  %v100 = vunpack.c.l.b16 %v31
  %v101 = vunpack.c.h.b16 %v31
  %v102 = vunpack.c.l.b16 %v32
  %v103 = vunpack.c.h.b16 %v32
  %v104 = vunpack.c.l.b16 %v33
  %v105 = vunpack.c.h.b16 %v33
  %v106 = vpack.c.b16 %v76, %v74
  %v107 = vpack.c.b16 %v77, %v75
  %v108 = vpack.c.b16 %v80, %v78
  %v109 = vpack.c.b16 %v81, %v79
  %v110 = vpack.c.b16 %v84, %v82
  %v111 = vpack.c.b16 %v85, %v83
  %v112 = vpack.c.b16 %v88, %v86
  %v113 = vpack.c.b16 %v89, %v87
  %v114 = vpack.c.b16 %v92, %v90
  %v115 = vpack.c.b16 %v93, %v91
  %v116 = vpack.c.b16 %v96, %v94
  %v117 = vpack.c.b16 %v97, %v95
  %v118 = vpack.c.b16 %v100, %v98
  %v119 = vpack.c.b16 %v101, %v99
  %v120 = vpack.c.b16 %v104, %v102
  %v121 = vpack.c.b16 %v105, %v103
  %v154 = vunpack.c.l.b16 %v34
  %v155 = vunpack.c.l.b16 %v35
  %v156 = vunpack.c.l.b16 %v36
  %v157 = vunpack.c.l.b16 %v37
  %v158 = vunpack.c.l.b16 %v38
  %v159 = vunpack.c.l.b16 %v39
  %v160 = vunpack.c.l.b16 %v40
  %v161 = vunpack.c.l.b16 %v41
  %v162 = vunpack.c.l.b16 %v42
  %v163 = vunpack.c.l.b16 %v43
  %v164 = vunpack.c.l.b16 %v44
  %v165 = vunpack.c.l.b16 %v45
  %v166 = vunpack.c.l.b16 %v46
  %v167 = vunpack.c.l.b16 %v47
  %v168 = vunpack.c.l.b16 %v48
  %v169 = vunpack.c.l.b16 %v49
  %v170 = vunpack.c.l.b16 %v50
  %v171 = vunpack.c.l.b16 %v51
  %v172 = vunpack.c.l.b16 %v52
  %v173 = vunpack.c.l.b16 %v53
  %v174 = vunpack.c.l.b16 %v54
  %v175 = vunpack.c.l.b16 %v55
  %v176 = vunpack.c.l.b16 %v56
  %v177 = vunpack.c.l.b16 %v57
  %v178 = vpack.c.b16 %v155, %v154
  %v179 = vpack.c.b16 %v157, %v156
  %v180 = vpack.c.b16 %v159, %v158
  %v181 = vpack.c.b16 %v161, %v160
  %v182 = vpack.c.b16 %v163, %v162
  %v183 = vpack.c.b16 %v165, %v164
  %v184 = vpack.c.b16 %v167, %v166
  %v185 = vpack.c.b16 %v169, %v168
  %v186 = vpack.c.b16 %v171, %v170
  %v187 = vpack.c.b16 %v173, %v172
  %v188 = vpack.c.b16 %v175, %v174
  %v189 = vpack.c.b16 %v177, %v176
  %vm202 = vcmask 523264
  %v204 = vsel %vm202, %v107, 0
  %v207 = vsel %vm202, %v109, 0
  %v210 = vsel %vm202, %v111, 0
  %v213 = vsel %vm202, %v113, 0
  %v216 = vsel %vm202, %v115, 0
  %v219 = vsel %vm202, %v117, 0
  %v222 = vsel %vm202, %v119, 0
  %v225 = vsel %vm202, %v121, 0
  %227 = vmatprep.subr.bf16.mxu0 0
  %228 = vmatpush1.bf16.msra.mxu0 %v185
  %229 = vmatprep.subr.bf16.mxu0 0
  %230 = vmatpush1.bf16.msra.mxu0 %v184
  %231 = vmatprep.subr.bf16.mxu0 0
  %232 = vmatpush1.bf16.msra.mxu0 %v183
  %233 = vmatprep.subr.bf16.mxu0 0
  %234 = vmatpush1.bf16.msra.mxu0 %v182
  %235 = vmatprep.subr.bf16.mxu0 0
  %236 = vmatpush1.bf16.msra.mxu0 %v181
  %237 = vmatprep.subr.bf16.mxu0 0
  %238 = vmatpush1.bf16.msra.mxu0 %v180
  %239 = vmatprep.subr.bf16.mxu0 0
  %240 = vmatpush1.bf16.msra.mxu0 %v179
  %241 = vmatprep.subr.bf16.mxu0 0
  %242 = vmatpush1.bf16.msra.mxu0 %v178
  %243 = vmatprep.subr.bf16.mxu0 0
  %244 = vmatpush2.bf16.msra.mxu0 0
  %245 = vmatprep.subr.bf16.mxu0 0
  %246 = vmatpush2.bf16.msra.mxu0 0
  %247 = vmatprep.subr.bf16.mxu0 0
  %248 = vmatpush2.bf16.msra.mxu0 0
  %249 = vmatprep.subr.bf16.mxu0 0
  %250 = vmatpush2.bf16.msra.mxu0 0
  %251 = vmatprep.subr.bf16.mxu0 0
  %252 = vmatpush2.bf16.msra.mxu0 %v189
  %253 = vmatprep.subr.bf16.mxu0 0
  %254 = vmatpush2.bf16.msra.mxu0 %v188
  %255 = vmatprep.subr.bf16.mxu0 0
  %256 = vmatpush2.bf16.msra.mxu0 %v187
  %257 = vmatprep.subr.bf16.mxu0 0
  %258 = vmatpush2.bf16.msra.mxu0 %v186
  %259 = vmatprep.mubr.bf16.mxu0 %v204
  %260 = vmatmul.mubr.bf16.gmra.mxu0 %v106
  %v261 = vpop.f32.mrf.mxu0
  %v262 = vadd.f32 0.0, %v261
  %v263 = vpop.f32.mrf.mxu0
  %v264 = vpop.f32.mrf.mxu0
  %v265 = vadd.f32 0.0, %v264
  %v266 = vpop.f32.mrf.mxu0
  %267 = vmatprep.mubr.bf16.mxu0 %v207
  %268 = vmatmul.mubr.bf16.gmra.mxu0 %v108
  %v269 = vpop.f32.mrf.mxu0
  %v270 = vadd.f32 0.0, %v269
  %v271 = vpop.f32.mrf.mxu0
  %v272 = vpop.f32.mrf.mxu0
  %v273 = vadd.f32 0.0, %v272
  %v274 = vpop.f32.mrf.mxu0
  %275 = vmatprep.mubr.bf16.mxu0 %v210
  %276 = vmatmul.mubr.bf16.gmra.mxu0 %v110
  %v277 = vpop.f32.mrf.mxu0
  %v278 = vadd.f32 0.0, %v277
  %v279 = vpop.f32.mrf.mxu0
  %v280 = vpop.f32.mrf.mxu0
  %v281 = vadd.f32 0.0, %v280
  %v282 = vpop.f32.mrf.mxu0
  %283 = vmatprep.mubr.bf16.mxu0 %v213
  %284 = vmatmul.mubr.bf16.gmra.mxu0 %v112
  %v285 = vpop.f32.mrf.mxu0
  %v286 = vadd.f32 0.0, %v285
  %v287 = vpop.f32.mrf.mxu0
  %v288 = vpop.f32.mrf.mxu0
  %v289 = vadd.f32 0.0, %v288
  %v290 = vpop.f32.mrf.mxu0
  %291 = vmatprep.mubr.bf16.mxu0 %v216
  %292 = vmatmul.mubr.bf16.gmra.mxu0 %v114
  %v293 = vpop.f32.mrf.mxu0
  %v294 = vadd.f32 0.0, %v293
  %v295 = vpop.f32.mrf.mxu0
  %v296 = vpop.f32.mrf.mxu0
  %v297 = vadd.f32 0.0, %v296
  %v298 = vpop.f32.mrf.mxu0
  %299 = vmatprep.mubr.bf16.mxu0 %v219
  %300 = vmatmul.mubr.bf16.gmra.mxu0 %v116
  %v301 = vpop.f32.mrf.mxu0
  %v302 = vadd.f32 0.0, %v301
  %v303 = vpop.f32.mrf.mxu0
  %v304 = vpop.f32.mrf.mxu0
  %v305 = vadd.f32 0.0, %v304
  %v306 = vpop.f32.mrf.mxu0
  %307 = vmatprep.mubr.bf16.mxu0 %v222
  %308 = vmatmul.mubr.bf16.gmra.mxu0 %v118
  %v309 = vpop.f32.mrf.mxu0
  %v310 = vadd.f32 0.0, %v309
  %v311 = vpop.f32.mrf.mxu0
  %v312 = vpop.f32.mrf.mxu0
  %v313 = vadd.f32 0.0, %v312
  %v314 = vpop.f32.mrf.mxu0
  %315 = vmatprep.mubr.bf16.mxu0 %v225
  %316 = vmatmul.mubr.bf16.gmra.mxu0 %v120
  %v317 = vpop.f32.mrf.mxu0
  %v318 = vadd.f32 0.0, %v317
  %v319 = vpop.f32.mrf.mxu0
  %v320 = vpop.f32.mrf.mxu0
  %v321 = vadd.f32 0.0, %v320
  %v322 = vpop.f32.mrf.mxu0
  %323 = vdwg.mxu0
  %v324 = vld [vmem:[%s2] sm:$0x1]
  %v326 = vlaneseq
  %v327 = vshrl.u32 %v326, 7
  %v328 = vsub.s32 0, %v327
  %v329 = vrot.slane %v324, %v328
  %v331 = vmul.f32 %v262, %v329
  %v332 = vmul.f32 %v265, %v329
  %v333 = vmul.f32 %v270, %v329
  %v334 = vmul.f32 %v273, %v329
  %v335 = vmul.f32 %v278, %v329
  %v336 = vmul.f32 %v281, %v329
  %v337 = vmul.f32 %v286, %v329
  %v338 = vmul.f32 %v289, %v329
  %v339 = vmul.f32 %v294, %v329
  %v340 = vmul.f32 %v297, %v329
  %v341 = vmul.f32 %v302, %v329
  %v342 = vmul.f32 %v305, %v329
  %v343 = vmul.f32 %v310, %v329
  %v344 = vmul.f32 %v313, %v329
  %v345 = vmul.f32 %v318, %v329
  %v346 = vmul.f32 %v321, %v329
  %v347 = vld [vmem:[%s3] sm:$0x1]
  %v349 = vlaneseq
  %v350 = vshrl.u32 %v349, 7
  %v351 = vsub.s32 0, %v350
  %v352 = vrot.slane %v347, %v351
  %v354 = vadd.f32 %v331, %v352
  %v355 = vadd.f32 %v332, %v352
  %v356 = vadd.f32 %v333, %v352
  %v357 = vadd.f32 %v334, %v352
  %v358 = vadd.f32 %v335, %v352
  %v359 = vadd.f32 %v336, %v352
  %v360 = vadd.f32 %v337, %v352
  %v361 = vadd.f32 %v338, %v352
  %v362 = vadd.f32 %v339, %v352
  %v363 = vadd.f32 %v340, %v352
  %v364 = vadd.f32 %v341, %v352
  %v365 = vadd.f32 %v342, %v352
  %v366 = vadd.f32 %v343, %v352
  %v367 = vadd.f32 %v344, %v352
  %v368 = vadd.f32 %v345, %v352
  %v369 = vadd.f32 %v346, %v352
  %v370 = vmax.f32 %v354, 0.0
  %v371 = vmax.f32 %v355, 0.0
  %v372 = vmax.f32 %v356, 0.0
  %v373 = vmax.f32 %v357, 0.0
  %v374 = vmax.f32 %v358, 0.0
  %v375 = vmax.f32 %v359, 0.0
  %v376 = vmax.f32 %v360, 0.0
  %v377 = vmax.f32 %v361, 0.0
  %v378 = vmax.f32 %v362, 0.0
  %v379 = vmax.f32 %v363, 0.0
  %v380 = vmax.f32 %v364, 0.0
  %v381 = vmax.f32 %v365, 0.0
  %v382 = vmax.f32 %v366, 0.0
  %v383 = vmax.f32 %v367, 0.0
  %v384 = vmax.f32 %v368, 0.0
  %v385 = vmax.f32 %v369, 0.0
  %vm386 = vcmask 130048
  %387 = vst.msk [vmem:[%s4] sm:$0xff] %vm386, %v370
  %388 = vst.msk [vmem:[%s4 + $0x8] sm:$0xff] %vm386, %v371
  %389 = vst.msk [vmem:[%s4 + $0x10] sm:$0xff] %vm386, %v372
  %390 = vst.msk [vmem:[%s4 + $0x18] sm:$0xff] %vm386, %v373
  %391 = vst.msk [vmem:[%s4 + $0x20] sm:$0xff] %vm386, %v374
  %392 = vst.msk [vmem:[%s4 + $0x28] sm:$0xff] %vm386, %v375
  %393 = vst.msk [vmem:[%s4 + $0x30] sm:$0xff] %vm386, %v376
  %394 = vst.msk [vmem:[%s4 + $0x38] sm:$0xff] %vm386, %v377
  %395 = vst.msk [vmem:[%s4 + $0x40] sm:$0xff] %vm386, %v378
  %396 = vst.msk [vmem:[%s4 + $0x48] sm:$0xff] %vm386, %v379
  %397 = vst.msk [vmem:[%s4 + $0x50] sm:$0xff] %vm386, %v380
  %398 = vst.msk [vmem:[%s4 + $0x58] sm:$0xff] %vm386, %v381
  %399 = vst.msk [vmem:[%s4 + $0x60] sm:$0xff] %vm386, %v382
  %400 = vst.msk [vmem:[%s4 + $0x68] sm:$0xff] %vm386, %v383
  %401 = vst.msk [vmem:[%s4 + $0x70] sm:$0xff] %vm386, %v384
  %402 = vst.msk [vmem:[%s4 + $0x78] sm:$0xff] %vm386, %v385
  // Predicated region
  $region18: #{adafocus_forward.14} parent=0 // pred_check
    _
  $region19: #{adafocus_forward.14} parent=0 // pred_check_branch
    %404 = sbr.rel (0) target = $region21
  $region20: #{adafocus_forward.14} parent=0 // pred_region
    _
  $region21: #{adafocus_forward.14} parent=0 // pred_fallthru
    _
  // Predicated region
  $region22: #{adafocus_forward.14} parent=0 // pred_check
    _
  $region23: #{adafocus_forward.14} parent=0 // pred_check_branch
    %406 = sbr.rel (0) target = $region25
  $region24: #{adafocus_forward.14} parent=0 // pred_region
    _
  $region25: #{adafocus_forward.14} parent=0 // pred_fallthru
    _

// kernel: adafocus_forward.15
$region0: #{adafocus_forward.15}
  #allocation0 [shape = 'u32[]', space=smem, size = 0x4, offset = 0x4, fixed_abs, tag = 'smem constant byte address 0x4 - core index']
  #allocation1 [shape = 'u32[144,128]{1,0:T(1,128)}', space=vmem, size = 0x12000, scoped, tag = 'internal scratch']
  %s0 = inlined_call_operand.vmem [shape: f32[2,256,6], index: 0, kind: input, shape index: {}]
  %s1 = inlined_call_operand.vmem [shape: f32[2,6,10], index: 1, kind: input, shape index: {}]
  %s2 = inlined_call_operand.hbm [shape: f32[2,1,10], index: 2, kind: output, shape index: {}]
  %s3 = sld [smem:[#allocation0]]
  $region41: #{adafocus_forward.15} parent=0
    _
  %s5 = ssub.s32 1, %s3
  %s6 = scalar_select 0, %s5, %s3
  $region1: #{adafocus_forward.15} parent=0
    #allocation2 [shape = 'u8[1024]{0}', space=vmem, size = 0x400, scoped, tag = 'output window, operand 0']
    #allocation3 [shape = 's32[2]{0}', space=sflag, size = 0x8, scoped, tag = 'scoped memory for adafocus_forward.15']
    %7 = vsyncpa [#allocation3], 0
    %s8 = scalar_lea.sflag [#allocation3], 1
    %9 = vsyncpa %s8, 0
    loop: start=0, step=1, limit=4
    $region2: #{adafocus_forward.15} parent=1 // loop_pre_header
      _
    $region3: #{adafocus_forward.15} parent=1 // loop_header
      %s11 = sphi 0, %s15
      %p12 = scmp.ge.s32.totalorder %s11, 4
      %s21 = sphi 0, %s23
      %s24 = sphi 0, %s21
      %s25 = sphi 0, %s24
      %s41 = sphi 0, %s25
      %s47 = sphi 0, %s49
      %s50 = sphi 0, %s47
      %s51 = sphi 0, %s50
      %s67 = sphi 0, %s51
      %s73 = sphi 0, %s75
      %s76 = sphi 0, %s73
      %s77 = sphi 0, %s76
      %s93 = sphi 0, %s77
    $region4: #{adafocus_forward.15} parent=1 // loop_header_branch
      %14 = sbr.rel (%p12) target = $region8
    $region5: #{adafocus_forward.15} parent=1 // loop_body
      %s16 = ssub.s32 %s11, 1
      %s17 = ssub.s32 %s11, 2
      %s18 = sadd.s32 %s11, 1
      %s19 = ssub.s32 %s11, %s18
      %p20 = scmp.eq.s32.totalorder %s19, 0
      %s22 = sadd.s32 %s21, 1
      %s23 = scalar_select %p20, %s21, %s22
      %p26 = pneg %p20
      %p27 = scmp.eq.s32.totalorder %s11, 1
      %p28 = por %p26, %p27
      %p29 = scmp.ne.s32.totalorder %s21, %s24
      %p30 = scmp.eq.s32.totalorder %s11, 0
      %p31 = por %p29, %p30
      %p32 = scmp.ne.s32.totalorder %s21, %s24
      %p33 = scmp.eq.s32.totalorder %s16, 1
      %p34 = por %p32, %p33
      %p35 = scmp.ne.s32.totalorder %s24, %s25
      %p36 = scmp.eq.s32.totalorder %s16, 0
      %p37 = por %p35, %p36
      %p38 = scmp.ne.s32.totalorder %s24, %s25
      %p39 = scmp.eq.s32.totalorder %s17, 1
      %p40 = por %p38, %p39
      %p42 = scmp.ne.s32.totalorder %s25, %s41
      %p43 = scmp.eq.s32.totalorder %s17, 0
      %p44 = por %p42, %p43
      %s45 = ssub.s32 %s11, %s18
      %p46 = scmp.eq.s32.totalorder %s45, 0
      %s48 = sadd.s32 %s47, 1
      %s49 = scalar_select %p46, %s47, %s48
      %p52 = pneg %p46
      %p53 = scmp.eq.s32.totalorder %s11, 1
      %p54 = por %p52, %p53
      %p55 = scmp.ne.s32.totalorder %s47, %s50
      %p56 = scmp.eq.s32.totalorder %s11, 0
      %p57 = por %p55, %p56
      %p58 = scmp.ne.s32.totalorder %s47, %s50
      %p59 = scmp.eq.s32.totalorder %s16, 1
      %p60 = por %p58, %p59
      %p61 = scmp.ne.s32.totalorder %s50, %s51
      %p62 = scmp.eq.s32.totalorder %s16, 0
      %p63 = por %p61, %p62
      %p64 = scmp.ne.s32.totalorder %s50, %s51
      %p65 = scmp.eq.s32.totalorder %s17, 1
      %p66 = por %p64, %p65
      %p68 = scmp.ne.s32.totalorder %s51, %s67
      %p69 = scmp.eq.s32.totalorder %s17, 0
      %p70 = por %p68, %p69
      %s71 = ssub.s32 %s11, %s18
      %p72 = scmp.eq.s32.totalorder %s71, 0
      %s74 = sadd.s32 %s73, 1
      %s75 = scalar_select %p72, %s73, %s74
      %p78 = pneg %p72
      %p79 = scmp.eq.s32.totalorder %s11, 1
      %p80 = por %p78, %p79
      %p81 = scmp.ne.s32.totalorder %s73, %s76
      %p82 = scmp.eq.s32.totalorder %s11, 0
      %p83 = por %p81, %p82
      %p84 = scmp.ne.s32.totalorder %s73, %s76
      %p85 = scmp.eq.s32.totalorder %s16, 1
      %p86 = por %p84, %p85
      %p87 = scmp.ne.s32.totalorder %s76, %s77
      %p88 = scmp.eq.s32.totalorder %s16, 0
      %p89 = por %p87, %p88
      %p90 = scmp.ne.s32.totalorder %s76, %s77
      %p91 = scmp.eq.s32.totalorder %s17, 1
      %p92 = por %p90, %p91
      %p94 = scmp.ne.s32.totalorder %s77, %s93
      %p95 = scmp.eq.s32.totalorder %s17, 0
      %p96 = por %p94, %p95
      %p97 = scmp.le.s32.totalorder 1, %s11
      %p98 = scmp.lt.s32.totalorder %s11, 3
      %p99 = pnand %p97, %p98
      %p100 = pneg %p99
      // Predicated region
      $region9: #{adafocus_forward.15} parent=5 // pred_check
        _
      $region10: #{adafocus_forward.15} parent=5 // pred_check_branch
        %102 = sbr.rel (%p99) target = $region12
      $region11: #{adafocus_forward.15} parent=5 // pred_region
        %s103 = ssub.s32 %s11, 1
      $region12: #{adafocus_forward.15} parent=5 // pred_fallthru
        _
      %p104 = scmp.lt.s32.totalorder %s11, 2
      // Predicated region
      $region13: #{adafocus_forward.15} parent=5 // pred_check
        %p105 = pneg %p104
      $region14: #{adafocus_forward.15} parent=5 // pred_check_branch
        %107 = sbr.rel (%p105) target = $region16
      $region15: #{adafocus_forward.15} parent=5 // pred_region
        // Predicated region
        $region17: #{adafocus_forward.15} parent=15 // pred_check
          %p108 = pneg %p31
        $region18: #{adafocus_forward.15} parent=15 // pred_check_branch
          %110 = sbr.rel (%p108) target = $region20
        $region19: #{adafocus_forward.15} parent=15 // pred_region
          %p111 = scmp.lt.s32.totalorder %s11, 1
          %s112 = scalar_select %p111, %s11, 1
          %s113 = smul.addr %s112, 32
          %s114 = smul.addr %s113, 8
          %s115 = scalar_lea.vmem %s0, %s114
        $region20: #{adafocus_forward.15} parent=15 // pred_fallthru
          _
        // Predicated region
        $region21: #{adafocus_forward.15} parent=15 // pred_check
          %p116 = pneg %p57
        $region22: #{adafocus_forward.15} parent=15 // pred_check_branch
          %118 = sbr.rel (%p116) target = $region24
        $region23: #{adafocus_forward.15} parent=15 // pred_region
          %p119 = scmp.lt.s32.totalorder %s11, 1
          %s120 = scalar_select %p119, %s11, 1
          %s121 = smul.addr %s120, 8
          %s122 = scalar_lea.vmem %s1, %s121
        $region24: #{adafocus_forward.15} parent=15 // pred_fallthru
          _
      $region16: #{adafocus_forward.15} parent=5 // pred_fallthru
        _
      %p123 = scmp.le.s32.totalorder 1, %s11
      %p124 = scmp.lt.s32.totalorder %s11, 3
      %p125 = pnand %p123, %p124
      %p126 = pneg %p125
      // Predicated region
      $region25: #{adafocus_forward.15} parent=5 // pred_check
        _
      $region26: #{adafocus_forward.15} parent=5 // pred_check_branch
        %128 = sbr.rel (%p125) target = $region28
      $region27: #{adafocus_forward.15} parent=5 // pred_region
        %s129 = ssub.s32 %s11, 1
        %p130 = scmp.lt.s32.totalorder %s16, 1
        %s131 = scalar_select %p130, %s16, 1
        %s132 = smul.addr %s131, 32
        %s133 = smul.addr %s132, 8
        %s134 = scalar_lea.vmem %s0, %s133
        %p135 = pneg %p37
        %p136 = pneg %p34
        %p137 = scmp.lt.s32.totalorder %s16, 1
        %s138 = scalar_select %p137, %s16, 1
        %s139 = smul.addr %s138, 8
        %s140 = scalar_lea.vmem %s1, %s139
        %p141 = pneg %p63
        %p142 = pneg %p60
        %p143 = pneg %p89
        %p144 = pneg %p86
        %s145 = sand.u32 %s76, 1
        %s146 = scalar_lea.sflag [#allocation3], %s145
        %s147 = sand.u32 %s76, 1
        %s148 = scalar_lea.vmem [#allocation2], %s147
        %p149 = scmp.lt.s32.totalorder %s16, 1
        %s150 = scalar_select %p149, %s16, 1
        %s151 = smul.addr %s150, 32
        %s152 = smul.addr %s151, 8
        %s153 = scalar_lea.vmem %s0, %s152
        %p154 = scmp.lt.s32.totalorder %s16, 1
        %s155 = scalar_select %p154, %s16, 1
        %s156 = smul.addr %s155, 8
        %s157 = scalar_lea.vmem %s1, %s156
        %v158 = vld [vmem:[%s153] sm:$0xff]
        %v159 = vld [vmem:[%s153 + $0x8] sm:$0xff]
        %v160 = vld [vmem:[%s153 + $0x10] sm:$0xff]
        %v161 = vld [vmem:[%s153 + $0x18] sm:$0xff]
        %v162 = vld [vmem:[%s153 + $0x20] sm:$0xff]
        %v163 = vld [vmem:[%s153 + $0x28] sm:$0xff]
        %v164 = vld [vmem:[%s153 + $0x30] sm:$0xff]
        %v165 = vld [vmem:[%s153 + $0x38] sm:$0xff]
        %v166 = vld [vmem:[%s153 + $0x40] sm:$0xff]
        %v167 = vld [vmem:[%s153 + $0x48] sm:$0xff]
        %v168 = vld [vmem:[%s153 + $0x50] sm:$0xff]
        %v169 = vld [vmem:[%s153 + $0x58] sm:$0xff]
        %v170 = vld [vmem:[%s153 + $0x60] sm:$0xff]
        %v171 = vld [vmem:[%s153 + $0x68] sm:$0xff]
        %v172 = vld [vmem:[%s153 + $0x70] sm:$0xff]
        %v173 = vld [vmem:[%s153 + $0x78] sm:$0xff]
        %v174 = vld [vmem:[%s153 + $0x80] sm:$0xff]
        %v175 = vld [vmem:[%s153 + $0x88] sm:$0xff]
        %v176 = vld [vmem:[%s153 + $0x90] sm:$0xff]
        %v177 = vld [vmem:[%s153 + $0x98] sm:$0xff]
        %v178 = vld [vmem:[%s153 + $0xa0] sm:$0xff]
        %v179 = vld [vmem:[%s153 + $0xa8] sm:$0xff]
        %v180 = vld [vmem:[%s153 + $0xb0] sm:$0xff]
        %v181 = vld [vmem:[%s153 + $0xb8] sm:$0xff]
        %v182 = vld [vmem:[%s153 + $0xc0] sm:$0xff]
        %v183 = vld [vmem:[%s153 + $0xc8] sm:$0xff]
        %v184 = vld [vmem:[%s153 + $0xd0] sm:$0xff]
        %v185 = vld [vmem:[%s153 + $0xd8] sm:$0xff]
        %v186 = vld [vmem:[%s153 + $0xe0] sm:$0xff]
        %v187 = vld [vmem:[%s153 + $0xe8] sm:$0xff]
        %v188 = vld [vmem:[%s153 + $0xf0] sm:$0xff]
        %v189 = vld [vmem:[%s153 + $0xf8] sm:$0xff]
        %v190 = vld [vmem:[%s157] sm:$0x3f]
        %vm191 = vcmask 48128
        %v193 = vsel %vm191, %v158, 0
        %v196 = vsel %vm191, %v159, 0
        %v199 = vsel %vm191, %v160, 0
        %v202 = vsel %vm191, %v161, 0
        %v205 = vsel %vm191, %v162, 0
        %v208 = vsel %vm191, %v163, 0
        %v211 = vsel %vm191, %v164, 0
        %v214 = vsel %vm191, %v165, 0
        %v217 = vsel %vm191, %v166, 0
        %v220 = vsel %vm191, %v167, 0
        %v223 = vsel %vm191, %v168, 0
        %v226 = vsel %vm191, %v169, 0
        %v229 = vsel %vm191, %v170, 0
        %v232 = vsel %vm191, %v171, 0
        %v235 = vsel %vm191, %v172, 0
        %v238 = vsel %vm191, %v173, 0
        %v241 = vsel %vm191, %v174, 0
        %v244 = vsel %vm191, %v175, 0
        %v247 = vsel %vm191, %v176, 0
        %v250 = vsel %vm191, %v177, 0
        %v253 = vsel %vm191, %v178, 0
        %v256 = vsel %vm191, %v179, 0
        %v259 = vsel %vm191, %v180, 0
        %v262 = vsel %vm191, %v181, 0
        %v265 = vsel %vm191, %v182, 0
        %v268 = vsel %vm191, %v183, 0
        %v271 = vsel %vm191, %v184, 0
        %v274 = vsel %vm191, %v185, 0
        %v277 = vsel %vm191, %v186, 0
        %v280 = vsel %vm191, %v187, 0
        %v283 = vsel %vm191, %v188, 0
        %v286 = vsel %vm191, %v189, 0
        %vm288 = vcmask 1045504
        %v290 = vsel %vm288, %v190, 0
        %292 = vmatprep.subr.mxu0 0.0
        %293 = vmatpush1.msra.mxu0 0.0
        %294 = vmatprep.subr.mxu0 0.0
        %295 = vmatpush1.msra.mxu0 0.0
        %296 = vmatprep.subr.mxu0 0.0
        %297 = vmatpush1.msra.mxu0 0.0
        %298 = vmatprep.subr.mxu0 0.0
        %299 = vmatpush1.msra.mxu0 0.0
        %300 = vmatprep.subr.mxu0 0.0
        %301 = vmatpush1.msra.mxu0 0.0
        %302 = vmatprep.subr.mxu0 0.0
        %303 = vmatpush1.msra.mxu0 0.0
        %304 = vmatprep.subr.mxu0 0.0
        %305 = vmatpush1.msra.mxu0 0.0
        %306 = vmatprep.subr.mxu0 0.0
        %307 = vmatpush1.msra.mxu0 0.0
        %308 = vmatprep.subr.mxu0 0.0
        %309 = vmatpush1.msra.mxu0 0.0
        %310 = vmatprep.subr.mxu0 0.0
        %311 = vmatpush1.msra.mxu0 0.0
        %312 = vmatprep.subr.mxu0 0.0
        %313 = vmatpush1.msra.mxu0 0.0
        %314 = vmatprep.subr.mxu0 0.0
        %315 = vmatpush1.msra.mxu0 0.0
        %316 = vmatprep.subr.mxu0 0.0
        %317 = vmatpush1.msra.mxu0 0.0
        %318 = vmatprep.subr.mxu0 0.0
        %319 = vmatpush1.msra.mxu0 0.0
        %320 = vmatprep.subr.mxu0 0.0
        %321 = vmatpush1.msra.mxu0 0.0
        %322 = vmatprep.subr.mxu0 0.0
        %323 = vmatpush1.msra.mxu0 %v290
        %324 = vmatprep.subr.mxu0 0.0
        %325 = vmatpush2.msra.mxu0 0.0
        %326 = vmatprep.subr.mxu0 0.0
        %327 = vmatpush2.msra.mxu0 0.0
        %328 = vmatprep.subr.mxu0 0.0
        %329 = vmatpush2.msra.mxu0 0.0
        %330 = vmatprep.subr.mxu0 0.0
        %331 = vmatpush2.msra.mxu0 0.0
        %332 = vmatprep.subr.mxu0 0.0
        %333 = vmatpush2.msra.mxu0 0.0
        %334 = vmatprep.subr.mxu0 0.0
        %335 = vmatpush2.msra.mxu0 0.0
        %336 = vmatprep.subr.mxu0 0.0
        %337 = vmatpush2.msra.mxu0 0.0
        %338 = vmatprep.subr.mxu0 0.0
        %339 = vmatpush2.msra.mxu0 0.0
        %340 = vmatprep.subr.mxu0 0.0
        %341 = vmatpush2.msra.mxu0 0.0
        %342 = vmatprep.subr.mxu0 0.0
        %343 = vmatpush2.msra.mxu0 0.0
        %344 = vmatprep.subr.mxu0 0.0
        %345 = vmatpush2.msra.mxu0 0.0
        %346 = vmatprep.subr.mxu0 0.0
        %347 = vmatpush2.msra.mxu0 0.0
        %348 = vmatprep.subr.mxu0 0.0
        %349 = vmatpush2.msra.mxu0 0.0
        %350 = vmatprep.subr.mxu0 0.0
        %351 = vmatpush2.msra.mxu0 0.0
        %352 = vmatprep.subr.mxu0 0.0
        %353 = vmatpush2.msra.mxu0 0.0
        %354 = vmatprep.subr.mxu0 0.0
        %355 = vmatpush2.msra.mxu0 0.0
        %356 = vmatprep.mubr.f32.mxu0 0.0
        %357 = vmatmul.mubr.f32.gmra.mxu0 %v193
        %v358 = vpop.f32.mrf.mxu0
        %v359 = vadd.f32 0.0, %v358
        %v360 = vpop.f32.mrf.mxu0
        %361 = vmatprep.mubr.f32.mxu0 0.0
        %362 = vmatmul.mubr.f32.gmra.mxu0 %v196
        %v363 = vpop.f32.mrf.mxu0
        %v364 = vadd.f32 0.0, %v363
        %v365 = vpop.f32.mrf.mxu0
        %366 = vmatprep.mubr.f32.mxu0 0.0
        %367 = vmatmul.mubr.f32.gmra.mxu0 %v199
        %v368 = vpop.f32.mrf.mxu0
        %v369 = vadd.f32 0.0, %v368
        %v370 = vpop.f32.mrf.mxu0
        %371 = vmatprep.mubr.f32.mxu0 0.0
        %372 = vmatmul.mubr.f32.gmra.mxu0 %v202
        %v373 = vpop.f32.mrf.mxu0
        %v374 = vadd.f32 0.0, %v373
        %v375 = vpop.f32.mrf.mxu0
        %376 = vmatprep.mubr.f32.mxu0 0.0
        %377 = vmatmul.mubr.f32.gmra.mxu0 %v205
        %v378 = vpop.f32.mrf.mxu0
        %v379 = vadd.f32 0.0, %v378
        %v380 = vpop.f32.mrf.mxu0
        %381 = vmatprep.mubr.f32.mxu0 0.0
        %382 = vmatmul.mubr.f32.gmra.mxu0 %v208
        %v383 = vpop.f32.mrf.mxu0
        %v384 = vadd.f32 0.0, %v383
        %v385 = vpop.f32.mrf.mxu0
        %386 = vmatprep.mubr.f32.mxu0 0.0
        %387 = vmatmul.mubr.f32.gmra.mxu0 %v211
        %v388 = vpop.f32.mrf.mxu0
        %v389 = vadd.f32 0.0, %v388
        %v390 = vpop.f32.mrf.mxu0
        %391 = vmatprep.mubr.f32.mxu0 0.0
        %392 = vmatmul.mubr.f32.gmra.mxu0 %v214
        %v393 = vpop.f32.mrf.mxu0
        %v394 = vadd.f32 0.0, %v393
        %v395 = vpop.f32.mrf.mxu0
        %396 = vmatprep.mubr.f32.mxu0 0.0
        %397 = vmatmul.mubr.f32.gmra.mxu0 %v217
        %v398 = vpop.f32.mrf.mxu0
        %v399 = vadd.f32 0.0, %v398
        %v400 = vpop.f32.mrf.mxu0
        %401 = vmatprep.mubr.f32.mxu0 0.0
        %402 = vmatmul.mubr.f32.gmra.mxu0 %v220
        %v403 = vpop.f32.mrf.mxu0
        %v404 = vadd.f32 0.0, %v403
        %v405 = vpop.f32.mrf.mxu0
        %406 = vmatprep.mubr.f32.mxu0 0.0
        %407 = vmatmul.mubr.f32.gmra.mxu0 %v223
        %v408 = vpop.f32.mrf.mxu0
        %v409 = vadd.f32 0.0, %v408
        %v410 = vpop.f32.mrf.mxu0
        %411 = vmatprep.mubr.f32.mxu0 0.0
        %412 = vmatmul.mubr.f32.gmra.mxu0 %v226
        %v413 = vpop.f32.mrf.mxu0
        %v414 = vadd.f32 0.0, %v413
        %v415 = vpop.f32.mrf.mxu0
        %416 = vmatprep.mubr.f32.mxu0 0.0
        %417 = vmatmul.mubr.f32.gmra.mxu0 %v229
        %v418 = vpop.f32.mrf.mxu0
        %v419 = vadd.f32 0.0, %v418
        %v420 = vpop.f32.mrf.mxu0
        %421 = vmatprep.mubr.f32.mxu0 0.0
        %422 = vmatmul.mubr.f32.gmra.mxu0 %v232
        %v423 = vpop.f32.mrf.mxu0
        %v424 = vadd.f32 0.0, %v423
        %v425 = vpop.f32.mrf.mxu0
        %426 = vmatprep.mubr.f32.mxu0 0.0
        %427 = vmatmul.mubr.f32.gmra.mxu0 %v235
        %v428 = vpop.f32.mrf.mxu0
        %v429 = vadd.f32 0.0, %v428
        %v430 = vpop.f32.mrf.mxu0
        %431 = vmatprep.mubr.f32.mxu0 0.0
        %432 = vmatmul.mubr.f32.gmra.mxu0 %v238
        %v433 = vpop.f32.mrf.mxu0
        %v434 = vadd.f32 0.0, %v433
        %v435 = vpop.f32.mrf.mxu0
        %436 = vmatprep.mubr.f32.mxu0 0.0
        %437 = vmatmul.mubr.f32.gmra.mxu0 %v241
        %v438 = vpop.f32.mrf.mxu0
        %v439 = vadd.f32 0.0, %v438
        %v440 = vpop.f32.mrf.mxu0
        %441 = vmatprep.mubr.f32.mxu0 0.0
        %442 = vmatmul.mubr.f32.gmra.mxu0 %v244
        %v443 = vpop.f32.mrf.mxu0
        %v444 = vadd.f32 0.0, %v443
        %v445 = vpop.f32.mrf.mxu0
        %446 = vmatprep.mubr.f32.mxu0 0.0
        %447 = vmatmul.mubr.f32.gmra.mxu0 %v247
        %v448 = vpop.f32.mrf.mxu0
        %v449 = vadd.f32 0.0, %v448
        %v450 = vpop.f32.mrf.mxu0
        %451 = vmatprep.mubr.f32.mxu0 0.0
        %452 = vmatmul.mubr.f32.gmra.mxu0 %v250
        %v453 = vpop.f32.mrf.mxu0
        %v454 = vadd.f32 0.0, %v453
        %v455 = vpop.f32.mrf.mxu0
        %456 = vmatprep.mubr.f32.mxu0 0.0
        %457 = vmatmul.mubr.f32.gmra.mxu0 %v253
        %v458 = vpop.f32.mrf.mxu0
        %v459 = vadd.f32 0.0, %v458
        %v460 = vpop.f32.mrf.mxu0
        %461 = vmatprep.mubr.f32.mxu0 0.0
        %462 = vmatmul.mubr.f32.gmra.mxu0 %v256
        %v463 = vpop.f32.mrf.mxu0
        %v464 = vadd.f32 0.0, %v463
        %v465 = vpop.f32.mrf.mxu0
        %466 = vmatprep.mubr.f32.mxu0 0.0
        %467 = vmatmul.mubr.f32.gmra.mxu0 %v259
        %v468 = vpop.f32.mrf.mxu0
        %v469 = vadd.f32 0.0, %v468
        %v470 = vpop.f32.mrf.mxu0
        %471 = vmatprep.mubr.f32.mxu0 0.0
        %472 = vmatmul.mubr.f32.gmra.mxu0 %v262
        %v473 = vpop.f32.mrf.mxu0
        %v474 = vadd.f32 0.0, %v473
        %v475 = vpop.f32.mrf.mxu0
        %476 = vmatprep.mubr.f32.mxu0 0.0
        %477 = vmatmul.mubr.f32.gmra.mxu0 %v265
        %v478 = vpop.f32.mrf.mxu0
        %v479 = vadd.f32 0.0, %v478
        %v480 = vpop.f32.mrf.mxu0
        %481 = vmatprep.mubr.f32.mxu0 0.0
        %482 = vmatmul.mubr.f32.gmra.mxu0 %v268
        %v483 = vpop.f32.mrf.mxu0
        %v484 = vadd.f32 0.0, %v483
        %v485 = vpop.f32.mrf.mxu0
        %486 = vmatprep.mubr.f32.mxu0 0.0
        %487 = vmatmul.mubr.f32.gmra.mxu0 %v271
        %v488 = vpop.f32.mrf.mxu0
        %v489 = vadd.f32 0.0, %v488
        %v490 = vpop.f32.mrf.mxu0
        %491 = vmatprep.mubr.f32.mxu0 0.0
        %492 = vmatmul.mubr.f32.gmra.mxu0 %v274
        %v493 = vpop.f32.mrf.mxu0
        %v494 = vadd.f32 0.0, %v493
        %v495 = vpop.f32.mrf.mxu0
        %496 = vmatprep.mubr.f32.mxu0 0.0
        %497 = vmatmul.mubr.f32.gmra.mxu0 %v277
        %v498 = vpop.f32.mrf.mxu0
        %v499 = vadd.f32 0.0, %v498
        %v500 = vpop.f32.mrf.mxu0
        %501 = vmatprep.mubr.f32.mxu0 0.0
        %502 = vmatmul.mubr.f32.gmra.mxu0 %v280
        %v503 = vpop.f32.mrf.mxu0
        %v504 = vadd.f32 0.0, %v503
        %v505 = vpop.f32.mrf.mxu0
        %506 = vmatprep.mubr.f32.mxu0 0.0
        %507 = vmatmul.mubr.f32.gmra.mxu0 %v283
        %v508 = vpop.f32.mrf.mxu0
        %v509 = vadd.f32 0.0, %v508
        %v510 = vpop.f32.mrf.mxu0
        %511 = vmatprep.mubr.f32.mxu0 0.0
        %512 = vmatmul.mubr.f32.gmra.mxu0 %v286
        %v513 = vpop.f32.mrf.mxu0
        %v514 = vadd.f32 0.0, %v513
        %v515 = vpop.f32.mrf.mxu0
        %516 = vdwg.mxu0
        %v517 = vsel %vm191, %v158, 0.0
        %518 = vadd.xlane.f32.xlu0 %v517
        %v519 = vpop.xlane.xlu0 %518
        %v520 = vsel %vm191, %v159, 0.0
        %521 = vadd.xlane.f32.xlu0 %v520
        %v522 = vpop.xlane.xlu0 %521
        %v523 = vsel %vm191, %v160, 0.0
        %524 = vadd.xlane.f32.xlu0 %v523
        %v525 = vpop.xlane.xlu0 %524
        %v526 = vsel %vm191, %v161, 0.0
        %527 = vadd.xlane.f32.xlu0 %v526
        %v528 = vpop.xlane.xlu0 %527
        %v529 = vsel %vm191, %v162, 0.0
        %530 = vadd.xlane.f32.xlu0 %v529
        %v531 = vpop.xlane.xlu0 %530
        %v532 = vsel %vm191, %v163, 0.0
        %533 = vadd.xlane.f32.xlu0 %v532
        %v534 = vpop.xlane.xlu0 %533
        %v535 = vsel %vm191, %v164, 0.0
        %536 = vadd.xlane.f32.xlu0 %v535
        %v537 = vpop.xlane.xlu0 %536
        %v538 = vsel %vm191, %v165, 0.0
        %539 = vadd.xlane.f32.xlu0 %v538
        %v540 = vpop.xlane.xlu0 %539
        %v541 = vsel %vm191, %v166, 0.0
        %542 = vadd.xlane.f32.xlu0 %v541
        %v543 = vpop.xlane.xlu0 %542
        %v544 = vsel %vm191, %v167, 0.0
        %545 = vadd.xlane.f32.xlu0 %v544
        %v546 = vpop.xlane.xlu0 %545
        %v547 = vsel %vm191, %v168, 0.0
        %548 = vadd.xlane.f32.xlu0 %v547
        %v549 = vpop.xlane.xlu0 %548
        %v550 = vsel %vm191, %v169, 0.0
        %551 = vadd.xlane.f32.xlu0 %v550
        %v552 = vpop.xlane.xlu0 %551
        %v553 = vsel %vm191, %v170, 0.0
        %554 = vadd.xlane.f32.xlu0 %v553
        %v555 = vpop.xlane.xlu0 %554
        %v556 = vsel %vm191, %v171, 0.0
        %557 = vadd.xlane.f32.xlu0 %v556
        %v558 = vpop.xlane.xlu0 %557
        %v559 = vsel %vm191, %v172, 0.0
        %560 = vadd.xlane.f32.xlu0 %v559
        %v561 = vpop.xlane.xlu0 %560
        %v562 = vsel %vm191, %v173, 0.0
        %563 = vadd.xlane.f32.xlu0 %v562
        %v564 = vpop.xlane.xlu0 %563
        %v565 = vsel %vm191, %v174, 0.0
        %566 = vadd.xlane.f32.xlu0 %v565
        %v567 = vpop.xlane.xlu0 %566
        %v568 = vsel %vm191, %v175, 0.0
        %569 = vadd.xlane.f32.xlu0 %v568
        %v570 = vpop.xlane.xlu0 %569
        %v571 = vsel %vm191, %v176, 0.0
        %572 = vadd.xlane.f32.xlu0 %v571
        %v573 = vpop.xlane.xlu0 %572
        %v574 = vsel %vm191, %v177, 0.0
        %575 = vadd.xlane.f32.xlu0 %v574
        %v576 = vpop.xlane.xlu0 %575
        %v577 = vsel %vm191, %v178, 0.0
        %578 = vadd.xlane.f32.xlu0 %v577
        %v579 = vpop.xlane.xlu0 %578
        %v580 = vsel %vm191, %v179, 0.0
        %581 = vadd.xlane.f32.xlu0 %v580
        %v582 = vpop.xlane.xlu0 %581
        %v583 = vsel %vm191, %v180, 0.0
        %584 = vadd.xlane.f32.xlu0 %v583
        %v585 = vpop.xlane.xlu0 %584
        %v586 = vsel %vm191, %v181, 0.0
        %587 = vadd.xlane.f32.xlu0 %v586
        %v588 = vpop.xlane.xlu0 %587
        %v589 = vsel %vm191, %v182, 0.0
        %590 = vadd.xlane.f32.xlu0 %v589
        %v591 = vpop.xlane.xlu0 %590
        %v592 = vsel %vm191, %v183, 0.0
        %593 = vadd.xlane.f32.xlu0 %v592
        %v594 = vpop.xlane.xlu0 %593
        %v595 = vsel %vm191, %v184, 0.0
        %596 = vadd.xlane.f32.xlu0 %v595
        %v597 = vpop.xlane.xlu0 %596
        %v598 = vsel %vm191, %v185, 0.0
        %599 = vadd.xlane.f32.xlu0 %v598
        %v600 = vpop.xlane.xlu0 %599
        %v601 = vsel %vm191, %v186, 0.0
        %602 = vadd.xlane.f32.xlu0 %v601
        %v603 = vpop.xlane.xlu0 %602
        %v604 = vsel %vm191, %v187, 0.0
        %605 = vadd.xlane.f32.xlu0 %v604
        %v606 = vpop.xlane.xlu0 %605
        %v607 = vsel %vm191, %v188, 0.0
        %608 = vadd.xlane.f32.xlu0 %v607
        %v609 = vpop.xlane.xlu0 %608
        %v610 = vsel %vm191, %v189, 0.0
        %611 = vadd.xlane.f32.xlu0 %v610
        %v612 = vpop.xlane.xlu0 %611
        %v613 = vmax.f32 %v519, 1e-12
        %v614 = vmax.f32 %v522, 1e-12
        %v615 = vmax.f32 %v525, 1e-12
        %v616 = vmax.f32 %v528, 1e-12
        %v617 = vmax.f32 %v531, 1e-12
        %v618 = vmax.f32 %v534, 1e-12
        %v619 = vmax.f32 %v537, 1e-12
        %v620 = vmax.f32 %v540, 1e-12
        %v621 = vmax.f32 %v543, 1e-12
        %v622 = vmax.f32 %v546, 1e-12
        %v623 = vmax.f32 %v549, 1e-12
        %v624 = vmax.f32 %v552, 1e-12
        %v625 = vmax.f32 %v555, 1e-12
        %v626 = vmax.f32 %v558, 1e-12
        %v627 = vmax.f32 %v561, 1e-12
        %v628 = vmax.f32 %v564, 1e-12
        %v629 = vmax.f32 %v567, 1e-12
        %v630 = vmax.f32 %v570, 1e-12
        %v631 = vmax.f32 %v573, 1e-12
        %v632 = vmax.f32 %v576, 1e-12
        %v633 = vmax.f32 %v579, 1e-12
        %v634 = vmax.f32 %v582, 1e-12
        %v635 = vmax.f32 %v585, 1e-12
        %v636 = vmax.f32 %v588, 1e-12
        %v637 = vmax.f32 %v591, 1e-12
        %v638 = vmax.f32 %v594, 1e-12
        %v639 = vmax.f32 %v597, 1e-12
        %v640 = vmax.f32 %v600, 1e-12
        %v641 = vmax.f32 %v603, 1e-12
        %v642 = vmax.f32 %v606, 1e-12
        %v643 = vmax.f32 %v609, 1e-12
        %v644 = vmax.f32 %v612, 1e-12
        %v645 = vrcp.pop %v613
        %v646 = vmul.f32 %v359, %v645
        %v647 = vrcp.pop %v614
        %v648 = vmul.f32 %v364, %v647
        %v649 = vrcp.pop %v615
        %v650 = vmul.f32 %v369, %v649
        %v651 = vrcp.pop %v616
        %v652 = vmul.f32 %v374, %v651
        %v653 = vrcp.pop %v617
        %v654 = vmul.f32 %v379, %v653
        %v655 = vrcp.pop %v618
        %v656 = vmul.f32 %v384, %v655
        %v657 = vrcp.pop %v619
        %v658 = vmul.f32 %v389, %v657
        %v659 = vrcp.pop %v620
        %v660 = vmul.f32 %v394, %v659
        %v661 = vrcp.pop %v621
        %v662 = vmul.f32 %v399, %v661
        %v663 = vrcp.pop %v622
        %v664 = vmul.f32 %v404, %v663
        %v665 = vrcp.pop %v623
        %v666 = vmul.f32 %v409, %v665
        %v667 = vrcp.pop %v624
        %v668 = vmul.f32 %v414, %v667
        %v669 = vrcp.pop %v625
        %v670 = vmul.f32 %v419, %v669
        %v671 = vrcp.pop %v626
        %v672 = vmul.f32 %v424, %v671
        %v673 = vrcp.pop %v627
        %v674 = vmul.f32 %v429, %v673
        %v675 = vrcp.pop %v628
        %v676 = vmul.f32 %v434, %v675
        %v677 = vrcp.pop %v629
        %v678 = vmul.f32 %v439, %v677
        %v679 = vrcp.pop %v630
        %v680 = vmul.f32 %v444, %v679
        %v681 = vrcp.pop %v631
        %v682 = vmul.f32 %v449, %v681
        %v683 = vrcp.pop %v632
        %v684 = vmul.f32 %v454, %v683
        %v685 = vrcp.pop %v633
        %v686 = vmul.f32 %v459, %v685
        %v687 = vrcp.pop %v634
        %v688 = vmul.f32 %v464, %v687
        %v689 = vrcp.pop %v635
        %v690 = vmul.f32 %v469, %v689
        %v691 = vrcp.pop %v636
        %v692 = vmul.f32 %v474, %v691
        %v693 = vrcp.pop %v637
        %v694 = vmul.f32 %v479, %v693
        %v695 = vrcp.pop %v638
        %v696 = vmul.f32 %v484, %v695
        %v697 = vrcp.pop %v639
        %v698 = vmul.f32 %v489, %v697
        %v699 = vrcp.pop %v640
        %v700 = vmul.f32 %v494, %v699
        %v701 = vrcp.pop %v641
        %v702 = vmul.f32 %v499, %v701
        %v703 = vrcp.pop %v642
        %v704 = vmul.f32 %v504, %v703
        %v705 = vrcp.pop %v643
        %v706 = vmul.f32 %v509, %v705
        %v707 = vrcp.pop %v644
        %v708 = vmul.f32 %v514, %v707
        %vm709 = vcmask 80896
        %v710 = vsel %vm709, %v646, 0.0
        %v711 = vsel %vm709, %v648, 0.0
        %v712 = vadd.f32 %v710, %v711
        %v713 = vsel %vm709, %v650, 0.0
        %v714 = vadd.f32 %v712, %v713
        %v715 = vsel %vm709, %v652, 0.0
        %v716 = vadd.f32 %v714, %v715
        %v717 = vsel %vm709, %v654, 0.0
        %v718 = vadd.f32 %v716, %v717
        %v719 = vsel %vm709, %v656, 0.0
        %v720 = vadd.f32 %v718, %v719
        %v721 = vsel %vm709, %v658, 0.0
        %v722 = vadd.f32 %v720, %v721
        %v723 = vsel %vm709, %v660, 0.0
        %v724 = vadd.f32 %v722, %v723
        %v725 = vsel %vm709, %v662, 0.0
        %v726 = vadd.f32 %v724, %v725
        %v727 = vsel %vm709, %v664, 0.0
        %v728 = vadd.f32 %v726, %v727
        %v729 = vsel %vm709, %v666, 0.0
        %v730 = vadd.f32 %v728, %v729
        %v731 = vsel %vm709, %v668, 0.0
        %v732 = vadd.f32 %v730, %v731
        %v733 = vsel %vm709, %v670, 0.0
        %v734 = vadd.f32 %v732, %v733
        %v735 = vsel %vm709, %v672, 0.0
        %v736 = vadd.f32 %v734, %v735
        %v737 = vsel %vm709, %v674, 0.0
        %v738 = vadd.f32 %v736, %v737
        %v739 = vsel %vm709, %v676, 0.0
        %v740 = vadd.f32 %v738, %v739
        %v741 = vsel %vm709, %v678, 0.0
        %v742 = vadd.f32 %v740, %v741
        %v743 = vsel %vm709, %v680, 0.0
        %v744 = vadd.f32 %v742, %v743
        %v745 = vsel %vm709, %v682, 0.0
        %v746 = vadd.f32 %v744, %v745
        %v747 = vsel %vm709, %v684, 0.0
        %v748 = vadd.f32 %v746, %v747
        %v749 = vsel %vm709, %v686, 0.0
        %v750 = vadd.f32 %v748, %v749
        %v751 = vsel %vm709, %v688, 0.0
        %v752 = vadd.f32 %v750, %v751
        %v753 = vsel %vm709, %v690, 0.0
        %v754 = vadd.f32 %v752, %v753
        %v755 = vsel %vm709, %v692, 0.0
        %v756 = vadd.f32 %v754, %v755
        %v757 = vsel %vm709, %v694, 0.0
        %v758 = vadd.f32 %v756, %v757
        %v759 = vsel %vm709, %v696, 0.0
        %v760 = vadd.f32 %v758, %v759
        %v761 = vsel %vm709, %v698, 0.0
        %v762 = vadd.f32 %v760, %v761
        %v763 = vsel %vm709, %v700, 0.0
        %v764 = vadd.f32 %v762, %v763
        %v765 = vsel %vm709, %v702, 0.0
        %v766 = vadd.f32 %v764, %v765
        %v767 = vsel %vm709, %v704, 0.0
        %v768 = vadd.f32 %v766, %v767
        %v769 = vsel %vm709, %v706, 0.0
        %v770 = vadd.f32 %v768, %v769
        %v771 = vsel %vm709, %v708, 0.0
        %v772 = vadd.f32 %v770, %v771
        %v773 = vrot.slane %v772, 4
        %v774 = vadd.f32 %v772, %v773
        %v775 = vrot.slane %v774, 2
        %v776 = vadd.f32 %v774, %v775
        %v777 = vrot.slane %v776, 1
        %v778 = vadd.f32 %v776, %v777
        %v779 = vmul.f32 %v778, 0.00390625
        %vm780 = vcmask 73728
        %781 = vst.msk [vmem:[%s148] sm:$0x1] %vm780, %v779
        %s782 = sand.u32 %s76, 1
        %s783 = scalar_lea.sflag [#allocation3], %s782
        %s784 = sand.u32 %s76, 1
        %s785 = scalar_lea.vmem [#allocation2], %s784
        // Predicated region
        $region29: #{adafocus_forward.15} parent=27 // pred_check
          %p786 = pneg %p86
        $region30: #{adafocus_forward.15} parent=27 // pred_check_branch
          %788 = sbr.rel (%p786) target = $region32
        $region31: #{adafocus_forward.15} parent=27 // pred_region
          %s790 = ssub.s32 16, 16
          %791 = vsyncadd %s783, %s790
          %s792 = smul.addr %s16, 16
          %s793 = scalar_lea.hbm %s2, %s792
          %s795 = sshll.u32 %s785, 4
          %s796 = int_to_ptr.vmem [resolvable:$true] %s795
          %798 = dma.vmem_to_hbm [thread:$0]  %s796, 16, %s793, %s783
        $region32: #{adafocus_forward.15} parent=27 // pred_fallthru
          _
      $region28: #{adafocus_forward.15} parent=5 // pred_fallthru
        _
      %p799 = scmp.le.s32.totalorder 2, %s11
      // Predicated region
      $region33: #{adafocus_forward.15} parent=5 // pred_check
        %p800 = pneg %p799
      $region34: #{adafocus_forward.15} parent=5 // pred_check_branch
        %802 = sbr.rel (%p800) target = $region36
      $region35: #{adafocus_forward.15} parent=5 // pred_region
        %s803 = ssub.s32 %s11, 2
        // Predicated region
        $region37: #{adafocus_forward.15} parent=35 // pred_check
          %p804 = pneg %p92
        $region38: #{adafocus_forward.15} parent=35 // pred_check_branch
          %806 = sbr.rel (%p804) target = $region40
        $region39: #{adafocus_forward.15} parent=35 // pred_region
          %s807 = sand.u32 %s77, 1
          %s808 = scalar_lea.sflag [#allocation3], %s807
          %s809 = sand.u32 %s77, 1
          %s810 = scalar_lea.vmem [#allocation2], %s809
          %811 = dma.done %s808, 16
        $region40: #{adafocus_forward.15} parent=35 // pred_fallthru
          _
      $region36: #{adafocus_forward.15} parent=5 // pred_fallthru
        _
    $region6: #{adafocus_forward.15} parent=1 // loop_footer
      %s15 = sadd.s32 1, %s11
    $region7: #{adafocus_forward.15} parent=1 // loop_footer_branch
      %10 = sbr.rel target = $region3
    $region8: #{adafocus_forward.15} parent=1 // loop_exit
      _
    %812 = vsyncpa [#allocation3], 1
    %s813 = scalar_lea.sflag [#allocation3], 1
    %814 = vsyncpa %s813, 1

</llo_original>
